<compile_context>
chip_gen: v6e
topology: v6e:2x2x1
jax: 0.10.0
libtpu: 0.0.40
codegen_flags: <defaults>
</compile_context>

<pallas_src>
import jax
import jax.numpy as jnp
from jax import lax
from jax.experimental import pallas as pl
from jax.experimental.pallas import tpu as pltpu

KSIZE = 3
PAD = 1
BN_EPS = 1e-5


# ----------------------------- Pallas kernels ------------------------------ #

def _depthwise_bn_stats_kernel(xp_ref, w_ref, b_ref, y_ref, sum_ref, sq_ref):
    """Depthwise 3x3x3 conv (+bias) for one batch element, fused with the
    per-batch BatchNorm partial statistics (per-channel sum and sum-of-squares)."""
    # xp_ref : (1, D+2, H+2, W+2, C)  spatially padded input
    # w_ref  : (3, 3, 3, C)           per-channel depthwise filters
    # b_ref  : (1, C)                 depthwise bias
    # y_ref  : (1, D, H, W, C)        depthwise output
    # sum_ref: (1, 1, C)              per-batch partial sum   (for BN)
    # sq_ref : (1, 1, C)              per-batch partial sum^2 (for BN)
    _, D, H, W, C = y_ref.shape
    x = xp_ref[0].astype(jnp.float32)            # cast once, outside the tap loop
    w = w_ref[...].astype(jnp.float32)
    acc = jnp.zeros((D, H, W, C), jnp.float32)
    # 3x3x3 depthwise conv as 27 shifted multiply-adds (pure VPU work; kd/kh shifts
    # slice leading dims, only the kw shift touches the sublane axis).
    for kd in range(KSIZE):
        for kh in range(KSIZE):
            for kw in range(KSIZE):
                acc = acc + x[kd:kd + D, kh:kh + H, kw:kw + W, :] * w[kd, kh, kw]
    acc = acc + b_ref[0].astype(jnp.float32)
    y_ref[0] = acc.astype(y_ref.dtype)
    # Fused BN statistics: per-batch partials, reduced across N in the wrapper, so the
    # grid axis stays "parallel" and y is never re-read from HBM for statistics.
    flat = acc.reshape(-1, C)
    sum_ref[0] = jnp.sum(flat, axis=0, keepdims=True)
    sq_ref[0] = jnp.sum(flat * flat, axis=0, keepdims=True)


def _pointwise_kernel(y_ref, w_ref, b_ref, o_ref):
    """1x1x1 pointwise conv with the BN affine pre-folded into (w, b).

    Output is produced transposed, (Cout, tm): the lane axis carries the large
    flattened-spatial tile so stores stay lane-dense even when Cout < 128."""
    y = y_ref[...].astype(jnp.float32)                               # (tm, Cin)
    w = w_ref[...]                                                   # (Cout, Cin)
    out = lax.dot_general(w, y, (((1,), (1,)), ((), ())),
                          preferred_element_type=jnp.float32)        # (Cout, tm)
    o_ref[...] = (out + b_ref[...]).astype(o_ref.dtype)


# ------------------------------- Wrapper ----------------------------------- #

def _pick_row_tile(m):
    """Largest row tile (multiple of 128, capped at 2048) that divides m."""
    for t in (2048, 1024, 512, 256, 128):
        if m % t == 0:
            return t
    if m <= 4096:
        return m          # single lane-dense block covering all rows
    return 512            # ragged tail handled by Pallas boundary masking


def depthwise_separable_conv3d(x_ncdhw, dw_w, dw_b, gamma, beta, pw_w, pw_b):
    """x_ncdhw: (N, Cin, D, H, W). dw_w: (Cin,1,3,3,3). pw_w: (Cout,Cin,1,1,1)."""
    N, C, D, H, W = x_ncdhw.shape
    Cout = pw_w.shape[0]

    # channels-last: C maps to the 128-wide lane axis.
    x = jnp.transpose(x_ncdhw, (0, 2, 3, 4, 1))                      # NDHWC
    # TODO(synk): replace this wrapper-level pad with in-kernel halo handling
    # (padded VMEM scratch or roll+mask) to save one HBM pass over x.
    xp = jnp.pad(x, ((0, 0), (PAD, PAD), (PAD, PAD), (PAD, PAD), (0, 0)))
    w_dw = jnp.transpose(dw_w[:, 0], (1, 2, 3, 0))                   # (3,3,3,C)
    b_dw = dw_b.reshape(1, C)

    # ---- depthwise 3x3x3 conv fused with BN batch statistics ----
    # NOTE: one batch element per grid step; for production volumes (v7x 64 MiB VMEM)
    # this axis should additionally be tiled over D with a halo.
    y, psum, psq = pl.pallas_call(
        _depthwise_bn_stats_kernel,
        out_shape=(jax.ShapeDtypeStruct((N, D, H, W, C), jnp.float32),
                   jax.ShapeDtypeStruct((N, 1, C), jnp.float32),
                   jax.ShapeDtypeStruct((N, 1, C), jnp.float32)),
        grid=(N,),
        in_specs=[
            pl.BlockSpec((1, D + 2 * PAD, H + 2 * PAD, W + 2 * PAD, C),
                         lambda n: (n, 0, 0, 0, 0)),
            pl.BlockSpec((KSIZE, KSIZE, KSIZE, C), lambda n: (0, 0, 0, 0)),
            pl.BlockSpec((1, C), lambda n: (0, 0)),
        ],
        out_specs=(
            pl.BlockSpec((1, D, H, W, C), lambda n: (n, 0, 0, 0, 0)),
            pl.BlockSpec((1, 1, C), lambda n: (n, 0, 0)),
            pl.BlockSpec((1, 1, C), lambda n: (n, 0, 0)),
        ),
        compiler_params=pltpu.CompilerParams(
            dimension_semantics=("parallel",),
            vmem_limit_bytes=64 * 1024 * 1024),
    )(xp, w_dw, b_dw)

    # ---- BatchNorm3d (training mode: batch stats, biased variance) ----
    count = float(N * D * H * W)
    mean = jnp.sum(psum[:, 0, :], axis=0) / count                    # (C,)
    ex2 = jnp.sum(psq[:, 0, :], axis=0) / count                      # (C,)
    var = ex2 - mean * mean
    inv_std = 1.0 / jnp.sqrt(var + BN_EPS)
    scale = gamma * inv_std                                          # (C,)
    shift = beta - mean * scale                                      # (C,)

    # ---- fold the BN affine into the pointwise conv ----
    w_pw2 = pw_w[:, :, 0, 0, 0]                                      # (Cout, Cin)
    w_eff = (w_pw2 * scale[None, :]).astype(jnp.float32)             # (Cout, Cin)
    b_eff = (w_pw2 @ shift + pw_b).reshape(Cout, 1).astype(jnp.float32)

    # ---- pointwise 1x1x1 conv: out^T (Cout, M) = w_eff contracted with y (lane-dense) ----
    M = N * D * H * W
    y_flat = y.reshape(M, C)
    tm = _pick_row_tile(M)
    out_t = pl.pallas_call(
        _pointwise_kernel,
        out_shape=jax.ShapeDtypeStruct((Cout, M), jnp.float32),
        grid=(pl.cdiv(M, tm),),
        in_specs=[
            pl.BlockSpec((tm, C), lambda i: (i, 0)),
            pl.BlockSpec((Cout, C), lambda i: (0, 0)),
            pl.BlockSpec((Cout, 1), lambda i: (0, 0)),
        ],
        out_specs=pl.BlockSpec((Cout, tm), lambda i: (0, i)),
        compiler_params=pltpu.CompilerParams(dimension_semantics=("parallel",)),
    )(y_flat, w_eff, b_eff)

    out = out_t.reshape(Cout, N, D, H, W)
    return jnp.transpose(out, (1, 0, 2, 3, 4))                       # back to NCDHW


# ------------------------ pure-JAX reference (check) ------------------------ #

def reference(x, dw_w, dw_b, gamma, beta, pw_w, pw_b):
    C = x.shape[1]
    y = lax.conv_general_dilated(
        x, dw_w, window_strides=(1, 1, 1), padding=((PAD, PAD),) * 3,
        dimension_numbers=("NCDHW", "OIDHW", "NCDHW"), feature_group_count=C)
    y = y + dw_b.reshape(1, C, 1, 1, 1)
    mean = jnp.mean(y, axis=(0, 2, 3, 4), keepdims=True)
    var = jnp.mean((y - mean) ** 2, axis=(0, 2, 3, 4), keepdims=True)
    yn = (y - mean) / jnp.sqrt(var + BN_EPS)
    yn = yn * gamma.reshape(1, C, 1, 1, 1) + beta.reshape(1, C, 1, 1, 1)
    out = lax.conv_general_dilated(
        yn, pw_w, window_strides=(1, 1, 1), padding=((0, 0),) * 3,
        dimension_numbers=("NCDHW", "OIDHW", "NCDHW"))
    return out + pw_b.reshape(1, -1, 1, 1, 1)


if __name__ == "__main__":
    key = jax.random.PRNGKey(0)
    k1, k2, k3, k4, k5 = jax.random.split(key, 5)

    N, Cin, Cout, D, H, W = 2, 4, 8, 8, 8, 8
    x = jax.random.normal(k1, (N, Cin, D, H, W), jnp.float32)

    # Deterministic synthetic parameters (shapes per nn.Conv3d / nn.BatchNorm3d init).
    dw_w = jax.random.normal(k2, (Cin, 1, KSIZE, KSIZE, KSIZE), jnp.float32) * 0.2
    dw_b = jax.random.normal(k3, (Cin,), jnp.float32) * 0.1
    gamma = jnp.ones((Cin,), jnp.float32)      # BatchNorm3d default affine init
    beta = jnp.zeros((Cin,), jnp.float32)
    pw_w = jax.random.normal(k4, (Cout, Cin, 1, 1, 1), jnp.float32) * 0.3
    pw_b = jax.random.normal(k5, (Cout,), jnp.float32) * 0.1

    out = depthwise_separable_conv3d(x, dw_w, dw_b, gamma, beta, pw_w, pw_b)
    out = jax.block_until_ready(out)

    ref = reference(x, dw_w, dw_b, gamma, beta, pw_w, pw_b)
    assert out.shape == (N, Cout, D, H, W)
    assert jnp.allclose(out, ref, atol=1e-3, rtol=1e-3), float(jnp.max(jnp.abs(out - ref)))
    print("KERNEL_OK")
</pallas_src>

<mosaic_0001>
module attributes {stable_mosaic.version = 11 : i64} {
  func.func @_depthwise_bn_stats_kernel(%arg0: i32, %arg1: memref<1x10x10x10x4xf32, #tpu.memory_space<vmem>>, %arg2: memref<3x3x3x4xf32, #tpu.memory_space<vmem>>, %arg3: memref<1x4xf32, #tpu.memory_space<vmem>>, %arg4: memref<1x8x8x8x4xf32, #tpu.memory_space<vmem>>, %arg5: memref<1x1x4xf32, #tpu.memory_space<vmem>>, %arg6: memref<1x1x4xf32, #tpu.memory_space<vmem>>) attributes {dimension_semantics = [#tpu.dimension_semantics<parallel>], iteration_bounds = array<i64: 2>, scalar_prefetch = 0 : i64, scratch_operands = 0 : i64, tpu.core_type = #tpu.core_type<tc>, window_params = [{transform_indices = @transform_0, window_bounds = array<i64: 1, 10, 10, 10, 4>}, {pipeline_mode = #tpu.pipeline_mode<synchronous>, transform_indices = @transform_1, window_bounds = array<i64: 3, 3, 3, 4>}, {pipeline_mode = #tpu.pipeline_mode<synchronous>, transform_indices = @transform_2, window_bounds = array<i64: 1, 4>}, {transform_indices = @transform_3, window_bounds = array<i64: 1, 8, 8, 8, 4>}, {transform_indices = @transform_4, window_bounds = array<i64: 1, 1, 4>}, {transform_indices = @transform_5, window_bounds = array<i64: 1, 1, 4>}]} {
    %c0 = arith.constant 0 : index
    %c0_0 = arith.constant 0 : index
    %c0_1 = arith.constant 0 : index
    %c0_2 = arith.constant 0 : index
    %c0_3 = arith.constant 0 : index
    %0 = vector.load %arg1[%c0, %c0_0, %c0_1, %c0_2, %c0_3] : memref<1x10x10x10x4xf32, #tpu.memory_space<vmem>>, vector<1x10x10x10x4xf32>
    %1 = vector.shape_cast %0 : vector<1x10x10x10x4xf32> to vector<10x10x10x4xf32>
    %c0_4 = arith.constant 0 : index
    %c0_5 = arith.constant 0 : index
    %c0_6 = arith.constant 0 : index
    %c0_7 = arith.constant 0 : index
    %2 = vector.load %arg2[%c0_4, %c0_5, %c0_6, %c0_7] : memref<3x3x3x4xf32, #tpu.memory_space<vmem>>, vector<3x3x3x4xf32>
    %cst = arith.constant 0.000000e+00 : f32
    %3 = vector.broadcast %cst : f32 to vector<8x8x8x4xf32>
    %4 = vector.extract_strided_slice %1 {offsets = [0, 0, 0, 0], sizes = [8, 8, 8, 4], strides = [1, 1, 1, 1]} : vector<10x10x10x4xf32> to vector<8x8x8x4xf32>
    %5 = vector.extract_strided_slice %2 {offsets = [0, 0, 0, 0], sizes = [1, 1, 1, 4], strides = [1, 1, 1, 1]} : vector<3x3x3x4xf32> to vector<1x1x1x4xf32>
    %6 = vector.shape_cast %5 : vector<1x1x1x4xf32> to vector<4xf32>
    %7 = vector.shape_cast %6 : vector<4xf32> to vector<1x1x1x4xf32>
    %8 = vector.broadcast %7 : vector<1x1x1x4xf32> to vector<8x8x8x4xf32>
    %9 = arith.mulf %4, %8 : vector<8x8x8x4xf32>
    %10 = arith.addf %3, %9 : vector<8x8x8x4xf32>
    %11 = vector.extract_strided_slice %1 {offsets = [0, 0, 1, 0], sizes = [8, 8, 8, 4], strides = [1, 1, 1, 1]} : vector<10x10x10x4xf32> to vector<8x8x8x4xf32>
    %12 = vector.extract_strided_slice %2 {offsets = [0, 0, 1, 0], sizes = [1, 1, 1, 4], strides = [1, 1, 1, 1]} : vector<3x3x3x4xf32> to vector<1x1x1x4xf32>
    %13 = vector.shape_cast %12 : vector<1x1x1x4xf32> to vector<4xf32>
    %14 = vector.shape_cast %13 : vector<4xf32> to vector<1x1x1x4xf32>
    %15 = vector.broadcast %14 : vector<1x1x1x4xf32> to vector<8x8x8x4xf32>
    %16 = arith.mulf %11, %15 : vector<8x8x8x4xf32>
    %17 = arith.addf %10, %16 : vector<8x8x8x4xf32>
    %18 = vector.extract_strided_slice %1 {offsets = [0, 0, 2, 0], sizes = [8, 8, 8, 4], strides = [1, 1, 1, 1]} : vector<10x10x10x4xf32> to vector<8x8x8x4xf32>
    %19 = vector.extract_strided_slice %2 {offsets = [0, 0, 2, 0], sizes = [1, 1, 1, 4], strides = [1, 1, 1, 1]} : vector<3x3x3x4xf32> to vector<1x1x1x4xf32>
    %20 = vector.shape_cast %19 : vector<1x1x1x4xf32> to vector<4xf32>
    %21 = vector.shape_cast %20 : vector<4xf32> to vector<1x1x1x4xf32>
    %22 = vector.broadcast %21 : vector<1x1x1x4xf32> to vector<8x8x8x4xf32>
    %23 = arith.mulf %18, %22 : vector<8x8x8x4xf32>
    %24 = arith.addf %17, %23 : vector<8x8x8x4xf32>
    %25 = vector.extract_strided_slice %1 {offsets = [0, 1, 0, 0], sizes = [8, 8, 8, 4], strides = [1, 1, 1, 1]} : vector<10x10x10x4xf32> to vector<8x8x8x4xf32>
    %26 = vector.extract_strided_slice %2 {offsets = [0, 1, 0, 0], sizes = [1, 1, 1, 4], strides = [1, 1, 1, 1]} : vector<3x3x3x4xf32> to vector<1x1x1x4xf32>
    %27 = vector.shape_cast %26 : vector<1x1x1x4xf32> to vector<4xf32>
    %28 = vector.shape_cast %27 : vector<4xf32> to vector<1x1x1x4xf32>
    %29 = vector.broadcast %28 : vector<1x1x1x4xf32> to vector<8x8x8x4xf32>
    %30 = arith.mulf %25, %29 : vector<8x8x8x4xf32>
    %31 = arith.addf %24, %30 : vector<8x8x8x4xf32>
    %32 = vector.extract_strided_slice %1 {offsets = [0, 1, 1, 0], sizes = [8, 8, 8, 4], strides = [1, 1, 1, 1]} : vector<10x10x10x4xf32> to vector<8x8x8x4xf32>
    %33 = vector.extract_strided_slice %2 {offsets = [0, 1, 1, 0], sizes = [1, 1, 1, 4], strides = [1, 1, 1, 1]} : vector<3x3x3x4xf32> to vector<1x1x1x4xf32>
    %34 = vector.shape_cast %33 : vector<1x1x1x4xf32> to vector<4xf32>
    %35 = vector.shape_cast %34 : vector<4xf32> to vector<1x1x1x4xf32>
    %36 = vector.broadcast %35 : vector<1x1x1x4xf32> to vector<8x8x8x4xf32>
    %37 = arith.mulf %32, %36 : vector<8x8x8x4xf32>
    %38 = arith.addf %31, %37 : vector<8x8x8x4xf32>
    %39 = vector.extract_strided_slice %1 {offsets = [0, 1, 2, 0], sizes = [8, 8, 8, 4], strides = [1, 1, 1, 1]} : vector<10x10x10x4xf32> to vector<8x8x8x4xf32>
    %40 = vector.extract_strided_slice %2 {offsets = [0, 1, 2, 0], sizes = [1, 1, 1, 4], strides = [1, 1, 1, 1]} : vector<3x3x3x4xf32> to vector<1x1x1x4xf32>
    %41 = vector.shape_cast %40 : vector<1x1x1x4xf32> to vector<4xf32>
    %42 = vector.shape_cast %41 : vector<4xf32> to vector<1x1x1x4xf32>
    %43 = vector.broadcast %42 : vector<1x1x1x4xf32> to vector<8x8x8x4xf32>
    %44 = arith.mulf %39, %43 : vector<8x8x8x4xf32>
    %45 = arith.addf %38, %44 : vector<8x8x8x4xf32>
    %46 = vector.extract_strided_slice %1 {offsets = [0, 2, 0, 0], sizes = [8, 8, 8, 4], strides = [1, 1, 1, 1]} : vector<10x10x10x4xf32> to vector<8x8x8x4xf32>
    %47 = vector.extract_strided_slice %2 {offsets = [0, 2, 0, 0], sizes = [1, 1, 1, 4], strides = [1, 1, 1, 1]} : vector<3x3x3x4xf32> to vector<1x1x1x4xf32>
    %48 = vector.shape_cast %47 : vector<1x1x1x4xf32> to vector<4xf32>
    %49 = vector.shape_cast %48 : vector<4xf32> to vector<1x1x1x4xf32>
    %50 = vector.broadcast %49 : vector<1x1x1x4xf32> to vector<8x8x8x4xf32>
    %51 = arith.mulf %46, %50 : vector<8x8x8x4xf32>
    %52 = arith.addf %45, %51 : vector<8x8x8x4xf32>
    %53 = vector.extract_strided_slice %1 {offsets = [0, 2, 1, 0], sizes = [8, 8, 8, 4], strides = [1, 1, 1, 1]} : vector<10x10x10x4xf32> to vector<8x8x8x4xf32>
    %54 = vector.extract_strided_slice %2 {offsets = [0, 2, 1, 0], sizes = [1, 1, 1, 4], strides = [1, 1, 1, 1]} : vector<3x3x3x4xf32> to vector<1x1x1x4xf32>
    %55 = vector.shape_cast %54 : vector<1x1x1x4xf32> to vector<4xf32>
    %56 = vector.shape_cast %55 : vector<4xf32> to vector<1x1x1x4xf32>
    %57 = vector.broadcast %56 : vector<1x1x1x4xf32> to vector<8x8x8x4xf32>
    %58 = arith.mulf %53, %57 : vector<8x8x8x4xf32>
    %59 = arith.addf %52, %58 : vector<8x8x8x4xf32>
    %60 = vector.extract_strided_slice %1 {offsets = [0, 2, 2, 0], sizes = [8, 8, 8, 4], strides = [1, 1, 1, 1]} : vector<10x10x10x4xf32> to vector<8x8x8x4xf32>
    %61 = vector.extract_strided_slice %2 {offsets = [0, 2, 2, 0], sizes = [1, 1, 1, 4], strides = [1, 1, 1, 1]} : vector<3x3x3x4xf32> to vector<1x1x1x4xf32>
    %62 = vector.shape_cast %61 : vector<1x1x1x4xf32> to vector<4xf32>
    %63 = vector.shape_cast %62 : vector<4xf32> to vector<1x1x1x4xf32>
    %64 = vector.broadcast %63 : vector<1x1x1x4xf32> to vector<8x8x8x4xf32>
    %65 = arith.mulf %60, %64 : vector<8x8x8x4xf32>
    %66 = arith.addf %59, %65 : vector<8x8x8x4xf32>
    %67 = vector.extract_strided_slice %1 {offsets = [1, 0, 0, 0], sizes = [8, 8, 8, 4], strides = [1, 1, 1, 1]} : vector<10x10x10x4xf32> to vector<8x8x8x4xf32>
    %68 = vector.extract_strided_slice %2 {offsets = [1, 0, 0, 0], sizes = [1, 1, 1, 4], strides = [1, 1, 1, 1]} : vector<3x3x3x4xf32> to vector<1x1x1x4xf32>
    %69 = vector.shape_cast %68 : vector<1x1x1x4xf32> to vector<4xf32>
    %70 = vector.shape_cast %69 : vector<4xf32> to vector<1x1x1x4xf32>
    %71 = vector.broadcast %70 : vector<1x1x1x4xf32> to vector<8x8x8x4xf32>
    %72 = arith.mulf %67, %71 : vector<8x8x8x4xf32>
    %73 = arith.addf %66, %72 : vector<8x8x8x4xf32>
    %74 = vector.extract_strided_slice %1 {offsets = [1, 0, 1, 0], sizes = [8, 8, 8, 4], strides = [1, 1, 1, 1]} : vector<10x10x10x4xf32> to vector<8x8x8x4xf32>
    %75 = vector.extract_strided_slice %2 {offsets = [1, 0, 1, 0], sizes = [1, 1, 1, 4], strides = [1, 1, 1, 1]} : vector<3x3x3x4xf32> to vector<1x1x1x4xf32>
    %76 = vector.shape_cast %75 : vector<1x1x1x4xf32> to vector<4xf32>
    %77 = vector.shape_cast %76 : vector<4xf32> to vector<1x1x1x4xf32>
    %78 = vector.broadcast %77 : vector<1x1x1x4xf32> to vector<8x8x8x4xf32>
    %79 = arith.mulf %74, %78 : vector<8x8x8x4xf32>
    %80 = arith.addf %73, %79 : vector<8x8x8x4xf32>
    %81 = vector.extract_strided_slice %1 {offsets = [1, 0, 2, 0], sizes = [8, 8, 8, 4], strides = [1, 1, 1, 1]} : vector<10x10x10x4xf32> to vector<8x8x8x4xf32>
    %82 = vector.extract_strided_slice %2 {offsets = [1, 0, 2, 0], sizes = [1, 1, 1, 4], strides = [1, 1, 1, 1]} : vector<3x3x3x4xf32> to vector<1x1x1x4xf32>
    %83 = vector.shape_cast %82 : vector<1x1x1x4xf32> to vector<4xf32>
    %84 = vector.shape_cast %83 : vector<4xf32> to vector<1x1x1x4xf32>
    %85 = vector.broadcast %84 : vector<1x1x1x4xf32> to vector<8x8x8x4xf32>
    %86 = arith.mulf %81, %85 : vector<8x8x8x4xf32>
    %87 = arith.addf %80, %86 : vector<8x8x8x4xf32>
    %88 = vector.extract_strided_slice %1 {offsets = [1, 1, 0, 0], sizes = [8, 8, 8, 4], strides = [1, 1, 1, 1]} : vector<10x10x10x4xf32> to vector<8x8x8x4xf32>
    %89 = vector.extract_strided_slice %2 {offsets = [1, 1, 0, 0], sizes = [1, 1, 1, 4], strides = [1, 1, 1, 1]} : vector<3x3x3x4xf32> to vector<1x1x1x4xf32>
    %90 = vector.shape_cast %89 : vector<1x1x1x4xf32> to vector<4xf32>
    %91 = vector.shape_cast %90 : vector<4xf32> to vector<1x1x1x4xf32>
    %92 = vector.broadcast %91 : vector<1x1x1x4xf32> to vector<8x8x8x4xf32>
    %93 = arith.mulf %88, %92 : vector<8x8x8x4xf32>
    %94 = arith.addf %87, %93 : vector<8x8x8x4xf32>
    %95 = vector.extract_strided_slice %1 {offsets = [1, 1, 1, 0], sizes = [8, 8, 8, 4], strides = [1, 1, 1, 1]} : vector<10x10x10x4xf32> to vector<8x8x8x4xf32>
    %96 = vector.extract_strided_slice %2 {offsets = [1, 1, 1, 0], sizes = [1, 1, 1, 4], strides = [1, 1, 1, 1]} : vector<3x3x3x4xf32> to vector<1x1x1x4xf32>
    %97 = vector.shape_cast %96 : vector<1x1x1x4xf32> to vector<4xf32>
    %98 = vector.shape_cast %97 : vector<4xf32> to vector<1x1x1x4xf32>
    %99 = vector.broadcast %98 : vector<1x1x1x4xf32> to vector<8x8x8x4xf32>
    %100 = arith.mulf %95, %99 : vector<8x8x8x4xf32>
    %101 = arith.addf %94, %100 : vector<8x8x8x4xf32>
    %102 = vector.extract_strided_slice %1 {offsets = [1, 1, 2, 0], sizes = [8, 8, 8, 4], strides = [1, 1, 1, 1]} : vector<10x10x10x4xf32> to vector<8x8x8x4xf32>
    %103 = vector.extract_strided_slice %2 {offsets = [1, 1, 2, 0], sizes = [1, 1, 1, 4], strides = [1, 1, 1, 1]} : vector<3x3x3x4xf32> to vector<1x1x1x4xf32>
    %104 = vector.shape_cast %103 : vector<1x1x1x4xf32> to vector<4xf32>
    %105 = vector.shape_cast %104 : vector<4xf32> to vector<1x1x1x4xf32>
    %106 = vector.broadcast %105 : vector<1x1x1x4xf32> to vector<8x8x8x4xf32>
    %107 = arith.mulf %102, %106 : vector<8x8x8x4xf32>
    %108 = arith.addf %101, %107 : vector<8x8x8x4xf32>
    %109 = vector.extract_strided_slice %1 {offsets = [1, 2, 0, 0], sizes = [8, 8, 8, 4], strides = [1, 1, 1, 1]} : vector<10x10x10x4xf32> to vector<8x8x8x4xf32>
    %110 = vector.extract_strided_slice %2 {offsets = [1, 2, 0, 0], sizes = [1, 1, 1, 4], strides = [1, 1, 1, 1]} : vector<3x3x3x4xf32> to vector<1x1x1x4xf32>
    %111 = vector.shape_cast %110 : vector<1x1x1x4xf32> to vector<4xf32>
    %112 = vector.shape_cast %111 : vector<4xf32> to vector<1x1x1x4xf32>
    %113 = vector.broadcast %112 : vector<1x1x1x4xf32> to vector<8x8x8x4xf32>
    %114 = arith.mulf %109, %113 : vector<8x8x8x4xf32>
    %115 = arith.addf %108, %114 : vector<8x8x8x4xf32>
    %116 = vector.extract_strided_slice %1 {offsets = [1, 2, 1, 0], sizes = [8, 8, 8, 4], strides = [1, 1, 1, 1]} : vector<10x10x10x4xf32> to vector<8x8x8x4xf32>
    %117 = vector.extract_strided_slice %2 {offsets = [1, 2, 1, 0], sizes = [1, 1, 1, 4], strides = [1, 1, 1, 1]} : vector<3x3x3x4xf32> to vector<1x1x1x4xf32>
    %118 = vector.shape_cast %117 : vector<1x1x1x4xf32> to vector<4xf32>
    %119 = vector.shape_cast %118 : vector<4xf32> to vector<1x1x1x4xf32>
    %120 = vector.broadcast %119 : vector<1x1x1x4xf32> to vector<8x8x8x4xf32>
    %121 = arith.mulf %116, %120 : vector<8x8x8x4xf32>
    %122 = arith.addf %115, %121 : vector<8x8x8x4xf32>
    %123 = vector.extract_strided_slice %1 {offsets = [1, 2, 2, 0], sizes = [8, 8, 8, 4], strides = [1, 1, 1, 1]} : vector<10x10x10x4xf32> to vector<8x8x8x4xf32>
    %124 = vector.extract_strided_slice %2 {offsets = [1, 2, 2, 0], sizes = [1, 1, 1, 4], strides = [1, 1, 1, 1]} : vector<3x3x3x4xf32> to vector<1x1x1x4xf32>
    %125 = vector.shape_cast %124 : vector<1x1x1x4xf32> to vector<4xf32>
    %126 = vector.shape_cast %125 : vector<4xf32> to vector<1x1x1x4xf32>
    %127 = vector.broadcast %126 : vector<1x1x1x4xf32> to vector<8x8x8x4xf32>
    %128 = arith.mulf %123, %127 : vector<8x8x8x4xf32>
    %129 = arith.addf %122, %128 : vector<8x8x8x4xf32>
    %130 = vector.extract_strided_slice %1 {offsets = [2, 0, 0, 0], sizes = [8, 8, 8, 4], strides = [1, 1, 1, 1]} : vector<10x10x10x4xf32> to vector<8x8x8x4xf32>
    %131 = vector.extract_strided_slice %2 {offsets = [2, 0, 0, 0], sizes = [1, 1, 1, 4], strides = [1, 1, 1, 1]} : vector<3x3x3x4xf32> to vector<1x1x1x4xf32>
    %132 = vector.shape_cast %131 : vector<1x1x1x4xf32> to vector<4xf32>
    %133 = vector.shape_cast %132 : vector<4xf32> to vector<1x1x1x4xf32>
    %134 = vector.broadcast %133 : vector<1x1x1x4xf32> to vector<8x8x8x4xf32>
    %135 = arith.mulf %130, %134 : vector<8x8x8x4xf32>
    %136 = arith.addf %129, %135 : vector<8x8x8x4xf32>
    %137 = vector.extract_strided_slice %1 {offsets = [2, 0, 1, 0], sizes = [8, 8, 8, 4], strides = [1, 1, 1, 1]} : vector<10x10x10x4xf32> to vector<8x8x8x4xf32>
    %138 = vector.extract_strided_slice %2 {offsets = [2, 0, 1, 0], sizes = [1, 1, 1, 4], strides = [1, 1, 1, 1]} : vector<3x3x3x4xf32> to vector<1x1x1x4xf32>
    %139 = vector.shape_cast %138 : vector<1x1x1x4xf32> to vector<4xf32>
    %140 = vector.shape_cast %139 : vector<4xf32> to vector<1x1x1x4xf32>
    %141 = vector.broadcast %140 : vector<1x1x1x4xf32> to vector<8x8x8x4xf32>
    %142 = arith.mulf %137, %141 : vector<8x8x8x4xf32>
    %143 = arith.addf %136, %142 : vector<8x8x8x4xf32>
    %144 = vector.extract_strided_slice %1 {offsets = [2, 0, 2, 0], sizes = [8, 8, 8, 4], strides = [1, 1, 1, 1]} : vector<10x10x10x4xf32> to vector<8x8x8x4xf32>
    %145 = vector.extract_strided_slice %2 {offsets = [2, 0, 2, 0], sizes = [1, 1, 1, 4], strides = [1, 1, 1, 1]} : vector<3x3x3x4xf32> to vector<1x1x1x4xf32>
    %146 = vector.shape_cast %145 : vector<1x1x1x4xf32> to vector<4xf32>
    %147 = vector.shape_cast %146 : vector<4xf32> to vector<1x1x1x4xf32>
    %148 = vector.broadcast %147 : vector<1x1x1x4xf32> to vector<8x8x8x4xf32>
    %149 = arith.mulf %144, %148 : vector<8x8x8x4xf32>
    %150 = arith.addf %143, %149 : vector<8x8x8x4xf32>
    %151 = vector.extract_strided_slice %1 {offsets = [2, 1, 0, 0], sizes = [8, 8, 8, 4], strides = [1, 1, 1, 1]} : vector<10x10x10x4xf32> to vector<8x8x8x4xf32>
    %152 = vector.extract_strided_slice %2 {offsets = [2, 1, 0, 0], sizes = [1, 1, 1, 4], strides = [1, 1, 1, 1]} : vector<3x3x3x4xf32> to vector<1x1x1x4xf32>
    %153 = vector.shape_cast %152 : vector<1x1x1x4xf32> to vector<4xf32>
    %154 = vector.shape_cast %153 : vector<4xf32> to vector<1x1x1x4xf32>
    %155 = vector.broadcast %154 : vector<1x1x1x4xf32> to vector<8x8x8x4xf32>
    %156 = arith.mulf %151, %155 : vector<8x8x8x4xf32>
    %157 = arith.addf %150, %156 : vector<8x8x8x4xf32>
    %158 = vector.extract_strided_slice %1 {offsets = [2, 1, 1, 0], sizes = [8, 8, 8, 4], strides = [1, 1, 1, 1]} : vector<10x10x10x4xf32> to vector<8x8x8x4xf32>
    %159 = vector.extract_strided_slice %2 {offsets = [2, 1, 1, 0], sizes = [1, 1, 1, 4], strides = [1, 1, 1, 1]} : vector<3x3x3x4xf32> to vector<1x1x1x4xf32>
    %160 = vector.shape_cast %159 : vector<1x1x1x4xf32> to vector<4xf32>
    %161 = vector.shape_cast %160 : vector<4xf32> to vector<1x1x1x4xf32>
    %162 = vector.broadcast %161 : vector<1x1x1x4xf32> to vector<8x8x8x4xf32>
    %163 = arith.mulf %158, %162 : vector<8x8x8x4xf32>
    %164 = arith.addf %157, %163 : vector<8x8x8x4xf32>
    %165 = vector.extract_strided_slice %1 {offsets = [2, 1, 2, 0], sizes = [8, 8, 8, 4], strides = [1, 1, 1, 1]} : vector<10x10x10x4xf32> to vector<8x8x8x4xf32>
    %166 = vector.extract_strided_slice %2 {offsets = [2, 1, 2, 0], sizes = [1, 1, 1, 4], strides = [1, 1, 1, 1]} : vector<3x3x3x4xf32> to vector<1x1x1x4xf32>
    %167 = vector.shape_cast %166 : vector<1x1x1x4xf32> to vector<4xf32>
    %168 = vector.shape_cast %167 : vector<4xf32> to vector<1x1x1x4xf32>
    %169 = vector.broadcast %168 : vector<1x1x1x4xf32> to vector<8x8x8x4xf32>
    %170 = arith.mulf %165, %169 : vector<8x8x8x4xf32>
    %171 = arith.addf %164, %170 : vector<8x8x8x4xf32>
    %172 = vector.extract_strided_slice %1 {offsets = [2, 2, 0, 0], sizes = [8, 8, 8, 4], strides = [1, 1, 1, 1]} : vector<10x10x10x4xf32> to vector<8x8x8x4xf32>
    %173 = vector.extract_strided_slice %2 {offsets = [2, 2, 0, 0], sizes = [1, 1, 1, 4], strides = [1, 1, 1, 1]} : vector<3x3x3x4xf32> to vector<1x1x1x4xf32>
    %174 = vector.shape_cast %173 : vector<1x1x1x4xf32> to vector<4xf32>
    %175 = vector.shape_cast %174 : vector<4xf32> to vector<1x1x1x4xf32>
    %176 = vector.broadcast %175 : vector<1x1x1x4xf32> to vector<8x8x8x4xf32>
    %177 = arith.mulf %172, %176 : vector<8x8x8x4xf32>
    %178 = arith.addf %171, %177 : vector<8x8x8x4xf32>
    %179 = vector.extract_strided_slice %1 {offsets = [2, 2, 1, 0], sizes = [8, 8, 8, 4], strides = [1, 1, 1, 1]} : vector<10x10x10x4xf32> to vector<8x8x8x4xf32>
    %180 = vector.extract_strided_slice %2 {offsets = [2, 2, 1, 0], sizes = [1, 1, 1, 4], strides = [1, 1, 1, 1]} : vector<3x3x3x4xf32> to vector<1x1x1x4xf32>
    %181 = vector.shape_cast %180 : vector<1x1x1x4xf32> to vector<4xf32>
    %182 = vector.shape_cast %181 : vector<4xf32> to vector<1x1x1x4xf32>
    %183 = vector.broadcast %182 : vector<1x1x1x4xf32> to vector<8x8x8x4xf32>
    %184 = arith.mulf %179, %183 : vector<8x8x8x4xf32>
    %185 = arith.addf %178, %184 : vector<8x8x8x4xf32>
    %186 = vector.extract_strided_slice %1 {offsets = [2, 2, 2, 0], sizes = [8, 8, 8, 4], strides = [1, 1, 1, 1]} : vector<10x10x10x4xf32> to vector<8x8x8x4xf32>
    %187 = vector.extract_strided_slice %2 {offsets = [2, 2, 2, 0], sizes = [1, 1, 1, 4], strides = [1, 1, 1, 1]} : vector<3x3x3x4xf32> to vector<1x1x1x4xf32>
    %188 = vector.shape_cast %187 : vector<1x1x1x4xf32> to vector<4xf32>
    %189 = vector.shape_cast %188 : vector<4xf32> to vector<1x1x1x4xf32>
    %190 = vector.broadcast %189 : vector<1x1x1x4xf32> to vector<8x8x8x4xf32>
    %191 = arith.mulf %186, %190 : vector<8x8x8x4xf32>
    %192 = arith.addf %185, %191 : vector<8x8x8x4xf32>
    %c0_8 = arith.constant 0 : index
    %c0_9 = arith.constant 0 : index
    %193 = vector.load %arg3[%c0_8, %c0_9] : memref<1x4xf32, #tpu.memory_space<vmem>>, vector<1x4xf32>
    %194 = vector.shape_cast %193 : vector<1x4xf32> to vector<4xf32>
    %195 = vector.shape_cast %194 : vector<4xf32> to vector<1x1x1x4xf32>
    %196 = vector.broadcast %195 : vector<1x1x1x4xf32> to vector<8x8x8x4xf32>
    %197 = arith.addf %192, %196 : vector<8x8x8x4xf32>
    %c0_10 = arith.constant 0 : index
    %c0_11 = arith.constant 0 : index
    %c0_12 = arith.constant 0 : index
    %c0_13 = arith.constant 0 : index
    %c0_14 = arith.constant 0 : index
    %198 = vector.load %arg4[%c0_10, %c0_11, %c0_12, %c0_13, %c0_14] : memref<1x8x8x8x4xf32, #tpu.memory_space<vmem>>, vector<1x8x8x8x4xf32>
    %199 = vector.shape_cast %198 : vector<1x8x8x8x4xf32> to vector<8x8x8x4xf32>
    %200 = vector.shape_cast %197 : vector<8x8x8x4xf32> to vector<1x8x8x8x4xf32>
    tpu.vector_store %arg4[%c0_10, %c0_11, %c0_12, %c0_13, %c0_14], %200 {strides = array<i32>} : memref<1x8x8x8x4xf32, #tpu.memory_space<vmem>>, vector<1x8x8x8x4xf32>,
    %201 = vector.shape_cast %197 : vector<8x8x8x4xf32> to vector<512x4xf32>
    %cst_15 = arith.constant dense<0.000000e+00> : vector<4xf32>
    %202 = vector.multi_reduction <add>, %201, %cst_15 [0] : vector<512x4xf32> to vector<4xf32>
    %203 = vector.shape_cast %202 : vector<4xf32> to vector<1x4xf32>
    %c0_16 = arith.constant 0 : index
    %c0_17 = arith.constant 0 : index
    %c0_18 = arith.constant 0 : index
    %204 = vector.load %arg5[%c0_16, %c0_17, %c0_18] : memref<1x1x4xf32, #tpu.memory_space<vmem>>, vector<1x1x4xf32>
    %205 = vector.shape_cast %204 : vector<1x1x4xf32> to vector<1x4xf32>
    %206 = vector.shape_cast %203 : vector<1x4xf32> to vector<1x1x4xf32>
    tpu.vector_store %arg5[%c0_16, %c0_17, %c0_18], %206 {strides = array<i32>} : memref<1x1x4xf32, #tpu.memory_space<vmem>>, vector<1x1x4xf32>,
    %207 = arith.mulf %201, %201 : vector<512x4xf32>
    %cst_19 = arith.constant dense<0.000000e+00> : vector<4xf32>
    %208 = vector.multi_reduction <add>, %207, %cst_19 [0] : vector<512x4xf32> to vector<4xf32>
    %209 = vector.shape_cast %208 : vector<4xf32> to vector<1x4xf32>
    %c0_20 = arith.constant 0 : index
    %c0_21 = arith.constant 0 : index
    %c0_22 = arith.constant 0 : index
    %210 = vector.load %arg6[%c0_20, %c0_21, %c0_22] : memref<1x1x4xf32, #tpu.memory_space<vmem>>, vector<1x1x4xf32>
    %211 = vector.shape_cast %210 : vector<1x1x4xf32> to vector<1x4xf32>
    %212 = vector.shape_cast %209 : vector<1x4xf32> to vector<1x1x4xf32>
    tpu.vector_store %arg6[%c0_20, %c0_21, %c0_22], %212 {strides = array<i32>} : memref<1x1x4xf32, #tpu.memory_space<vmem>>, vector<1x1x4xf32>,
    return
  }
  func.func @transform_0(%arg0: i32) -> (i32, i32, i32, i32, i32) {
    %c0_i32 = arith.constant 0 : i32
    %c0_i32_0 = arith.constant 0 : i32
    %c0_i32_1 = arith.constant 0 : i32
    %c0_i32_2 = arith.constant 0 : i32
    %c0_i32_3 = arith.constant 0 : i32
    return %arg0, %c0_i32, %c0_i32_0, %c0_i32_1, %c0_i32_2 : i32, i32, i32, i32, i32
  }
  func.func @transform_1(%arg0: i32) -> (i32, i32, i32, i32) {
    %c0_i32 = arith.constant 0 : i32
    %c0_i32_0 = arith.constant 0 : i32
    %c0_i32_1 = arith.constant 0 : i32
    %c0_i32_2 = arith.constant 0 : i32
    %c0_i32_3 = arith.constant 0 : i32
    return %c0_i32, %c0_i32_0, %c0_i32_1, %c0_i32_2 : i32, i32, i32, i32
  }
  func.func @transform_2(%arg0: i32) -> (i32, i32) {
    %c0_i32 = arith.constant 0 : i32
    %c0_i32_0 = arith.constant 0 : i32
    %c0_i32_1 = arith.constant 0 : i32
    return %c0_i32, %c0_i32_0 : i32, i32
  }
  func.func @transform_3(%arg0: i32) -> (i32, i32, i32, i32, i32) {
    %c0_i32 = arith.constant 0 : i32
    %c0_i32_0 = arith.constant 0 : i32
    %c0_i32_1 = arith.constant 0 : i32
    %c0_i32_2 = arith.constant 0 : i32
    %c0_i32_3 = arith.constant 0 : i32
    return %arg0, %c0_i32, %c0_i32_0, %c0_i32_1, %c0_i32_2 : i32, i32, i32, i32, i32
  }
  func.func @transform_4(%arg0: i32) -> (i32, i32, i32) {
    %c0_i32 = arith.constant 0 : i32
    %c0_i32_0 = arith.constant 0 : i32
    %c0_i32_1 = arith.constant 0 : i32
    return %arg0, %c0_i32, %c0_i32_0 : i32, i32, i32
  }
  func.func @transform_5(%arg0: i32) -> (i32, i32, i32) {
    %c0_i32 = arith.constant 0 : i32
    %c0_i32_0 = arith.constant 0 : i32
    %c0_i32_1 = arith.constant 0 : i32
    return %arg0, %c0_i32, %c0_i32_0 : i32, i32, i32
  }
}

</mosaic_0001>

<llo_original>
// kernel: tpu_custom_call.1
$region0: #{tpu_custom_call.1}
  #allocation0 [shape = 'u32[]', space=smem, size = 0x4, offset = 0x4, fixed_abs, tag = 'smem constant byte address 0x4 - core index']
  #allocation1 [shape = 'u32[144,128]{1,0:T(1,128)}', space=vmem, size = 0x12000, scoped, tag = 'internal scratch']
  %s0 = inlined_call_operand.vmem [shape: f32[2,10,10,10,4], index: 0, kind: input, shape index: {}]
  %s1 = inlined_call_operand.vmem [shape: f32[3,3,3,4], index: 1, kind: input, shape index: {}]
  %s2 = inlined_call_operand.vmem [shape: f32[1,4], index: 2, kind: input, shape index: {}]
  %s3 = inlined_call_operand.vmem [shape: f32[2,8,8,8,4], index: 3, kind: output, shape index: {0}]
  %s4 = inlined_call_operand.hbm [shape: f32[2,1,4], index: 4, kind: output, shape index: {1}]
  %s5 = inlined_call_operand.hbm [shape: f32[2,1,4], index: 5, kind: output, shape index: {2}]
  %6 = xla_tuple %s3, %s4, %s5
  %s7 = sld [smem:[#allocation0]]
  $region61: #{tpu_custom_call.1} parent=0
    _
  %s9 = ssub.s32 1, %s7
  %s10 = scalar_select 0, %s9, %s7
  $region1: #{tpu_custom_call.1} parent=0
    #allocation2 [shape = 'u8[1024]{0}', space=vmem, size = 0x400, scoped, tag = 'output window, operand 1']
    #allocation3 [shape = 's32[2]{0}', space=sflag, size = 0x8, scoped, tag = 'scoped memory for tpu_custom_call.1']
    #allocation4 [shape = 'u8[1024]{0}', space=vmem, size = 0x400, scoped, tag = 'output window, operand 2']
    #allocation5 [shape = 's32[2]{0}', space=sflag, size = 0x8, scoped, tag = 'scoped memory for tpu_custom_call.1']
    %11 = vsyncpa [#allocation3], 0
    %s12 = scalar_lea.sflag [#allocation3], 1
    %13 = vsyncpa %s12, 0
    %14 = vsyncpa [#allocation5], 0
    %s15 = scalar_lea.sflag [#allocation5], 1
    %16 = vsyncpa %s15, 0
    loop: start=0, step=1, limit=4
    $region2: #{tpu_custom_call.1} parent=1 // loop_pre_header
      _
    $region3: #{tpu_custom_call.1} parent=1 // loop_header
      %s18 = sphi 0, %s22
      %p19 = scmp.ge.s32.totalorder %s18, 4
      %s28 = sphi 0, %s30
      %s31 = sphi 0, %s28
      %s32 = sphi 0, %s31
      %s48 = sphi 0, %s32
      %s52 = sphi 0, %s52
      %s54 = sphi 0, %s52
      %s55 = sphi 0, %s54
      %s69 = sphi 0, %s55
      %s73 = sphi 0, %s73
      %s75 = sphi 0, %s73
      %s76 = sphi 0, %s75
      %s90 = sphi 0, %s76
      %s96 = sphi 0, %s98
      %s99 = sphi 0, %s96
      %s100 = sphi 0, %s99
      %s116 = sphi 0, %s100
      %s122 = sphi 0, %s124
      %s125 = sphi 0, %s122
      %s126 = sphi 0, %s125
      %s142 = sphi 0, %s126
      %s148 = sphi 0, %s150
      %s151 = sphi 0, %s148
      %s152 = sphi 0, %s151
      %s168 = sphi 0, %s152
    $region4: #{tpu_custom_call.1} parent=1 // loop_header_branch
      %21 = sbr.rel (%p19) target = $region8
    $region5: #{tpu_custom_call.1} parent=1 // loop_body
      %s23 = ssub.s32 %s18, 1
      %s24 = ssub.s32 %s18, 2
      %s25 = sadd.s32 %s18, 1
      %s26 = ssub.s32 %s18, %s25
      %p27 = scmp.eq.s32.totalorder %s26, 0
      %s29 = sadd.s32 %s28, 1
      %s30 = scalar_select %p27, %s28, %s29
      %p33 = pneg %p27
      %p34 = scmp.eq.s32.totalorder %s18, 1
      %p35 = por %p33, %p34
      %p36 = scmp.ne.s32.totalorder %s28, %s31
      %p37 = scmp.eq.s32.totalorder %s18, 0
      %p38 = por %p36, %p37
      %p39 = scmp.ne.s32.totalorder %s28, %s31
      %p40 = scmp.eq.s32.totalorder %s23, 1
      %p41 = por %p39, %p40
      %p42 = scmp.ne.s32.totalorder %s31, %s32
      %p43 = scmp.eq.s32.totalorder %s23, 0
      %p44 = por %p42, %p43
      %p45 = scmp.ne.s32.totalorder %s31, %s32
      %p46 = scmp.eq.s32.totalorder %s24, 1
      %p47 = por %p45, %p46
      %p49 = scmp.ne.s32.totalorder %s32, %s48
      %p50 = scmp.eq.s32.totalorder %s24, 0
      %p51 = por %p49, %p50
      %s53 = sadd.s32 %s52, 1
      %p56 = scmp.eq.s32.totalorder %s18, 1
      %p57 = scmp.ne.s32.totalorder %s52, %s54
      %p58 = scmp.eq.s32.totalorder %s18, 0
      %p59 = por %p57, %p58
      %p60 = scmp.ne.s32.totalorder %s52, %s54
      %p61 = scmp.eq.s32.totalorder %s23, 1
      %p62 = por %p60, %p61
      %p63 = scmp.ne.s32.totalorder %s54, %s55
      %p64 = scmp.eq.s32.totalorder %s23, 0
      %p65 = por %p63, %p64
      %p66 = scmp.ne.s32.totalorder %s54, %s55
      %p67 = scmp.eq.s32.totalorder %s24, 1
      %p68 = por %p66, %p67
      %p70 = scmp.ne.s32.totalorder %s55, %s69
      %p71 = scmp.eq.s32.totalorder %s24, 0
      %p72 = por %p70, %p71
      %s74 = sadd.s32 %s73, 1
      %p77 = scmp.eq.s32.totalorder %s18, 1
      %p78 = scmp.ne.s32.totalorder %s73, %s75
      %p79 = scmp.eq.s32.totalorder %s18, 0
      %p80 = por %p78, %p79
      %p81 = scmp.ne.s32.totalorder %s73, %s75
      %p82 = scmp.eq.s32.totalorder %s23, 1
      %p83 = por %p81, %p82
      %p84 = scmp.ne.s32.totalorder %s75, %s76
      %p85 = scmp.eq.s32.totalorder %s23, 0
      %p86 = por %p84, %p85
      %p87 = scmp.ne.s32.totalorder %s75, %s76
      %p88 = scmp.eq.s32.totalorder %s24, 1
      %p89 = por %p87, %p88
      %p91 = scmp.ne.s32.totalorder %s76, %s90
      %p92 = scmp.eq.s32.totalorder %s24, 0
      %p93 = por %p91, %p92
      %s94 = ssub.s32 %s18, %s25
      %p95 = scmp.eq.s32.totalorder %s94, 0
      %s97 = sadd.s32 %s96, 1
      %s98 = scalar_select %p95, %s96, %s97
      %p101 = pneg %p95
      %p102 = scmp.eq.s32.totalorder %s18, 1
      %p103 = por %p101, %p102
      %p104 = scmp.ne.s32.totalorder %s96, %s99
      %p105 = scmp.eq.s32.totalorder %s18, 0
      %p106 = por %p104, %p105
      %p107 = scmp.ne.s32.totalorder %s96, %s99
      %p108 = scmp.eq.s32.totalorder %s23, 1
      %p109 = por %p107, %p108
      %p110 = scmp.ne.s32.totalorder %s99, %s100
      %p111 = scmp.eq.s32.totalorder %s23, 0
      %p112 = por %p110, %p111
      %p113 = scmp.ne.s32.totalorder %s99, %s100
      %p114 = scmp.eq.s32.totalorder %s24, 1
      %p115 = por %p113, %p114
      %p117 = scmp.ne.s32.totalorder %s100, %s116
      %p118 = scmp.eq.s32.totalorder %s24, 0
      %p119 = por %p117, %p118
      %s120 = ssub.s32 %s18, %s25
      %p121 = scmp.eq.s32.totalorder %s120, 0
      %s123 = sadd.s32 %s122, 1
      %s124 = scalar_select %p121, %s122, %s123
      %p127 = pneg %p121
      %p128 = scmp.eq.s32.totalorder %s18, 1
      %p129 = por %p127, %p128
      %p130 = scmp.ne.s32.totalorder %s122, %s125
      %p131 = scmp.eq.s32.totalorder %s18, 0
      %p132 = por %p130, %p131
      %p133 = scmp.ne.s32.totalorder %s122, %s125
      %p134 = scmp.eq.s32.totalorder %s23, 1
      %p135 = por %p133, %p134
      %p136 = scmp.ne.s32.totalorder %s125, %s126
      %p137 = scmp.eq.s32.totalorder %s23, 0
      %p138 = por %p136, %p137
      %p139 = scmp.ne.s32.totalorder %s125, %s126
      %p140 = scmp.eq.s32.totalorder %s24, 1
      %p141 = por %p139, %p140
      %p143 = scmp.ne.s32.totalorder %s126, %s142
      %p144 = scmp.eq.s32.totalorder %s24, 0
      %p145 = por %p143, %p144
      %s146 = ssub.s32 %s18, %s25
      %p147 = scmp.eq.s32.totalorder %s146, 0
      %s149 = sadd.s32 %s148, 1
      %s150 = scalar_select %p147, %s148, %s149
      %p153 = pneg %p147
      %p154 = scmp.eq.s32.totalorder %s18, 1
      %p155 = por %p153, %p154
      %p156 = scmp.ne.s32.totalorder %s148, %s151
      %p157 = scmp.eq.s32.totalorder %s18, 0
      %p158 = por %p156, %p157
      %p159 = scmp.ne.s32.totalorder %s148, %s151
      %p160 = scmp.eq.s32.totalorder %s23, 1
      %p161 = por %p159, %p160
      %p162 = scmp.ne.s32.totalorder %s151, %s152
      %p163 = scmp.eq.s32.totalorder %s23, 0
      %p164 = por %p162, %p163
      %p165 = scmp.ne.s32.totalorder %s151, %s152
      %p166 = scmp.eq.s32.totalorder %s24, 1
      %p167 = por %p165, %p166
      %p169 = scmp.ne.s32.totalorder %s152, %s168
      %p170 = scmp.eq.s32.totalorder %s24, 0
      %p171 = por %p169, %p170
      %p172 = scmp.le.s32.totalorder 1, %s18
      %p173 = scmp.lt.s32.totalorder %s18, 3
      %p174 = pnand %p172, %p173
      %p175 = pneg %p174
      // Predicated region
      $region9: #{tpu_custom_call.1} parent=5 // pred_check
        _
      $region10: #{tpu_custom_call.1} parent=5 // pred_check_branch
        %177 = sbr.rel (%p174) target = $region12
      $region11: #{tpu_custom_call.1} parent=5 // pred_region
        %s178 = ssub.s32 %s18, 1
        // Predicated region
        $region13: #{tpu_custom_call.1} parent=11 // pred_check
          %p179 = pneg %p65
        $region14: #{tpu_custom_call.1} parent=11 // pred_check_branch
          %181 = sbr.rel (%p179) target = $region16
        $region15: #{tpu_custom_call.1} parent=11 // pred_region
          _
        $region16: #{tpu_custom_call.1} parent=11 // pred_fallthru
          _
        // Predicated region
        $region17: #{tpu_custom_call.1} parent=11 // pred_check
          %p182 = pneg %p86
        $region18: #{tpu_custom_call.1} parent=11 // pred_check_branch
          %184 = sbr.rel (%p182) target = $region20
        $region19: #{tpu_custom_call.1} parent=11 // pred_region
          _
        $region20: #{tpu_custom_call.1} parent=11 // pred_fallthru
          _
      $region12: #{tpu_custom_call.1} parent=5 // pred_fallthru
        _
      %p185 = scmp.lt.s32.totalorder %s18, 2
      // Predicated region
      $region21: #{tpu_custom_call.1} parent=5 // pred_check
        %p186 = pneg %p185
      $region22: #{tpu_custom_call.1} parent=5 // pred_check_branch
        %188 = sbr.rel (%p186) target = $region24
      $region23: #{tpu_custom_call.1} parent=5 // pred_region
        // Predicated region
        $region25: #{tpu_custom_call.1} parent=23 // pred_check
          %p189 = pneg %p38
        $region26: #{tpu_custom_call.1} parent=23 // pred_check_branch
          %191 = sbr.rel (%p189) target = $region28
        $region27: #{tpu_custom_call.1} parent=23 // pred_region
          %p192 = scmp.lt.s32.totalorder %s18, 1
          %s193 = scalar_select %p192, %s18, 1
          %s194 = smul.addr %s193, 200
          %s195 = smul.addr %s194, 8
          %s196 = scalar_lea.vmem %s0, %s195
        $region28: #{tpu_custom_call.1} parent=23 // pred_fallthru
          _
      $region24: #{tpu_custom_call.1} parent=5 // pred_fallthru
        _
      %p197 = scmp.le.s32.totalorder 1, %s18
      %p198 = scmp.lt.s32.totalorder %s18, 3
      %p199 = pnand %p197, %p198
      %p200 = pneg %p199
      // Predicated region
      $region29: #{tpu_custom_call.1} parent=5 // pred_check
        _
      $region30: #{tpu_custom_call.1} parent=5 // pred_check_branch
        %202 = sbr.rel (%p199) target = $region32
      $region31: #{tpu_custom_call.1} parent=5 // pred_region
        %s203 = ssub.s32 %s18, 1
        %p204 = scmp.lt.s32.totalorder %s23, 1
        %s205 = scalar_select %p204, %s23, 1
        %s206 = smul.addr %s205, 200
        %s207 = smul.addr %s206, 8
        %s208 = scalar_lea.vmem %s0, %s207
        %p209 = pneg %p44
        %p210 = pneg %p41
        %p211 = pneg %p65
        %p212 = pneg %p62
        %p213 = pneg %p86
        %p214 = pneg %p83
        %p215 = pneg %p112
        %p216 = pneg %p109
        %p217 = scmp.lt.s32.totalorder %s23, 1
        %s218 = scalar_select %p217, %s23, 1
        %s219 = smul.addr %s218, 64
        %s220 = smul.addr %s219, 8
        %s221 = scalar_lea.vmem %s3, %s220
        %p222 = pneg %p138
        %p223 = pneg %p135
        %s224 = sand.u32 %s125, 1
        %s225 = scalar_lea.sflag [#allocation3], %s224
        %s226 = sand.u32 %s125, 1
        %s227 = scalar_lea.vmem [#allocation2], %s226
        %p228 = pneg %p164
        %p229 = pneg %p161
        %s230 = sand.u32 %s151, 1
        %s231 = scalar_lea.sflag [#allocation5], %s230
        %s232 = sand.u32 %s151, 1
        %s233 = scalar_lea.vmem [#allocation4], %s232
        %p234 = scmp.lt.s32.totalorder %s23, 1
        %s235 = scalar_select %p234, %s23, 1
        %s236 = smul.addr %s235, 200
        %s237 = smul.addr %s236, 8
        %s238 = scalar_lea.vmem %s0, %s237
        %p239 = scmp.lt.s32.totalorder %s23, 1
        %s240 = scalar_select %p239, %s23, 1
        %s241 = smul.addr %s240, 64
        %s242 = smul.addr %s241, 8
        %s243 = scalar_lea.vmem %s3, %s242
        %v244 = vld [vmem:[%s238] sm:$0xff]
        %v245 = vld [vmem:[%s238 + $0x8] sm:$0x3]
        %v246 = vld [vmem:[%s238 + $0x10] sm:$0xff]
        %v247 = vld [vmem:[%s238 + $0x18] sm:$0x3]
        %v248 = vld [vmem:[%s238 + $0x20] sm:$0xff]
        %v249 = vld [vmem:[%s238 + $0x28] sm:$0x3]
        %v250 = vld [vmem:[%s238 + $0x30] sm:$0xff]
        %v251 = vld [vmem:[%s238 + $0x38] sm:$0x3]
        %v252 = vld [vmem:[%s238 + $0x40] sm:$0xff]
        %v253 = vld [vmem:[%s238 + $0x48] sm:$0x3]
        %v254 = vld [vmem:[%s238 + $0x50] sm:$0xff]
        %v255 = vld [vmem:[%s238 + $0x58] sm:$0x3]
        %v256 = vld [vmem:[%s238 + $0x60] sm:$0xff]
        %v257 = vld [vmem:[%s238 + $0x68] sm:$0x3]
        %v258 = vld [vmem:[%s238 + $0x70] sm:$0xff]
        %v259 = vld [vmem:[%s238 + $0x78] sm:$0x3]
        %v260 = vld [vmem:[%s238 + $0x80] sm:$0xff]
        %v261 = vld [vmem:[%s238 + $0x88] sm:$0x3]
        %v262 = vld [vmem:[%s238 + $0x90] sm:$0xff]
        %v263 = vld [vmem:[%s238 + $0x98] sm:$0x3]
        %v264 = vld [vmem:[%s238 + $0xa0] sm:$0xff]
        %v265 = vld [vmem:[%s238 + $0xa8] sm:$0x3]
        %v266 = vld [vmem:[%s238 + $0xb0] sm:$0xff]
        %v267 = vld [vmem:[%s238 + $0xb8] sm:$0x3]
        %v268 = vld [vmem:[%s238 + $0xc0] sm:$0xff]
        %v269 = vld [vmem:[%s238 + $0xc8] sm:$0x3]
        %v270 = vld [vmem:[%s238 + $0xd0] sm:$0xff]
        %v271 = vld [vmem:[%s238 + $0xd8] sm:$0x3]
        %v272 = vld [vmem:[%s238 + $0xe0] sm:$0xff]
        %v273 = vld [vmem:[%s238 + $0xe8] sm:$0x3]
        %v274 = vld [vmem:[%s238 + $0xf0] sm:$0xff]
        %v275 = vld [vmem:[%s238 + $0xf8] sm:$0x3]
        %v276 = vld [vmem:[%s238 + $0x100] sm:$0xff]
        %v277 = vld [vmem:[%s238 + $0x108] sm:$0x3]
        %v278 = vld [vmem:[%s238 + $0x110] sm:$0xff]
        %v279 = vld [vmem:[%s238 + $0x118] sm:$0x3]
        %v280 = vld [vmem:[%s238 + $0x120] sm:$0xff]
        %v281 = vld [vmem:[%s238 + $0x128] sm:$0x3]
        %v282 = vld [vmem:[%s238 + $0x130] sm:$0xff]
        %v283 = vld [vmem:[%s238 + $0x138] sm:$0x3]
        %v284 = vld [vmem:[%s238 + $0x140] sm:$0xff]
        %v285 = vld [vmem:[%s238 + $0x148] sm:$0x3]
        %v286 = vld [vmem:[%s238 + $0x150] sm:$0xff]
        %v287 = vld [vmem:[%s238 + $0x158] sm:$0x3]
        %v288 = vld [vmem:[%s238 + $0x160] sm:$0xff]
        %v289 = vld [vmem:[%s238 + $0x168] sm:$0x3]
        %v290 = vld [vmem:[%s238 + $0x170] sm:$0xff]
        %v291 = vld [vmem:[%s238 + $0x178] sm:$0x3]
        %v292 = vld [vmem:[%s238 + $0x180] sm:$0xff]
        %v293 = vld [vmem:[%s238 + $0x188] sm:$0x3]
        %v294 = vld [vmem:[%s238 + $0x190] sm:$0xff]
        %v295 = vld [vmem:[%s238 + $0x198] sm:$0x3]
        %v296 = vld [vmem:[%s238 + $0x1a0] sm:$0xff]
        %v297 = vld [vmem:[%s238 + $0x1a8] sm:$0x3]
        %v298 = vld [vmem:[%s238 + $0x1b0] sm:$0xff]
        %v299 = vld [vmem:[%s238 + $0x1b8] sm:$0x3]
        %v300 = vld [vmem:[%s238 + $0x1c0] sm:$0xff]
        %v301 = vld [vmem:[%s238 + $0x1c8] sm:$0x3]
        %v302 = vld [vmem:[%s238 + $0x1d0] sm:$0xff]
        %v303 = vld [vmem:[%s238 + $0x1d8] sm:$0x3]
        %v304 = vld [vmem:[%s238 + $0x1e0] sm:$0xff]
        %v305 = vld [vmem:[%s238 + $0x1e8] sm:$0x3]
        %v306 = vld [vmem:[%s238 + $0x1f0] sm:$0xff]
        %v307 = vld [vmem:[%s238 + $0x1f8] sm:$0x3]
        %v308 = vld [vmem:[%s238 + $0x200] sm:$0xff]
        %v309 = vld [vmem:[%s238 + $0x208] sm:$0x3]
        %v310 = vld [vmem:[%s238 + $0x210] sm:$0xff]
        %v311 = vld [vmem:[%s238 + $0x218] sm:$0x3]
        %v312 = vld [vmem:[%s238 + $0x220] sm:$0xff]
        %v313 = vld [vmem:[%s238 + $0x228] sm:$0x3]
        %v314 = vld [vmem:[%s238 + $0x230] sm:$0xff]
        %v315 = vld [vmem:[%s238 + $0x238] sm:$0x3]
        %v316 = vld [vmem:[%s238 + $0x240] sm:$0xff]
        %v317 = vld [vmem:[%s238 + $0x248] sm:$0x3]
        %v318 = vld [vmem:[%s238 + $0x250] sm:$0xff]
        %v319 = vld [vmem:[%s238 + $0x258] sm:$0x3]
        %v320 = vld [vmem:[%s238 + $0x260] sm:$0xff]
        %v321 = vld [vmem:[%s238 + $0x268] sm:$0x3]
        %v322 = vld [vmem:[%s238 + $0x270] sm:$0xff]
        %v323 = vld [vmem:[%s238 + $0x278] sm:$0x3]
        %v324 = vld [vmem:[%s238 + $0x280] sm:$0xff]
        %v325 = vld [vmem:[%s238 + $0x288] sm:$0x3]
        %v326 = vld [vmem:[%s238 + $0x290] sm:$0xff]
        %v327 = vld [vmem:[%s238 + $0x298] sm:$0x3]
        %v328 = vld [vmem:[%s238 + $0x2a0] sm:$0xff]
        %v329 = vld [vmem:[%s238 + $0x2a8] sm:$0x3]
        %v330 = vld [vmem:[%s238 + $0x2b0] sm:$0xff]
        %v331 = vld [vmem:[%s238 + $0x2b8] sm:$0x3]
        %v332 = vld [vmem:[%s238 + $0x2c0] sm:$0xff]
        %v333 = vld [vmem:[%s238 + $0x2c8] sm:$0x3]
        %v334 = vld [vmem:[%s238 + $0x2d0] sm:$0xff]
        %v335 = vld [vmem:[%s238 + $0x2d8] sm:$0x3]
        %v336 = vld [vmem:[%s238 + $0x2e0] sm:$0xff]
        %v337 = vld [vmem:[%s238 + $0x2e8] sm:$0x3]
        %v338 = vld [vmem:[%s238 + $0x2f0] sm:$0xff]
        %v339 = vld [vmem:[%s238 + $0x2f8] sm:$0x3]
        %v340 = vld [vmem:[%s238 + $0x300] sm:$0xff]
        %v341 = vld [vmem:[%s238 + $0x308] sm:$0x3]
        %v342 = vld [vmem:[%s238 + $0x310] sm:$0xff]
        %v343 = vld [vmem:[%s238 + $0x318] sm:$0x3]
        %v344 = vld [vmem:[%s238 + $0x320] sm:$0xff]
        %v345 = vld [vmem:[%s238 + $0x328] sm:$0x3]
        %v346 = vld [vmem:[%s238 + $0x330] sm:$0xff]
        %v347 = vld [vmem:[%s238 + $0x338] sm:$0x3]
        %v348 = vld [vmem:[%s238 + $0x340] sm:$0xff]
        %v349 = vld [vmem:[%s238 + $0x348] sm:$0x3]
        %v350 = vld [vmem:[%s238 + $0x350] sm:$0xff]
        %v351 = vld [vmem:[%s238 + $0x358] sm:$0x3]
        %v352 = vld [vmem:[%s238 + $0x360] sm:$0xff]
        %v353 = vld [vmem:[%s238 + $0x368] sm:$0x3]
        %v354 = vld [vmem:[%s238 + $0x370] sm:$0xff]
        %v355 = vld [vmem:[%s238 + $0x378] sm:$0x3]
        %v356 = vld [vmem:[%s238 + $0x380] sm:$0xff]
        %v357 = vld [vmem:[%s238 + $0x388] sm:$0x3]
        %v358 = vld [vmem:[%s238 + $0x390] sm:$0xff]
        %v359 = vld [vmem:[%s238 + $0x398] sm:$0x3]
        %v360 = vld [vmem:[%s238 + $0x3a0] sm:$0xff]
        %v361 = vld [vmem:[%s238 + $0x3a8] sm:$0x3]
        %v362 = vld [vmem:[%s238 + $0x3b0] sm:$0xff]
        %v363 = vld [vmem:[%s238 + $0x3b8] sm:$0x3]
        %v364 = vld [vmem:[%s238 + $0x3c0] sm:$0xff]
        %v365 = vld [vmem:[%s238 + $0x3c8] sm:$0x3]
        %v366 = vld [vmem:[%s238 + $0x3d0] sm:$0xff]
        %v367 = vld [vmem:[%s238 + $0x3d8] sm:$0x3]
        %v368 = vld [vmem:[%s238 + $0x3e0] sm:$0xff]
        %v369 = vld [vmem:[%s238 + $0x3e8] sm:$0x3]
        %v370 = vld [vmem:[%s238 + $0x3f0] sm:$0xff]
        %v371 = vld [vmem:[%s238 + $0x3f8] sm:$0x3]
        %v372 = vld [vmem:[%s238 + $0x400] sm:$0xff]
        %v373 = vld [vmem:[%s238 + $0x408] sm:$0x3]
        %v374 = vld [vmem:[%s238 + $0x410] sm:$0xff]
        %v375 = vld [vmem:[%s238 + $0x418] sm:$0x3]
        %v376 = vld [vmem:[%s238 + $0x420] sm:$0xff]
        %v377 = vld [vmem:[%s238 + $0x428] sm:$0x3]
        %v378 = vld [vmem:[%s238 + $0x430] sm:$0xff]
        %v379 = vld [vmem:[%s238 + $0x438] sm:$0x3]
        %v380 = vld [vmem:[%s238 + $0x440] sm:$0xff]
        %v381 = vld [vmem:[%s238 + $0x448] sm:$0x3]
        %v382 = vld [vmem:[%s238 + $0x450] sm:$0xff]
        %v383 = vld [vmem:[%s238 + $0x458] sm:$0x3]
        %v384 = vld [vmem:[%s238 + $0x460] sm:$0xff]
        %v385 = vld [vmem:[%s238 + $0x468] sm:$0x3]
        %v386 = vld [vmem:[%s238 + $0x470] sm:$0xff]
        %v387 = vld [vmem:[%s238 + $0x478] sm:$0x3]
        %v388 = vld [vmem:[%s238 + $0x480] sm:$0xff]
        %v389 = vld [vmem:[%s238 + $0x488] sm:$0x3]
        %v390 = vld [vmem:[%s238 + $0x490] sm:$0xff]
        %v391 = vld [vmem:[%s238 + $0x498] sm:$0x3]
        %v392 = vld [vmem:[%s238 + $0x4a0] sm:$0xff]
        %v393 = vld [vmem:[%s238 + $0x4a8] sm:$0x3]
        %v394 = vld [vmem:[%s238 + $0x4b0] sm:$0xff]
        %v395 = vld [vmem:[%s238 + $0x4b8] sm:$0x3]
        %v396 = vld [vmem:[%s238 + $0x4c0] sm:$0xff]
        %v397 = vld [vmem:[%s238 + $0x4c8] sm:$0x3]
        %v398 = vld [vmem:[%s238 + $0x4d0] sm:$0xff]
        %v399 = vld [vmem:[%s238 + $0x4d8] sm:$0x3]
        %v400 = vld [vmem:[%s238 + $0x4e0] sm:$0xff]
        %v401 = vld [vmem:[%s238 + $0x4e8] sm:$0x3]
        %v402 = vld [vmem:[%s238 + $0x4f0] sm:$0xff]
        %v403 = vld [vmem:[%s238 + $0x4f8] sm:$0x3]
        %v404 = vld [vmem:[%s238 + $0x500] sm:$0xff]
        %v405 = vld [vmem:[%s238 + $0x508] sm:$0x3]
        %v406 = vld [vmem:[%s238 + $0x510] sm:$0xff]
        %v407 = vld [vmem:[%s238 + $0x518] sm:$0x3]
        %v408 = vld [vmem:[%s238 + $0x520] sm:$0xff]
        %v409 = vld [vmem:[%s238 + $0x528] sm:$0x3]
        %v410 = vld [vmem:[%s238 + $0x530] sm:$0xff]
        %v411 = vld [vmem:[%s238 + $0x538] sm:$0x3]
        %v412 = vld [vmem:[%s238 + $0x540] sm:$0xff]
        %v413 = vld [vmem:[%s238 + $0x548] sm:$0x3]
        %v414 = vld [vmem:[%s238 + $0x550] sm:$0xff]
        %v415 = vld [vmem:[%s238 + $0x558] sm:$0x3]
        %v416 = vld [vmem:[%s238 + $0x560] sm:$0xff]
        %v417 = vld [vmem:[%s238 + $0x568] sm:$0x3]
        %v418 = vld [vmem:[%s238 + $0x570] sm:$0xff]
        %v419 = vld [vmem:[%s238 + $0x578] sm:$0x3]
        %v420 = vld [vmem:[%s238 + $0x580] sm:$0xff]
        %v421 = vld [vmem:[%s238 + $0x588] sm:$0x3]
        %v422 = vld [vmem:[%s238 + $0x590] sm:$0xff]
        %v423 = vld [vmem:[%s238 + $0x598] sm:$0x3]
        %v424 = vld [vmem:[%s238 + $0x5a0] sm:$0xff]
        %v425 = vld [vmem:[%s238 + $0x5a8] sm:$0x3]
        %v426 = vld [vmem:[%s238 + $0x5b0] sm:$0xff]
        %v427 = vld [vmem:[%s238 + $0x5b8] sm:$0x3]
        %v428 = vld [vmem:[%s238 + $0x5c0] sm:$0xff]
        %v429 = vld [vmem:[%s238 + $0x5c8] sm:$0x3]
        %v430 = vld [vmem:[%s238 + $0x5d0] sm:$0xff]
        %v431 = vld [vmem:[%s238 + $0x5d8] sm:$0x3]
        %v432 = vld [vmem:[%s238 + $0x5e0] sm:$0xff]
        %v433 = vld [vmem:[%s238 + $0x5e8] sm:$0x3]
        %v434 = vld [vmem:[%s238 + $0x5f0] sm:$0xff]
        %v435 = vld [vmem:[%s238 + $0x5f8] sm:$0x3]
        %v436 = vld [vmem:[%s238 + $0x600] sm:$0xff]
        %v437 = vld [vmem:[%s238 + $0x608] sm:$0x3]
        %v438 = vld [vmem:[%s238 + $0x610] sm:$0xff]
        %v439 = vld [vmem:[%s238 + $0x618] sm:$0x3]
        %v440 = vld [vmem:[%s238 + $0x620] sm:$0xff]
        %v441 = vld [vmem:[%s238 + $0x628] sm:$0x3]
        %v442 = vld [vmem:[%s238 + $0x630] sm:$0xff]
        %v443 = vld [vmem:[%s238 + $0x638] sm:$0x3]
        %v444 = vld [vmem:[%s1] sm:$0x7]
        %v445 = vld [vmem:[%s1 + $0x4] sm:$0x7]
        %v446 = vld [vmem:[%s1 + $0x8] sm:$0x7]
        %v447 = vld [vmem:[%s1 + $0xc] sm:$0x7]
        %v448 = vld [vmem:[%s1 + $0x10] sm:$0x7]
        %v449 = vld [vmem:[%s1 + $0x14] sm:$0x7]
        %v450 = vld [vmem:[%s1 + $0x18] sm:$0x7]
        %v451 = vld [vmem:[%s1 + $0x1c] sm:$0x7]
        %v452 = vld [vmem:[%s1 + $0x20] sm:$0x7]
        %v453 = vlaneseq
        %v454 = vshrl.u32 %v453, 7
        %v455 = vsub.s32 0, %v454
        %v456 = vrot.slane %v444, %v455
        %v457 = vmul.f32 %v244, %v456
        %v458 = vmul.f32 %v246, %v456
        %v459 = vmul.f32 %v248, %v456
        %v460 = vmul.f32 %v250, %v456
        %v461 = vmul.f32 %v252, %v456
        %v462 = vmul.f32 %v254, %v456
        %v463 = vmul.f32 %v256, %v456
        %v464 = vmul.f32 %v258, %v456
        %v465 = vmul.f32 %v264, %v456
        %v466 = vmul.f32 %v266, %v456
        %v467 = vmul.f32 %v268, %v456
        %v468 = vmul.f32 %v270, %v456
        %v469 = vmul.f32 %v272, %v456
        %v470 = vmul.f32 %v274, %v456
        %v471 = vmul.f32 %v276, %v456
        %v472 = vmul.f32 %v278, %v456
        %v473 = vmul.f32 %v284, %v456
        %v474 = vmul.f32 %v286, %v456
        %v475 = vmul.f32 %v288, %v456
        %v476 = vmul.f32 %v290, %v456
        %v477 = vmul.f32 %v292, %v456
        %v478 = vmul.f32 %v294, %v456
        %v479 = vmul.f32 %v296, %v456
        %v480 = vmul.f32 %v298, %v456
        %v481 = vmul.f32 %v304, %v456
        %v482 = vmul.f32 %v306, %v456
        %v483 = vmul.f32 %v308, %v456
        %v484 = vmul.f32 %v310, %v456
        %v485 = vmul.f32 %v312, %v456
        %v486 = vmul.f32 %v314, %v456
        %v487 = vmul.f32 %v316, %v456
        %v488 = vmul.f32 %v318, %v456
        %v489 = vmul.f32 %v324, %v456
        %v490 = vmul.f32 %v326, %v456
        %v491 = vmul.f32 %v328, %v456
        %v492 = vmul.f32 %v330, %v456
        %v493 = vmul.f32 %v332, %v456
        %v494 = vmul.f32 %v334, %v456
        %v495 = vmul.f32 %v336, %v456
        %v496 = vmul.f32 %v338, %v456
        %v497 = vmul.f32 %v344, %v456
        %v498 = vmul.f32 %v346, %v456
        %v499 = vmul.f32 %v348, %v456
        %v500 = vmul.f32 %v350, %v456
        %v501 = vmul.f32 %v352, %v456
        %v502 = vmul.f32 %v354, %v456
        %v503 = vmul.f32 %v356, %v456
        %v504 = vmul.f32 %v358, %v456
        %v505 = vmul.f32 %v364, %v456
        %v506 = vmul.f32 %v366, %v456
        %v507 = vmul.f32 %v368, %v456
        %v508 = vmul.f32 %v370, %v456
        %v509 = vmul.f32 %v372, %v456
        %v510 = vmul.f32 %v374, %v456
        %v511 = vmul.f32 %v376, %v456
        %v512 = vmul.f32 %v378, %v456
        %v513 = vmul.f32 %v384, %v456
        %v514 = vmul.f32 %v386, %v456
        %v515 = vmul.f32 %v388, %v456
        %v516 = vmul.f32 %v390, %v456
        %v517 = vmul.f32 %v392, %v456
        %v518 = vmul.f32 %v394, %v456
        %v519 = vmul.f32 %v396, %v456
        %v520 = vmul.f32 %v398, %v456
        %v521 = vadd.f32 %v457, 0.0
        %v522 = vadd.f32 %v458, 0.0
        %v523 = vadd.f32 %v459, 0.0
        %v524 = vadd.f32 %v460, 0.0
        %v525 = vadd.f32 %v461, 0.0
        %v526 = vadd.f32 %v462, 0.0
        %v527 = vadd.f32 %v463, 0.0
        %v528 = vadd.f32 %v464, 0.0
        %v529 = vadd.f32 %v465, 0.0
        %v530 = vadd.f32 %v466, 0.0
        %v531 = vadd.f32 %v467, 0.0
        %v532 = vadd.f32 %v468, 0.0
        %v533 = vadd.f32 %v469, 0.0
        %v534 = vadd.f32 %v470, 0.0
        %v535 = vadd.f32 %v471, 0.0
        %v536 = vadd.f32 %v472, 0.0
        %v537 = vadd.f32 %v473, 0.0
        %v538 = vadd.f32 %v474, 0.0
        %v539 = vadd.f32 %v475, 0.0
        %v540 = vadd.f32 %v476, 0.0
        %v541 = vadd.f32 %v477, 0.0
        %v542 = vadd.f32 %v478, 0.0
        %v543 = vadd.f32 %v479, 0.0
        %v544 = vadd.f32 %v480, 0.0
        %v545 = vadd.f32 %v481, 0.0
        %v546 = vadd.f32 %v482, 0.0
        %v547 = vadd.f32 %v483, 0.0
        %v548 = vadd.f32 %v484, 0.0
        %v549 = vadd.f32 %v485, 0.0
        %v550 = vadd.f32 %v486, 0.0
        %v551 = vadd.f32 %v487, 0.0
        %v552 = vadd.f32 %v488, 0.0
        %v553 = vadd.f32 %v489, 0.0
        %v554 = vadd.f32 %v490, 0.0
        %v555 = vadd.f32 %v491, 0.0
        %v556 = vadd.f32 %v492, 0.0
        %v557 = vadd.f32 %v493, 0.0
        %v558 = vadd.f32 %v494, 0.0
        %v559 = vadd.f32 %v495, 0.0
        %v560 = vadd.f32 %v496, 0.0
        %v561 = vadd.f32 %v497, 0.0
        %v562 = vadd.f32 %v498, 0.0
        %v563 = vadd.f32 %v499, 0.0
        %v564 = vadd.f32 %v500, 0.0
        %v565 = vadd.f32 %v501, 0.0
        %v566 = vadd.f32 %v502, 0.0
        %v567 = vadd.f32 %v503, 0.0
        %v568 = vadd.f32 %v504, 0.0
        %v569 = vadd.f32 %v505, 0.0
        %v570 = vadd.f32 %v506, 0.0
        %v571 = vadd.f32 %v507, 0.0
        %v572 = vadd.f32 %v508, 0.0
        %v573 = vadd.f32 %v509, 0.0
        %v574 = vadd.f32 %v510, 0.0
        %v575 = vadd.f32 %v511, 0.0
        %v576 = vadd.f32 %v512, 0.0
        %v577 = vadd.f32 %v513, 0.0
        %v578 = vadd.f32 %v514, 0.0
        %v579 = vadd.f32 %v515, 0.0
        %v580 = vadd.f32 %v516, 0.0
        %v581 = vadd.f32 %v517, 0.0
        %v582 = vadd.f32 %v518, 0.0
        %v583 = vadd.f32 %v519, 0.0
        %v584 = vadd.f32 %v520, 0.0
        %v585 = vlaneseq
        %v586 = vshrl.u32 %v585, 7
        %v587 = vsub.s32 1, %v586
        %v588 = vrot.slane %v444, %v587
        %v589 = vmul.f32 %v244, %v588
        %v590 = vmul.f32 %v245, %v588
        %v591 = vmul.f32 %v246, %v588
        %v592 = vmul.f32 %v247, %v588
        %v593 = vmul.f32 %v248, %v588
        %v594 = vmul.f32 %v249, %v588
        %v595 = vmul.f32 %v250, %v588
        %v596 = vmul.f32 %v251, %v588
        %v597 = vmul.f32 %v252, %v588
        %v598 = vmul.f32 %v253, %v588
        %v599 = vmul.f32 %v254, %v588
        %v600 = vmul.f32 %v255, %v588
        %v601 = vmul.f32 %v256, %v588
        %v602 = vmul.f32 %v257, %v588
        %v603 = vmul.f32 %v258, %v588
        %v604 = vmul.f32 %v259, %v588
        %v605 = vmul.f32 %v264, %v588
        %v606 = vmul.f32 %v265, %v588
        %v607 = vmul.f32 %v266, %v588
        %v608 = vmul.f32 %v267, %v588
        %v609 = vmul.f32 %v268, %v588
        %v610 = vmul.f32 %v269, %v588
        %v611 = vmul.f32 %v270, %v588
        %v612 = vmul.f32 %v271, %v588
        %v613 = vmul.f32 %v272, %v588
        %v614 = vmul.f32 %v273, %v588
        %v615 = vmul.f32 %v274, %v588
        %v616 = vmul.f32 %v275, %v588
        %v617 = vmul.f32 %v276, %v588
        %v618 = vmul.f32 %v277, %v588
        %v619 = vmul.f32 %v278, %v588
        %v620 = vmul.f32 %v279, %v588
        %v621 = vmul.f32 %v284, %v588
        %v622 = vmul.f32 %v285, %v588
        %v623 = vmul.f32 %v286, %v588
        %v624 = vmul.f32 %v287, %v588
        %v625 = vmul.f32 %v288, %v588
        %v626 = vmul.f32 %v289, %v588
        %v627 = vmul.f32 %v290, %v588
        %v628 = vmul.f32 %v291, %v588
        %v629 = vmul.f32 %v292, %v588
        %v630 = vmul.f32 %v293, %v588
        %v631 = vmul.f32 %v294, %v588
        %v632 = vmul.f32 %v295, %v588
        %v633 = vmul.f32 %v296, %v588
        %v634 = vmul.f32 %v297, %v588
        %v635 = vmul.f32 %v298, %v588
        %v636 = vmul.f32 %v299, %v588
        %v637 = vmul.f32 %v304, %v588
        %v638 = vmul.f32 %v305, %v588
        %v639 = vmul.f32 %v306, %v588
        %v640 = vmul.f32 %v307, %v588
        %v641 = vmul.f32 %v308, %v588
        %v642 = vmul.f32 %v309, %v588
        %v643 = vmul.f32 %v310, %v588
        %v644 = vmul.f32 %v311, %v588
        %v645 = vmul.f32 %v312, %v588
        %v646 = vmul.f32 %v313, %v588
        %v647 = vmul.f32 %v314, %v588
        %v648 = vmul.f32 %v315, %v588
        %v649 = vmul.f32 %v316, %v588
        %v650 = vmul.f32 %v317, %v588
        %v651 = vmul.f32 %v318, %v588
        %v652 = vmul.f32 %v319, %v588
        %v653 = vmul.f32 %v324, %v588
        %v654 = vmul.f32 %v325, %v588
        %v655 = vmul.f32 %v326, %v588
        %v656 = vmul.f32 %v327, %v588
        %v657 = vmul.f32 %v328, %v588
        %v658 = vmul.f32 %v329, %v588
        %v659 = vmul.f32 %v330, %v588
        %v660 = vmul.f32 %v331, %v588
        %v661 = vmul.f32 %v332, %v588
        %v662 = vmul.f32 %v333, %v588
        %v663 = vmul.f32 %v334, %v588
        %v664 = vmul.f32 %v335, %v588
        %v665 = vmul.f32 %v336, %v588
        %v666 = vmul.f32 %v337, %v588
        %v667 = vmul.f32 %v338, %v588
        %v668 = vmul.f32 %v339, %v588
        %v669 = vmul.f32 %v344, %v588
        %v670 = vmul.f32 %v345, %v588
        %v671 = vmul.f32 %v346, %v588
        %v672 = vmul.f32 %v347, %v588
        %v673 = vmul.f32 %v348, %v588
        %v674 = vmul.f32 %v349, %v588
        %v675 = vmul.f32 %v350, %v588
        %v676 = vmul.f32 %v351, %v588
        %v677 = vmul.f32 %v352, %v588
        %v678 = vmul.f32 %v353, %v588
        %v679 = vmul.f32 %v354, %v588
        %v680 = vmul.f32 %v355, %v588
        %v681 = vmul.f32 %v356, %v588
        %v682 = vmul.f32 %v357, %v588
        %v683 = vmul.f32 %v358, %v588
        %v684 = vmul.f32 %v359, %v588
        %v685 = vmul.f32 %v364, %v588
        %v686 = vmul.f32 %v365, %v588
        %v687 = vmul.f32 %v366, %v588
        %v688 = vmul.f32 %v367, %v588
        %v689 = vmul.f32 %v368, %v588
        %v690 = vmul.f32 %v369, %v588
        %v691 = vmul.f32 %v370, %v588
        %v692 = vmul.f32 %v371, %v588
        %v693 = vmul.f32 %v372, %v588
        %v694 = vmul.f32 %v373, %v588
        %v695 = vmul.f32 %v374, %v588
        %v696 = vmul.f32 %v375, %v588
        %v697 = vmul.f32 %v376, %v588
        %v698 = vmul.f32 %v377, %v588
        %v699 = vmul.f32 %v378, %v588
        %v700 = vmul.f32 %v379, %v588
        %v701 = vmul.f32 %v384, %v588
        %v702 = vmul.f32 %v385, %v588
        %v703 = vmul.f32 %v386, %v588
        %v704 = vmul.f32 %v387, %v588
        %v705 = vmul.f32 %v388, %v588
        %v706 = vmul.f32 %v389, %v588
        %v707 = vmul.f32 %v390, %v588
        %v708 = vmul.f32 %v391, %v588
        %v709 = vmul.f32 %v392, %v588
        %v710 = vmul.f32 %v393, %v588
        %v711 = vmul.f32 %v394, %v588
        %v712 = vmul.f32 %v395, %v588
        %v713 = vmul.f32 %v396, %v588
        %v714 = vmul.f32 %v397, %v588
        %v715 = vmul.f32 %v398, %v588
        %v716 = vmul.f32 %v399, %v588
        %vm845 = vcmask 1046528
        %v846 = vrot.slane %v589, 1
        %v847 = vrot.slane %v590, 1
        %v848 = vsel %vm845, %v846, %v847
        %v849 = vrot.slane %v591, 1
        %v850 = vrot.slane %v592, 1
        %v851 = vsel %vm845, %v849, %v850
        %v852 = vrot.slane %v593, 1
        %v853 = vrot.slane %v594, 1
        %v854 = vsel %vm845, %v852, %v853
        %v855 = vrot.slane %v595, 1
        %v856 = vrot.slane %v596, 1
        %v857 = vsel %vm845, %v855, %v856
        %v858 = vrot.slane %v597, 1
        %v859 = vrot.slane %v598, 1
        %v860 = vsel %vm845, %v858, %v859
        %v861 = vrot.slane %v599, 1
        %v862 = vrot.slane %v600, 1
        %v863 = vsel %vm845, %v861, %v862
        %v864 = vrot.slane %v601, 1
        %v865 = vrot.slane %v602, 1
        %v866 = vsel %vm845, %v864, %v865
        %v867 = vrot.slane %v603, 1
        %v868 = vrot.slane %v604, 1
        %v869 = vsel %vm845, %v867, %v868
        %v870 = vrot.slane %v605, 1
        %v871 = vrot.slane %v606, 1
        %v872 = vsel %vm845, %v870, %v871
        %v873 = vrot.slane %v607, 1
        %v874 = vrot.slane %v608, 1
        %v875 = vsel %vm845, %v873, %v874
        %v876 = vrot.slane %v609, 1
        %v877 = vrot.slane %v610, 1
        %v878 = vsel %vm845, %v876, %v877
        %v879 = vrot.slane %v611, 1
        %v880 = vrot.slane %v612, 1
        %v881 = vsel %vm845, %v879, %v880
        %v882 = vrot.slane %v613, 1
        %v883 = vrot.slane %v614, 1
        %v884 = vsel %vm845, %v882, %v883
        %v885 = vrot.slane %v615, 1
        %v886 = vrot.slane %v616, 1
        %v887 = vsel %vm845, %v885, %v886
        %v888 = vrot.slane %v617, 1
        %v889 = vrot.slane %v618, 1
        %v890 = vsel %vm845, %v888, %v889
        %v891 = vrot.slane %v619, 1
        %v892 = vrot.slane %v620, 1
        %v893 = vsel %vm845, %v891, %v892
        %v894 = vrot.slane %v621, 1
        %v895 = vrot.slane %v622, 1
        %v896 = vsel %vm845, %v894, %v895
        %v897 = vrot.slane %v623, 1
        %v898 = vrot.slane %v624, 1
        %v899 = vsel %vm845, %v897, %v898
        %v900 = vrot.slane %v625, 1
        %v901 = vrot.slane %v626, 1
        %v902 = vsel %vm845, %v900, %v901
        %v903 = vrot.slane %v627, 1
        %v904 = vrot.slane %v628, 1
        %v905 = vsel %vm845, %v903, %v904
        %v906 = vrot.slane %v629, 1
        %v907 = vrot.slane %v630, 1
        %v908 = vsel %vm845, %v906, %v907
        %v909 = vrot.slane %v631, 1
        %v910 = vrot.slane %v632, 1
        %v911 = vsel %vm845, %v909, %v910
        %v912 = vrot.slane %v633, 1
        %v913 = vrot.slane %v634, 1
        %v914 = vsel %vm845, %v912, %v913
        %v915 = vrot.slane %v635, 1
        %v916 = vrot.slane %v636, 1
        %v917 = vsel %vm845, %v915, %v916
        %v918 = vrot.slane %v637, 1
        %v919 = vrot.slane %v638, 1
        %v920 = vsel %vm845, %v918, %v919
        %v921 = vrot.slane %v639, 1
        %v922 = vrot.slane %v640, 1
        %v923 = vsel %vm845, %v921, %v922
        %v924 = vrot.slane %v641, 1
        %v925 = vrot.slane %v642, 1
        %v926 = vsel %vm845, %v924, %v925
        %v927 = vrot.slane %v643, 1
        %v928 = vrot.slane %v644, 1
        %v929 = vsel %vm845, %v927, %v928
        %v930 = vrot.slane %v645, 1
        %v931 = vrot.slane %v646, 1
        %v932 = vsel %vm845, %v930, %v931
        %v933 = vrot.slane %v647, 1
        %v934 = vrot.slane %v648, 1
        %v935 = vsel %vm845, %v933, %v934
        %v936 = vrot.slane %v649, 1
        %v937 = vrot.slane %v650, 1
        %v938 = vsel %vm845, %v936, %v937
        %v939 = vrot.slane %v651, 1
        %v940 = vrot.slane %v652, 1
        %v941 = vsel %vm845, %v939, %v940
        %v942 = vrot.slane %v653, 1
        %v943 = vrot.slane %v654, 1
        %v944 = vsel %vm845, %v942, %v943
        %v945 = vrot.slane %v655, 1
        %v946 = vrot.slane %v656, 1
        %v947 = vsel %vm845, %v945, %v946
        %v948 = vrot.slane %v657, 1
        %v949 = vrot.slane %v658, 1
        %v950 = vsel %vm845, %v948, %v949
        %v951 = vrot.slane %v659, 1
        %v952 = vrot.slane %v660, 1
        %v953 = vsel %vm845, %v951, %v952
        %v954 = vrot.slane %v661, 1
        %v955 = vrot.slane %v662, 1
        %v956 = vsel %vm845, %v954, %v955
        %v957 = vrot.slane %v663, 1
        %v958 = vrot.slane %v664, 1
        %v959 = vsel %vm845, %v957, %v958
        %v960 = vrot.slane %v665, 1
        %v961 = vrot.slane %v666, 1
        %v962 = vsel %vm845, %v960, %v961
        %v963 = vrot.slane %v667, 1
        %v964 = vrot.slane %v668, 1
        %v965 = vsel %vm845, %v963, %v964
        %v966 = vrot.slane %v669, 1
        %v967 = vrot.slane %v670, 1
        %v968 = vsel %vm845, %v966, %v967
        %v969 = vrot.slane %v671, 1
        %v970 = vrot.slane %v672, 1
        %v971 = vsel %vm845, %v969, %v970
        %v972 = vrot.slane %v673, 1
        %v973 = vrot.slane %v674, 1
        %v974 = vsel %vm845, %v972, %v973
        %v975 = vrot.slane %v675, 1
        %v976 = vrot.slane %v676, 1
        %v977 = vsel %vm845, %v975, %v976
        %v978 = vrot.slane %v677, 1
        %v979 = vrot.slane %v678, 1
        %v980 = vsel %vm845, %v978, %v979
        %v981 = vrot.slane %v679, 1
        %v982 = vrot.slane %v680, 1
        %v983 = vsel %vm845, %v981, %v982
        %v984 = vrot.slane %v681, 1
        %v985 = vrot.slane %v682, 1
        %v986 = vsel %vm845, %v984, %v985
        %v987 = vrot.slane %v683, 1
        %v988 = vrot.slane %v684, 1
        %v989 = vsel %vm845, %v987, %v988
        %v990 = vrot.slane %v685, 1
        %v991 = vrot.slane %v686, 1
        %v992 = vsel %vm845, %v990, %v991
        %v993 = vrot.slane %v687, 1
        %v994 = vrot.slane %v688, 1
        %v995 = vsel %vm845, %v993, %v994
        %v996 = vrot.slane %v689, 1
        %v997 = vrot.slane %v690, 1
        %v998 = vsel %vm845, %v996, %v997
        %v999 = vrot.slane %v691, 1
        %v1000 = vrot.slane %v692, 1
        %v1001 = vsel %vm845, %v999, %v1000
        %v1002 = vrot.slane %v693, 1
        %v1003 = vrot.slane %v694, 1
        %v1004 = vsel %vm845, %v1002, %v1003
        %v1005 = vrot.slane %v695, 1
        %v1006 = vrot.slane %v696, 1
        %v1007 = vsel %vm845, %v1005, %v1006
        %v1008 = vrot.slane %v697, 1
        %v1009 = vrot.slane %v698, 1
        %v1010 = vsel %vm845, %v1008, %v1009
        %v1011 = vrot.slane %v699, 1
        %v1012 = vrot.slane %v700, 1
        %v1013 = vsel %vm845, %v1011, %v1012
        %v1014 = vrot.slane %v701, 1
        %v1015 = vrot.slane %v702, 1
        %v1016 = vsel %vm845, %v1014, %v1015
        %v1017 = vrot.slane %v703, 1
        %v1018 = vrot.slane %v704, 1
        %v1019 = vsel %vm845, %v1017, %v1018
        %v1020 = vrot.slane %v705, 1
        %v1021 = vrot.slane %v706, 1
        %v1022 = vsel %vm845, %v1020, %v1021
        %v1023 = vrot.slane %v707, 1
        %v1024 = vrot.slane %v708, 1
        %v1025 = vsel %vm845, %v1023, %v1024
        %v1026 = vrot.slane %v709, 1
        %v1027 = vrot.slane %v710, 1
        %v1028 = vsel %vm845, %v1026, %v1027
        %v1029 = vrot.slane %v711, 1
        %v1030 = vrot.slane %v712, 1
        %v1031 = vsel %vm845, %v1029, %v1030
        %v1032 = vrot.slane %v713, 1
        %v1033 = vrot.slane %v714, 1
        %v1034 = vsel %vm845, %v1032, %v1033
        %v1035 = vrot.slane %v715, 1
        %v1036 = vrot.slane %v716, 1
        %v1037 = vsel %vm845, %v1035, %v1036
        %v1102 = vadd.f32 %v521, %v848
        %v1103 = vadd.f32 %v522, %v851
        %v1104 = vadd.f32 %v523, %v854
        %v1105 = vadd.f32 %v524, %v857
        %v1106 = vadd.f32 %v525, %v860
        %v1107 = vadd.f32 %v526, %v863
        %v1108 = vadd.f32 %v527, %v866
        %v1109 = vadd.f32 %v528, %v869
        %v1110 = vadd.f32 %v529, %v872
        %v1111 = vadd.f32 %v530, %v875
        %v1112 = vadd.f32 %v531, %v878
        %v1113 = vadd.f32 %v532, %v881
        %v1114 = vadd.f32 %v533, %v884
        %v1115 = vadd.f32 %v534, %v887
        %v1116 = vadd.f32 %v535, %v890
        %v1117 = vadd.f32 %v536, %v893
        %v1118 = vadd.f32 %v537, %v896
        %v1119 = vadd.f32 %v538, %v899
        %v1120 = vadd.f32 %v539, %v902
        %v1121 = vadd.f32 %v540, %v905
        %v1122 = vadd.f32 %v541, %v908
        %v1123 = vadd.f32 %v542, %v911
        %v1124 = vadd.f32 %v543, %v914
        %v1125 = vadd.f32 %v544, %v917
        %v1126 = vadd.f32 %v545, %v920
        %v1127 = vadd.f32 %v546, %v923
        %v1128 = vadd.f32 %v547, %v926
        %v1129 = vadd.f32 %v548, %v929
        %v1130 = vadd.f32 %v549, %v932
        %v1131 = vadd.f32 %v550, %v935
        %v1132 = vadd.f32 %v551, %v938
        %v1133 = vadd.f32 %v552, %v941
        %v1134 = vadd.f32 %v553, %v944
        %v1135 = vadd.f32 %v554, %v947
        %v1136 = vadd.f32 %v555, %v950
        %v1137 = vadd.f32 %v556, %v953
        %v1138 = vadd.f32 %v557, %v956
        %v1139 = vadd.f32 %v558, %v959
        %v1140 = vadd.f32 %v559, %v962
        %v1141 = vadd.f32 %v560, %v965
        %v1142 = vadd.f32 %v561, %v968
        %v1143 = vadd.f32 %v562, %v971
        %v1144 = vadd.f32 %v563, %v974
        %v1145 = vadd.f32 %v564, %v977
        %v1146 = vadd.f32 %v565, %v980
        %v1147 = vadd.f32 %v566, %v983
        %v1148 = vadd.f32 %v567, %v986
        %v1149 = vadd.f32 %v568, %v989
        %v1150 = vadd.f32 %v569, %v992
        %v1151 = vadd.f32 %v570, %v995
        %v1152 = vadd.f32 %v571, %v998
        %v1153 = vadd.f32 %v572, %v1001
        %v1154 = vadd.f32 %v573, %v1004
        %v1155 = vadd.f32 %v574, %v1007
        %v1156 = vadd.f32 %v575, %v1010
        %v1157 = vadd.f32 %v576, %v1013
        %v1158 = vadd.f32 %v577, %v1016
        %v1159 = vadd.f32 %v578, %v1019
        %v1160 = vadd.f32 %v579, %v1022
        %v1161 = vadd.f32 %v580, %v1025
        %v1162 = vadd.f32 %v581, %v1028
        %v1163 = vadd.f32 %v582, %v1031
        %v1164 = vadd.f32 %v583, %v1034
        %v1165 = vadd.f32 %v584, %v1037
        %v1166 = vlaneseq
        %v1167 = vshrl.u32 %v1166, 7
        %v1168 = vsub.s32 2, %v1167
        %v1169 = vrot.slane %v444, %v1168
        %v1170 = vmul.f32 %v244, %v1169
        %v1171 = vmul.f32 %v245, %v1169
        %v1172 = vmul.f32 %v246, %v1169
        %v1173 = vmul.f32 %v247, %v1169
        %v1174 = vmul.f32 %v248, %v1169
        %v1175 = vmul.f32 %v249, %v1169
        %v1176 = vmul.f32 %v250, %v1169
        %v1177 = vmul.f32 %v251, %v1169
        %v1178 = vmul.f32 %v252, %v1169
        %v1179 = vmul.f32 %v253, %v1169
        %v1180 = vmul.f32 %v254, %v1169
        %v1181 = vmul.f32 %v255, %v1169
        %v1182 = vmul.f32 %v256, %v1169
        %v1183 = vmul.f32 %v257, %v1169
        %v1184 = vmul.f32 %v258, %v1169
        %v1185 = vmul.f32 %v259, %v1169
        %v1186 = vmul.f32 %v264, %v1169
        %v1187 = vmul.f32 %v265, %v1169
        %v1188 = vmul.f32 %v266, %v1169
        %v1189 = vmul.f32 %v267, %v1169
        %v1190 = vmul.f32 %v268, %v1169
        %v1191 = vmul.f32 %v269, %v1169
        %v1192 = vmul.f32 %v270, %v1169
        %v1193 = vmul.f32 %v271, %v1169
        %v1194 = vmul.f32 %v272, %v1169
        %v1195 = vmul.f32 %v273, %v1169
        %v1196 = vmul.f32 %v274, %v1169
        %v1197 = vmul.f32 %v275, %v1169
        %v1198 = vmul.f32 %v276, %v1169
        %v1199 = vmul.f32 %v277, %v1169
        %v1200 = vmul.f32 %v278, %v1169
        %v1201 = vmul.f32 %v279, %v1169
        %v1202 = vmul.f32 %v284, %v1169
        %v1203 = vmul.f32 %v285, %v1169
        %v1204 = vmul.f32 %v286, %v1169
        %v1205 = vmul.f32 %v287, %v1169
        %v1206 = vmul.f32 %v288, %v1169
        %v1207 = vmul.f32 %v289, %v1169
        %v1208 = vmul.f32 %v290, %v1169
        %v1209 = vmul.f32 %v291, %v1169
        %v1210 = vmul.f32 %v292, %v1169
        %v1211 = vmul.f32 %v293, %v1169
        %v1212 = vmul.f32 %v294, %v1169
        %v1213 = vmul.f32 %v295, %v1169
        %v1214 = vmul.f32 %v296, %v1169
        %v1215 = vmul.f32 %v297, %v1169
        %v1216 = vmul.f32 %v298, %v1169
        %v1217 = vmul.f32 %v299, %v1169
        %v1218 = vmul.f32 %v304, %v1169
        %v1219 = vmul.f32 %v305, %v1169
        %v1220 = vmul.f32 %v306, %v1169
        %v1221 = vmul.f32 %v307, %v1169
        %v1222 = vmul.f32 %v308, %v1169
        %v1223 = vmul.f32 %v309, %v1169
        %v1224 = vmul.f32 %v310, %v1169
        %v1225 = vmul.f32 %v311, %v1169
        %v1226 = vmul.f32 %v312, %v1169
        %v1227 = vmul.f32 %v313, %v1169
        %v1228 = vmul.f32 %v314, %v1169
        %v1229 = vmul.f32 %v315, %v1169
        %v1230 = vmul.f32 %v316, %v1169
        %v1231 = vmul.f32 %v317, %v1169
        %v1232 = vmul.f32 %v318, %v1169
        %v1233 = vmul.f32 %v319, %v1169
        %v1234 = vmul.f32 %v324, %v1169
        %v1235 = vmul.f32 %v325, %v1169
        %v1236 = vmul.f32 %v326, %v1169
        %v1237 = vmul.f32 %v327, %v1169
        %v1238 = vmul.f32 %v328, %v1169
        %v1239 = vmul.f32 %v329, %v1169
        %v1240 = vmul.f32 %v330, %v1169
        %v1241 = vmul.f32 %v331, %v1169
        %v1242 = vmul.f32 %v332, %v1169
        %v1243 = vmul.f32 %v333, %v1169
        %v1244 = vmul.f32 %v334, %v1169
        %v1245 = vmul.f32 %v335, %v1169
        %v1246 = vmul.f32 %v336, %v1169
        %v1247 = vmul.f32 %v337, %v1169
        %v1248 = vmul.f32 %v338, %v1169
        %v1249 = vmul.f32 %v339, %v1169
        %v1250 = vmul.f32 %v344, %v1169
        %v1251 = vmul.f32 %v345, %v1169
        %v1252 = vmul.f32 %v346, %v1169
        %v1253 = vmul.f32 %v347, %v1169
        %v1254 = vmul.f32 %v348, %v1169
        %v1255 = vmul.f32 %v349, %v1169
        %v1256 = vmul.f32 %v350, %v1169
        %v1257 = vmul.f32 %v351, %v1169
        %v1258 = vmul.f32 %v352, %v1169
        %v1259 = vmul.f32 %v353, %v1169
        %v1260 = vmul.f32 %v354, %v1169
        %v1261 = vmul.f32 %v355, %v1169
        %v1262 = vmul.f32 %v356, %v1169
        %v1263 = vmul.f32 %v357, %v1169
        %v1264 = vmul.f32 %v358, %v1169
        %v1265 = vmul.f32 %v359, %v1169
        %v1266 = vmul.f32 %v364, %v1169
        %v1267 = vmul.f32 %v365, %v1169
        %v1268 = vmul.f32 %v366, %v1169
        %v1269 = vmul.f32 %v367, %v1169
        %v1270 = vmul.f32 %v368, %v1169
        %v1271 = vmul.f32 %v369, %v1169
        %v1272 = vmul.f32 %v370, %v1169
        %v1273 = vmul.f32 %v371, %v1169
        %v1274 = vmul.f32 %v372, %v1169
        %v1275 = vmul.f32 %v373, %v1169
        %v1276 = vmul.f32 %v374, %v1169
        %v1277 = vmul.f32 %v375, %v1169
        %v1278 = vmul.f32 %v376, %v1169
        %v1279 = vmul.f32 %v377, %v1169
        %v1280 = vmul.f32 %v378, %v1169
        %v1281 = vmul.f32 %v379, %v1169
        %v1282 = vmul.f32 %v384, %v1169
        %v1283 = vmul.f32 %v385, %v1169
        %v1284 = vmul.f32 %v386, %v1169
        %v1285 = vmul.f32 %v387, %v1169
        %v1286 = vmul.f32 %v388, %v1169
        %v1287 = vmul.f32 %v389, %v1169
        %v1288 = vmul.f32 %v390, %v1169
        %v1289 = vmul.f32 %v391, %v1169
        %v1290 = vmul.f32 %v392, %v1169
        %v1291 = vmul.f32 %v393, %v1169
        %v1292 = vmul.f32 %v394, %v1169
        %v1293 = vmul.f32 %v395, %v1169
        %v1294 = vmul.f32 %v396, %v1169
        %v1295 = vmul.f32 %v397, %v1169
        %v1296 = vmul.f32 %v398, %v1169
        %v1297 = vmul.f32 %v399, %v1169
        %vm1426 = vcmask 1045504
        %v1427 = vrot.slane %v1170, 2
        %v1428 = vrot.slane %v1171, 2
        %v1429 = vsel %vm1426, %v1427, %v1428
        %v1430 = vrot.slane %v1172, 2
        %v1431 = vrot.slane %v1173, 2
        %v1432 = vsel %vm1426, %v1430, %v1431
        %v1433 = vrot.slane %v1174, 2
        %v1434 = vrot.slane %v1175, 2
        %v1435 = vsel %vm1426, %v1433, %v1434
        %v1436 = vrot.slane %v1176, 2
        %v1437 = vrot.slane %v1177, 2
        %v1438 = vsel %vm1426, %v1436, %v1437
        %v1439 = vrot.slane %v1178, 2
        %v1440 = vrot.slane %v1179, 2
        %v1441 = vsel %vm1426, %v1439, %v1440
        %v1442 = vrot.slane %v1180, 2
        %v1443 = vrot.slane %v1181, 2
        %v1444 = vsel %vm1426, %v1442, %v1443
        %v1445 = vrot.slane %v1182, 2
        %v1446 = vrot.slane %v1183, 2
        %v1447 = vsel %vm1426, %v1445, %v1446
        %v1448 = vrot.slane %v1184, 2
        %v1449 = vrot.slane %v1185, 2
        %v1450 = vsel %vm1426, %v1448, %v1449
        %v1451 = vrot.slane %v1186, 2
        %v1452 = vrot.slane %v1187, 2
        %v1453 = vsel %vm1426, %v1451, %v1452
        %v1454 = vrot.slane %v1188, 2
        %v1455 = vrot.slane %v1189, 2
        %v1456 = vsel %vm1426, %v1454, %v1455
        %v1457 = vrot.slane %v1190, 2
        %v1458 = vrot.slane %v1191, 2
        %v1459 = vsel %vm1426, %v1457, %v1458
        %v1460 = vrot.slane %v1192, 2
        %v1461 = vrot.slane %v1193, 2
        %v1462 = vsel %vm1426, %v1460, %v1461
        %v1463 = vrot.slane %v1194, 2
        %v1464 = vrot.slane %v1195, 2
        %v1465 = vsel %vm1426, %v1463, %v1464
        %v1466 = vrot.slane %v1196, 2
        %v1467 = vrot.slane %v1197, 2
        %v1468 = vsel %vm1426, %v1466, %v1467
        %v1469 = vrot.slane %v1198, 2
        %v1470 = vrot.slane %v1199, 2
        %v1471 = vsel %vm1426, %v1469, %v1470
        %v1472 = vrot.slane %v1200, 2
        %v1473 = vrot.slane %v1201, 2
        %v1474 = vsel %vm1426, %v1472, %v1473
        %v1475 = vrot.slane %v1202, 2
        %v1476 = vrot.slane %v1203, 2
        %v1477 = vsel %vm1426, %v1475, %v1476
        %v1478 = vrot.slane %v1204, 2
        %v1479 = vrot.slane %v1205, 2
        %v1480 = vsel %vm1426, %v1478, %v1479
        %v1481 = vrot.slane %v1206, 2
        %v1482 = vrot.slane %v1207, 2
        %v1483 = vsel %vm1426, %v1481, %v1482
        %v1484 = vrot.slane %v1208, 2
        %v1485 = vrot.slane %v1209, 2
        %v1486 = vsel %vm1426, %v1484, %v1485
        %v1487 = vrot.slane %v1210, 2
        %v1488 = vrot.slane %v1211, 2
        %v1489 = vsel %vm1426, %v1487, %v1488
        %v1490 = vrot.slane %v1212, 2
        %v1491 = vrot.slane %v1213, 2
        %v1492 = vsel %vm1426, %v1490, %v1491
        %v1493 = vrot.slane %v1214, 2
        %v1494 = vrot.slane %v1215, 2
        %v1495 = vsel %vm1426, %v1493, %v1494
        %v1496 = vrot.slane %v1216, 2
        %v1497 = vrot.slane %v1217, 2
        %v1498 = vsel %vm1426, %v1496, %v1497
        %v1499 = vrot.slane %v1218, 2
        %v1500 = vrot.slane %v1219, 2
        %v1501 = vsel %vm1426, %v1499, %v1500
        %v1502 = vrot.slane %v1220, 2
        %v1503 = vrot.slane %v1221, 2
        %v1504 = vsel %vm1426, %v1502, %v1503
        %v1505 = vrot.slane %v1222, 2
        %v1506 = vrot.slane %v1223, 2
        %v1507 = vsel %vm1426, %v1505, %v1506
        %v1508 = vrot.slane %v1224, 2
        %v1509 = vrot.slane %v1225, 2
        %v1510 = vsel %vm1426, %v1508, %v1509
        %v1511 = vrot.slane %v1226, 2
        %v1512 = vrot.slane %v1227, 2
        %v1513 = vsel %vm1426, %v1511, %v1512
        %v1514 = vrot.slane %v1228, 2
        %v1515 = vrot.slane %v1229, 2
        %v1516 = vsel %vm1426, %v1514, %v1515
        %v1517 = vrot.slane %v1230, 2
        %v1518 = vrot.slane %v1231, 2
        %v1519 = vsel %vm1426, %v1517, %v1518
        %v1520 = vrot.slane %v1232, 2
        %v1521 = vrot.slane %v1233, 2
        %v1522 = vsel %vm1426, %v1520, %v1521
        %v1523 = vrot.slane %v1234, 2
        %v1524 = vrot.slane %v1235, 2
        %v1525 = vsel %vm1426, %v1523, %v1524
        %v1526 = vrot.slane %v1236, 2
        %v1527 = vrot.slane %v1237, 2
        %v1528 = vsel %vm1426, %v1526, %v1527
        %v1529 = vrot.slane %v1238, 2
        %v1530 = vrot.slane %v1239, 2
        %v1531 = vsel %vm1426, %v1529, %v1530
        %v1532 = vrot.slane %v1240, 2
        %v1533 = vrot.slane %v1241, 2
        %v1534 = vsel %vm1426, %v1532, %v1533
        %v1535 = vrot.slane %v1242, 2
        %v1536 = vrot.slane %v1243, 2
        %v1537 = vsel %vm1426, %v1535, %v1536
        %v1538 = vrot.slane %v1244, 2
        %v1539 = vrot.slane %v1245, 2
        %v1540 = vsel %vm1426, %v1538, %v1539
        %v1541 = vrot.slane %v1246, 2
        %v1542 = vrot.slane %v1247, 2
        %v1543 = vsel %vm1426, %v1541, %v1542
        %v1544 = vrot.slane %v1248, 2
        %v1545 = vrot.slane %v1249, 2
        %v1546 = vsel %vm1426, %v1544, %v1545
        %v1547 = vrot.slane %v1250, 2
        %v1548 = vrot.slane %v1251, 2
        %v1549 = vsel %vm1426, %v1547, %v1548
        %v1550 = vrot.slane %v1252, 2
        %v1551 = vrot.slane %v1253, 2
        %v1552 = vsel %vm1426, %v1550, %v1551
        %v1553 = vrot.slane %v1254, 2
        %v1554 = vrot.slane %v1255, 2
        %v1555 = vsel %vm1426, %v1553, %v1554
        %v1556 = vrot.slane %v1256, 2
        %v1557 = vrot.slane %v1257, 2
        %v1558 = vsel %vm1426, %v1556, %v1557
        %v1559 = vrot.slane %v1258, 2
        %v1560 = vrot.slane %v1259, 2
        %v1561 = vsel %vm1426, %v1559, %v1560
        %v1562 = vrot.slane %v1260, 2
        %v1563 = vrot.slane %v1261, 2
        %v1564 = vsel %vm1426, %v1562, %v1563
        %v1565 = vrot.slane %v1262, 2
        %v1566 = vrot.slane %v1263, 2
        %v1567 = vsel %vm1426, %v1565, %v1566
        %v1568 = vrot.slane %v1264, 2
        %v1569 = vrot.slane %v1265, 2
        %v1570 = vsel %vm1426, %v1568, %v1569
        %v1571 = vrot.slane %v1266, 2
        %v1572 = vrot.slane %v1267, 2
        %v1573 = vsel %vm1426, %v1571, %v1572
        %v1574 = vrot.slane %v1268, 2
        %v1575 = vrot.slane %v1269, 2
        %v1576 = vsel %vm1426, %v1574, %v1575
        %v1577 = vrot.slane %v1270, 2
        %v1578 = vrot.slane %v1271, 2
        %v1579 = vsel %vm1426, %v1577, %v1578
        %v1580 = vrot.slane %v1272, 2
        %v1581 = vrot.slane %v1273, 2
        %v1582 = vsel %vm1426, %v1580, %v1581
        %v1583 = vrot.slane %v1274, 2
        %v1584 = vrot.slane %v1275, 2
        %v1585 = vsel %vm1426, %v1583, %v1584
        %v1586 = vrot.slane %v1276, 2
        %v1587 = vrot.slane %v1277, 2
        %v1588 = vsel %vm1426, %v1586, %v1587
        %v1589 = vrot.slane %v1278, 2
        %v1590 = vrot.slane %v1279, 2
        %v1591 = vsel %vm1426, %v1589, %v1590
        %v1592 = vrot.slane %v1280, 2
        %v1593 = vrot.slane %v1281, 2
        %v1594 = vsel %vm1426, %v1592, %v1593
        %v1595 = vrot.slane %v1282, 2
        %v1596 = vrot.slane %v1283, 2
        %v1597 = vsel %vm1426, %v1595, %v1596
        %v1598 = vrot.slane %v1284, 2
        %v1599 = vrot.slane %v1285, 2
        %v1600 = vsel %vm1426, %v1598, %v1599
        %v1601 = vrot.slane %v1286, 2
        %v1602 = vrot.slane %v1287, 2
        %v1603 = vsel %vm1426, %v1601, %v1602
        %v1604 = vrot.slane %v1288, 2
        %v1605 = vrot.slane %v1289, 2
        %v1606 = vsel %vm1426, %v1604, %v1605
        %v1607 = vrot.slane %v1290, 2
        %v1608 = vrot.slane %v1291, 2
        %v1609 = vsel %vm1426, %v1607, %v1608
        %v1610 = vrot.slane %v1292, 2
        %v1611 = vrot.slane %v1293, 2
        %v1612 = vsel %vm1426, %v1610, %v1611
        %v1613 = vrot.slane %v1294, 2
        %v1614 = vrot.slane %v1295, 2
        %v1615 = vsel %vm1426, %v1613, %v1614
        %v1616 = vrot.slane %v1296, 2
        %v1617 = vrot.slane %v1297, 2
        %v1618 = vsel %vm1426, %v1616, %v1617
        %v1683 = vadd.f32 %v1102, %v1429
        %v1684 = vadd.f32 %v1103, %v1432
        %v1685 = vadd.f32 %v1104, %v1435
        %v1686 = vadd.f32 %v1105, %v1438
        %v1687 = vadd.f32 %v1106, %v1441
        %v1688 = vadd.f32 %v1107, %v1444
        %v1689 = vadd.f32 %v1108, %v1447
        %v1690 = vadd.f32 %v1109, %v1450
        %v1691 = vadd.f32 %v1110, %v1453
        %v1692 = vadd.f32 %v1111, %v1456
        %v1693 = vadd.f32 %v1112, %v1459
        %v1694 = vadd.f32 %v1113, %v1462
        %v1695 = vadd.f32 %v1114, %v1465
        %v1696 = vadd.f32 %v1115, %v1468
        %v1697 = vadd.f32 %v1116, %v1471
        %v1698 = vadd.f32 %v1117, %v1474
        %v1699 = vadd.f32 %v1118, %v1477
        %v1700 = vadd.f32 %v1119, %v1480
        %v1701 = vadd.f32 %v1120, %v1483
        %v1702 = vadd.f32 %v1121, %v1486
        %v1703 = vadd.f32 %v1122, %v1489
        %v1704 = vadd.f32 %v1123, %v1492
        %v1705 = vadd.f32 %v1124, %v1495
        %v1706 = vadd.f32 %v1125, %v1498
        %v1707 = vadd.f32 %v1126, %v1501
        %v1708 = vadd.f32 %v1127, %v1504
        %v1709 = vadd.f32 %v1128, %v1507
        %v1710 = vadd.f32 %v1129, %v1510
        %v1711 = vadd.f32 %v1130, %v1513
        %v1712 = vadd.f32 %v1131, %v1516
        %v1713 = vadd.f32 %v1132, %v1519
        %v1714 = vadd.f32 %v1133, %v1522
        %v1715 = vadd.f32 %v1134, %v1525
        %v1716 = vadd.f32 %v1135, %v1528
        %v1717 = vadd.f32 %v1136, %v1531
        %v1718 = vadd.f32 %v1137, %v1534
        %v1719 = vadd.f32 %v1138, %v1537
        %v1720 = vadd.f32 %v1139, %v1540
        %v1721 = vadd.f32 %v1140, %v1543
        %v1722 = vadd.f32 %v1141, %v1546
        %v1723 = vadd.f32 %v1142, %v1549
        %v1724 = vadd.f32 %v1143, %v1552
        %v1725 = vadd.f32 %v1144, %v1555
        %v1726 = vadd.f32 %v1145, %v1558
        %v1727 = vadd.f32 %v1146, %v1561
        %v1728 = vadd.f32 %v1147, %v1564
        %v1729 = vadd.f32 %v1148, %v1567
        %v1730 = vadd.f32 %v1149, %v1570
        %v1731 = vadd.f32 %v1150, %v1573
        %v1732 = vadd.f32 %v1151, %v1576
        %v1733 = vadd.f32 %v1152, %v1579
        %v1734 = vadd.f32 %v1153, %v1582
        %v1735 = vadd.f32 %v1154, %v1585
        %v1736 = vadd.f32 %v1155, %v1588
        %v1737 = vadd.f32 %v1156, %v1591
        %v1738 = vadd.f32 %v1157, %v1594
        %v1739 = vadd.f32 %v1158, %v1597
        %v1740 = vadd.f32 %v1159, %v1600
        %v1741 = vadd.f32 %v1160, %v1603
        %v1742 = vadd.f32 %v1161, %v1606
        %v1743 = vadd.f32 %v1162, %v1609
        %v1744 = vadd.f32 %v1163, %v1612
        %v1745 = vadd.f32 %v1164, %v1615
        %v1746 = vadd.f32 %v1165, %v1618
        %v1747 = vlaneseq
        %v1748 = vshrl.u32 %v1747, 7
        %v1749 = vsub.s32 0, %v1748
        %v1750 = vrot.slane %v445, %v1749
        %v1751 = vmul.f32 %v246, %v1750
        %v1752 = vmul.f32 %v248, %v1750
        %v1753 = vmul.f32 %v250, %v1750
        %v1754 = vmul.f32 %v252, %v1750
        %v1755 = vmul.f32 %v254, %v1750
        %v1756 = vmul.f32 %v256, %v1750
        %v1757 = vmul.f32 %v258, %v1750
        %v1758 = vmul.f32 %v260, %v1750
        %v1759 = vmul.f32 %v266, %v1750
        %v1760 = vmul.f32 %v268, %v1750
        %v1761 = vmul.f32 %v270, %v1750
        %v1762 = vmul.f32 %v272, %v1750
        %v1763 = vmul.f32 %v274, %v1750
        %v1764 = vmul.f32 %v276, %v1750
        %v1765 = vmul.f32 %v278, %v1750
        %v1766 = vmul.f32 %v280, %v1750
        %v1767 = vmul.f32 %v286, %v1750
        %v1768 = vmul.f32 %v288, %v1750
        %v1769 = vmul.f32 %v290, %v1750
        %v1770 = vmul.f32 %v292, %v1750
        %v1771 = vmul.f32 %v294, %v1750
        %v1772 = vmul.f32 %v296, %v1750
        %v1773 = vmul.f32 %v298, %v1750
        %v1774 = vmul.f32 %v300, %v1750
        %v1775 = vmul.f32 %v306, %v1750
        %v1776 = vmul.f32 %v308, %v1750
        %v1777 = vmul.f32 %v310, %v1750
        %v1778 = vmul.f32 %v312, %v1750
        %v1779 = vmul.f32 %v314, %v1750
        %v1780 = vmul.f32 %v316, %v1750
        %v1781 = vmul.f32 %v318, %v1750
        %v1782 = vmul.f32 %v320, %v1750
        %v1783 = vmul.f32 %v326, %v1750
        %v1784 = vmul.f32 %v328, %v1750
        %v1785 = vmul.f32 %v330, %v1750
        %v1786 = vmul.f32 %v332, %v1750
        %v1787 = vmul.f32 %v334, %v1750
        %v1788 = vmul.f32 %v336, %v1750
        %v1789 = vmul.f32 %v338, %v1750
        %v1790 = vmul.f32 %v340, %v1750
        %v1791 = vmul.f32 %v346, %v1750
        %v1792 = vmul.f32 %v348, %v1750
        %v1793 = vmul.f32 %v350, %v1750
        %v1794 = vmul.f32 %v352, %v1750
        %v1795 = vmul.f32 %v354, %v1750
        %v1796 = vmul.f32 %v356, %v1750
        %v1797 = vmul.f32 %v358, %v1750
        %v1798 = vmul.f32 %v360, %v1750
        %v1799 = vmul.f32 %v366, %v1750
        %v1800 = vmul.f32 %v368, %v1750
        %v1801 = vmul.f32 %v370, %v1750
        %v1802 = vmul.f32 %v372, %v1750
        %v1803 = vmul.f32 %v374, %v1750
        %v1804 = vmul.f32 %v376, %v1750
        %v1805 = vmul.f32 %v378, %v1750
        %v1806 = vmul.f32 %v380, %v1750
        %v1807 = vmul.f32 %v386, %v1750
        %v1808 = vmul.f32 %v388, %v1750
        %v1809 = vmul.f32 %v390, %v1750
        %v1810 = vmul.f32 %v392, %v1750
        %v1811 = vmul.f32 %v394, %v1750
        %v1812 = vmul.f32 %v396, %v1750
        %v1813 = vmul.f32 %v398, %v1750
        %v1814 = vmul.f32 %v400, %v1750
        %v1815 = vadd.f32 %v1683, %v1751
        %v1816 = vadd.f32 %v1684, %v1752
        %v1817 = vadd.f32 %v1685, %v1753
        %v1818 = vadd.f32 %v1686, %v1754
        %v1819 = vadd.f32 %v1687, %v1755
        %v1820 = vadd.f32 %v1688, %v1756
        %v1821 = vadd.f32 %v1689, %v1757
        %v1822 = vadd.f32 %v1690, %v1758
        %v1823 = vadd.f32 %v1691, %v1759
        %v1824 = vadd.f32 %v1692, %v1760
        %v1825 = vadd.f32 %v1693, %v1761
        %v1826 = vadd.f32 %v1694, %v1762
        %v1827 = vadd.f32 %v1695, %v1763
        %v1828 = vadd.f32 %v1696, %v1764
        %v1829 = vadd.f32 %v1697, %v1765
        %v1830 = vadd.f32 %v1698, %v1766
        %v1831 = vadd.f32 %v1699, %v1767
        %v1832 = vadd.f32 %v1700, %v1768
        %v1833 = vadd.f32 %v1701, %v1769
        %v1834 = vadd.f32 %v1702, %v1770
        %v1835 = vadd.f32 %v1703, %v1771
        %v1836 = vadd.f32 %v1704, %v1772
        %v1837 = vadd.f32 %v1705, %v1773
        %v1838 = vadd.f32 %v1706, %v1774
        %v1839 = vadd.f32 %v1707, %v1775
        %v1840 = vadd.f32 %v1708, %v1776
        %v1841 = vadd.f32 %v1709, %v1777
        %v1842 = vadd.f32 %v1710, %v1778
        %v1843 = vadd.f32 %v1711, %v1779
        %v1844 = vadd.f32 %v1712, %v1780
        %v1845 = vadd.f32 %v1713, %v1781
        %v1846 = vadd.f32 %v1714, %v1782
        %v1847 = vadd.f32 %v1715, %v1783
        %v1848 = vadd.f32 %v1716, %v1784
        %v1849 = vadd.f32 %v1717, %v1785
        %v1850 = vadd.f32 %v1718, %v1786
        %v1851 = vadd.f32 %v1719, %v1787
        %v1852 = vadd.f32 %v1720, %v1788
        %v1853 = vadd.f32 %v1721, %v1789
        %v1854 = vadd.f32 %v1722, %v1790
        %v1855 = vadd.f32 %v1723, %v1791
        %v1856 = vadd.f32 %v1724, %v1792
        %v1857 = vadd.f32 %v1725, %v1793
        %v1858 = vadd.f32 %v1726, %v1794
        %v1859 = vadd.f32 %v1727, %v1795
        %v1860 = vadd.f32 %v1728, %v1796
        %v1861 = vadd.f32 %v1729, %v1797
        %v1862 = vadd.f32 %v1730, %v1798
        %v1863 = vadd.f32 %v1731, %v1799
        %v1864 = vadd.f32 %v1732, %v1800
        %v1865 = vadd.f32 %v1733, %v1801
        %v1866 = vadd.f32 %v1734, %v1802
        %v1867 = vadd.f32 %v1735, %v1803
        %v1868 = vadd.f32 %v1736, %v1804
        %v1869 = vadd.f32 %v1737, %v1805
        %v1870 = vadd.f32 %v1738, %v1806
        %v1871 = vadd.f32 %v1739, %v1807
        %v1872 = vadd.f32 %v1740, %v1808
        %v1873 = vadd.f32 %v1741, %v1809
        %v1874 = vadd.f32 %v1742, %v1810
        %v1875 = vadd.f32 %v1743, %v1811
        %v1876 = vadd.f32 %v1744, %v1812
        %v1877 = vadd.f32 %v1745, %v1813
        %v1878 = vadd.f32 %v1746, %v1814
        %v1879 = vlaneseq
        %v1880 = vshrl.u32 %v1879, 7
        %v1881 = vsub.s32 1, %v1880
        %v1882 = vrot.slane %v445, %v1881
        %v1883 = vmul.f32 %v246, %v1882
        %v1884 = vmul.f32 %v247, %v1882
        %v1885 = vmul.f32 %v248, %v1882
        %v1886 = vmul.f32 %v249, %v1882
        %v1887 = vmul.f32 %v250, %v1882
        %v1888 = vmul.f32 %v251, %v1882
        %v1889 = vmul.f32 %v252, %v1882
        %v1890 = vmul.f32 %v253, %v1882
        %v1891 = vmul.f32 %v254, %v1882
        %v1892 = vmul.f32 %v255, %v1882
        %v1893 = vmul.f32 %v256, %v1882
        %v1894 = vmul.f32 %v257, %v1882
        %v1895 = vmul.f32 %v258, %v1882
        %v1896 = vmul.f32 %v259, %v1882
        %v1897 = vmul.f32 %v260, %v1882
        %v1898 = vmul.f32 %v261, %v1882
        %v1899 = vmul.f32 %v266, %v1882
        %v1900 = vmul.f32 %v267, %v1882
        %v1901 = vmul.f32 %v268, %v1882
        %v1902 = vmul.f32 %v269, %v1882
        %v1903 = vmul.f32 %v270, %v1882
        %v1904 = vmul.f32 %v271, %v1882
        %v1905 = vmul.f32 %v272, %v1882
        %v1906 = vmul.f32 %v273, %v1882
        %v1907 = vmul.f32 %v274, %v1882
        %v1908 = vmul.f32 %v275, %v1882
        %v1909 = vmul.f32 %v276, %v1882
        %v1910 = vmul.f32 %v277, %v1882
        %v1911 = vmul.f32 %v278, %v1882
        %v1912 = vmul.f32 %v279, %v1882
        %v1913 = vmul.f32 %v280, %v1882
        %v1914 = vmul.f32 %v281, %v1882
        %v1915 = vmul.f32 %v286, %v1882
        %v1916 = vmul.f32 %v287, %v1882
        %v1917 = vmul.f32 %v288, %v1882
        %v1918 = vmul.f32 %v289, %v1882
        %v1919 = vmul.f32 %v290, %v1882
        %v1920 = vmul.f32 %v291, %v1882
        %v1921 = vmul.f32 %v292, %v1882
        %v1922 = vmul.f32 %v293, %v1882
        %v1923 = vmul.f32 %v294, %v1882
        %v1924 = vmul.f32 %v295, %v1882
        %v1925 = vmul.f32 %v296, %v1882
        %v1926 = vmul.f32 %v297, %v1882
        %v1927 = vmul.f32 %v298, %v1882
        %v1928 = vmul.f32 %v299, %v1882
        %v1929 = vmul.f32 %v300, %v1882
        %v1930 = vmul.f32 %v301, %v1882
        %v1931 = vmul.f32 %v306, %v1882
        %v1932 = vmul.f32 %v307, %v1882
        %v1933 = vmul.f32 %v308, %v1882
        %v1934 = vmul.f32 %v309, %v1882
        %v1935 = vmul.f32 %v310, %v1882
        %v1936 = vmul.f32 %v311, %v1882
        %v1937 = vmul.f32 %v312, %v1882
        %v1938 = vmul.f32 %v313, %v1882
        %v1939 = vmul.f32 %v314, %v1882
        %v1940 = vmul.f32 %v315, %v1882
        %v1941 = vmul.f32 %v316, %v1882
        %v1942 = vmul.f32 %v317, %v1882
        %v1943 = vmul.f32 %v318, %v1882
        %v1944 = vmul.f32 %v319, %v1882
        %v1945 = vmul.f32 %v320, %v1882
        %v1946 = vmul.f32 %v321, %v1882
        %v1947 = vmul.f32 %v326, %v1882
        %v1948 = vmul.f32 %v327, %v1882
        %v1949 = vmul.f32 %v328, %v1882
        %v1950 = vmul.f32 %v329, %v1882
        %v1951 = vmul.f32 %v330, %v1882
        %v1952 = vmul.f32 %v331, %v1882
        %v1953 = vmul.f32 %v332, %v1882
        %v1954 = vmul.f32 %v333, %v1882
        %v1955 = vmul.f32 %v334, %v1882
        %v1956 = vmul.f32 %v335, %v1882
        %v1957 = vmul.f32 %v336, %v1882
        %v1958 = vmul.f32 %v337, %v1882
        %v1959 = vmul.f32 %v338, %v1882
        %v1960 = vmul.f32 %v339, %v1882
        %v1961 = vmul.f32 %v340, %v1882
        %v1962 = vmul.f32 %v341, %v1882
        %v1963 = vmul.f32 %v346, %v1882
        %v1964 = vmul.f32 %v347, %v1882
        %v1965 = vmul.f32 %v348, %v1882
        %v1966 = vmul.f32 %v349, %v1882
        %v1967 = vmul.f32 %v350, %v1882
        %v1968 = vmul.f32 %v351, %v1882
        %v1969 = vmul.f32 %v352, %v1882
        %v1970 = vmul.f32 %v353, %v1882
        %v1971 = vmul.f32 %v354, %v1882
        %v1972 = vmul.f32 %v355, %v1882
        %v1973 = vmul.f32 %v356, %v1882
        %v1974 = vmul.f32 %v357, %v1882
        %v1975 = vmul.f32 %v358, %v1882
        %v1976 = vmul.f32 %v359, %v1882
        %v1977 = vmul.f32 %v360, %v1882
        %v1978 = vmul.f32 %v361, %v1882
        %v1979 = vmul.f32 %v366, %v1882
        %v1980 = vmul.f32 %v367, %v1882
        %v1981 = vmul.f32 %v368, %v1882
        %v1982 = vmul.f32 %v369, %v1882
        %v1983 = vmul.f32 %v370, %v1882
        %v1984 = vmul.f32 %v371, %v1882
        %v1985 = vmul.f32 %v372, %v1882
        %v1986 = vmul.f32 %v373, %v1882
        %v1987 = vmul.f32 %v374, %v1882
        %v1988 = vmul.f32 %v375, %v1882
        %v1989 = vmul.f32 %v376, %v1882
        %v1990 = vmul.f32 %v377, %v1882
        %v1991 = vmul.f32 %v378, %v1882
        %v1992 = vmul.f32 %v379, %v1882
        %v1993 = vmul.f32 %v380, %v1882
        %v1994 = vmul.f32 %v381, %v1882
        %v1995 = vmul.f32 %v386, %v1882
        %v1996 = vmul.f32 %v387, %v1882
        %v1997 = vmul.f32 %v388, %v1882
        %v1998 = vmul.f32 %v389, %v1882
        %v1999 = vmul.f32 %v390, %v1882
        %v2000 = vmul.f32 %v391, %v1882
        %v2001 = vmul.f32 %v392, %v1882
        %v2002 = vmul.f32 %v393, %v1882
        %v2003 = vmul.f32 %v394, %v1882
        %v2004 = vmul.f32 %v395, %v1882
        %v2005 = vmul.f32 %v396, %v1882
        %v2006 = vmul.f32 %v397, %v1882
        %v2007 = vmul.f32 %v398, %v1882
        %v2008 = vmul.f32 %v399, %v1882
        %v2009 = vmul.f32 %v400, %v1882
        %v2010 = vmul.f32 %v401, %v1882
        %v2139 = vrot.slane %v1883, 1
        %v2140 = vrot.slane %v1884, 1
        %v2141 = vsel %vm845, %v2139, %v2140
        %v2142 = vrot.slane %v1885, 1
        %v2143 = vrot.slane %v1886, 1
        %v2144 = vsel %vm845, %v2142, %v2143
        %v2145 = vrot.slane %v1887, 1
        %v2146 = vrot.slane %v1888, 1
        %v2147 = vsel %vm845, %v2145, %v2146
        %v2148 = vrot.slane %v1889, 1
        %v2149 = vrot.slane %v1890, 1
        %v2150 = vsel %vm845, %v2148, %v2149
        %v2151 = vrot.slane %v1891, 1
        %v2152 = vrot.slane %v1892, 1
        %v2153 = vsel %vm845, %v2151, %v2152
        %v2154 = vrot.slane %v1893, 1
        %v2155 = vrot.slane %v1894, 1
        %v2156 = vsel %vm845, %v2154, %v2155
        %v2157 = vrot.slane %v1895, 1
        %v2158 = vrot.slane %v1896, 1
        %v2159 = vsel %vm845, %v2157, %v2158
        %v2160 = vrot.slane %v1897, 1
        %v2161 = vrot.slane %v1898, 1
        %v2162 = vsel %vm845, %v2160, %v2161
        %v2163 = vrot.slane %v1899, 1
        %v2164 = vrot.slane %v1900, 1
        %v2165 = vsel %vm845, %v2163, %v2164
        %v2166 = vrot.slane %v1901, 1
        %v2167 = vrot.slane %v1902, 1
        %v2168 = vsel %vm845, %v2166, %v2167
        %v2169 = vrot.slane %v1903, 1
        %v2170 = vrot.slane %v1904, 1
        %v2171 = vsel %vm845, %v2169, %v2170
        %v2172 = vrot.slane %v1905, 1
        %v2173 = vrot.slane %v1906, 1
        %v2174 = vsel %vm845, %v2172, %v2173
        %v2175 = vrot.slane %v1907, 1
        %v2176 = vrot.slane %v1908, 1
        %v2177 = vsel %vm845, %v2175, %v2176
        %v2178 = vrot.slane %v1909, 1
        %v2179 = vrot.slane %v1910, 1
        %v2180 = vsel %vm845, %v2178, %v2179
        %v2181 = vrot.slane %v1911, 1
        %v2182 = vrot.slane %v1912, 1
        %v2183 = vsel %vm845, %v2181, %v2182
        %v2184 = vrot.slane %v1913, 1
        %v2185 = vrot.slane %v1914, 1
        %v2186 = vsel %vm845, %v2184, %v2185
        %v2187 = vrot.slane %v1915, 1
        %v2188 = vrot.slane %v1916, 1
        %v2189 = vsel %vm845, %v2187, %v2188
        %v2190 = vrot.slane %v1917, 1
        %v2191 = vrot.slane %v1918, 1
        %v2192 = vsel %vm845, %v2190, %v2191
        %v2193 = vrot.slane %v1919, 1
        %v2194 = vrot.slane %v1920, 1
        %v2195 = vsel %vm845, %v2193, %v2194
        %v2196 = vrot.slane %v1921, 1
        %v2197 = vrot.slane %v1922, 1
        %v2198 = vsel %vm845, %v2196, %v2197
        %v2199 = vrot.slane %v1923, 1
        %v2200 = vrot.slane %v1924, 1
        %v2201 = vsel %vm845, %v2199, %v2200
        %v2202 = vrot.slane %v1925, 1
        %v2203 = vrot.slane %v1926, 1
        %v2204 = vsel %vm845, %v2202, %v2203
        %v2205 = vrot.slane %v1927, 1
        %v2206 = vrot.slane %v1928, 1
        %v2207 = vsel %vm845, %v2205, %v2206
        %v2208 = vrot.slane %v1929, 1
        %v2209 = vrot.slane %v1930, 1
        %v2210 = vsel %vm845, %v2208, %v2209
        %v2211 = vrot.slane %v1931, 1
        %v2212 = vrot.slane %v1932, 1
        %v2213 = vsel %vm845, %v2211, %v2212
        %v2214 = vrot.slane %v1933, 1
        %v2215 = vrot.slane %v1934, 1
        %v2216 = vsel %vm845, %v2214, %v2215
        %v2217 = vrot.slane %v1935, 1
        %v2218 = vrot.slane %v1936, 1
        %v2219 = vsel %vm845, %v2217, %v2218
        %v2220 = vrot.slane %v1937, 1
        %v2221 = vrot.slane %v1938, 1
        %v2222 = vsel %vm845, %v2220, %v2221
        %v2223 = vrot.slane %v1939, 1
        %v2224 = vrot.slane %v1940, 1
        %v2225 = vsel %vm845, %v2223, %v2224
        %v2226 = vrot.slane %v1941, 1
        %v2227 = vrot.slane %v1942, 1
        %v2228 = vsel %vm845, %v2226, %v2227
        %v2229 = vrot.slane %v1943, 1
        %v2230 = vrot.slane %v1944, 1
        %v2231 = vsel %vm845, %v2229, %v2230
        %v2232 = vrot.slane %v1945, 1
        %v2233 = vrot.slane %v1946, 1
        %v2234 = vsel %vm845, %v2232, %v2233
        %v2235 = vrot.slane %v1947, 1
        %v2236 = vrot.slane %v1948, 1
        %v2237 = vsel %vm845, %v2235, %v2236
        %v2238 = vrot.slane %v1949, 1
        %v2239 = vrot.slane %v1950, 1
        %v2240 = vsel %vm845, %v2238, %v2239
        %v2241 = vrot.slane %v1951, 1
        %v2242 = vrot.slane %v1952, 1
        %v2243 = vsel %vm845, %v2241, %v2242
        %v2244 = vrot.slane %v1953, 1
        %v2245 = vrot.slane %v1954, 1
        %v2246 = vsel %vm845, %v2244, %v2245
        %v2247 = vrot.slane %v1955, 1
        %v2248 = vrot.slane %v1956, 1
        %v2249 = vsel %vm845, %v2247, %v2248
        %v2250 = vrot.slane %v1957, 1
        %v2251 = vrot.slane %v1958, 1
        %v2252 = vsel %vm845, %v2250, %v2251
        %v2253 = vrot.slane %v1959, 1
        %v2254 = vrot.slane %v1960, 1
        %v2255 = vsel %vm845, %v2253, %v2254
        %v2256 = vrot.slane %v1961, 1
        %v2257 = vrot.slane %v1962, 1
        %v2258 = vsel %vm845, %v2256, %v2257
        %v2259 = vrot.slane %v1963, 1
        %v2260 = vrot.slane %v1964, 1
        %v2261 = vsel %vm845, %v2259, %v2260
        %v2262 = vrot.slane %v1965, 1
        %v2263 = vrot.slane %v1966, 1
        %v2264 = vsel %vm845, %v2262, %v2263
        %v2265 = vrot.slane %v1967, 1
        %v2266 = vrot.slane %v1968, 1
        %v2267 = vsel %vm845, %v2265, %v2266
        %v2268 = vrot.slane %v1969, 1
        %v2269 = vrot.slane %v1970, 1
        %v2270 = vsel %vm845, %v2268, %v2269
        %v2271 = vrot.slane %v1971, 1
        %v2272 = vrot.slane %v1972, 1
        %v2273 = vsel %vm845, %v2271, %v2272
        %v2274 = vrot.slane %v1973, 1
        %v2275 = vrot.slane %v1974, 1
        %v2276 = vsel %vm845, %v2274, %v2275
        %v2277 = vrot.slane %v1975, 1
        %v2278 = vrot.slane %v1976, 1
        %v2279 = vsel %vm845, %v2277, %v2278
        %v2280 = vrot.slane %v1977, 1
        %v2281 = vrot.slane %v1978, 1
        %v2282 = vsel %vm845, %v2280, %v2281
        %v2283 = vrot.slane %v1979, 1
        %v2284 = vrot.slane %v1980, 1
        %v2285 = vsel %vm845, %v2283, %v2284
        %v2286 = vrot.slane %v1981, 1
        %v2287 = vrot.slane %v1982, 1
        %v2288 = vsel %vm845, %v2286, %v2287
        %v2289 = vrot.slane %v1983, 1
        %v2290 = vrot.slane %v1984, 1
        %v2291 = vsel %vm845, %v2289, %v2290
        %v2292 = vrot.slane %v1985, 1
        %v2293 = vrot.slane %v1986, 1
        %v2294 = vsel %vm845, %v2292, %v2293
        %v2295 = vrot.slane %v1987, 1
        %v2296 = vrot.slane %v1988, 1
        %v2297 = vsel %vm845, %v2295, %v2296
        %v2298 = vrot.slane %v1989, 1
        %v2299 = vrot.slane %v1990, 1
        %v2300 = vsel %vm845, %v2298, %v2299
        %v2301 = vrot.slane %v1991, 1
        %v2302 = vrot.slane %v1992, 1
        %v2303 = vsel %vm845, %v2301, %v2302
        %v2304 = vrot.slane %v1993, 1
        %v2305 = vrot.slane %v1994, 1
        %v2306 = vsel %vm845, %v2304, %v2305
        %v2307 = vrot.slane %v1995, 1
        %v2308 = vrot.slane %v1996, 1
        %v2309 = vsel %vm845, %v2307, %v2308
        %v2310 = vrot.slane %v1997, 1
        %v2311 = vrot.slane %v1998, 1
        %v2312 = vsel %vm845, %v2310, %v2311
        %v2313 = vrot.slane %v1999, 1
        %v2314 = vrot.slane %v2000, 1
        %v2315 = vsel %vm845, %v2313, %v2314
        %v2316 = vrot.slane %v2001, 1
        %v2317 = vrot.slane %v2002, 1
        %v2318 = vsel %vm845, %v2316, %v2317
        %v2319 = vrot.slane %v2003, 1
        %v2320 = vrot.slane %v2004, 1
        %v2321 = vsel %vm845, %v2319, %v2320
        %v2322 = vrot.slane %v2005, 1
        %v2323 = vrot.slane %v2006, 1
        %v2324 = vsel %vm845, %v2322, %v2323
        %v2325 = vrot.slane %v2007, 1
        %v2326 = vrot.slane %v2008, 1
        %v2327 = vsel %vm845, %v2325, %v2326
        %v2328 = vrot.slane %v2009, 1
        %v2329 = vrot.slane %v2010, 1
        %v2330 = vsel %vm845, %v2328, %v2329
        %v2395 = vadd.f32 %v1815, %v2141
        %v2396 = vadd.f32 %v1816, %v2144
        %v2397 = vadd.f32 %v1817, %v2147
        %v2398 = vadd.f32 %v1818, %v2150
        %v2399 = vadd.f32 %v1819, %v2153
        %v2400 = vadd.f32 %v1820, %v2156
        %v2401 = vadd.f32 %v1821, %v2159
        %v2402 = vadd.f32 %v1822, %v2162
        %v2403 = vadd.f32 %v1823, %v2165
        %v2404 = vadd.f32 %v1824, %v2168
        %v2405 = vadd.f32 %v1825, %v2171
        %v2406 = vadd.f32 %v1826, %v2174
        %v2407 = vadd.f32 %v1827, %v2177
        %v2408 = vadd.f32 %v1828, %v2180
        %v2409 = vadd.f32 %v1829, %v2183
        %v2410 = vadd.f32 %v1830, %v2186
        %v2411 = vadd.f32 %v1831, %v2189
        %v2412 = vadd.f32 %v1832, %v2192
        %v2413 = vadd.f32 %v1833, %v2195
        %v2414 = vadd.f32 %v1834, %v2198
        %v2415 = vadd.f32 %v1835, %v2201
        %v2416 = vadd.f32 %v1836, %v2204
        %v2417 = vadd.f32 %v1837, %v2207
        %v2418 = vadd.f32 %v1838, %v2210
        %v2419 = vadd.f32 %v1839, %v2213
        %v2420 = vadd.f32 %v1840, %v2216
        %v2421 = vadd.f32 %v1841, %v2219
        %v2422 = vadd.f32 %v1842, %v2222
        %v2423 = vadd.f32 %v1843, %v2225
        %v2424 = vadd.f32 %v1844, %v2228
        %v2425 = vadd.f32 %v1845, %v2231
        %v2426 = vadd.f32 %v1846, %v2234
        %v2427 = vadd.f32 %v1847, %v2237
        %v2428 = vadd.f32 %v1848, %v2240
        %v2429 = vadd.f32 %v1849, %v2243
        %v2430 = vadd.f32 %v1850, %v2246
        %v2431 = vadd.f32 %v1851, %v2249
        %v2432 = vadd.f32 %v1852, %v2252
        %v2433 = vadd.f32 %v1853, %v2255
        %v2434 = vadd.f32 %v1854, %v2258
        %v2435 = vadd.f32 %v1855, %v2261
        %v2436 = vadd.f32 %v1856, %v2264
        %v2437 = vadd.f32 %v1857, %v2267
        %v2438 = vadd.f32 %v1858, %v2270
        %v2439 = vadd.f32 %v1859, %v2273
        %v2440 = vadd.f32 %v1860, %v2276
        %v2441 = vadd.f32 %v1861, %v2279
        %v2442 = vadd.f32 %v1862, %v2282
        %v2443 = vadd.f32 %v1863, %v2285
        %v2444 = vadd.f32 %v1864, %v2288
        %v2445 = vadd.f32 %v1865, %v2291
        %v2446 = vadd.f32 %v1866, %v2294
        %v2447 = vadd.f32 %v1867, %v2297
        %v2448 = vadd.f32 %v1868, %v2300
        %v2449 = vadd.f32 %v1869, %v2303
        %v2450 = vadd.f32 %v1870, %v2306
        %v2451 = vadd.f32 %v1871, %v2309
        %v2452 = vadd.f32 %v1872, %v2312
        %v2453 = vadd.f32 %v1873, %v2315
        %v2454 = vadd.f32 %v1874, %v2318
        %v2455 = vadd.f32 %v1875, %v2321
        %v2456 = vadd.f32 %v1876, %v2324
        %v2457 = vadd.f32 %v1877, %v2327
        %v2458 = vadd.f32 %v1878, %v2330
        %v2459 = vlaneseq
        %v2460 = vshrl.u32 %v2459, 7
        %v2461 = vsub.s32 2, %v2460
        %v2462 = vrot.slane %v445, %v2461
        %v2463 = vmul.f32 %v246, %v2462
        %v2464 = vmul.f32 %v247, %v2462
        %v2465 = vmul.f32 %v248, %v2462
        %v2466 = vmul.f32 %v249, %v2462
        %v2467 = vmul.f32 %v250, %v2462
        %v2468 = vmul.f32 %v251, %v2462
        %v2469 = vmul.f32 %v252, %v2462
        %v2470 = vmul.f32 %v253, %v2462
        %v2471 = vmul.f32 %v254, %v2462
        %v2472 = vmul.f32 %v255, %v2462
        %v2473 = vmul.f32 %v256, %v2462
        %v2474 = vmul.f32 %v257, %v2462
        %v2475 = vmul.f32 %v258, %v2462
        %v2476 = vmul.f32 %v259, %v2462
        %v2477 = vmul.f32 %v260, %v2462
        %v2478 = vmul.f32 %v261, %v2462
        %v2479 = vmul.f32 %v266, %v2462
        %v2480 = vmul.f32 %v267, %v2462
        %v2481 = vmul.f32 %v268, %v2462
        %v2482 = vmul.f32 %v269, %v2462
        %v2483 = vmul.f32 %v270, %v2462
        %v2484 = vmul.f32 %v271, %v2462
        %v2485 = vmul.f32 %v272, %v2462
        %v2486 = vmul.f32 %v273, %v2462
        %v2487 = vmul.f32 %v274, %v2462
        %v2488 = vmul.f32 %v275, %v2462
        %v2489 = vmul.f32 %v276, %v2462
        %v2490 = vmul.f32 %v277, %v2462
        %v2491 = vmul.f32 %v278, %v2462
        %v2492 = vmul.f32 %v279, %v2462
        %v2493 = vmul.f32 %v280, %v2462
        %v2494 = vmul.f32 %v281, %v2462
        %v2495 = vmul.f32 %v286, %v2462
        %v2496 = vmul.f32 %v287, %v2462
        %v2497 = vmul.f32 %v288, %v2462
        %v2498 = vmul.f32 %v289, %v2462
        %v2499 = vmul.f32 %v290, %v2462
        %v2500 = vmul.f32 %v291, %v2462
        %v2501 = vmul.f32 %v292, %v2462
        %v2502 = vmul.f32 %v293, %v2462
        %v2503 = vmul.f32 %v294, %v2462
        %v2504 = vmul.f32 %v295, %v2462
        %v2505 = vmul.f32 %v296, %v2462
        %v2506 = vmul.f32 %v297, %v2462
        %v2507 = vmul.f32 %v298, %v2462
        %v2508 = vmul.f32 %v299, %v2462
        %v2509 = vmul.f32 %v300, %v2462
        %v2510 = vmul.f32 %v301, %v2462
        %v2511 = vmul.f32 %v306, %v2462
        %v2512 = vmul.f32 %v307, %v2462
        %v2513 = vmul.f32 %v308, %v2462
        %v2514 = vmul.f32 %v309, %v2462
        %v2515 = vmul.f32 %v310, %v2462
        %v2516 = vmul.f32 %v311, %v2462
        %v2517 = vmul.f32 %v312, %v2462
        %v2518 = vmul.f32 %v313, %v2462
        %v2519 = vmul.f32 %v314, %v2462
        %v2520 = vmul.f32 %v315, %v2462
        %v2521 = vmul.f32 %v316, %v2462
        %v2522 = vmul.f32 %v317, %v2462
        %v2523 = vmul.f32 %v318, %v2462
        %v2524 = vmul.f32 %v319, %v2462
        %v2525 = vmul.f32 %v320, %v2462
        %v2526 = vmul.f32 %v321, %v2462
        %v2527 = vmul.f32 %v326, %v2462
        %v2528 = vmul.f32 %v327, %v2462
        %v2529 = vmul.f32 %v328, %v2462
        %v2530 = vmul.f32 %v329, %v2462
        %v2531 = vmul.f32 %v330, %v2462
        %v2532 = vmul.f32 %v331, %v2462
        %v2533 = vmul.f32 %v332, %v2462
        %v2534 = vmul.f32 %v333, %v2462
        %v2535 = vmul.f32 %v334, %v2462
        %v2536 = vmul.f32 %v335, %v2462
        %v2537 = vmul.f32 %v336, %v2462
        %v2538 = vmul.f32 %v337, %v2462
        %v2539 = vmul.f32 %v338, %v2462
        %v2540 = vmul.f32 %v339, %v2462
        %v2541 = vmul.f32 %v340, %v2462
        %v2542 = vmul.f32 %v341, %v2462
        %v2543 = vmul.f32 %v346, %v2462
        %v2544 = vmul.f32 %v347, %v2462
        %v2545 = vmul.f32 %v348, %v2462
        %v2546 = vmul.f32 %v349, %v2462
        %v2547 = vmul.f32 %v350, %v2462
        %v2548 = vmul.f32 %v351, %v2462
        %v2549 = vmul.f32 %v352, %v2462
        %v2550 = vmul.f32 %v353, %v2462
        %v2551 = vmul.f32 %v354, %v2462
        %v2552 = vmul.f32 %v355, %v2462
        %v2553 = vmul.f32 %v356, %v2462
        %v2554 = vmul.f32 %v357, %v2462
        %v2555 = vmul.f32 %v358, %v2462
        %v2556 = vmul.f32 %v359, %v2462
        %v2557 = vmul.f32 %v360, %v2462
        %v2558 = vmul.f32 %v361, %v2462
        %v2559 = vmul.f32 %v366, %v2462
        %v2560 = vmul.f32 %v367, %v2462
        %v2561 = vmul.f32 %v368, %v2462
        %v2562 = vmul.f32 %v369, %v2462
        %v2563 = vmul.f32 %v370, %v2462
        %v2564 = vmul.f32 %v371, %v2462
        %v2565 = vmul.f32 %v372, %v2462
        %v2566 = vmul.f32 %v373, %v2462
        %v2567 = vmul.f32 %v374, %v2462
        %v2568 = vmul.f32 %v375, %v2462
        %v2569 = vmul.f32 %v376, %v2462
        %v2570 = vmul.f32 %v377, %v2462
        %v2571 = vmul.f32 %v378, %v2462
        %v2572 = vmul.f32 %v379, %v2462
        %v2573 = vmul.f32 %v380, %v2462
        %v2574 = vmul.f32 %v381, %v2462
        %v2575 = vmul.f32 %v386, %v2462
        %v2576 = vmul.f32 %v387, %v2462
        %v2577 = vmul.f32 %v388, %v2462
        %v2578 = vmul.f32 %v389, %v2462
        %v2579 = vmul.f32 %v390, %v2462
        %v2580 = vmul.f32 %v391, %v2462
        %v2581 = vmul.f32 %v392, %v2462
        %v2582 = vmul.f32 %v393, %v2462
        %v2583 = vmul.f32 %v394, %v2462
        %v2584 = vmul.f32 %v395, %v2462
        %v2585 = vmul.f32 %v396, %v2462
        %v2586 = vmul.f32 %v397, %v2462
        %v2587 = vmul.f32 %v398, %v2462
        %v2588 = vmul.f32 %v399, %v2462
        %v2589 = vmul.f32 %v400, %v2462
        %v2590 = vmul.f32 %v401, %v2462
        %v2719 = vrot.slane %v2463, 2
        %v2720 = vrot.slane %v2464, 2
        %v2721 = vsel %vm1426, %v2719, %v2720
        %v2722 = vrot.slane %v2465, 2
        %v2723 = vrot.slane %v2466, 2
        %v2724 = vsel %vm1426, %v2722, %v2723
        %v2725 = vrot.slane %v2467, 2
        %v2726 = vrot.slane %v2468, 2
        %v2727 = vsel %vm1426, %v2725, %v2726
        %v2728 = vrot.slane %v2469, 2
        %v2729 = vrot.slane %v2470, 2
        %v2730 = vsel %vm1426, %v2728, %v2729
        %v2731 = vrot.slane %v2471, 2
        %v2732 = vrot.slane %v2472, 2
        %v2733 = vsel %vm1426, %v2731, %v2732
        %v2734 = vrot.slane %v2473, 2
        %v2735 = vrot.slane %v2474, 2
        %v2736 = vsel %vm1426, %v2734, %v2735
        %v2737 = vrot.slane %v2475, 2
        %v2738 = vrot.slane %v2476, 2
        %v2739 = vsel %vm1426, %v2737, %v2738
        %v2740 = vrot.slane %v2477, 2
        %v2741 = vrot.slane %v2478, 2
        %v2742 = vsel %vm1426, %v2740, %v2741
        %v2743 = vrot.slane %v2479, 2
        %v2744 = vrot.slane %v2480, 2
        %v2745 = vsel %vm1426, %v2743, %v2744
        %v2746 = vrot.slane %v2481, 2
        %v2747 = vrot.slane %v2482, 2
        %v2748 = vsel %vm1426, %v2746, %v2747
        %v2749 = vrot.slane %v2483, 2
        %v2750 = vrot.slane %v2484, 2
        %v2751 = vsel %vm1426, %v2749, %v2750
        %v2752 = vrot.slane %v2485, 2
        %v2753 = vrot.slane %v2486, 2
        %v2754 = vsel %vm1426, %v2752, %v2753
        %v2755 = vrot.slane %v2487, 2
        %v2756 = vrot.slane %v2488, 2
        %v2757 = vsel %vm1426, %v2755, %v2756
        %v2758 = vrot.slane %v2489, 2
        %v2759 = vrot.slane %v2490, 2
        %v2760 = vsel %vm1426, %v2758, %v2759
        %v2761 = vrot.slane %v2491, 2
        %v2762 = vrot.slane %v2492, 2
        %v2763 = vsel %vm1426, %v2761, %v2762
        %v2764 = vrot.slane %v2493, 2
        %v2765 = vrot.slane %v2494, 2
        %v2766 = vsel %vm1426, %v2764, %v2765
        %v2767 = vrot.slane %v2495, 2
        %v2768 = vrot.slane %v2496, 2
        %v2769 = vsel %vm1426, %v2767, %v2768
        %v2770 = vrot.slane %v2497, 2
        %v2771 = vrot.slane %v2498, 2
        %v2772 = vsel %vm1426, %v2770, %v2771
        %v2773 = vrot.slane %v2499, 2
        %v2774 = vrot.slane %v2500, 2
        %v2775 = vsel %vm1426, %v2773, %v2774
        %v2776 = vrot.slane %v2501, 2
        %v2777 = vrot.slane %v2502, 2
        %v2778 = vsel %vm1426, %v2776, %v2777
        %v2779 = vrot.slane %v2503, 2
        %v2780 = vrot.slane %v2504, 2
        %v2781 = vsel %vm1426, %v2779, %v2780
        %v2782 = vrot.slane %v2505, 2
        %v2783 = vrot.slane %v2506, 2
        %v2784 = vsel %vm1426, %v2782, %v2783
        %v2785 = vrot.slane %v2507, 2
        %v2786 = vrot.slane %v2508, 2
        %v2787 = vsel %vm1426, %v2785, %v2786
        %v2788 = vrot.slane %v2509, 2
        %v2789 = vrot.slane %v2510, 2
        %v2790 = vsel %vm1426, %v2788, %v2789
        %v2791 = vrot.slane %v2511, 2
        %v2792 = vrot.slane %v2512, 2
        %v2793 = vsel %vm1426, %v2791, %v2792
        %v2794 = vrot.slane %v2513, 2
        %v2795 = vrot.slane %v2514, 2
        %v2796 = vsel %vm1426, %v2794, %v2795
        %v2797 = vrot.slane %v2515, 2
        %v2798 = vrot.slane %v2516, 2
        %v2799 = vsel %vm1426, %v2797, %v2798
        %v2800 = vrot.slane %v2517, 2
        %v2801 = vrot.slane %v2518, 2
        %v2802 = vsel %vm1426, %v2800, %v2801
        %v2803 = vrot.slane %v2519, 2
        %v2804 = vrot.slane %v2520, 2
        %v2805 = vsel %vm1426, %v2803, %v2804
        %v2806 = vrot.slane %v2521, 2
        %v2807 = vrot.slane %v2522, 2
        %v2808 = vsel %vm1426, %v2806, %v2807
        %v2809 = vrot.slane %v2523, 2
        %v2810 = vrot.slane %v2524, 2
        %v2811 = vsel %vm1426, %v2809, %v2810
        %v2812 = vrot.slane %v2525, 2
        %v2813 = vrot.slane %v2526, 2
        %v2814 = vsel %vm1426, %v2812, %v2813
        %v2815 = vrot.slane %v2527, 2
        %v2816 = vrot.slane %v2528, 2
        %v2817 = vsel %vm1426, %v2815, %v2816
        %v2818 = vrot.slane %v2529, 2
        %v2819 = vrot.slane %v2530, 2
        %v2820 = vsel %vm1426, %v2818, %v2819
        %v2821 = vrot.slane %v2531, 2
        %v2822 = vrot.slane %v2532, 2
        %v2823 = vsel %vm1426, %v2821, %v2822
        %v2824 = vrot.slane %v2533, 2
        %v2825 = vrot.slane %v2534, 2
        %v2826 = vsel %vm1426, %v2824, %v2825
        %v2827 = vrot.slane %v2535, 2
        %v2828 = vrot.slane %v2536, 2
        %v2829 = vsel %vm1426, %v2827, %v2828
        %v2830 = vrot.slane %v2537, 2
        %v2831 = vrot.slane %v2538, 2
        %v2832 = vsel %vm1426, %v2830, %v2831
        %v2833 = vrot.slane %v2539, 2
        %v2834 = vrot.slane %v2540, 2
        %v2835 = vsel %vm1426, %v2833, %v2834
        %v2836 = vrot.slane %v2541, 2
        %v2837 = vrot.slane %v2542, 2
        %v2838 = vsel %vm1426, %v2836, %v2837
        %v2839 = vrot.slane %v2543, 2
        %v2840 = vrot.slane %v2544, 2
        %v2841 = vsel %vm1426, %v2839, %v2840
        %v2842 = vrot.slane %v2545, 2
        %v2843 = vrot.slane %v2546, 2
        %v2844 = vsel %vm1426, %v2842, %v2843
        %v2845 = vrot.slane %v2547, 2
        %v2846 = vrot.slane %v2548, 2
        %v2847 = vsel %vm1426, %v2845, %v2846
        %v2848 = vrot.slane %v2549, 2
        %v2849 = vrot.slane %v2550, 2
        %v2850 = vsel %vm1426, %v2848, %v2849
        %v2851 = vrot.slane %v2551, 2
        %v2852 = vrot.slane %v2552, 2
        %v2853 = vsel %vm1426, %v2851, %v2852
        %v2854 = vrot.slane %v2553, 2
        %v2855 = vrot.slane %v2554, 2
        %v2856 = vsel %vm1426, %v2854, %v2855
        %v2857 = vrot.slane %v2555, 2
        %v2858 = vrot.slane %v2556, 2
        %v2859 = vsel %vm1426, %v2857, %v2858
        %v2860 = vrot.slane %v2557, 2
        %v2861 = vrot.slane %v2558, 2
        %v2862 = vsel %vm1426, %v2860, %v2861
        %v2863 = vrot.slane %v2559, 2
        %v2864 = vrot.slane %v2560, 2
        %v2865 = vsel %vm1426, %v2863, %v2864
        %v2866 = vrot.slane %v2561, 2
        %v2867 = vrot.slane %v2562, 2
        %v2868 = vsel %vm1426, %v2866, %v2867
        %v2869 = vrot.slane %v2563, 2
        %v2870 = vrot.slane %v2564, 2
        %v2871 = vsel %vm1426, %v2869, %v2870
        %v2872 = vrot.slane %v2565, 2
        %v2873 = vrot.slane %v2566, 2
        %v2874 = vsel %vm1426, %v2872, %v2873
        %v2875 = vrot.slane %v2567, 2
        %v2876 = vrot.slane %v2568, 2
        %v2877 = vsel %vm1426, %v2875, %v2876
        %v2878 = vrot.slane %v2569, 2
        %v2879 = vrot.slane %v2570, 2
        %v2880 = vsel %vm1426, %v2878, %v2879
        %v2881 = vrot.slane %v2571, 2
        %v2882 = vrot.slane %v2572, 2
        %v2883 = vsel %vm1426, %v2881, %v2882
        %v2884 = vrot.slane %v2573, 2
        %v2885 = vrot.slane %v2574, 2
        %v2886 = vsel %vm1426, %v2884, %v2885
        %v2887 = vrot.slane %v2575, 2
        %v2888 = vrot.slane %v2576, 2
        %v2889 = vsel %vm1426, %v2887, %v2888
        %v2890 = vrot.slane %v2577, 2
        %v2891 = vrot.slane %v2578, 2
        %v2892 = vsel %vm1426, %v2890, %v2891
        %v2893 = vrot.slane %v2579, 2
        %v2894 = vrot.slane %v2580, 2
        %v2895 = vsel %vm1426, %v2893, %v2894
        %v2896 = vrot.slane %v2581, 2
        %v2897 = vrot.slane %v2582, 2
        %v2898 = vsel %vm1426, %v2896, %v2897
        %v2899 = vrot.slane %v2583, 2
        %v2900 = vrot.slane %v2584, 2
        %v2901 = vsel %vm1426, %v2899, %v2900
        %v2902 = vrot.slane %v2585, 2
        %v2903 = vrot.slane %v2586, 2
        %v2904 = vsel %vm1426, %v2902, %v2903
        %v2905 = vrot.slane %v2587, 2
        %v2906 = vrot.slane %v2588, 2
        %v2907 = vsel %vm1426, %v2905, %v2906
        %v2908 = vrot.slane %v2589, 2
        %v2909 = vrot.slane %v2590, 2
        %v2910 = vsel %vm1426, %v2908, %v2909
        %v2975 = vadd.f32 %v2395, %v2721
        %v2976 = vadd.f32 %v2396, %v2724
        %v2977 = vadd.f32 %v2397, %v2727
        %v2978 = vadd.f32 %v2398, %v2730
        %v2979 = vadd.f32 %v2399, %v2733
        %v2980 = vadd.f32 %v2400, %v2736
        %v2981 = vadd.f32 %v2401, %v2739
        %v2982 = vadd.f32 %v2402, %v2742
        %v2983 = vadd.f32 %v2403, %v2745
        %v2984 = vadd.f32 %v2404, %v2748
        %v2985 = vadd.f32 %v2405, %v2751
        %v2986 = vadd.f32 %v2406, %v2754
        %v2987 = vadd.f32 %v2407, %v2757
        %v2988 = vadd.f32 %v2408, %v2760
        %v2989 = vadd.f32 %v2409, %v2763
        %v2990 = vadd.f32 %v2410, %v2766
        %v2991 = vadd.f32 %v2411, %v2769
        %v2992 = vadd.f32 %v2412, %v2772
        %v2993 = vadd.f32 %v2413, %v2775
        %v2994 = vadd.f32 %v2414, %v2778
        %v2995 = vadd.f32 %v2415, %v2781
        %v2996 = vadd.f32 %v2416, %v2784
        %v2997 = vadd.f32 %v2417, %v2787
        %v2998 = vadd.f32 %v2418, %v2790
        %v2999 = vadd.f32 %v2419, %v2793
        %v3000 = vadd.f32 %v2420, %v2796
        %v3001 = vadd.f32 %v2421, %v2799
        %v3002 = vadd.f32 %v2422, %v2802
        %v3003 = vadd.f32 %v2423, %v2805
        %v3004 = vadd.f32 %v2424, %v2808
        %v3005 = vadd.f32 %v2425, %v2811
        %v3006 = vadd.f32 %v2426, %v2814
        %v3007 = vadd.f32 %v2427, %v2817
        %v3008 = vadd.f32 %v2428, %v2820
        %v3009 = vadd.f32 %v2429, %v2823
        %v3010 = vadd.f32 %v2430, %v2826
        %v3011 = vadd.f32 %v2431, %v2829
        %v3012 = vadd.f32 %v2432, %v2832
        %v3013 = vadd.f32 %v2433, %v2835
        %v3014 = vadd.f32 %v2434, %v2838
        %v3015 = vadd.f32 %v2435, %v2841
        %v3016 = vadd.f32 %v2436, %v2844
        %v3017 = vadd.f32 %v2437, %v2847
        %v3018 = vadd.f32 %v2438, %v2850
        %v3019 = vadd.f32 %v2439, %v2853
        %v3020 = vadd.f32 %v2440, %v2856
        %v3021 = vadd.f32 %v2441, %v2859
        %v3022 = vadd.f32 %v2442, %v2862
        %v3023 = vadd.f32 %v2443, %v2865
        %v3024 = vadd.f32 %v2444, %v2868
        %v3025 = vadd.f32 %v2445, %v2871
        %v3026 = vadd.f32 %v2446, %v2874
        %v3027 = vadd.f32 %v2447, %v2877
        %v3028 = vadd.f32 %v2448, %v2880
        %v3029 = vadd.f32 %v2449, %v2883
        %v3030 = vadd.f32 %v2450, %v2886
        %v3031 = vadd.f32 %v2451, %v2889
        %v3032 = vadd.f32 %v2452, %v2892
        %v3033 = vadd.f32 %v2453, %v2895
        %v3034 = vadd.f32 %v2454, %v2898
        %v3035 = vadd.f32 %v2455, %v2901
        %v3036 = vadd.f32 %v2456, %v2904
        %v3037 = vadd.f32 %v2457, %v2907
        %v3038 = vadd.f32 %v2458, %v2910
        %v3039 = vlaneseq
        %v3040 = vshrl.u32 %v3039, 7
        %v3041 = vsub.s32 0, %v3040
        %v3042 = vrot.slane %v446, %v3041
        %v3043 = vmul.f32 %v248, %v3042
        %v3044 = vmul.f32 %v250, %v3042
        %v3045 = vmul.f32 %v252, %v3042
        %v3046 = vmul.f32 %v254, %v3042
        %v3047 = vmul.f32 %v256, %v3042
        %v3048 = vmul.f32 %v258, %v3042
        %v3049 = vmul.f32 %v260, %v3042
        %v3050 = vmul.f32 %v262, %v3042
        %v3051 = vmul.f32 %v268, %v3042
        %v3052 = vmul.f32 %v270, %v3042
        %v3053 = vmul.f32 %v272, %v3042
        %v3054 = vmul.f32 %v274, %v3042
        %v3055 = vmul.f32 %v276, %v3042
        %v3056 = vmul.f32 %v278, %v3042
        %v3057 = vmul.f32 %v280, %v3042
        %v3058 = vmul.f32 %v282, %v3042
        %v3059 = vmul.f32 %v288, %v3042
        %v3060 = vmul.f32 %v290, %v3042
        %v3061 = vmul.f32 %v292, %v3042
        %v3062 = vmul.f32 %v294, %v3042
        %v3063 = vmul.f32 %v296, %v3042
        %v3064 = vmul.f32 %v298, %v3042
        %v3065 = vmul.f32 %v300, %v3042
        %v3066 = vmul.f32 %v302, %v3042
        %v3067 = vmul.f32 %v308, %v3042
        %v3068 = vmul.f32 %v310, %v3042
        %v3069 = vmul.f32 %v312, %v3042
        %v3070 = vmul.f32 %v314, %v3042
        %v3071 = vmul.f32 %v316, %v3042
        %v3072 = vmul.f32 %v318, %v3042
        %v3073 = vmul.f32 %v320, %v3042
        %v3074 = vmul.f32 %v322, %v3042
        %v3075 = vmul.f32 %v328, %v3042
        %v3076 = vmul.f32 %v330, %v3042
        %v3077 = vmul.f32 %v332, %v3042
        %v3078 = vmul.f32 %v334, %v3042
        %v3079 = vmul.f32 %v336, %v3042
        %v3080 = vmul.f32 %v338, %v3042
        %v3081 = vmul.f32 %v340, %v3042
        %v3082 = vmul.f32 %v342, %v3042
        %v3083 = vmul.f32 %v348, %v3042
        %v3084 = vmul.f32 %v350, %v3042
        %v3085 = vmul.f32 %v352, %v3042
        %v3086 = vmul.f32 %v354, %v3042
        %v3087 = vmul.f32 %v356, %v3042
        %v3088 = vmul.f32 %v358, %v3042
        %v3089 = vmul.f32 %v360, %v3042
        %v3090 = vmul.f32 %v362, %v3042
        %v3091 = vmul.f32 %v368, %v3042
        %v3092 = vmul.f32 %v370, %v3042
        %v3093 = vmul.f32 %v372, %v3042
        %v3094 = vmul.f32 %v374, %v3042
        %v3095 = vmul.f32 %v376, %v3042
        %v3096 = vmul.f32 %v378, %v3042
        %v3097 = vmul.f32 %v380, %v3042
        %v3098 = vmul.f32 %v382, %v3042
        %v3099 = vmul.f32 %v388, %v3042
        %v3100 = vmul.f32 %v390, %v3042
        %v3101 = vmul.f32 %v392, %v3042
        %v3102 = vmul.f32 %v394, %v3042
        %v3103 = vmul.f32 %v396, %v3042
        %v3104 = vmul.f32 %v398, %v3042
        %v3105 = vmul.f32 %v400, %v3042
        %v3106 = vmul.f32 %v402, %v3042
        %v3107 = vadd.f32 %v2975, %v3043
        %v3108 = vadd.f32 %v2976, %v3044
        %v3109 = vadd.f32 %v2977, %v3045
        %v3110 = vadd.f32 %v2978, %v3046
        %v3111 = vadd.f32 %v2979, %v3047
        %v3112 = vadd.f32 %v2980, %v3048
        %v3113 = vadd.f32 %v2981, %v3049
        %v3114 = vadd.f32 %v2982, %v3050
        %v3115 = vadd.f32 %v2983, %v3051
        %v3116 = vadd.f32 %v2984, %v3052
        %v3117 = vadd.f32 %v2985, %v3053
        %v3118 = vadd.f32 %v2986, %v3054
        %v3119 = vadd.f32 %v2987, %v3055
        %v3120 = vadd.f32 %v2988, %v3056
        %v3121 = vadd.f32 %v2989, %v3057
        %v3122 = vadd.f32 %v2990, %v3058
        %v3123 = vadd.f32 %v2991, %v3059
        %v3124 = vadd.f32 %v2992, %v3060
        %v3125 = vadd.f32 %v2993, %v3061
        %v3126 = vadd.f32 %v2994, %v3062
        %v3127 = vadd.f32 %v2995, %v3063
        %v3128 = vadd.f32 %v2996, %v3064
        %v3129 = vadd.f32 %v2997, %v3065
        %v3130 = vadd.f32 %v2998, %v3066
        %v3131 = vadd.f32 %v2999, %v3067
        %v3132 = vadd.f32 %v3000, %v3068
        %v3133 = vadd.f32 %v3001, %v3069
        %v3134 = vadd.f32 %v3002, %v3070
        %v3135 = vadd.f32 %v3003, %v3071
        %v3136 = vadd.f32 %v3004, %v3072
        %v3137 = vadd.f32 %v3005, %v3073
        %v3138 = vadd.f32 %v3006, %v3074
        %v3139 = vadd.f32 %v3007, %v3075
        %v3140 = vadd.f32 %v3008, %v3076
        %v3141 = vadd.f32 %v3009, %v3077
        %v3142 = vadd.f32 %v3010, %v3078
        %v3143 = vadd.f32 %v3011, %v3079
        %v3144 = vadd.f32 %v3012, %v3080
        %v3145 = vadd.f32 %v3013, %v3081
        %v3146 = vadd.f32 %v3014, %v3082
        %v3147 = vadd.f32 %v3015, %v3083
        %v3148 = vadd.f32 %v3016, %v3084
        %v3149 = vadd.f32 %v3017, %v3085
        %v3150 = vadd.f32 %v3018, %v3086
        %v3151 = vadd.f32 %v3019, %v3087
        %v3152 = vadd.f32 %v3020, %v3088
        %v3153 = vadd.f32 %v3021, %v3089
        %v3154 = vadd.f32 %v3022, %v3090
        %v3155 = vadd.f32 %v3023, %v3091
        %v3156 = vadd.f32 %v3024, %v3092
        %v3157 = vadd.f32 %v3025, %v3093
        %v3158 = vadd.f32 %v3026, %v3094
        %v3159 = vadd.f32 %v3027, %v3095
        %v3160 = vadd.f32 %v3028, %v3096
        %v3161 = vadd.f32 %v3029, %v3097
        %v3162 = vadd.f32 %v3030, %v3098
        %v3163 = vadd.f32 %v3031, %v3099
        %v3164 = vadd.f32 %v3032, %v3100
        %v3165 = vadd.f32 %v3033, %v3101
        %v3166 = vadd.f32 %v3034, %v3102
        %v3167 = vadd.f32 %v3035, %v3103
        %v3168 = vadd.f32 %v3036, %v3104
        %v3169 = vadd.f32 %v3037, %v3105
        %v3170 = vadd.f32 %v3038, %v3106
        %v3171 = vlaneseq
        %v3172 = vshrl.u32 %v3171, 7
        %v3173 = vsub.s32 1, %v3172
        %v3174 = vrot.slane %v446, %v3173
        %v3175 = vmul.f32 %v248, %v3174
        %v3176 = vmul.f32 %v249, %v3174
        %v3177 = vmul.f32 %v250, %v3174
        %v3178 = vmul.f32 %v251, %v3174
        %v3179 = vmul.f32 %v252, %v3174
        %v3180 = vmul.f32 %v253, %v3174
        %v3181 = vmul.f32 %v254, %v3174
        %v3182 = vmul.f32 %v255, %v3174
        %v3183 = vmul.f32 %v256, %v3174
        %v3184 = vmul.f32 %v257, %v3174
        %v3185 = vmul.f32 %v258, %v3174
        %v3186 = vmul.f32 %v259, %v3174
        %v3187 = vmul.f32 %v260, %v3174
        %v3188 = vmul.f32 %v261, %v3174
        %v3189 = vmul.f32 %v262, %v3174
        %v3190 = vmul.f32 %v263, %v3174
        %v3191 = vmul.f32 %v268, %v3174
        %v3192 = vmul.f32 %v269, %v3174
        %v3193 = vmul.f32 %v270, %v3174
        %v3194 = vmul.f32 %v271, %v3174
        %v3195 = vmul.f32 %v272, %v3174
        %v3196 = vmul.f32 %v273, %v3174
        %v3197 = vmul.f32 %v274, %v3174
        %v3198 = vmul.f32 %v275, %v3174
        %v3199 = vmul.f32 %v276, %v3174
        %v3200 = vmul.f32 %v277, %v3174
        %v3201 = vmul.f32 %v278, %v3174
        %v3202 = vmul.f32 %v279, %v3174
        %v3203 = vmul.f32 %v280, %v3174
        %v3204 = vmul.f32 %v281, %v3174
        %v3205 = vmul.f32 %v282, %v3174
        %v3206 = vmul.f32 %v283, %v3174
        %v3207 = vmul.f32 %v288, %v3174
        %v3208 = vmul.f32 %v289, %v3174
        %v3209 = vmul.f32 %v290, %v3174
        %v3210 = vmul.f32 %v291, %v3174
        %v3211 = vmul.f32 %v292, %v3174
        %v3212 = vmul.f32 %v293, %v3174
        %v3213 = vmul.f32 %v294, %v3174
        %v3214 = vmul.f32 %v295, %v3174
        %v3215 = vmul.f32 %v296, %v3174
        %v3216 = vmul.f32 %v297, %v3174
        %v3217 = vmul.f32 %v298, %v3174
        %v3218 = vmul.f32 %v299, %v3174
        %v3219 = vmul.f32 %v300, %v3174
        %v3220 = vmul.f32 %v301, %v3174
        %v3221 = vmul.f32 %v302, %v3174
        %v3222 = vmul.f32 %v303, %v3174
        %v3223 = vmul.f32 %v308, %v3174
        %v3224 = vmul.f32 %v309, %v3174
        %v3225 = vmul.f32 %v310, %v3174
        %v3226 = vmul.f32 %v311, %v3174
        %v3227 = vmul.f32 %v312, %v3174
        %v3228 = vmul.f32 %v313, %v3174
        %v3229 = vmul.f32 %v314, %v3174
        %v3230 = vmul.f32 %v315, %v3174
        %v3231 = vmul.f32 %v316, %v3174
        %v3232 = vmul.f32 %v317, %v3174
        %v3233 = vmul.f32 %v318, %v3174
        %v3234 = vmul.f32 %v319, %v3174
        %v3235 = vmul.f32 %v320, %v3174
        %v3236 = vmul.f32 %v321, %v3174
        %v3237 = vmul.f32 %v322, %v3174
        %v3238 = vmul.f32 %v323, %v3174
        %v3239 = vmul.f32 %v328, %v3174
        %v3240 = vmul.f32 %v329, %v3174
        %v3241 = vmul.f32 %v330, %v3174
        %v3242 = vmul.f32 %v331, %v3174
        %v3243 = vmul.f32 %v332, %v3174
        %v3244 = vmul.f32 %v333, %v3174
        %v3245 = vmul.f32 %v334, %v3174
        %v3246 = vmul.f32 %v335, %v3174
        %v3247 = vmul.f32 %v336, %v3174
        %v3248 = vmul.f32 %v337, %v3174
        %v3249 = vmul.f32 %v338, %v3174
        %v3250 = vmul.f32 %v339, %v3174
        %v3251 = vmul.f32 %v340, %v3174
        %v3252 = vmul.f32 %v341, %v3174
        %v3253 = vmul.f32 %v342, %v3174
        %v3254 = vmul.f32 %v343, %v3174
        %v3255 = vmul.f32 %v348, %v3174
        %v3256 = vmul.f32 %v349, %v3174
        %v3257 = vmul.f32 %v350, %v3174
        %v3258 = vmul.f32 %v351, %v3174
        %v3259 = vmul.f32 %v352, %v3174
        %v3260 = vmul.f32 %v353, %v3174
        %v3261 = vmul.f32 %v354, %v3174
        %v3262 = vmul.f32 %v355, %v3174
        %v3263 = vmul.f32 %v356, %v3174
        %v3264 = vmul.f32 %v357, %v3174
        %v3265 = vmul.f32 %v358, %v3174
        %v3266 = vmul.f32 %v359, %v3174
        %v3267 = vmul.f32 %v360, %v3174
        %v3268 = vmul.f32 %v361, %v3174
        %v3269 = vmul.f32 %v362, %v3174
        %v3270 = vmul.f32 %v363, %v3174
        %v3271 = vmul.f32 %v368, %v3174
        %v3272 = vmul.f32 %v369, %v3174
        %v3273 = vmul.f32 %v370, %v3174
        %v3274 = vmul.f32 %v371, %v3174
        %v3275 = vmul.f32 %v372, %v3174
        %v3276 = vmul.f32 %v373, %v3174
        %v3277 = vmul.f32 %v374, %v3174
        %v3278 = vmul.f32 %v375, %v3174
        %v3279 = vmul.f32 %v376, %v3174
        %v3280 = vmul.f32 %v377, %v3174
        %v3281 = vmul.f32 %v378, %v3174
        %v3282 = vmul.f32 %v379, %v3174
        %v3283 = vmul.f32 %v380, %v3174
        %v3284 = vmul.f32 %v381, %v3174
        %v3285 = vmul.f32 %v382, %v3174
        %v3286 = vmul.f32 %v383, %v3174
        %v3287 = vmul.f32 %v388, %v3174
        %v3288 = vmul.f32 %v389, %v3174
        %v3289 = vmul.f32 %v390, %v3174
        %v3290 = vmul.f32 %v391, %v3174
        %v3291 = vmul.f32 %v392, %v3174
        %v3292 = vmul.f32 %v393, %v3174
        %v3293 = vmul.f32 %v394, %v3174
        %v3294 = vmul.f32 %v395, %v3174
        %v3295 = vmul.f32 %v396, %v3174
        %v3296 = vmul.f32 %v397, %v3174
        %v3297 = vmul.f32 %v398, %v3174
        %v3298 = vmul.f32 %v399, %v3174
        %v3299 = vmul.f32 %v400, %v3174
        %v3300 = vmul.f32 %v401, %v3174
        %v3301 = vmul.f32 %v402, %v3174
        %v3302 = vmul.f32 %v403, %v3174
        %v3431 = vrot.slane %v3175, 1
        %v3432 = vrot.slane %v3176, 1
        %v3433 = vsel %vm845, %v3431, %v3432
        %v3434 = vrot.slane %v3177, 1
        %v3435 = vrot.slane %v3178, 1
        %v3436 = vsel %vm845, %v3434, %v3435
        %v3437 = vrot.slane %v3179, 1
        %v3438 = vrot.slane %v3180, 1
        %v3439 = vsel %vm845, %v3437, %v3438
        %v3440 = vrot.slane %v3181, 1
        %v3441 = vrot.slane %v3182, 1
        %v3442 = vsel %vm845, %v3440, %v3441
        %v3443 = vrot.slane %v3183, 1
        %v3444 = vrot.slane %v3184, 1
        %v3445 = vsel %vm845, %v3443, %v3444
        %v3446 = vrot.slane %v3185, 1
        %v3447 = vrot.slane %v3186, 1
        %v3448 = vsel %vm845, %v3446, %v3447
        %v3449 = vrot.slane %v3187, 1
        %v3450 = vrot.slane %v3188, 1
        %v3451 = vsel %vm845, %v3449, %v3450
        %v3452 = vrot.slane %v3189, 1
        %v3453 = vrot.slane %v3190, 1
        %v3454 = vsel %vm845, %v3452, %v3453
        %v3455 = vrot.slane %v3191, 1
        %v3456 = vrot.slane %v3192, 1
        %v3457 = vsel %vm845, %v3455, %v3456
        %v3458 = vrot.slane %v3193, 1
        %v3459 = vrot.slane %v3194, 1
        %v3460 = vsel %vm845, %v3458, %v3459
        %v3461 = vrot.slane %v3195, 1
        %v3462 = vrot.slane %v3196, 1
        %v3463 = vsel %vm845, %v3461, %v3462
        %v3464 = vrot.slane %v3197, 1
        %v3465 = vrot.slane %v3198, 1
        %v3466 = vsel %vm845, %v3464, %v3465
        %v3467 = vrot.slane %v3199, 1
        %v3468 = vrot.slane %v3200, 1
        %v3469 = vsel %vm845, %v3467, %v3468
        %v3470 = vrot.slane %v3201, 1
        %v3471 = vrot.slane %v3202, 1
        %v3472 = vsel %vm845, %v3470, %v3471
        %v3473 = vrot.slane %v3203, 1
        %v3474 = vrot.slane %v3204, 1
        %v3475 = vsel %vm845, %v3473, %v3474
        %v3476 = vrot.slane %v3205, 1
        %v3477 = vrot.slane %v3206, 1
        %v3478 = vsel %vm845, %v3476, %v3477
        %v3479 = vrot.slane %v3207, 1
        %v3480 = vrot.slane %v3208, 1
        %v3481 = vsel %vm845, %v3479, %v3480
        %v3482 = vrot.slane %v3209, 1
        %v3483 = vrot.slane %v3210, 1
        %v3484 = vsel %vm845, %v3482, %v3483
        %v3485 = vrot.slane %v3211, 1
        %v3486 = vrot.slane %v3212, 1
        %v3487 = vsel %vm845, %v3485, %v3486
        %v3488 = vrot.slane %v3213, 1
        %v3489 = vrot.slane %v3214, 1
        %v3490 = vsel %vm845, %v3488, %v3489
        %v3491 = vrot.slane %v3215, 1
        %v3492 = vrot.slane %v3216, 1
        %v3493 = vsel %vm845, %v3491, %v3492
        %v3494 = vrot.slane %v3217, 1
        %v3495 = vrot.slane %v3218, 1
        %v3496 = vsel %vm845, %v3494, %v3495
        %v3497 = vrot.slane %v3219, 1
        %v3498 = vrot.slane %v3220, 1
        %v3499 = vsel %vm845, %v3497, %v3498
        %v3500 = vrot.slane %v3221, 1
        %v3501 = vrot.slane %v3222, 1
        %v3502 = vsel %vm845, %v3500, %v3501
        %v3503 = vrot.slane %v3223, 1
        %v3504 = vrot.slane %v3224, 1
        %v3505 = vsel %vm845, %v3503, %v3504
        %v3506 = vrot.slane %v3225, 1
        %v3507 = vrot.slane %v3226, 1
        %v3508 = vsel %vm845, %v3506, %v3507
        %v3509 = vrot.slane %v3227, 1
        %v3510 = vrot.slane %v3228, 1
        %v3511 = vsel %vm845, %v3509, %v3510
        %v3512 = vrot.slane %v3229, 1
        %v3513 = vrot.slane %v3230, 1
        %v3514 = vsel %vm845, %v3512, %v3513
        %v3515 = vrot.slane %v3231, 1
        %v3516 = vrot.slane %v3232, 1
        %v3517 = vsel %vm845, %v3515, %v3516
        %v3518 = vrot.slane %v3233, 1
        %v3519 = vrot.slane %v3234, 1
        %v3520 = vsel %vm845, %v3518, %v3519
        %v3521 = vrot.slane %v3235, 1
        %v3522 = vrot.slane %v3236, 1
        %v3523 = vsel %vm845, %v3521, %v3522
        %v3524 = vrot.slane %v3237, 1
        %v3525 = vrot.slane %v3238, 1
        %v3526 = vsel %vm845, %v3524, %v3525
        %v3527 = vrot.slane %v3239, 1
        %v3528 = vrot.slane %v3240, 1
        %v3529 = vsel %vm845, %v3527, %v3528
        %v3530 = vrot.slane %v3241, 1
        %v3531 = vrot.slane %v3242, 1
        %v3532 = vsel %vm845, %v3530, %v3531
        %v3533 = vrot.slane %v3243, 1
        %v3534 = vrot.slane %v3244, 1
        %v3535 = vsel %vm845, %v3533, %v3534
        %v3536 = vrot.slane %v3245, 1
        %v3537 = vrot.slane %v3246, 1
        %v3538 = vsel %vm845, %v3536, %v3537
        %v3539 = vrot.slane %v3247, 1
        %v3540 = vrot.slane %v3248, 1
        %v3541 = vsel %vm845, %v3539, %v3540
        %v3542 = vrot.slane %v3249, 1
        %v3543 = vrot.slane %v3250, 1
        %v3544 = vsel %vm845, %v3542, %v3543
        %v3545 = vrot.slane %v3251, 1
        %v3546 = vrot.slane %v3252, 1
        %v3547 = vsel %vm845, %v3545, %v3546
        %v3548 = vrot.slane %v3253, 1
        %v3549 = vrot.slane %v3254, 1
        %v3550 = vsel %vm845, %v3548, %v3549
        %v3551 = vrot.slane %v3255, 1
        %v3552 = vrot.slane %v3256, 1
        %v3553 = vsel %vm845, %v3551, %v3552
        %v3554 = vrot.slane %v3257, 1
        %v3555 = vrot.slane %v3258, 1
        %v3556 = vsel %vm845, %v3554, %v3555
        %v3557 = vrot.slane %v3259, 1
        %v3558 = vrot.slane %v3260, 1
        %v3559 = vsel %vm845, %v3557, %v3558
        %v3560 = vrot.slane %v3261, 1
        %v3561 = vrot.slane %v3262, 1
        %v3562 = vsel %vm845, %v3560, %v3561
        %v3563 = vrot.slane %v3263, 1
        %v3564 = vrot.slane %v3264, 1
        %v3565 = vsel %vm845, %v3563, %v3564
        %v3566 = vrot.slane %v3265, 1
        %v3567 = vrot.slane %v3266, 1
        %v3568 = vsel %vm845, %v3566, %v3567
        %v3569 = vrot.slane %v3267, 1
        %v3570 = vrot.slane %v3268, 1
        %v3571 = vsel %vm845, %v3569, %v3570
        %v3572 = vrot.slane %v3269, 1
        %v3573 = vrot.slane %v3270, 1
        %v3574 = vsel %vm845, %v3572, %v3573
        %v3575 = vrot.slane %v3271, 1
        %v3576 = vrot.slane %v3272, 1
        %v3577 = vsel %vm845, %v3575, %v3576
        %v3578 = vrot.slane %v3273, 1
        %v3579 = vrot.slane %v3274, 1
        %v3580 = vsel %vm845, %v3578, %v3579
        %v3581 = vrot.slane %v3275, 1
        %v3582 = vrot.slane %v3276, 1
        %v3583 = vsel %vm845, %v3581, %v3582
        %v3584 = vrot.slane %v3277, 1
        %v3585 = vrot.slane %v3278, 1
        %v3586 = vsel %vm845, %v3584, %v3585
        %v3587 = vrot.slane %v3279, 1
        %v3588 = vrot.slane %v3280, 1
        %v3589 = vsel %vm845, %v3587, %v3588
        %v3590 = vrot.slane %v3281, 1
        %v3591 = vrot.slane %v3282, 1
        %v3592 = vsel %vm845, %v3590, %v3591
        %v3593 = vrot.slane %v3283, 1
        %v3594 = vrot.slane %v3284, 1
        %v3595 = vsel %vm845, %v3593, %v3594
        %v3596 = vrot.slane %v3285, 1
        %v3597 = vrot.slane %v3286, 1
        %v3598 = vsel %vm845, %v3596, %v3597
        %v3599 = vrot.slane %v3287, 1
        %v3600 = vrot.slane %v3288, 1
        %v3601 = vsel %vm845, %v3599, %v3600
        %v3602 = vrot.slane %v3289, 1
        %v3603 = vrot.slane %v3290, 1
        %v3604 = vsel %vm845, %v3602, %v3603
        %v3605 = vrot.slane %v3291, 1
        %v3606 = vrot.slane %v3292, 1
        %v3607 = vsel %vm845, %v3605, %v3606
        %v3608 = vrot.slane %v3293, 1
        %v3609 = vrot.slane %v3294, 1
        %v3610 = vsel %vm845, %v3608, %v3609
        %v3611 = vrot.slane %v3295, 1
        %v3612 = vrot.slane %v3296, 1
        %v3613 = vsel %vm845, %v3611, %v3612
        %v3614 = vrot.slane %v3297, 1
        %v3615 = vrot.slane %v3298, 1
        %v3616 = vsel %vm845, %v3614, %v3615
        %v3617 = vrot.slane %v3299, 1
        %v3618 = vrot.slane %v3300, 1
        %v3619 = vsel %vm845, %v3617, %v3618
        %v3620 = vrot.slane %v3301, 1
        %v3621 = vrot.slane %v3302, 1
        %v3622 = vsel %vm845, %v3620, %v3621
        %v3687 = vadd.f32 %v3107, %v3433
        %v3688 = vadd.f32 %v3108, %v3436
        %v3689 = vadd.f32 %v3109, %v3439
        %v3690 = vadd.f32 %v3110, %v3442
        %v3691 = vadd.f32 %v3111, %v3445
        %v3692 = vadd.f32 %v3112, %v3448
        %v3693 = vadd.f32 %v3113, %v3451
        %v3694 = vadd.f32 %v3114, %v3454
        %v3695 = vadd.f32 %v3115, %v3457
        %v3696 = vadd.f32 %v3116, %v3460
        %v3697 = vadd.f32 %v3117, %v3463
        %v3698 = vadd.f32 %v3118, %v3466
        %v3699 = vadd.f32 %v3119, %v3469
        %v3700 = vadd.f32 %v3120, %v3472
        %v3701 = vadd.f32 %v3121, %v3475
        %v3702 = vadd.f32 %v3122, %v3478
        %v3703 = vadd.f32 %v3123, %v3481
        %v3704 = vadd.f32 %v3124, %v3484
        %v3705 = vadd.f32 %v3125, %v3487
        %v3706 = vadd.f32 %v3126, %v3490
        %v3707 = vadd.f32 %v3127, %v3493
        %v3708 = vadd.f32 %v3128, %v3496
        %v3709 = vadd.f32 %v3129, %v3499
        %v3710 = vadd.f32 %v3130, %v3502
        %v3711 = vadd.f32 %v3131, %v3505
        %v3712 = vadd.f32 %v3132, %v3508
        %v3713 = vadd.f32 %v3133, %v3511
        %v3714 = vadd.f32 %v3134, %v3514
        %v3715 = vadd.f32 %v3135, %v3517
        %v3716 = vadd.f32 %v3136, %v3520
        %v3717 = vadd.f32 %v3137, %v3523
        %v3718 = vadd.f32 %v3138, %v3526
        %v3719 = vadd.f32 %v3139, %v3529
        %v3720 = vadd.f32 %v3140, %v3532
        %v3721 = vadd.f32 %v3141, %v3535
        %v3722 = vadd.f32 %v3142, %v3538
        %v3723 = vadd.f32 %v3143, %v3541
        %v3724 = vadd.f32 %v3144, %v3544
        %v3725 = vadd.f32 %v3145, %v3547
        %v3726 = vadd.f32 %v3146, %v3550
        %v3727 = vadd.f32 %v3147, %v3553
        %v3728 = vadd.f32 %v3148, %v3556
        %v3729 = vadd.f32 %v3149, %v3559
        %v3730 = vadd.f32 %v3150, %v3562
        %v3731 = vadd.f32 %v3151, %v3565
        %v3732 = vadd.f32 %v3152, %v3568
        %v3733 = vadd.f32 %v3153, %v3571
        %v3734 = vadd.f32 %v3154, %v3574
        %v3735 = vadd.f32 %v3155, %v3577
        %v3736 = vadd.f32 %v3156, %v3580
        %v3737 = vadd.f32 %v3157, %v3583
        %v3738 = vadd.f32 %v3158, %v3586
        %v3739 = vadd.f32 %v3159, %v3589
        %v3740 = vadd.f32 %v3160, %v3592
        %v3741 = vadd.f32 %v3161, %v3595
        %v3742 = vadd.f32 %v3162, %v3598
        %v3743 = vadd.f32 %v3163, %v3601
        %v3744 = vadd.f32 %v3164, %v3604
        %v3745 = vadd.f32 %v3165, %v3607
        %v3746 = vadd.f32 %v3166, %v3610
        %v3747 = vadd.f32 %v3167, %v3613
        %v3748 = vadd.f32 %v3168, %v3616
        %v3749 = vadd.f32 %v3169, %v3619
        %v3750 = vadd.f32 %v3170, %v3622
        %v3751 = vlaneseq
        %v3752 = vshrl.u32 %v3751, 7
        %v3753 = vsub.s32 2, %v3752
        %v3754 = vrot.slane %v446, %v3753
        %v3755 = vmul.f32 %v248, %v3754
        %v3756 = vmul.f32 %v249, %v3754
        %v3757 = vmul.f32 %v250, %v3754
        %v3758 = vmul.f32 %v251, %v3754
        %v3759 = vmul.f32 %v252, %v3754
        %v3760 = vmul.f32 %v253, %v3754
        %v3761 = vmul.f32 %v254, %v3754
        %v3762 = vmul.f32 %v255, %v3754
        %v3763 = vmul.f32 %v256, %v3754
        %v3764 = vmul.f32 %v257, %v3754
        %v3765 = vmul.f32 %v258, %v3754
        %v3766 = vmul.f32 %v259, %v3754
        %v3767 = vmul.f32 %v260, %v3754
        %v3768 = vmul.f32 %v261, %v3754
        %v3769 = vmul.f32 %v262, %v3754
        %v3770 = vmul.f32 %v263, %v3754
        %v3771 = vmul.f32 %v268, %v3754
        %v3772 = vmul.f32 %v269, %v3754
        %v3773 = vmul.f32 %v270, %v3754
        %v3774 = vmul.f32 %v271, %v3754
        %v3775 = vmul.f32 %v272, %v3754
        %v3776 = vmul.f32 %v273, %v3754
        %v3777 = vmul.f32 %v274, %v3754
        %v3778 = vmul.f32 %v275, %v3754
        %v3779 = vmul.f32 %v276, %v3754
        %v3780 = vmul.f32 %v277, %v3754
        %v3781 = vmul.f32 %v278, %v3754
        %v3782 = vmul.f32 %v279, %v3754
        %v3783 = vmul.f32 %v280, %v3754
        %v3784 = vmul.f32 %v281, %v3754
        %v3785 = vmul.f32 %v282, %v3754
        %v3786 = vmul.f32 %v283, %v3754
        %v3787 = vmul.f32 %v288, %v3754
        %v3788 = vmul.f32 %v289, %v3754
        %v3789 = vmul.f32 %v290, %v3754
        %v3790 = vmul.f32 %v291, %v3754
        %v3791 = vmul.f32 %v292, %v3754
        %v3792 = vmul.f32 %v293, %v3754
        %v3793 = vmul.f32 %v294, %v3754
        %v3794 = vmul.f32 %v295, %v3754
        %v3795 = vmul.f32 %v296, %v3754
        %v3796 = vmul.f32 %v297, %v3754
        %v3797 = vmul.f32 %v298, %v3754
        %v3798 = vmul.f32 %v299, %v3754
        %v3799 = vmul.f32 %v300, %v3754
        %v3800 = vmul.f32 %v301, %v3754
        %v3801 = vmul.f32 %v302, %v3754
        %v3802 = vmul.f32 %v303, %v3754
        %v3803 = vmul.f32 %v308, %v3754
        %v3804 = vmul.f32 %v309, %v3754
        %v3805 = vmul.f32 %v310, %v3754
        %v3806 = vmul.f32 %v311, %v3754
        %v3807 = vmul.f32 %v312, %v3754
        %v3808 = vmul.f32 %v313, %v3754
        %v3809 = vmul.f32 %v314, %v3754
        %v3810 = vmul.f32 %v315, %v3754
        %v3811 = vmul.f32 %v316, %v3754
        %v3812 = vmul.f32 %v317, %v3754
        %v3813 = vmul.f32 %v318, %v3754
        %v3814 = vmul.f32 %v319, %v3754
        %v3815 = vmul.f32 %v320, %v3754
        %v3816 = vmul.f32 %v321, %v3754
        %v3817 = vmul.f32 %v322, %v3754
        %v3818 = vmul.f32 %v323, %v3754
        %v3819 = vmul.f32 %v328, %v3754
        %v3820 = vmul.f32 %v329, %v3754
        %v3821 = vmul.f32 %v330, %v3754
        %v3822 = vmul.f32 %v331, %v3754
        %v3823 = vmul.f32 %v332, %v3754
        %v3824 = vmul.f32 %v333, %v3754
        %v3825 = vmul.f32 %v334, %v3754
        %v3826 = vmul.f32 %v335, %v3754
        %v3827 = vmul.f32 %v336, %v3754
        %v3828 = vmul.f32 %v337, %v3754
        %v3829 = vmul.f32 %v338, %v3754
        %v3830 = vmul.f32 %v339, %v3754
        %v3831 = vmul.f32 %v340, %v3754
        %v3832 = vmul.f32 %v341, %v3754
        %v3833 = vmul.f32 %v342, %v3754
        %v3834 = vmul.f32 %v343, %v3754
        %v3835 = vmul.f32 %v348, %v3754
        %v3836 = vmul.f32 %v349, %v3754
        %v3837 = vmul.f32 %v350, %v3754
        %v3838 = vmul.f32 %v351, %v3754
        %v3839 = vmul.f32 %v352, %v3754
        %v3840 = vmul.f32 %v353, %v3754
        %v3841 = vmul.f32 %v354, %v3754
        %v3842 = vmul.f32 %v355, %v3754
        %v3843 = vmul.f32 %v356, %v3754
        %v3844 = vmul.f32 %v357, %v3754
        %v3845 = vmul.f32 %v358, %v3754
        %v3846 = vmul.f32 %v359, %v3754
        %v3847 = vmul.f32 %v360, %v3754
        %v3848 = vmul.f32 %v361, %v3754
        %v3849 = vmul.f32 %v362, %v3754
        %v3850 = vmul.f32 %v363, %v3754
        %v3851 = vmul.f32 %v368, %v3754
        %v3852 = vmul.f32 %v369, %v3754
        %v3853 = vmul.f32 %v370, %v3754
        %v3854 = vmul.f32 %v371, %v3754
        %v3855 = vmul.f32 %v372, %v3754
        %v3856 = vmul.f32 %v373, %v3754
        %v3857 = vmul.f32 %v374, %v3754
        %v3858 = vmul.f32 %v375, %v3754
        %v3859 = vmul.f32 %v376, %v3754
        %v3860 = vmul.f32 %v377, %v3754
        %v3861 = vmul.f32 %v378, %v3754
        %v3862 = vmul.f32 %v379, %v3754
        %v3863 = vmul.f32 %v380, %v3754
        %v3864 = vmul.f32 %v381, %v3754
        %v3865 = vmul.f32 %v382, %v3754
        %v3866 = vmul.f32 %v383, %v3754
        %v3867 = vmul.f32 %v388, %v3754
        %v3868 = vmul.f32 %v389, %v3754
        %v3869 = vmul.f32 %v390, %v3754
        %v3870 = vmul.f32 %v391, %v3754
        %v3871 = vmul.f32 %v392, %v3754
        %v3872 = vmul.f32 %v393, %v3754
        %v3873 = vmul.f32 %v394, %v3754
        %v3874 = vmul.f32 %v395, %v3754
        %v3875 = vmul.f32 %v396, %v3754
        %v3876 = vmul.f32 %v397, %v3754
        %v3877 = vmul.f32 %v398, %v3754
        %v3878 = vmul.f32 %v399, %v3754
        %v3879 = vmul.f32 %v400, %v3754
        %v3880 = vmul.f32 %v401, %v3754
        %v3881 = vmul.f32 %v402, %v3754
        %v3882 = vmul.f32 %v403, %v3754
        %v4011 = vrot.slane %v3755, 2
        %v4012 = vrot.slane %v3756, 2
        %v4013 = vsel %vm1426, %v4011, %v4012
        %v4014 = vrot.slane %v3757, 2
        %v4015 = vrot.slane %v3758, 2
        %v4016 = vsel %vm1426, %v4014, %v4015
        %v4017 = vrot.slane %v3759, 2
        %v4018 = vrot.slane %v3760, 2
        %v4019 = vsel %vm1426, %v4017, %v4018
        %v4020 = vrot.slane %v3761, 2
        %v4021 = vrot.slane %v3762, 2
        %v4022 = vsel %vm1426, %v4020, %v4021
        %v4023 = vrot.slane %v3763, 2
        %v4024 = vrot.slane %v3764, 2
        %v4025 = vsel %vm1426, %v4023, %v4024
        %v4026 = vrot.slane %v3765, 2
        %v4027 = vrot.slane %v3766, 2
        %v4028 = vsel %vm1426, %v4026, %v4027
        %v4029 = vrot.slane %v3767, 2
        %v4030 = vrot.slane %v3768, 2
        %v4031 = vsel %vm1426, %v4029, %v4030
        %v4032 = vrot.slane %v3769, 2
        %v4033 = vrot.slane %v3770, 2
        %v4034 = vsel %vm1426, %v4032, %v4033
        %v4035 = vrot.slane %v3771, 2
        %v4036 = vrot.slane %v3772, 2
        %v4037 = vsel %vm1426, %v4035, %v4036
        %v4038 = vrot.slane %v3773, 2
        %v4039 = vrot.slane %v3774, 2
        %v4040 = vsel %vm1426, %v4038, %v4039
        %v4041 = vrot.slane %v3775, 2
        %v4042 = vrot.slane %v3776, 2
        %v4043 = vsel %vm1426, %v4041, %v4042
        %v4044 = vrot.slane %v3777, 2
        %v4045 = vrot.slane %v3778, 2
        %v4046 = vsel %vm1426, %v4044, %v4045
        %v4047 = vrot.slane %v3779, 2
        %v4048 = vrot.slane %v3780, 2
        %v4049 = vsel %vm1426, %v4047, %v4048
        %v4050 = vrot.slane %v3781, 2
        %v4051 = vrot.slane %v3782, 2
        %v4052 = vsel %vm1426, %v4050, %v4051
        %v4053 = vrot.slane %v3783, 2
        %v4054 = vrot.slane %v3784, 2
        %v4055 = vsel %vm1426, %v4053, %v4054
        %v4056 = vrot.slane %v3785, 2
        %v4057 = vrot.slane %v3786, 2
        %v4058 = vsel %vm1426, %v4056, %v4057
        %v4059 = vrot.slane %v3787, 2
        %v4060 = vrot.slane %v3788, 2
        %v4061 = vsel %vm1426, %v4059, %v4060
        %v4062 = vrot.slane %v3789, 2
        %v4063 = vrot.slane %v3790, 2
        %v4064 = vsel %vm1426, %v4062, %v4063
        %v4065 = vrot.slane %v3791, 2
        %v4066 = vrot.slane %v3792, 2
        %v4067 = vsel %vm1426, %v4065, %v4066
        %v4068 = vrot.slane %v3793, 2
        %v4069 = vrot.slane %v3794, 2
        %v4070 = vsel %vm1426, %v4068, %v4069
        %v4071 = vrot.slane %v3795, 2
        %v4072 = vrot.slane %v3796, 2
        %v4073 = vsel %vm1426, %v4071, %v4072
        %v4074 = vrot.slane %v3797, 2
        %v4075 = vrot.slane %v3798, 2
        %v4076 = vsel %vm1426, %v4074, %v4075
        %v4077 = vrot.slane %v3799, 2
        %v4078 = vrot.slane %v3800, 2
        %v4079 = vsel %vm1426, %v4077, %v4078
        %v4080 = vrot.slane %v3801, 2
        %v4081 = vrot.slane %v3802, 2
        %v4082 = vsel %vm1426, %v4080, %v4081
        %v4083 = vrot.slane %v3803, 2
        %v4084 = vrot.slane %v3804, 2
        %v4085 = vsel %vm1426, %v4083, %v4084
        %v4086 = vrot.slane %v3805, 2
        %v4087 = vrot.slane %v3806, 2
        %v4088 = vsel %vm1426, %v4086, %v4087
        %v4089 = vrot.slane %v3807, 2
        %v4090 = vrot.slane %v3808, 2
        %v4091 = vsel %vm1426, %v4089, %v4090
        %v4092 = vrot.slane %v3809, 2
        %v4093 = vrot.slane %v3810, 2
        %v4094 = vsel %vm1426, %v4092, %v4093
        %v4095 = vrot.slane %v3811, 2
        %v4096 = vrot.slane %v3812, 2
        %v4097 = vsel %vm1426, %v4095, %v4096
        %v4098 = vrot.slane %v3813, 2
        %v4099 = vrot.slane %v3814, 2
        %v4100 = vsel %vm1426, %v4098, %v4099
        %v4101 = vrot.slane %v3815, 2
        %v4102 = vrot.slane %v3816, 2
        %v4103 = vsel %vm1426, %v4101, %v4102
        %v4104 = vrot.slane %v3817, 2
        %v4105 = vrot.slane %v3818, 2
        %v4106 = vsel %vm1426, %v4104, %v4105
        %v4107 = vrot.slane %v3819, 2
        %v4108 = vrot.slane %v3820, 2
        %v4109 = vsel %vm1426, %v4107, %v4108
        %v4110 = vrot.slane %v3821, 2
        %v4111 = vrot.slane %v3822, 2
        %v4112 = vsel %vm1426, %v4110, %v4111
        %v4113 = vrot.slane %v3823, 2
        %v4114 = vrot.slane %v3824, 2
        %v4115 = vsel %vm1426, %v4113, %v4114
        %v4116 = vrot.slane %v3825, 2
        %v4117 = vrot.slane %v3826, 2
        %v4118 = vsel %vm1426, %v4116, %v4117
        %v4119 = vrot.slane %v3827, 2
        %v4120 = vrot.slane %v3828, 2
        %v4121 = vsel %vm1426, %v4119, %v4120
        %v4122 = vrot.slane %v3829, 2
        %v4123 = vrot.slane %v3830, 2
        %v4124 = vsel %vm1426, %v4122, %v4123
        %v4125 = vrot.slane %v3831, 2
        %v4126 = vrot.slane %v3832, 2
        %v4127 = vsel %vm1426, %v4125, %v4126
        %v4128 = vrot.slane %v3833, 2
        %v4129 = vrot.slane %v3834, 2
        %v4130 = vsel %vm1426, %v4128, %v4129
        %v4131 = vrot.slane %v3835, 2
        %v4132 = vrot.slane %v3836, 2
        %v4133 = vsel %vm1426, %v4131, %v4132
        %v4134 = vrot.slane %v3837, 2
        %v4135 = vrot.slane %v3838, 2
        %v4136 = vsel %vm1426, %v4134, %v4135
        %v4137 = vrot.slane %v3839, 2
        %v4138 = vrot.slane %v3840, 2
        %v4139 = vsel %vm1426, %v4137, %v4138
        %v4140 = vrot.slane %v3841, 2
        %v4141 = vrot.slane %v3842, 2
        %v4142 = vsel %vm1426, %v4140, %v4141
        %v4143 = vrot.slane %v3843, 2
        %v4144 = vrot.slane %v3844, 2
        %v4145 = vsel %vm1426, %v4143, %v4144
        %v4146 = vrot.slane %v3845, 2
        %v4147 = vrot.slane %v3846, 2
        %v4148 = vsel %vm1426, %v4146, %v4147
        %v4149 = vrot.slane %v3847, 2
        %v4150 = vrot.slane %v3848, 2
        %v4151 = vsel %vm1426, %v4149, %v4150
        %v4152 = vrot.slane %v3849, 2
        %v4153 = vrot.slane %v3850, 2
        %v4154 = vsel %vm1426, %v4152, %v4153
        %v4155 = vrot.slane %v3851, 2
        %v4156 = vrot.slane %v3852, 2
        %v4157 = vsel %vm1426, %v4155, %v4156
        %v4158 = vrot.slane %v3853, 2
        %v4159 = vrot.slane %v3854, 2
        %v4160 = vsel %vm1426, %v4158, %v4159
        %v4161 = vrot.slane %v3855, 2
        %v4162 = vrot.slane %v3856, 2
        %v4163 = vsel %vm1426, %v4161, %v4162
        %v4164 = vrot.slane %v3857, 2
        %v4165 = vrot.slane %v3858, 2
        %v4166 = vsel %vm1426, %v4164, %v4165
        %v4167 = vrot.slane %v3859, 2
        %v4168 = vrot.slane %v3860, 2
        %v4169 = vsel %vm1426, %v4167, %v4168
        %v4170 = vrot.slane %v3861, 2
        %v4171 = vrot.slane %v3862, 2
        %v4172 = vsel %vm1426, %v4170, %v4171
        %v4173 = vrot.slane %v3863, 2
        %v4174 = vrot.slane %v3864, 2
        %v4175 = vsel %vm1426, %v4173, %v4174
        %v4176 = vrot.slane %v3865, 2
        %v4177 = vrot.slane %v3866, 2
        %v4178 = vsel %vm1426, %v4176, %v4177
        %v4179 = vrot.slane %v3867, 2
        %v4180 = vrot.slane %v3868, 2
        %v4181 = vsel %vm1426, %v4179, %v4180
        %v4182 = vrot.slane %v3869, 2
        %v4183 = vrot.slane %v3870, 2
        %v4184 = vsel %vm1426, %v4182, %v4183
        %v4185 = vrot.slane %v3871, 2
        %v4186 = vrot.slane %v3872, 2
        %v4187 = vsel %vm1426, %v4185, %v4186
        %v4188 = vrot.slane %v3873, 2
        %v4189 = vrot.slane %v3874, 2
        %v4190 = vsel %vm1426, %v4188, %v4189
        %v4191 = vrot.slane %v3875, 2
        %v4192 = vrot.slane %v3876, 2
        %v4193 = vsel %vm1426, %v4191, %v4192
        %v4194 = vrot.slane %v3877, 2
        %v4195 = vrot.slane %v3878, 2
        %v4196 = vsel %vm1426, %v4194, %v4195
        %v4197 = vrot.slane %v3879, 2
        %v4198 = vrot.slane %v3880, 2
        %v4199 = vsel %vm1426, %v4197, %v4198
        %v4200 = vrot.slane %v3881, 2
        %v4201 = vrot.slane %v3882, 2
        %v4202 = vsel %vm1426, %v4200, %v4201
        %v4267 = vadd.f32 %v3687, %v4013
        %v4268 = vadd.f32 %v3688, %v4016
        %v4269 = vadd.f32 %v3689, %v4019
        %v4270 = vadd.f32 %v3690, %v4022
        %v4271 = vadd.f32 %v3691, %v4025
        %v4272 = vadd.f32 %v3692, %v4028
        %v4273 = vadd.f32 %v3693, %v4031
        %v4274 = vadd.f32 %v3694, %v4034
        %v4275 = vadd.f32 %v3695, %v4037
        %v4276 = vadd.f32 %v3696, %v4040
        %v4277 = vadd.f32 %v3697, %v4043
        %v4278 = vadd.f32 %v3698, %v4046
        %v4279 = vadd.f32 %v3699, %v4049
        %v4280 = vadd.f32 %v3700, %v4052
        %v4281 = vadd.f32 %v3701, %v4055
        %v4282 = vadd.f32 %v3702, %v4058
        %v4283 = vadd.f32 %v3703, %v4061
        %v4284 = vadd.f32 %v3704, %v4064
        %v4285 = vadd.f32 %v3705, %v4067
        %v4286 = vadd.f32 %v3706, %v4070
        %v4287 = vadd.f32 %v3707, %v4073
        %v4288 = vadd.f32 %v3708, %v4076
        %v4289 = vadd.f32 %v3709, %v4079
        %v4290 = vadd.f32 %v3710, %v4082
        %v4291 = vadd.f32 %v3711, %v4085
        %v4292 = vadd.f32 %v3712, %v4088
        %v4293 = vadd.f32 %v3713, %v4091
        %v4294 = vadd.f32 %v3714, %v4094
        %v4295 = vadd.f32 %v3715, %v4097
        %v4296 = vadd.f32 %v3716, %v4100
        %v4297 = vadd.f32 %v3717, %v4103
        %v4298 = vadd.f32 %v3718, %v4106
        %v4299 = vadd.f32 %v3719, %v4109
        %v4300 = vadd.f32 %v3720, %v4112
        %v4301 = vadd.f32 %v3721, %v4115
        %v4302 = vadd.f32 %v3722, %v4118
        %v4303 = vadd.f32 %v3723, %v4121
        %v4304 = vadd.f32 %v3724, %v4124
        %v4305 = vadd.f32 %v3725, %v4127
        %v4306 = vadd.f32 %v3726, %v4130
        %v4307 = vadd.f32 %v3727, %v4133
        %v4308 = vadd.f32 %v3728, %v4136
        %v4309 = vadd.f32 %v3729, %v4139
        %v4310 = vadd.f32 %v3730, %v4142
        %v4311 = vadd.f32 %v3731, %v4145
        %v4312 = vadd.f32 %v3732, %v4148
        %v4313 = vadd.f32 %v3733, %v4151
        %v4314 = vadd.f32 %v3734, %v4154
        %v4315 = vadd.f32 %v3735, %v4157
        %v4316 = vadd.f32 %v3736, %v4160
        %v4317 = vadd.f32 %v3737, %v4163
        %v4318 = vadd.f32 %v3738, %v4166
        %v4319 = vadd.f32 %v3739, %v4169
        %v4320 = vadd.f32 %v3740, %v4172
        %v4321 = vadd.f32 %v3741, %v4175
        %v4322 = vadd.f32 %v3742, %v4178
        %v4323 = vadd.f32 %v3743, %v4181
        %v4324 = vadd.f32 %v3744, %v4184
        %v4325 = vadd.f32 %v3745, %v4187
        %v4326 = vadd.f32 %v3746, %v4190
        %v4327 = vadd.f32 %v3747, %v4193
        %v4328 = vadd.f32 %v3748, %v4196
        %v4329 = vadd.f32 %v3749, %v4199
        %v4330 = vadd.f32 %v3750, %v4202
        %v4331 = vlaneseq
        %v4332 = vshrl.u32 %v4331, 7
        %v4333 = vsub.s32 0, %v4332
        %v4334 = vrot.slane %v447, %v4333
        %v4335 = vmul.f32 %v264, %v4334
        %v4336 = vmul.f32 %v266, %v4334
        %v4337 = vmul.f32 %v268, %v4334
        %v4338 = vmul.f32 %v270, %v4334
        %v4339 = vmul.f32 %v272, %v4334
        %v4340 = vmul.f32 %v274, %v4334
        %v4341 = vmul.f32 %v276, %v4334
        %v4342 = vmul.f32 %v278, %v4334
        %v4343 = vmul.f32 %v284, %v4334
        %v4344 = vmul.f32 %v286, %v4334
        %v4345 = vmul.f32 %v288, %v4334
        %v4346 = vmul.f32 %v290, %v4334
        %v4347 = vmul.f32 %v292, %v4334
        %v4348 = vmul.f32 %v294, %v4334
        %v4349 = vmul.f32 %v296, %v4334
        %v4350 = vmul.f32 %v298, %v4334
        %v4351 = vmul.f32 %v304, %v4334
        %v4352 = vmul.f32 %v306, %v4334
        %v4353 = vmul.f32 %v308, %v4334
        %v4354 = vmul.f32 %v310, %v4334
        %v4355 = vmul.f32 %v312, %v4334
        %v4356 = vmul.f32 %v314, %v4334
        %v4357 = vmul.f32 %v316, %v4334
        %v4358 = vmul.f32 %v318, %v4334
        %v4359 = vmul.f32 %v324, %v4334
        %v4360 = vmul.f32 %v326, %v4334
        %v4361 = vmul.f32 %v328, %v4334
        %v4362 = vmul.f32 %v330, %v4334
        %v4363 = vmul.f32 %v332, %v4334
        %v4364 = vmul.f32 %v334, %v4334
        %v4365 = vmul.f32 %v336, %v4334
        %v4366 = vmul.f32 %v338, %v4334
        %v4367 = vmul.f32 %v344, %v4334
        %v4368 = vmul.f32 %v346, %v4334
        %v4369 = vmul.f32 %v348, %v4334
        %v4370 = vmul.f32 %v350, %v4334
        %v4371 = vmul.f32 %v352, %v4334
        %v4372 = vmul.f32 %v354, %v4334
        %v4373 = vmul.f32 %v356, %v4334
        %v4374 = vmul.f32 %v358, %v4334
        %v4375 = vmul.f32 %v364, %v4334
        %v4376 = vmul.f32 %v366, %v4334
        %v4377 = vmul.f32 %v368, %v4334
        %v4378 = vmul.f32 %v370, %v4334
        %v4379 = vmul.f32 %v372, %v4334
        %v4380 = vmul.f32 %v374, %v4334
        %v4381 = vmul.f32 %v376, %v4334
        %v4382 = vmul.f32 %v378, %v4334
        %v4383 = vmul.f32 %v384, %v4334
        %v4384 = vmul.f32 %v386, %v4334
        %v4385 = vmul.f32 %v388, %v4334
        %v4386 = vmul.f32 %v390, %v4334
        %v4387 = vmul.f32 %v392, %v4334
        %v4388 = vmul.f32 %v394, %v4334
        %v4389 = vmul.f32 %v396, %v4334
        %v4390 = vmul.f32 %v398, %v4334
        %v4391 = vmul.f32 %v404, %v4334
        %v4392 = vmul.f32 %v406, %v4334
        %v4393 = vmul.f32 %v408, %v4334
        %v4394 = vmul.f32 %v410, %v4334
        %v4395 = vmul.f32 %v412, %v4334
        %v4396 = vmul.f32 %v414, %v4334
        %v4397 = vmul.f32 %v416, %v4334
        %v4398 = vmul.f32 %v418, %v4334
        %v4399 = vadd.f32 %v4267, %v4335
        %v4400 = vadd.f32 %v4268, %v4336
        %v4401 = vadd.f32 %v4269, %v4337
        %v4402 = vadd.f32 %v4270, %v4338
        %v4403 = vadd.f32 %v4271, %v4339
        %v4404 = vadd.f32 %v4272, %v4340
        %v4405 = vadd.f32 %v4273, %v4341
        %v4406 = vadd.f32 %v4274, %v4342
        %v4407 = vadd.f32 %v4275, %v4343
        %v4408 = vadd.f32 %v4276, %v4344
        %v4409 = vadd.f32 %v4277, %v4345
        %v4410 = vadd.f32 %v4278, %v4346
        %v4411 = vadd.f32 %v4279, %v4347
        %v4412 = vadd.f32 %v4280, %v4348
        %v4413 = vadd.f32 %v4281, %v4349
        %v4414 = vadd.f32 %v4282, %v4350
        %v4415 = vadd.f32 %v4283, %v4351
        %v4416 = vadd.f32 %v4284, %v4352
        %v4417 = vadd.f32 %v4285, %v4353
        %v4418 = vadd.f32 %v4286, %v4354
        %v4419 = vadd.f32 %v4287, %v4355
        %v4420 = vadd.f32 %v4288, %v4356
        %v4421 = vadd.f32 %v4289, %v4357
        %v4422 = vadd.f32 %v4290, %v4358
        %v4423 = vadd.f32 %v4291, %v4359
        %v4424 = vadd.f32 %v4292, %v4360
        %v4425 = vadd.f32 %v4293, %v4361
        %v4426 = vadd.f32 %v4294, %v4362
        %v4427 = vadd.f32 %v4295, %v4363
        %v4428 = vadd.f32 %v4296, %v4364
        %v4429 = vadd.f32 %v4297, %v4365
        %v4430 = vadd.f32 %v4298, %v4366
        %v4431 = vadd.f32 %v4299, %v4367
        %v4432 = vadd.f32 %v4300, %v4368
        %v4433 = vadd.f32 %v4301, %v4369
        %v4434 = vadd.f32 %v4302, %v4370
        %v4435 = vadd.f32 %v4303, %v4371
        %v4436 = vadd.f32 %v4304, %v4372
        %v4437 = vadd.f32 %v4305, %v4373
        %v4438 = vadd.f32 %v4306, %v4374
        %v4439 = vadd.f32 %v4307, %v4375
        %v4440 = vadd.f32 %v4308, %v4376
        %v4441 = vadd.f32 %v4309, %v4377
        %v4442 = vadd.f32 %v4310, %v4378
        %v4443 = vadd.f32 %v4311, %v4379
        %v4444 = vadd.f32 %v4312, %v4380
        %v4445 = vadd.f32 %v4313, %v4381
        %v4446 = vadd.f32 %v4314, %v4382
        %v4447 = vadd.f32 %v4315, %v4383
        %v4448 = vadd.f32 %v4316, %v4384
        %v4449 = vadd.f32 %v4317, %v4385
        %v4450 = vadd.f32 %v4318, %v4386
        %v4451 = vadd.f32 %v4319, %v4387
        %v4452 = vadd.f32 %v4320, %v4388
        %v4453 = vadd.f32 %v4321, %v4389
        %v4454 = vadd.f32 %v4322, %v4390
        %v4455 = vadd.f32 %v4323, %v4391
        %v4456 = vadd.f32 %v4324, %v4392
        %v4457 = vadd.f32 %v4325, %v4393
        %v4458 = vadd.f32 %v4326, %v4394
        %v4459 = vadd.f32 %v4327, %v4395
        %v4460 = vadd.f32 %v4328, %v4396
        %v4461 = vadd.f32 %v4329, %v4397
        %v4462 = vadd.f32 %v4330, %v4398
        %v4463 = vlaneseq
        %v4464 = vshrl.u32 %v4463, 7
        %v4465 = vsub.s32 1, %v4464
        %v4466 = vrot.slane %v447, %v4465
        %v4467 = vmul.f32 %v264, %v4466
        %v4468 = vmul.f32 %v265, %v4466
        %v4469 = vmul.f32 %v266, %v4466
        %v4470 = vmul.f32 %v267, %v4466
        %v4471 = vmul.f32 %v268, %v4466
        %v4472 = vmul.f32 %v269, %v4466
        %v4473 = vmul.f32 %v270, %v4466
        %v4474 = vmul.f32 %v271, %v4466
        %v4475 = vmul.f32 %v272, %v4466
        %v4476 = vmul.f32 %v273, %v4466
        %v4477 = vmul.f32 %v274, %v4466
        %v4478 = vmul.f32 %v275, %v4466
        %v4479 = vmul.f32 %v276, %v4466
        %v4480 = vmul.f32 %v277, %v4466
        %v4481 = vmul.f32 %v278, %v4466
        %v4482 = vmul.f32 %v279, %v4466
        %v4483 = vmul.f32 %v284, %v4466
        %v4484 = vmul.f32 %v285, %v4466
        %v4485 = vmul.f32 %v286, %v4466
        %v4486 = vmul.f32 %v287, %v4466
        %v4487 = vmul.f32 %v288, %v4466
        %v4488 = vmul.f32 %v289, %v4466
        %v4489 = vmul.f32 %v290, %v4466
        %v4490 = vmul.f32 %v291, %v4466
        %v4491 = vmul.f32 %v292, %v4466
        %v4492 = vmul.f32 %v293, %v4466
        %v4493 = vmul.f32 %v294, %v4466
        %v4494 = vmul.f32 %v295, %v4466
        %v4495 = vmul.f32 %v296, %v4466
        %v4496 = vmul.f32 %v297, %v4466
        %v4497 = vmul.f32 %v298, %v4466
        %v4498 = vmul.f32 %v299, %v4466
        %v4499 = vmul.f32 %v304, %v4466
        %v4500 = vmul.f32 %v305, %v4466
        %v4501 = vmul.f32 %v306, %v4466
        %v4502 = vmul.f32 %v307, %v4466
        %v4503 = vmul.f32 %v308, %v4466
        %v4504 = vmul.f32 %v309, %v4466
        %v4505 = vmul.f32 %v310, %v4466
        %v4506 = vmul.f32 %v311, %v4466
        %v4507 = vmul.f32 %v312, %v4466
        %v4508 = vmul.f32 %v313, %v4466
        %v4509 = vmul.f32 %v314, %v4466
        %v4510 = vmul.f32 %v315, %v4466
        %v4511 = vmul.f32 %v316, %v4466
        %v4512 = vmul.f32 %v317, %v4466
        %v4513 = vmul.f32 %v318, %v4466
        %v4514 = vmul.f32 %v319, %v4466
        %v4515 = vmul.f32 %v324, %v4466
        %v4516 = vmul.f32 %v325, %v4466
        %v4517 = vmul.f32 %v326, %v4466
        %v4518 = vmul.f32 %v327, %v4466
        %v4519 = vmul.f32 %v328, %v4466
        %v4520 = vmul.f32 %v329, %v4466
        %v4521 = vmul.f32 %v330, %v4466
        %v4522 = vmul.f32 %v331, %v4466
        %v4523 = vmul.f32 %v332, %v4466
        %v4524 = vmul.f32 %v333, %v4466
        %v4525 = vmul.f32 %v334, %v4466
        %v4526 = vmul.f32 %v335, %v4466
        %v4527 = vmul.f32 %v336, %v4466
        %v4528 = vmul.f32 %v337, %v4466
        %v4529 = vmul.f32 %v338, %v4466
        %v4530 = vmul.f32 %v339, %v4466
        %v4531 = vmul.f32 %v344, %v4466
        %v4532 = vmul.f32 %v345, %v4466
        %v4533 = vmul.f32 %v346, %v4466
        %v4534 = vmul.f32 %v347, %v4466
        %v4535 = vmul.f32 %v348, %v4466
        %v4536 = vmul.f32 %v349, %v4466
        %v4537 = vmul.f32 %v350, %v4466
        %v4538 = vmul.f32 %v351, %v4466
        %v4539 = vmul.f32 %v352, %v4466
        %v4540 = vmul.f32 %v353, %v4466
        %v4541 = vmul.f32 %v354, %v4466
        %v4542 = vmul.f32 %v355, %v4466
        %v4543 = vmul.f32 %v356, %v4466
        %v4544 = vmul.f32 %v357, %v4466
        %v4545 = vmul.f32 %v358, %v4466
        %v4546 = vmul.f32 %v359, %v4466
        %v4547 = vmul.f32 %v364, %v4466
        %v4548 = vmul.f32 %v365, %v4466
        %v4549 = vmul.f32 %v366, %v4466
        %v4550 = vmul.f32 %v367, %v4466
        %v4551 = vmul.f32 %v368, %v4466
        %v4552 = vmul.f32 %v369, %v4466
        %v4553 = vmul.f32 %v370, %v4466
        %v4554 = vmul.f32 %v371, %v4466
        %v4555 = vmul.f32 %v372, %v4466
        %v4556 = vmul.f32 %v373, %v4466
        %v4557 = vmul.f32 %v374, %v4466
        %v4558 = vmul.f32 %v375, %v4466
        %v4559 = vmul.f32 %v376, %v4466
        %v4560 = vmul.f32 %v377, %v4466
        %v4561 = vmul.f32 %v378, %v4466
        %v4562 = vmul.f32 %v379, %v4466
        %v4563 = vmul.f32 %v384, %v4466
        %v4564 = vmul.f32 %v385, %v4466
        %v4565 = vmul.f32 %v386, %v4466
        %v4566 = vmul.f32 %v387, %v4466
        %v4567 = vmul.f32 %v388, %v4466
        %v4568 = vmul.f32 %v389, %v4466
        %v4569 = vmul.f32 %v390, %v4466
        %v4570 = vmul.f32 %v391, %v4466
        %v4571 = vmul.f32 %v392, %v4466
        %v4572 = vmul.f32 %v393, %v4466
        %v4573 = vmul.f32 %v394, %v4466
        %v4574 = vmul.f32 %v395, %v4466
        %v4575 = vmul.f32 %v396, %v4466
        %v4576 = vmul.f32 %v397, %v4466
        %v4577 = vmul.f32 %v398, %v4466
        %v4578 = vmul.f32 %v399, %v4466
        %v4579 = vmul.f32 %v404, %v4466
        %v4580 = vmul.f32 %v405, %v4466
        %v4581 = vmul.f32 %v406, %v4466
        %v4582 = vmul.f32 %v407, %v4466
        %v4583 = vmul.f32 %v408, %v4466
        %v4584 = vmul.f32 %v409, %v4466
        %v4585 = vmul.f32 %v410, %v4466
        %v4586 = vmul.f32 %v411, %v4466
        %v4587 = vmul.f32 %v412, %v4466
        %v4588 = vmul.f32 %v413, %v4466
        %v4589 = vmul.f32 %v414, %v4466
        %v4590 = vmul.f32 %v415, %v4466
        %v4591 = vmul.f32 %v416, %v4466
        %v4592 = vmul.f32 %v417, %v4466
        %v4593 = vmul.f32 %v418, %v4466
        %v4594 = vmul.f32 %v419, %v4466
        %v4723 = vrot.slane %v4467, 1
        %v4724 = vrot.slane %v4468, 1
        %v4725 = vsel %vm845, %v4723, %v4724
        %v4726 = vrot.slane %v4469, 1
        %v4727 = vrot.slane %v4470, 1
        %v4728 = vsel %vm845, %v4726, %v4727
        %v4729 = vrot.slane %v4471, 1
        %v4730 = vrot.slane %v4472, 1
        %v4731 = vsel %vm845, %v4729, %v4730
        %v4732 = vrot.slane %v4473, 1
        %v4733 = vrot.slane %v4474, 1
        %v4734 = vsel %vm845, %v4732, %v4733
        %v4735 = vrot.slane %v4475, 1
        %v4736 = vrot.slane %v4476, 1
        %v4737 = vsel %vm845, %v4735, %v4736
        %v4738 = vrot.slane %v4477, 1
        %v4739 = vrot.slane %v4478, 1
        %v4740 = vsel %vm845, %v4738, %v4739
        %v4741 = vrot.slane %v4479, 1
        %v4742 = vrot.slane %v4480, 1
        %v4743 = vsel %vm845, %v4741, %v4742
        %v4744 = vrot.slane %v4481, 1
        %v4745 = vrot.slane %v4482, 1
        %v4746 = vsel %vm845, %v4744, %v4745
        %v4747 = vrot.slane %v4483, 1
        %v4748 = vrot.slane %v4484, 1
        %v4749 = vsel %vm845, %v4747, %v4748
        %v4750 = vrot.slane %v4485, 1
        %v4751 = vrot.slane %v4486, 1
        %v4752 = vsel %vm845, %v4750, %v4751
        %v4753 = vrot.slane %v4487, 1
        %v4754 = vrot.slane %v4488, 1
        %v4755 = vsel %vm845, %v4753, %v4754
        %v4756 = vrot.slane %v4489, 1
        %v4757 = vrot.slane %v4490, 1
        %v4758 = vsel %vm845, %v4756, %v4757
        %v4759 = vrot.slane %v4491, 1
        %v4760 = vrot.slane %v4492, 1
        %v4761 = vsel %vm845, %v4759, %v4760
        %v4762 = vrot.slane %v4493, 1
        %v4763 = vrot.slane %v4494, 1
        %v4764 = vsel %vm845, %v4762, %v4763
        %v4765 = vrot.slane %v4495, 1
        %v4766 = vrot.slane %v4496, 1
        %v4767 = vsel %vm845, %v4765, %v4766
        %v4768 = vrot.slane %v4497, 1
        %v4769 = vrot.slane %v4498, 1
        %v4770 = vsel %vm845, %v4768, %v4769
        %v4771 = vrot.slane %v4499, 1
        %v4772 = vrot.slane %v4500, 1
        %v4773 = vsel %vm845, %v4771, %v4772
        %v4774 = vrot.slane %v4501, 1
        %v4775 = vrot.slane %v4502, 1
        %v4776 = vsel %vm845, %v4774, %v4775
        %v4777 = vrot.slane %v4503, 1
        %v4778 = vrot.slane %v4504, 1
        %v4779 = vsel %vm845, %v4777, %v4778
        %v4780 = vrot.slane %v4505, 1
        %v4781 = vrot.slane %v4506, 1
        %v4782 = vsel %vm845, %v4780, %v4781
        %v4783 = vrot.slane %v4507, 1
        %v4784 = vrot.slane %v4508, 1
        %v4785 = vsel %vm845, %v4783, %v4784
        %v4786 = vrot.slane %v4509, 1
        %v4787 = vrot.slane %v4510, 1
        %v4788 = vsel %vm845, %v4786, %v4787
        %v4789 = vrot.slane %v4511, 1
        %v4790 = vrot.slane %v4512, 1
        %v4791 = vsel %vm845, %v4789, %v4790
        %v4792 = vrot.slane %v4513, 1
        %v4793 = vrot.slane %v4514, 1
        %v4794 = vsel %vm845, %v4792, %v4793
        %v4795 = vrot.slane %v4515, 1
        %v4796 = vrot.slane %v4516, 1
        %v4797 = vsel %vm845, %v4795, %v4796
        %v4798 = vrot.slane %v4517, 1
        %v4799 = vrot.slane %v4518, 1
        %v4800 = vsel %vm845, %v4798, %v4799
        %v4801 = vrot.slane %v4519, 1
        %v4802 = vrot.slane %v4520, 1
        %v4803 = vsel %vm845, %v4801, %v4802
        %v4804 = vrot.slane %v4521, 1
        %v4805 = vrot.slane %v4522, 1
        %v4806 = vsel %vm845, %v4804, %v4805
        %v4807 = vrot.slane %v4523, 1
        %v4808 = vrot.slane %v4524, 1
        %v4809 = vsel %vm845, %v4807, %v4808
        %v4810 = vrot.slane %v4525, 1
        %v4811 = vrot.slane %v4526, 1
        %v4812 = vsel %vm845, %v4810, %v4811
        %v4813 = vrot.slane %v4527, 1
        %v4814 = vrot.slane %v4528, 1
        %v4815 = vsel %vm845, %v4813, %v4814
        %v4816 = vrot.slane %v4529, 1
        %v4817 = vrot.slane %v4530, 1
        %v4818 = vsel %vm845, %v4816, %v4817
        %v4819 = vrot.slane %v4531, 1
        %v4820 = vrot.slane %v4532, 1
        %v4821 = vsel %vm845, %v4819, %v4820
        %v4822 = vrot.slane %v4533, 1
        %v4823 = vrot.slane %v4534, 1
        %v4824 = vsel %vm845, %v4822, %v4823
        %v4825 = vrot.slane %v4535, 1
        %v4826 = vrot.slane %v4536, 1
        %v4827 = vsel %vm845, %v4825, %v4826
        %v4828 = vrot.slane %v4537, 1
        %v4829 = vrot.slane %v4538, 1
        %v4830 = vsel %vm845, %v4828, %v4829
        %v4831 = vrot.slane %v4539, 1
        %v4832 = vrot.slane %v4540, 1
        %v4833 = vsel %vm845, %v4831, %v4832
        %v4834 = vrot.slane %v4541, 1
        %v4835 = vrot.slane %v4542, 1
        %v4836 = vsel %vm845, %v4834, %v4835
        %v4837 = vrot.slane %v4543, 1
        %v4838 = vrot.slane %v4544, 1
        %v4839 = vsel %vm845, %v4837, %v4838
        %v4840 = vrot.slane %v4545, 1
        %v4841 = vrot.slane %v4546, 1
        %v4842 = vsel %vm845, %v4840, %v4841
        %v4843 = vrot.slane %v4547, 1
        %v4844 = vrot.slane %v4548, 1
        %v4845 = vsel %vm845, %v4843, %v4844
        %v4846 = vrot.slane %v4549, 1
        %v4847 = vrot.slane %v4550, 1
        %v4848 = vsel %vm845, %v4846, %v4847
        %v4849 = vrot.slane %v4551, 1
        %v4850 = vrot.slane %v4552, 1
        %v4851 = vsel %vm845, %v4849, %v4850
        %v4852 = vrot.slane %v4553, 1
        %v4853 = vrot.slane %v4554, 1
        %v4854 = vsel %vm845, %v4852, %v4853
        %v4855 = vrot.slane %v4555, 1
        %v4856 = vrot.slane %v4556, 1
        %v4857 = vsel %vm845, %v4855, %v4856
        %v4858 = vrot.slane %v4557, 1
        %v4859 = vrot.slane %v4558, 1
        %v4860 = vsel %vm845, %v4858, %v4859
        %v4861 = vrot.slane %v4559, 1
        %v4862 = vrot.slane %v4560, 1
        %v4863 = vsel %vm845, %v4861, %v4862
        %v4864 = vrot.slane %v4561, 1
        %v4865 = vrot.slane %v4562, 1
        %v4866 = vsel %vm845, %v4864, %v4865
        %v4867 = vrot.slane %v4563, 1
        %v4868 = vrot.slane %v4564, 1
        %v4869 = vsel %vm845, %v4867, %v4868
        %v4870 = vrot.slane %v4565, 1
        %v4871 = vrot.slane %v4566, 1
        %v4872 = vsel %vm845, %v4870, %v4871
        %v4873 = vrot.slane %v4567, 1
        %v4874 = vrot.slane %v4568, 1
        %v4875 = vsel %vm845, %v4873, %v4874
        %v4876 = vrot.slane %v4569, 1
        %v4877 = vrot.slane %v4570, 1
        %v4878 = vsel %vm845, %v4876, %v4877
        %v4879 = vrot.slane %v4571, 1
        %v4880 = vrot.slane %v4572, 1
        %v4881 = vsel %vm845, %v4879, %v4880
        %v4882 = vrot.slane %v4573, 1
        %v4883 = vrot.slane %v4574, 1
        %v4884 = vsel %vm845, %v4882, %v4883
        %v4885 = vrot.slane %v4575, 1
        %v4886 = vrot.slane %v4576, 1
        %v4887 = vsel %vm845, %v4885, %v4886
        %v4888 = vrot.slane %v4577, 1
        %v4889 = vrot.slane %v4578, 1
        %v4890 = vsel %vm845, %v4888, %v4889
        %v4891 = vrot.slane %v4579, 1
        %v4892 = vrot.slane %v4580, 1
        %v4893 = vsel %vm845, %v4891, %v4892
        %v4894 = vrot.slane %v4581, 1
        %v4895 = vrot.slane %v4582, 1
        %v4896 = vsel %vm845, %v4894, %v4895
        %v4897 = vrot.slane %v4583, 1
        %v4898 = vrot.slane %v4584, 1
        %v4899 = vsel %vm845, %v4897, %v4898
        %v4900 = vrot.slane %v4585, 1
        %v4901 = vrot.slane %v4586, 1
        %v4902 = vsel %vm845, %v4900, %v4901
        %v4903 = vrot.slane %v4587, 1
        %v4904 = vrot.slane %v4588, 1
        %v4905 = vsel %vm845, %v4903, %v4904
        %v4906 = vrot.slane %v4589, 1
        %v4907 = vrot.slane %v4590, 1
        %v4908 = vsel %vm845, %v4906, %v4907
        %v4909 = vrot.slane %v4591, 1
        %v4910 = vrot.slane %v4592, 1
        %v4911 = vsel %vm845, %v4909, %v4910
        %v4912 = vrot.slane %v4593, 1
        %v4913 = vrot.slane %v4594, 1
        %v4914 = vsel %vm845, %v4912, %v4913
        %v4979 = vadd.f32 %v4399, %v4725
        %v4980 = vadd.f32 %v4400, %v4728
        %v4981 = vadd.f32 %v4401, %v4731
        %v4982 = vadd.f32 %v4402, %v4734
        %v4983 = vadd.f32 %v4403, %v4737
        %v4984 = vadd.f32 %v4404, %v4740
        %v4985 = vadd.f32 %v4405, %v4743
        %v4986 = vadd.f32 %v4406, %v4746
        %v4987 = vadd.f32 %v4407, %v4749
        %v4988 = vadd.f32 %v4408, %v4752
        %v4989 = vadd.f32 %v4409, %v4755
        %v4990 = vadd.f32 %v4410, %v4758
        %v4991 = vadd.f32 %v4411, %v4761
        %v4992 = vadd.f32 %v4412, %v4764
        %v4993 = vadd.f32 %v4413, %v4767
        %v4994 = vadd.f32 %v4414, %v4770
        %v4995 = vadd.f32 %v4415, %v4773
        %v4996 = vadd.f32 %v4416, %v4776
        %v4997 = vadd.f32 %v4417, %v4779
        %v4998 = vadd.f32 %v4418, %v4782
        %v4999 = vadd.f32 %v4419, %v4785
        %v5000 = vadd.f32 %v4420, %v4788
        %v5001 = vadd.f32 %v4421, %v4791
        %v5002 = vadd.f32 %v4422, %v4794
        %v5003 = vadd.f32 %v4423, %v4797
        %v5004 = vadd.f32 %v4424, %v4800
        %v5005 = vadd.f32 %v4425, %v4803
        %v5006 = vadd.f32 %v4426, %v4806
        %v5007 = vadd.f32 %v4427, %v4809
        %v5008 = vadd.f32 %v4428, %v4812
        %v5009 = vadd.f32 %v4429, %v4815
        %v5010 = vadd.f32 %v4430, %v4818
        %v5011 = vadd.f32 %v4431, %v4821
        %v5012 = vadd.f32 %v4432, %v4824
        %v5013 = vadd.f32 %v4433, %v4827
        %v5014 = vadd.f32 %v4434, %v4830
        %v5015 = vadd.f32 %v4435, %v4833
        %v5016 = vadd.f32 %v4436, %v4836
        %v5017 = vadd.f32 %v4437, %v4839
        %v5018 = vadd.f32 %v4438, %v4842
        %v5019 = vadd.f32 %v4439, %v4845
        %v5020 = vadd.f32 %v4440, %v4848
        %v5021 = vadd.f32 %v4441, %v4851
        %v5022 = vadd.f32 %v4442, %v4854
        %v5023 = vadd.f32 %v4443, %v4857
        %v5024 = vadd.f32 %v4444, %v4860
        %v5025 = vadd.f32 %v4445, %v4863
        %v5026 = vadd.f32 %v4446, %v4866
        %v5027 = vadd.f32 %v4447, %v4869
        %v5028 = vadd.f32 %v4448, %v4872
        %v5029 = vadd.f32 %v4449, %v4875
        %v5030 = vadd.f32 %v4450, %v4878
        %v5031 = vadd.f32 %v4451, %v4881
        %v5032 = vadd.f32 %v4452, %v4884
        %v5033 = vadd.f32 %v4453, %v4887
        %v5034 = vadd.f32 %v4454, %v4890
        %v5035 = vadd.f32 %v4455, %v4893
        %v5036 = vadd.f32 %v4456, %v4896
        %v5037 = vadd.f32 %v4457, %v4899
        %v5038 = vadd.f32 %v4458, %v4902
        %v5039 = vadd.f32 %v4459, %v4905
        %v5040 = vadd.f32 %v4460, %v4908
        %v5041 = vadd.f32 %v4461, %v4911
        %v5042 = vadd.f32 %v4462, %v4914
        %v5043 = vlaneseq
        %v5044 = vshrl.u32 %v5043, 7
        %v5045 = vsub.s32 2, %v5044
        %v5046 = vrot.slane %v447, %v5045
        %v5047 = vmul.f32 %v264, %v5046
        %v5048 = vmul.f32 %v265, %v5046
        %v5049 = vmul.f32 %v266, %v5046
        %v5050 = vmul.f32 %v267, %v5046
        %v5051 = vmul.f32 %v268, %v5046
        %v5052 = vmul.f32 %v269, %v5046
        %v5053 = vmul.f32 %v270, %v5046
        %v5054 = vmul.f32 %v271, %v5046
        %v5055 = vmul.f32 %v272, %v5046
        %v5056 = vmul.f32 %v273, %v5046
        %v5057 = vmul.f32 %v274, %v5046
        %v5058 = vmul.f32 %v275, %v5046
        %v5059 = vmul.f32 %v276, %v5046
        %v5060 = vmul.f32 %v277, %v5046
        %v5061 = vmul.f32 %v278, %v5046
        %v5062 = vmul.f32 %v279, %v5046
        %v5063 = vmul.f32 %v284, %v5046
        %v5064 = vmul.f32 %v285, %v5046
        %v5065 = vmul.f32 %v286, %v5046
        %v5066 = vmul.f32 %v287, %v5046
        %v5067 = vmul.f32 %v288, %v5046
        %v5068 = vmul.f32 %v289, %v5046
        %v5069 = vmul.f32 %v290, %v5046
        %v5070 = vmul.f32 %v291, %v5046
        %v5071 = vmul.f32 %v292, %v5046
        %v5072 = vmul.f32 %v293, %v5046
        %v5073 = vmul.f32 %v294, %v5046
        %v5074 = vmul.f32 %v295, %v5046
        %v5075 = vmul.f32 %v296, %v5046
        %v5076 = vmul.f32 %v297, %v5046
        %v5077 = vmul.f32 %v298, %v5046
        %v5078 = vmul.f32 %v299, %v5046
        %v5079 = vmul.f32 %v304, %v5046
        %v5080 = vmul.f32 %v305, %v5046
        %v5081 = vmul.f32 %v306, %v5046
        %v5082 = vmul.f32 %v307, %v5046
        %v5083 = vmul.f32 %v308, %v5046
        %v5084 = vmul.f32 %v309, %v5046
        %v5085 = vmul.f32 %v310, %v5046
        %v5086 = vmul.f32 %v311, %v5046
        %v5087 = vmul.f32 %v312, %v5046
        %v5088 = vmul.f32 %v313, %v5046
        %v5089 = vmul.f32 %v314, %v5046
        %v5090 = vmul.f32 %v315, %v5046
        %v5091 = vmul.f32 %v316, %v5046
        %v5092 = vmul.f32 %v317, %v5046
        %v5093 = vmul.f32 %v318, %v5046
        %v5094 = vmul.f32 %v319, %v5046
        %v5095 = vmul.f32 %v324, %v5046
        %v5096 = vmul.f32 %v325, %v5046
        %v5097 = vmul.f32 %v326, %v5046
        %v5098 = vmul.f32 %v327, %v5046
        %v5099 = vmul.f32 %v328, %v5046
        %v5100 = vmul.f32 %v329, %v5046
        %v5101 = vmul.f32 %v330, %v5046
        %v5102 = vmul.f32 %v331, %v5046
        %v5103 = vmul.f32 %v332, %v5046
        %v5104 = vmul.f32 %v333, %v5046
        %v5105 = vmul.f32 %v334, %v5046
        %v5106 = vmul.f32 %v335, %v5046
        %v5107 = vmul.f32 %v336, %v5046
        %v5108 = vmul.f32 %v337, %v5046
        %v5109 = vmul.f32 %v338, %v5046
        %v5110 = vmul.f32 %v339, %v5046
        %v5111 = vmul.f32 %v344, %v5046
        %v5112 = vmul.f32 %v345, %v5046
        %v5113 = vmul.f32 %v346, %v5046
        %v5114 = vmul.f32 %v347, %v5046
        %v5115 = vmul.f32 %v348, %v5046
        %v5116 = vmul.f32 %v349, %v5046
        %v5117 = vmul.f32 %v350, %v5046
        %v5118 = vmul.f32 %v351, %v5046
        %v5119 = vmul.f32 %v352, %v5046
        %v5120 = vmul.f32 %v353, %v5046
        %v5121 = vmul.f32 %v354, %v5046
        %v5122 = vmul.f32 %v355, %v5046
        %v5123 = vmul.f32 %v356, %v5046
        %v5124 = vmul.f32 %v357, %v5046
        %v5125 = vmul.f32 %v358, %v5046
        %v5126 = vmul.f32 %v359, %v5046
        %v5127 = vmul.f32 %v364, %v5046
        %v5128 = vmul.f32 %v365, %v5046
        %v5129 = vmul.f32 %v366, %v5046
        %v5130 = vmul.f32 %v367, %v5046
        %v5131 = vmul.f32 %v368, %v5046
        %v5132 = vmul.f32 %v369, %v5046
        %v5133 = vmul.f32 %v370, %v5046
        %v5134 = vmul.f32 %v371, %v5046
        %v5135 = vmul.f32 %v372, %v5046
        %v5136 = vmul.f32 %v373, %v5046
        %v5137 = vmul.f32 %v374, %v5046
        %v5138 = vmul.f32 %v375, %v5046
        %v5139 = vmul.f32 %v376, %v5046
        %v5140 = vmul.f32 %v377, %v5046
        %v5141 = vmul.f32 %v378, %v5046
        %v5142 = vmul.f32 %v379, %v5046
        %v5143 = vmul.f32 %v384, %v5046
        %v5144 = vmul.f32 %v385, %v5046
        %v5145 = vmul.f32 %v386, %v5046
        %v5146 = vmul.f32 %v387, %v5046
        %v5147 = vmul.f32 %v388, %v5046
        %v5148 = vmul.f32 %v389, %v5046
        %v5149 = vmul.f32 %v390, %v5046
        %v5150 = vmul.f32 %v391, %v5046
        %v5151 = vmul.f32 %v392, %v5046
        %v5152 = vmul.f32 %v393, %v5046
        %v5153 = vmul.f32 %v394, %v5046
        %v5154 = vmul.f32 %v395, %v5046
        %v5155 = vmul.f32 %v396, %v5046
        %v5156 = vmul.f32 %v397, %v5046
        %v5157 = vmul.f32 %v398, %v5046
        %v5158 = vmul.f32 %v399, %v5046
        %v5159 = vmul.f32 %v404, %v5046
        %v5160 = vmul.f32 %v405, %v5046
        %v5161 = vmul.f32 %v406, %v5046
        %v5162 = vmul.f32 %v407, %v5046
        %v5163 = vmul.f32 %v408, %v5046
        %v5164 = vmul.f32 %v409, %v5046
        %v5165 = vmul.f32 %v410, %v5046
        %v5166 = vmul.f32 %v411, %v5046
        %v5167 = vmul.f32 %v412, %v5046
        %v5168 = vmul.f32 %v413, %v5046
        %v5169 = vmul.f32 %v414, %v5046
        %v5170 = vmul.f32 %v415, %v5046
        %v5171 = vmul.f32 %v416, %v5046
        %v5172 = vmul.f32 %v417, %v5046
        %v5173 = vmul.f32 %v418, %v5046
        %v5174 = vmul.f32 %v419, %v5046
        %v5303 = vrot.slane %v5047, 2
        %v5304 = vrot.slane %v5048, 2
        %v5305 = vsel %vm1426, %v5303, %v5304
        %v5306 = vrot.slane %v5049, 2
        %v5307 = vrot.slane %v5050, 2
        %v5308 = vsel %vm1426, %v5306, %v5307
        %v5309 = vrot.slane %v5051, 2
        %v5310 = vrot.slane %v5052, 2
        %v5311 = vsel %vm1426, %v5309, %v5310
        %v5312 = vrot.slane %v5053, 2
        %v5313 = vrot.slane %v5054, 2
        %v5314 = vsel %vm1426, %v5312, %v5313
        %v5315 = vrot.slane %v5055, 2
        %v5316 = vrot.slane %v5056, 2
        %v5317 = vsel %vm1426, %v5315, %v5316
        %v5318 = vrot.slane %v5057, 2
        %v5319 = vrot.slane %v5058, 2
        %v5320 = vsel %vm1426, %v5318, %v5319
        %v5321 = vrot.slane %v5059, 2
        %v5322 = vrot.slane %v5060, 2
        %v5323 = vsel %vm1426, %v5321, %v5322
        %v5324 = vrot.slane %v5061, 2
        %v5325 = vrot.slane %v5062, 2
        %v5326 = vsel %vm1426, %v5324, %v5325
        %v5327 = vrot.slane %v5063, 2
        %v5328 = vrot.slane %v5064, 2
        %v5329 = vsel %vm1426, %v5327, %v5328
        %v5330 = vrot.slane %v5065, 2
        %v5331 = vrot.slane %v5066, 2
        %v5332 = vsel %vm1426, %v5330, %v5331
        %v5333 = vrot.slane %v5067, 2
        %v5334 = vrot.slane %v5068, 2
        %v5335 = vsel %vm1426, %v5333, %v5334
        %v5336 = vrot.slane %v5069, 2
        %v5337 = vrot.slane %v5070, 2
        %v5338 = vsel %vm1426, %v5336, %v5337
        %v5339 = vrot.slane %v5071, 2
        %v5340 = vrot.slane %v5072, 2
        %v5341 = vsel %vm1426, %v5339, %v5340
        %v5342 = vrot.slane %v5073, 2
        %v5343 = vrot.slane %v5074, 2
        %v5344 = vsel %vm1426, %v5342, %v5343
        %v5345 = vrot.slane %v5075, 2
        %v5346 = vrot.slane %v5076, 2
        %v5347 = vsel %vm1426, %v5345, %v5346
        %v5348 = vrot.slane %v5077, 2
        %v5349 = vrot.slane %v5078, 2
        %v5350 = vsel %vm1426, %v5348, %v5349
        %v5351 = vrot.slane %v5079, 2
        %v5352 = vrot.slane %v5080, 2
        %v5353 = vsel %vm1426, %v5351, %v5352
        %v5354 = vrot.slane %v5081, 2
        %v5355 = vrot.slane %v5082, 2
        %v5356 = vsel %vm1426, %v5354, %v5355
        %v5357 = vrot.slane %v5083, 2
        %v5358 = vrot.slane %v5084, 2
        %v5359 = vsel %vm1426, %v5357, %v5358
        %v5360 = vrot.slane %v5085, 2
        %v5361 = vrot.slane %v5086, 2
        %v5362 = vsel %vm1426, %v5360, %v5361
        %v5363 = vrot.slane %v5087, 2
        %v5364 = vrot.slane %v5088, 2
        %v5365 = vsel %vm1426, %v5363, %v5364
        %v5366 = vrot.slane %v5089, 2
        %v5367 = vrot.slane %v5090, 2
        %v5368 = vsel %vm1426, %v5366, %v5367
        %v5369 = vrot.slane %v5091, 2
        %v5370 = vrot.slane %v5092, 2
        %v5371 = vsel %vm1426, %v5369, %v5370
        %v5372 = vrot.slane %v5093, 2
        %v5373 = vrot.slane %v5094, 2
        %v5374 = vsel %vm1426, %v5372, %v5373
        %v5375 = vrot.slane %v5095, 2
        %v5376 = vrot.slane %v5096, 2
        %v5377 = vsel %vm1426, %v5375, %v5376
        %v5378 = vrot.slane %v5097, 2
        %v5379 = vrot.slane %v5098, 2
        %v5380 = vsel %vm1426, %v5378, %v5379
        %v5381 = vrot.slane %v5099, 2
        %v5382 = vrot.slane %v5100, 2
        %v5383 = vsel %vm1426, %v5381, %v5382
        %v5384 = vrot.slane %v5101, 2
        %v5385 = vrot.slane %v5102, 2
        %v5386 = vsel %vm1426, %v5384, %v5385
        %v5387 = vrot.slane %v5103, 2
        %v5388 = vrot.slane %v5104, 2
        %v5389 = vsel %vm1426, %v5387, %v5388
        %v5390 = vrot.slane %v5105, 2
        %v5391 = vrot.slane %v5106, 2
        %v5392 = vsel %vm1426, %v5390, %v5391
        %v5393 = vrot.slane %v5107, 2
        %v5394 = vrot.slane %v5108, 2
        %v5395 = vsel %vm1426, %v5393, %v5394
        %v5396 = vrot.slane %v5109, 2
        %v5397 = vrot.slane %v5110, 2
        %v5398 = vsel %vm1426, %v5396, %v5397
        %v5399 = vrot.slane %v5111, 2
        %v5400 = vrot.slane %v5112, 2
        %v5401 = vsel %vm1426, %v5399, %v5400
        %v5402 = vrot.slane %v5113, 2
        %v5403 = vrot.slane %v5114, 2
        %v5404 = vsel %vm1426, %v5402, %v5403
        %v5405 = vrot.slane %v5115, 2
        %v5406 = vrot.slane %v5116, 2
        %v5407 = vsel %vm1426, %v5405, %v5406
        %v5408 = vrot.slane %v5117, 2
        %v5409 = vrot.slane %v5118, 2
        %v5410 = vsel %vm1426, %v5408, %v5409
        %v5411 = vrot.slane %v5119, 2
        %v5412 = vrot.slane %v5120, 2
        %v5413 = vsel %vm1426, %v5411, %v5412
        %v5414 = vrot.slane %v5121, 2
        %v5415 = vrot.slane %v5122, 2
        %v5416 = vsel %vm1426, %v5414, %v5415
        %v5417 = vrot.slane %v5123, 2
        %v5418 = vrot.slane %v5124, 2
        %v5419 = vsel %vm1426, %v5417, %v5418
        %v5420 = vrot.slane %v5125, 2
        %v5421 = vrot.slane %v5126, 2
        %v5422 = vsel %vm1426, %v5420, %v5421
        %v5423 = vrot.slane %v5127, 2
        %v5424 = vrot.slane %v5128, 2
        %v5425 = vsel %vm1426, %v5423, %v5424
        %v5426 = vrot.slane %v5129, 2
        %v5427 = vrot.slane %v5130, 2
        %v5428 = vsel %vm1426, %v5426, %v5427
        %v5429 = vrot.slane %v5131, 2
        %v5430 = vrot.slane %v5132, 2
        %v5431 = vsel %vm1426, %v5429, %v5430
        %v5432 = vrot.slane %v5133, 2
        %v5433 = vrot.slane %v5134, 2
        %v5434 = vsel %vm1426, %v5432, %v5433
        %v5435 = vrot.slane %v5135, 2
        %v5436 = vrot.slane %v5136, 2
        %v5437 = vsel %vm1426, %v5435, %v5436
        %v5438 = vrot.slane %v5137, 2
        %v5439 = vrot.slane %v5138, 2
        %v5440 = vsel %vm1426, %v5438, %v5439
        %v5441 = vrot.slane %v5139, 2
        %v5442 = vrot.slane %v5140, 2
        %v5443 = vsel %vm1426, %v5441, %v5442
        %v5444 = vrot.slane %v5141, 2
        %v5445 = vrot.slane %v5142, 2
        %v5446 = vsel %vm1426, %v5444, %v5445
        %v5447 = vrot.slane %v5143, 2
        %v5448 = vrot.slane %v5144, 2
        %v5449 = vsel %vm1426, %v5447, %v5448
        %v5450 = vrot.slane %v5145, 2
        %v5451 = vrot.slane %v5146, 2
        %v5452 = vsel %vm1426, %v5450, %v5451
        %v5453 = vrot.slane %v5147, 2
        %v5454 = vrot.slane %v5148, 2
        %v5455 = vsel %vm1426, %v5453, %v5454
        %v5456 = vrot.slane %v5149, 2
        %v5457 = vrot.slane %v5150, 2
        %v5458 = vsel %vm1426, %v5456, %v5457
        %v5459 = vrot.slane %v5151, 2
        %v5460 = vrot.slane %v5152, 2
        %v5461 = vsel %vm1426, %v5459, %v5460
        %v5462 = vrot.slane %v5153, 2
        %v5463 = vrot.slane %v5154, 2
        %v5464 = vsel %vm1426, %v5462, %v5463
        %v5465 = vrot.slane %v5155, 2
        %v5466 = vrot.slane %v5156, 2
        %v5467 = vsel %vm1426, %v5465, %v5466
        %v5468 = vrot.slane %v5157, 2
        %v5469 = vrot.slane %v5158, 2
        %v5470 = vsel %vm1426, %v5468, %v5469
        %v5471 = vrot.slane %v5159, 2
        %v5472 = vrot.slane %v5160, 2
        %v5473 = vsel %vm1426, %v5471, %v5472
        %v5474 = vrot.slane %v5161, 2
        %v5475 = vrot.slane %v5162, 2
        %v5476 = vsel %vm1426, %v5474, %v5475
        %v5477 = vrot.slane %v5163, 2
        %v5478 = vrot.slane %v5164, 2
        %v5479 = vsel %vm1426, %v5477, %v5478
        %v5480 = vrot.slane %v5165, 2
        %v5481 = vrot.slane %v5166, 2
        %v5482 = vsel %vm1426, %v5480, %v5481
        %v5483 = vrot.slane %v5167, 2
        %v5484 = vrot.slane %v5168, 2
        %v5485 = vsel %vm1426, %v5483, %v5484
        %v5486 = vrot.slane %v5169, 2
        %v5487 = vrot.slane %v5170, 2
        %v5488 = vsel %vm1426, %v5486, %v5487
        %v5489 = vrot.slane %v5171, 2
        %v5490 = vrot.slane %v5172, 2
        %v5491 = vsel %vm1426, %v5489, %v5490
        %v5492 = vrot.slane %v5173, 2
        %v5493 = vrot.slane %v5174, 2
        %v5494 = vsel %vm1426, %v5492, %v5493
        %v5559 = vadd.f32 %v4979, %v5305
        %v5560 = vadd.f32 %v4980, %v5308
        %v5561 = vadd.f32 %v4981, %v5311
        %v5562 = vadd.f32 %v4982, %v5314
        %v5563 = vadd.f32 %v4983, %v5317
        %v5564 = vadd.f32 %v4984, %v5320
        %v5565 = vadd.f32 %v4985, %v5323
        %v5566 = vadd.f32 %v4986, %v5326
        %v5567 = vadd.f32 %v4987, %v5329
        %v5568 = vadd.f32 %v4988, %v5332
        %v5569 = vadd.f32 %v4989, %v5335
        %v5570 = vadd.f32 %v4990, %v5338
        %v5571 = vadd.f32 %v4991, %v5341
        %v5572 = vadd.f32 %v4992, %v5344
        %v5573 = vadd.f32 %v4993, %v5347
        %v5574 = vadd.f32 %v4994, %v5350
        %v5575 = vadd.f32 %v4995, %v5353
        %v5576 = vadd.f32 %v4996, %v5356
        %v5577 = vadd.f32 %v4997, %v5359
        %v5578 = vadd.f32 %v4998, %v5362
        %v5579 = vadd.f32 %v4999, %v5365
        %v5580 = vadd.f32 %v5000, %v5368
        %v5581 = vadd.f32 %v5001, %v5371
        %v5582 = vadd.f32 %v5002, %v5374
        %v5583 = vadd.f32 %v5003, %v5377
        %v5584 = vadd.f32 %v5004, %v5380
        %v5585 = vadd.f32 %v5005, %v5383
        %v5586 = vadd.f32 %v5006, %v5386
        %v5587 = vadd.f32 %v5007, %v5389
        %v5588 = vadd.f32 %v5008, %v5392
        %v5589 = vadd.f32 %v5009, %v5395
        %v5590 = vadd.f32 %v5010, %v5398
        %v5591 = vadd.f32 %v5011, %v5401
        %v5592 = vadd.f32 %v5012, %v5404
        %v5593 = vadd.f32 %v5013, %v5407
        %v5594 = vadd.f32 %v5014, %v5410
        %v5595 = vadd.f32 %v5015, %v5413
        %v5596 = vadd.f32 %v5016, %v5416
        %v5597 = vadd.f32 %v5017, %v5419
        %v5598 = vadd.f32 %v5018, %v5422
        %v5599 = vadd.f32 %v5019, %v5425
        %v5600 = vadd.f32 %v5020, %v5428
        %v5601 = vadd.f32 %v5021, %v5431
        %v5602 = vadd.f32 %v5022, %v5434
        %v5603 = vadd.f32 %v5023, %v5437
        %v5604 = vadd.f32 %v5024, %v5440
        %v5605 = vadd.f32 %v5025, %v5443
        %v5606 = vadd.f32 %v5026, %v5446
        %v5607 = vadd.f32 %v5027, %v5449
        %v5608 = vadd.f32 %v5028, %v5452
        %v5609 = vadd.f32 %v5029, %v5455
        %v5610 = vadd.f32 %v5030, %v5458
        %v5611 = vadd.f32 %v5031, %v5461
        %v5612 = vadd.f32 %v5032, %v5464
        %v5613 = vadd.f32 %v5033, %v5467
        %v5614 = vadd.f32 %v5034, %v5470
        %v5615 = vadd.f32 %v5035, %v5473
        %v5616 = vadd.f32 %v5036, %v5476
        %v5617 = vadd.f32 %v5037, %v5479
        %v5618 = vadd.f32 %v5038, %v5482
        %v5619 = vadd.f32 %v5039, %v5485
        %v5620 = vadd.f32 %v5040, %v5488
        %v5621 = vadd.f32 %v5041, %v5491
        %v5622 = vadd.f32 %v5042, %v5494
        %v5623 = vlaneseq
        %v5624 = vshrl.u32 %v5623, 7
        %v5625 = vsub.s32 0, %v5624
        %v5626 = vrot.slane %v448, %v5625
        %v5627 = vmul.f32 %v266, %v5626
        %v5628 = vmul.f32 %v268, %v5626
        %v5629 = vmul.f32 %v270, %v5626
        %v5630 = vmul.f32 %v272, %v5626
        %v5631 = vmul.f32 %v274, %v5626
        %v5632 = vmul.f32 %v276, %v5626
        %v5633 = vmul.f32 %v278, %v5626
        %v5634 = vmul.f32 %v280, %v5626
        %v5635 = vmul.f32 %v286, %v5626
        %v5636 = vmul.f32 %v288, %v5626
        %v5637 = vmul.f32 %v290, %v5626
        %v5638 = vmul.f32 %v292, %v5626
        %v5639 = vmul.f32 %v294, %v5626
        %v5640 = vmul.f32 %v296, %v5626
        %v5641 = vmul.f32 %v298, %v5626
        %v5642 = vmul.f32 %v300, %v5626
        %v5643 = vmul.f32 %v306, %v5626
        %v5644 = vmul.f32 %v308, %v5626
        %v5645 = vmul.f32 %v310, %v5626
        %v5646 = vmul.f32 %v312, %v5626
        %v5647 = vmul.f32 %v314, %v5626
        %v5648 = vmul.f32 %v316, %v5626
        %v5649 = vmul.f32 %v318, %v5626
        %v5650 = vmul.f32 %v320, %v5626
        %v5651 = vmul.f32 %v326, %v5626
        %v5652 = vmul.f32 %v328, %v5626
        %v5653 = vmul.f32 %v330, %v5626
        %v5654 = vmul.f32 %v332, %v5626
        %v5655 = vmul.f32 %v334, %v5626
        %v5656 = vmul.f32 %v336, %v5626
        %v5657 = vmul.f32 %v338, %v5626
        %v5658 = vmul.f32 %v340, %v5626
        %v5659 = vmul.f32 %v346, %v5626
        %v5660 = vmul.f32 %v348, %v5626
        %v5661 = vmul.f32 %v350, %v5626
        %v5662 = vmul.f32 %v352, %v5626
        %v5663 = vmul.f32 %v354, %v5626
        %v5664 = vmul.f32 %v356, %v5626
        %v5665 = vmul.f32 %v358, %v5626
        %v5666 = vmul.f32 %v360, %v5626
        %v5667 = vmul.f32 %v366, %v5626
        %v5668 = vmul.f32 %v368, %v5626
        %v5669 = vmul.f32 %v370, %v5626
        %v5670 = vmul.f32 %v372, %v5626
        %v5671 = vmul.f32 %v374, %v5626
        %v5672 = vmul.f32 %v376, %v5626
        %v5673 = vmul.f32 %v378, %v5626
        %v5674 = vmul.f32 %v380, %v5626
        %v5675 = vmul.f32 %v386, %v5626
        %v5676 = vmul.f32 %v388, %v5626
        %v5677 = vmul.f32 %v390, %v5626
        %v5678 = vmul.f32 %v392, %v5626
        %v5679 = vmul.f32 %v394, %v5626
        %v5680 = vmul.f32 %v396, %v5626
        %v5681 = vmul.f32 %v398, %v5626
        %v5682 = vmul.f32 %v400, %v5626
        %v5683 = vmul.f32 %v406, %v5626
        %v5684 = vmul.f32 %v408, %v5626
        %v5685 = vmul.f32 %v410, %v5626
        %v5686 = vmul.f32 %v412, %v5626
        %v5687 = vmul.f32 %v414, %v5626
        %v5688 = vmul.f32 %v416, %v5626
        %v5689 = vmul.f32 %v418, %v5626
        %v5690 = vmul.f32 %v420, %v5626
        %v5691 = vadd.f32 %v5559, %v5627
        %v5692 = vadd.f32 %v5560, %v5628
        %v5693 = vadd.f32 %v5561, %v5629
        %v5694 = vadd.f32 %v5562, %v5630
        %v5695 = vadd.f32 %v5563, %v5631
        %v5696 = vadd.f32 %v5564, %v5632
        %v5697 = vadd.f32 %v5565, %v5633
        %v5698 = vadd.f32 %v5566, %v5634
        %v5699 = vadd.f32 %v5567, %v5635
        %v5700 = vadd.f32 %v5568, %v5636
        %v5701 = vadd.f32 %v5569, %v5637
        %v5702 = vadd.f32 %v5570, %v5638
        %v5703 = vadd.f32 %v5571, %v5639
        %v5704 = vadd.f32 %v5572, %v5640
        %v5705 = vadd.f32 %v5573, %v5641
        %v5706 = vadd.f32 %v5574, %v5642
        %v5707 = vadd.f32 %v5575, %v5643
        %v5708 = vadd.f32 %v5576, %v5644
        %v5709 = vadd.f32 %v5577, %v5645
        %v5710 = vadd.f32 %v5578, %v5646
        %v5711 = vadd.f32 %v5579, %v5647
        %v5712 = vadd.f32 %v5580, %v5648
        %v5713 = vadd.f32 %v5581, %v5649
        %v5714 = vadd.f32 %v5582, %v5650
        %v5715 = vadd.f32 %v5583, %v5651
        %v5716 = vadd.f32 %v5584, %v5652
        %v5717 = vadd.f32 %v5585, %v5653
        %v5718 = vadd.f32 %v5586, %v5654
        %v5719 = vadd.f32 %v5587, %v5655
        %v5720 = vadd.f32 %v5588, %v5656
        %v5721 = vadd.f32 %v5589, %v5657
        %v5722 = vadd.f32 %v5590, %v5658
        %v5723 = vadd.f32 %v5591, %v5659
        %v5724 = vadd.f32 %v5592, %v5660
        %v5725 = vadd.f32 %v5593, %v5661
        %v5726 = vadd.f32 %v5594, %v5662
        %v5727 = vadd.f32 %v5595, %v5663
        %v5728 = vadd.f32 %v5596, %v5664
        %v5729 = vadd.f32 %v5597, %v5665
        %v5730 = vadd.f32 %v5598, %v5666
        %v5731 = vadd.f32 %v5599, %v5667
        %v5732 = vadd.f32 %v5600, %v5668
        %v5733 = vadd.f32 %v5601, %v5669
        %v5734 = vadd.f32 %v5602, %v5670
        %v5735 = vadd.f32 %v5603, %v5671
        %v5736 = vadd.f32 %v5604, %v5672
        %v5737 = vadd.f32 %v5605, %v5673
        %v5738 = vadd.f32 %v5606, %v5674
        %v5739 = vadd.f32 %v5607, %v5675
        %v5740 = vadd.f32 %v5608, %v5676
        %v5741 = vadd.f32 %v5609, %v5677
        %v5742 = vadd.f32 %v5610, %v5678
        %v5743 = vadd.f32 %v5611, %v5679
        %v5744 = vadd.f32 %v5612, %v5680
        %v5745 = vadd.f32 %v5613, %v5681
        %v5746 = vadd.f32 %v5614, %v5682
        %v5747 = vadd.f32 %v5615, %v5683
        %v5748 = vadd.f32 %v5616, %v5684
        %v5749 = vadd.f32 %v5617, %v5685
        %v5750 = vadd.f32 %v5618, %v5686
        %v5751 = vadd.f32 %v5619, %v5687
        %v5752 = vadd.f32 %v5620, %v5688
        %v5753 = vadd.f32 %v5621, %v5689
        %v5754 = vadd.f32 %v5622, %v5690
        %v5755 = vlaneseq
        %v5756 = vshrl.u32 %v5755, 7
        %v5757 = vsub.s32 1, %v5756
        %v5758 = vrot.slane %v448, %v5757
        %v5759 = vmul.f32 %v266, %v5758
        %v5760 = vmul.f32 %v267, %v5758
        %v5761 = vmul.f32 %v268, %v5758
        %v5762 = vmul.f32 %v269, %v5758
        %v5763 = vmul.f32 %v270, %v5758
        %v5764 = vmul.f32 %v271, %v5758
        %v5765 = vmul.f32 %v272, %v5758
        %v5766 = vmul.f32 %v273, %v5758
        %v5767 = vmul.f32 %v274, %v5758
        %v5768 = vmul.f32 %v275, %v5758
        %v5769 = vmul.f32 %v276, %v5758
        %v5770 = vmul.f32 %v277, %v5758
        %v5771 = vmul.f32 %v278, %v5758
        %v5772 = vmul.f32 %v279, %v5758
        %v5773 = vmul.f32 %v280, %v5758
        %v5774 = vmul.f32 %v281, %v5758
        %v5775 = vmul.f32 %v286, %v5758
        %v5776 = vmul.f32 %v287, %v5758
        %v5777 = vmul.f32 %v288, %v5758
        %v5778 = vmul.f32 %v289, %v5758
        %v5779 = vmul.f32 %v290, %v5758
        %v5780 = vmul.f32 %v291, %v5758
        %v5781 = vmul.f32 %v292, %v5758
        %v5782 = vmul.f32 %v293, %v5758
        %v5783 = vmul.f32 %v294, %v5758
        %v5784 = vmul.f32 %v295, %v5758
        %v5785 = vmul.f32 %v296, %v5758
        %v5786 = vmul.f32 %v297, %v5758
        %v5787 = vmul.f32 %v298, %v5758
        %v5788 = vmul.f32 %v299, %v5758
        %v5789 = vmul.f32 %v300, %v5758
        %v5790 = vmul.f32 %v301, %v5758
        %v5791 = vmul.f32 %v306, %v5758
        %v5792 = vmul.f32 %v307, %v5758
        %v5793 = vmul.f32 %v308, %v5758
        %v5794 = vmul.f32 %v309, %v5758
        %v5795 = vmul.f32 %v310, %v5758
        %v5796 = vmul.f32 %v311, %v5758
        %v5797 = vmul.f32 %v312, %v5758
        %v5798 = vmul.f32 %v313, %v5758
        %v5799 = vmul.f32 %v314, %v5758
        %v5800 = vmul.f32 %v315, %v5758
        %v5801 = vmul.f32 %v316, %v5758
        %v5802 = vmul.f32 %v317, %v5758
        %v5803 = vmul.f32 %v318, %v5758
        %v5804 = vmul.f32 %v319, %v5758
        %v5805 = vmul.f32 %v320, %v5758
        %v5806 = vmul.f32 %v321, %v5758
        %v5807 = vmul.f32 %v326, %v5758
        %v5808 = vmul.f32 %v327, %v5758
        %v5809 = vmul.f32 %v328, %v5758
        %v5810 = vmul.f32 %v329, %v5758
        %v5811 = vmul.f32 %v330, %v5758
        %v5812 = vmul.f32 %v331, %v5758
        %v5813 = vmul.f32 %v332, %v5758
        %v5814 = vmul.f32 %v333, %v5758
        %v5815 = vmul.f32 %v334, %v5758
        %v5816 = vmul.f32 %v335, %v5758
        %v5817 = vmul.f32 %v336, %v5758
        %v5818 = vmul.f32 %v337, %v5758
        %v5819 = vmul.f32 %v338, %v5758
        %v5820 = vmul.f32 %v339, %v5758
        %v5821 = vmul.f32 %v340, %v5758
        %v5822 = vmul.f32 %v341, %v5758
        %v5823 = vmul.f32 %v346, %v5758
        %v5824 = vmul.f32 %v347, %v5758
        %v5825 = vmul.f32 %v348, %v5758
        %v5826 = vmul.f32 %v349, %v5758
        %v5827 = vmul.f32 %v350, %v5758
        %v5828 = vmul.f32 %v351, %v5758
        %v5829 = vmul.f32 %v352, %v5758
        %v5830 = vmul.f32 %v353, %v5758
        %v5831 = vmul.f32 %v354, %v5758
        %v5832 = vmul.f32 %v355, %v5758
        %v5833 = vmul.f32 %v356, %v5758
        %v5834 = vmul.f32 %v357, %v5758
        %v5835 = vmul.f32 %v358, %v5758
        %v5836 = vmul.f32 %v359, %v5758
        %v5837 = vmul.f32 %v360, %v5758
        %v5838 = vmul.f32 %v361, %v5758
        %v5839 = vmul.f32 %v366, %v5758
        %v5840 = vmul.f32 %v367, %v5758
        %v5841 = vmul.f32 %v368, %v5758
        %v5842 = vmul.f32 %v369, %v5758
        %v5843 = vmul.f32 %v370, %v5758
        %v5844 = vmul.f32 %v371, %v5758
        %v5845 = vmul.f32 %v372, %v5758
        %v5846 = vmul.f32 %v373, %v5758
        %v5847 = vmul.f32 %v374, %v5758
        %v5848 = vmul.f32 %v375, %v5758
        %v5849 = vmul.f32 %v376, %v5758
        %v5850 = vmul.f32 %v377, %v5758
        %v5851 = vmul.f32 %v378, %v5758
        %v5852 = vmul.f32 %v379, %v5758
        %v5853 = vmul.f32 %v380, %v5758
        %v5854 = vmul.f32 %v381, %v5758
        %v5855 = vmul.f32 %v386, %v5758
        %v5856 = vmul.f32 %v387, %v5758
        %v5857 = vmul.f32 %v388, %v5758
        %v5858 = vmul.f32 %v389, %v5758
        %v5859 = vmul.f32 %v390, %v5758
        %v5860 = vmul.f32 %v391, %v5758
        %v5861 = vmul.f32 %v392, %v5758
        %v5862 = vmul.f32 %v393, %v5758
        %v5863 = vmul.f32 %v394, %v5758
        %v5864 = vmul.f32 %v395, %v5758
        %v5865 = vmul.f32 %v396, %v5758
        %v5866 = vmul.f32 %v397, %v5758
        %v5867 = vmul.f32 %v398, %v5758
        %v5868 = vmul.f32 %v399, %v5758
        %v5869 = vmul.f32 %v400, %v5758
        %v5870 = vmul.f32 %v401, %v5758
        %v5871 = vmul.f32 %v406, %v5758
        %v5872 = vmul.f32 %v407, %v5758
        %v5873 = vmul.f32 %v408, %v5758
        %v5874 = vmul.f32 %v409, %v5758
        %v5875 = vmul.f32 %v410, %v5758
        %v5876 = vmul.f32 %v411, %v5758
        %v5877 = vmul.f32 %v412, %v5758
        %v5878 = vmul.f32 %v413, %v5758
        %v5879 = vmul.f32 %v414, %v5758
        %v5880 = vmul.f32 %v415, %v5758
        %v5881 = vmul.f32 %v416, %v5758
        %v5882 = vmul.f32 %v417, %v5758
        %v5883 = vmul.f32 %v418, %v5758
        %v5884 = vmul.f32 %v419, %v5758
        %v5885 = vmul.f32 %v420, %v5758
        %v5886 = vmul.f32 %v421, %v5758
        %v6015 = vrot.slane %v5759, 1
        %v6016 = vrot.slane %v5760, 1
        %v6017 = vsel %vm845, %v6015, %v6016
        %v6018 = vrot.slane %v5761, 1
        %v6019 = vrot.slane %v5762, 1
        %v6020 = vsel %vm845, %v6018, %v6019
        %v6021 = vrot.slane %v5763, 1
        %v6022 = vrot.slane %v5764, 1
        %v6023 = vsel %vm845, %v6021, %v6022
        %v6024 = vrot.slane %v5765, 1
        %v6025 = vrot.slane %v5766, 1
        %v6026 = vsel %vm845, %v6024, %v6025
        %v6027 = vrot.slane %v5767, 1
        %v6028 = vrot.slane %v5768, 1
        %v6029 = vsel %vm845, %v6027, %v6028
        %v6030 = vrot.slane %v5769, 1
        %v6031 = vrot.slane %v5770, 1
        %v6032 = vsel %vm845, %v6030, %v6031
        %v6033 = vrot.slane %v5771, 1
        %v6034 = vrot.slane %v5772, 1
        %v6035 = vsel %vm845, %v6033, %v6034
        %v6036 = vrot.slane %v5773, 1
        %v6037 = vrot.slane %v5774, 1
        %v6038 = vsel %vm845, %v6036, %v6037
        %v6039 = vrot.slane %v5775, 1
        %v6040 = vrot.slane %v5776, 1
        %v6041 = vsel %vm845, %v6039, %v6040
        %v6042 = vrot.slane %v5777, 1
        %v6043 = vrot.slane %v5778, 1
        %v6044 = vsel %vm845, %v6042, %v6043
        %v6045 = vrot.slane %v5779, 1
        %v6046 = vrot.slane %v5780, 1
        %v6047 = vsel %vm845, %v6045, %v6046
        %v6048 = vrot.slane %v5781, 1
        %v6049 = vrot.slane %v5782, 1
        %v6050 = vsel %vm845, %v6048, %v6049
        %v6051 = vrot.slane %v5783, 1
        %v6052 = vrot.slane %v5784, 1
        %v6053 = vsel %vm845, %v6051, %v6052
        %v6054 = vrot.slane %v5785, 1
        %v6055 = vrot.slane %v5786, 1
        %v6056 = vsel %vm845, %v6054, %v6055
        %v6057 = vrot.slane %v5787, 1
        %v6058 = vrot.slane %v5788, 1
        %v6059 = vsel %vm845, %v6057, %v6058
        %v6060 = vrot.slane %v5789, 1
        %v6061 = vrot.slane %v5790, 1
        %v6062 = vsel %vm845, %v6060, %v6061
        %v6063 = vrot.slane %v5791, 1
        %v6064 = vrot.slane %v5792, 1
        %v6065 = vsel %vm845, %v6063, %v6064
        %v6066 = vrot.slane %v5793, 1
        %v6067 = vrot.slane %v5794, 1
        %v6068 = vsel %vm845, %v6066, %v6067
        %v6069 = vrot.slane %v5795, 1
        %v6070 = vrot.slane %v5796, 1
        %v6071 = vsel %vm845, %v6069, %v6070
        %v6072 = vrot.slane %v5797, 1
        %v6073 = vrot.slane %v5798, 1
        %v6074 = vsel %vm845, %v6072, %v6073
        %v6075 = vrot.slane %v5799, 1
        %v6076 = vrot.slane %v5800, 1
        %v6077 = vsel %vm845, %v6075, %v6076
        %v6078 = vrot.slane %v5801, 1
        %v6079 = vrot.slane %v5802, 1
        %v6080 = vsel %vm845, %v6078, %v6079
        %v6081 = vrot.slane %v5803, 1
        %v6082 = vrot.slane %v5804, 1
        %v6083 = vsel %vm845, %v6081, %v6082
        %v6084 = vrot.slane %v5805, 1
        %v6085 = vrot.slane %v5806, 1
        %v6086 = vsel %vm845, %v6084, %v6085
        %v6087 = vrot.slane %v5807, 1
        %v6088 = vrot.slane %v5808, 1
        %v6089 = vsel %vm845, %v6087, %v6088
        %v6090 = vrot.slane %v5809, 1
        %v6091 = vrot.slane %v5810, 1
        %v6092 = vsel %vm845, %v6090, %v6091
        %v6093 = vrot.slane %v5811, 1
        %v6094 = vrot.slane %v5812, 1
        %v6095 = vsel %vm845, %v6093, %v6094
        %v6096 = vrot.slane %v5813, 1
        %v6097 = vrot.slane %v5814, 1
        %v6098 = vsel %vm845, %v6096, %v6097
        %v6099 = vrot.slane %v5815, 1
        %v6100 = vrot.slane %v5816, 1
        %v6101 = vsel %vm845, %v6099, %v6100
        %v6102 = vrot.slane %v5817, 1
        %v6103 = vrot.slane %v5818, 1
        %v6104 = vsel %vm845, %v6102, %v6103
        %v6105 = vrot.slane %v5819, 1
        %v6106 = vrot.slane %v5820, 1
        %v6107 = vsel %vm845, %v6105, %v6106
        %v6108 = vrot.slane %v5821, 1
        %v6109 = vrot.slane %v5822, 1
        %v6110 = vsel %vm845, %v6108, %v6109
        %v6111 = vrot.slane %v5823, 1
        %v6112 = vrot.slane %v5824, 1
        %v6113 = vsel %vm845, %v6111, %v6112
        %v6114 = vrot.slane %v5825, 1
        %v6115 = vrot.slane %v5826, 1
        %v6116 = vsel %vm845, %v6114, %v6115
        %v6117 = vrot.slane %v5827, 1
        %v6118 = vrot.slane %v5828, 1
        %v6119 = vsel %vm845, %v6117, %v6118
        %v6120 = vrot.slane %v5829, 1
        %v6121 = vrot.slane %v5830, 1
        %v6122 = vsel %vm845, %v6120, %v6121
        %v6123 = vrot.slane %v5831, 1
        %v6124 = vrot.slane %v5832, 1
        %v6125 = vsel %vm845, %v6123, %v6124
        %v6126 = vrot.slane %v5833, 1
        %v6127 = vrot.slane %v5834, 1
        %v6128 = vsel %vm845, %v6126, %v6127
        %v6129 = vrot.slane %v5835, 1
        %v6130 = vrot.slane %v5836, 1
        %v6131 = vsel %vm845, %v6129, %v6130
        %v6132 = vrot.slane %v5837, 1
        %v6133 = vrot.slane %v5838, 1
        %v6134 = vsel %vm845, %v6132, %v6133
        %v6135 = vrot.slane %v5839, 1
        %v6136 = vrot.slane %v5840, 1
        %v6137 = vsel %vm845, %v6135, %v6136
        %v6138 = vrot.slane %v5841, 1
        %v6139 = vrot.slane %v5842, 1
        %v6140 = vsel %vm845, %v6138, %v6139
        %v6141 = vrot.slane %v5843, 1
        %v6142 = vrot.slane %v5844, 1
        %v6143 = vsel %vm845, %v6141, %v6142
        %v6144 = vrot.slane %v5845, 1
        %v6145 = vrot.slane %v5846, 1
        %v6146 = vsel %vm845, %v6144, %v6145
        %v6147 = vrot.slane %v5847, 1
        %v6148 = vrot.slane %v5848, 1
        %v6149 = vsel %vm845, %v6147, %v6148
        %v6150 = vrot.slane %v5849, 1
        %v6151 = vrot.slane %v5850, 1
        %v6152 = vsel %vm845, %v6150, %v6151
        %v6153 = vrot.slane %v5851, 1
        %v6154 = vrot.slane %v5852, 1
        %v6155 = vsel %vm845, %v6153, %v6154
        %v6156 = vrot.slane %v5853, 1
        %v6157 = vrot.slane %v5854, 1
        %v6158 = vsel %vm845, %v6156, %v6157
        %v6159 = vrot.slane %v5855, 1
        %v6160 = vrot.slane %v5856, 1
        %v6161 = vsel %vm845, %v6159, %v6160
        %v6162 = vrot.slane %v5857, 1
        %v6163 = vrot.slane %v5858, 1
        %v6164 = vsel %vm845, %v6162, %v6163
        %v6165 = vrot.slane %v5859, 1
        %v6166 = vrot.slane %v5860, 1
        %v6167 = vsel %vm845, %v6165, %v6166
        %v6168 = vrot.slane %v5861, 1
        %v6169 = vrot.slane %v5862, 1
        %v6170 = vsel %vm845, %v6168, %v6169
        %v6171 = vrot.slane %v5863, 1
        %v6172 = vrot.slane %v5864, 1
        %v6173 = vsel %vm845, %v6171, %v6172
        %v6174 = vrot.slane %v5865, 1
        %v6175 = vrot.slane %v5866, 1
        %v6176 = vsel %vm845, %v6174, %v6175
        %v6177 = vrot.slane %v5867, 1
        %v6178 = vrot.slane %v5868, 1
        %v6179 = vsel %vm845, %v6177, %v6178
        %v6180 = vrot.slane %v5869, 1
        %v6181 = vrot.slane %v5870, 1
        %v6182 = vsel %vm845, %v6180, %v6181
        %v6183 = vrot.slane %v5871, 1
        %v6184 = vrot.slane %v5872, 1
        %v6185 = vsel %vm845, %v6183, %v6184
        %v6186 = vrot.slane %v5873, 1
        %v6187 = vrot.slane %v5874, 1
        %v6188 = vsel %vm845, %v6186, %v6187
        %v6189 = vrot.slane %v5875, 1
        %v6190 = vrot.slane %v5876, 1
        %v6191 = vsel %vm845, %v6189, %v6190
        %v6192 = vrot.slane %v5877, 1
        %v6193 = vrot.slane %v5878, 1
        %v6194 = vsel %vm845, %v6192, %v6193
        %v6195 = vrot.slane %v5879, 1
        %v6196 = vrot.slane %v5880, 1
        %v6197 = vsel %vm845, %v6195, %v6196
        %v6198 = vrot.slane %v5881, 1
        %v6199 = vrot.slane %v5882, 1
        %v6200 = vsel %vm845, %v6198, %v6199
        %v6201 = vrot.slane %v5883, 1
        %v6202 = vrot.slane %v5884, 1
        %v6203 = vsel %vm845, %v6201, %v6202
        %v6204 = vrot.slane %v5885, 1
        %v6205 = vrot.slane %v5886, 1
        %v6206 = vsel %vm845, %v6204, %v6205
        %v6271 = vadd.f32 %v5691, %v6017
        %v6272 = vadd.f32 %v5692, %v6020
        %v6273 = vadd.f32 %v5693, %v6023
        %v6274 = vadd.f32 %v5694, %v6026
        %v6275 = vadd.f32 %v5695, %v6029
        %v6276 = vadd.f32 %v5696, %v6032
        %v6277 = vadd.f32 %v5697, %v6035
        %v6278 = vadd.f32 %v5698, %v6038
        %v6279 = vadd.f32 %v5699, %v6041
        %v6280 = vadd.f32 %v5700, %v6044
        %v6281 = vadd.f32 %v5701, %v6047
        %v6282 = vadd.f32 %v5702, %v6050
        %v6283 = vadd.f32 %v5703, %v6053
        %v6284 = vadd.f32 %v5704, %v6056
        %v6285 = vadd.f32 %v5705, %v6059
        %v6286 = vadd.f32 %v5706, %v6062
        %v6287 = vadd.f32 %v5707, %v6065
        %v6288 = vadd.f32 %v5708, %v6068
        %v6289 = vadd.f32 %v5709, %v6071
        %v6290 = vadd.f32 %v5710, %v6074
        %v6291 = vadd.f32 %v5711, %v6077
        %v6292 = vadd.f32 %v5712, %v6080
        %v6293 = vadd.f32 %v5713, %v6083
        %v6294 = vadd.f32 %v5714, %v6086
        %v6295 = vadd.f32 %v5715, %v6089
        %v6296 = vadd.f32 %v5716, %v6092
        %v6297 = vadd.f32 %v5717, %v6095
        %v6298 = vadd.f32 %v5718, %v6098
        %v6299 = vadd.f32 %v5719, %v6101
        %v6300 = vadd.f32 %v5720, %v6104
        %v6301 = vadd.f32 %v5721, %v6107
        %v6302 = vadd.f32 %v5722, %v6110
        %v6303 = vadd.f32 %v5723, %v6113
        %v6304 = vadd.f32 %v5724, %v6116
        %v6305 = vadd.f32 %v5725, %v6119
        %v6306 = vadd.f32 %v5726, %v6122
        %v6307 = vadd.f32 %v5727, %v6125
        %v6308 = vadd.f32 %v5728, %v6128
        %v6309 = vadd.f32 %v5729, %v6131
        %v6310 = vadd.f32 %v5730, %v6134
        %v6311 = vadd.f32 %v5731, %v6137
        %v6312 = vadd.f32 %v5732, %v6140
        %v6313 = vadd.f32 %v5733, %v6143
        %v6314 = vadd.f32 %v5734, %v6146
        %v6315 = vadd.f32 %v5735, %v6149
        %v6316 = vadd.f32 %v5736, %v6152
        %v6317 = vadd.f32 %v5737, %v6155
        %v6318 = vadd.f32 %v5738, %v6158
        %v6319 = vadd.f32 %v5739, %v6161
        %v6320 = vadd.f32 %v5740, %v6164
        %v6321 = vadd.f32 %v5741, %v6167
        %v6322 = vadd.f32 %v5742, %v6170
        %v6323 = vadd.f32 %v5743, %v6173
        %v6324 = vadd.f32 %v5744, %v6176
        %v6325 = vadd.f32 %v5745, %v6179
        %v6326 = vadd.f32 %v5746, %v6182
        %v6327 = vadd.f32 %v5747, %v6185
        %v6328 = vadd.f32 %v5748, %v6188
        %v6329 = vadd.f32 %v5749, %v6191
        %v6330 = vadd.f32 %v5750, %v6194
        %v6331 = vadd.f32 %v5751, %v6197
        %v6332 = vadd.f32 %v5752, %v6200
        %v6333 = vadd.f32 %v5753, %v6203
        %v6334 = vadd.f32 %v5754, %v6206
        %v6335 = vlaneseq
        %v6336 = vshrl.u32 %v6335, 7
        %v6337 = vsub.s32 2, %v6336
        %v6338 = vrot.slane %v448, %v6337
        %v6339 = vmul.f32 %v266, %v6338
        %v6340 = vmul.f32 %v267, %v6338
        %v6341 = vmul.f32 %v268, %v6338
        %v6342 = vmul.f32 %v269, %v6338
        %v6343 = vmul.f32 %v270, %v6338
        %v6344 = vmul.f32 %v271, %v6338
        %v6345 = vmul.f32 %v272, %v6338
        %v6346 = vmul.f32 %v273, %v6338
        %v6347 = vmul.f32 %v274, %v6338
        %v6348 = vmul.f32 %v275, %v6338
        %v6349 = vmul.f32 %v276, %v6338
        %v6350 = vmul.f32 %v277, %v6338
        %v6351 = vmul.f32 %v278, %v6338
        %v6352 = vmul.f32 %v279, %v6338
        %v6353 = vmul.f32 %v280, %v6338
        %v6354 = vmul.f32 %v281, %v6338
        %v6355 = vmul.f32 %v286, %v6338
        %v6356 = vmul.f32 %v287, %v6338
        %v6357 = vmul.f32 %v288, %v6338
        %v6358 = vmul.f32 %v289, %v6338
        %v6359 = vmul.f32 %v290, %v6338
        %v6360 = vmul.f32 %v291, %v6338
        %v6361 = vmul.f32 %v292, %v6338
        %v6362 = vmul.f32 %v293, %v6338
        %v6363 = vmul.f32 %v294, %v6338
        %v6364 = vmul.f32 %v295, %v6338
        %v6365 = vmul.f32 %v296, %v6338
        %v6366 = vmul.f32 %v297, %v6338
        %v6367 = vmul.f32 %v298, %v6338
        %v6368 = vmul.f32 %v299, %v6338
        %v6369 = vmul.f32 %v300, %v6338
        %v6370 = vmul.f32 %v301, %v6338
        %v6371 = vmul.f32 %v306, %v6338
        %v6372 = vmul.f32 %v307, %v6338
        %v6373 = vmul.f32 %v308, %v6338
        %v6374 = vmul.f32 %v309, %v6338
        %v6375 = vmul.f32 %v310, %v6338
        %v6376 = vmul.f32 %v311, %v6338
        %v6377 = vmul.f32 %v312, %v6338
        %v6378 = vmul.f32 %v313, %v6338
        %v6379 = vmul.f32 %v314, %v6338
        %v6380 = vmul.f32 %v315, %v6338
        %v6381 = vmul.f32 %v316, %v6338
        %v6382 = vmul.f32 %v317, %v6338
        %v6383 = vmul.f32 %v318, %v6338
        %v6384 = vmul.f32 %v319, %v6338
        %v6385 = vmul.f32 %v320, %v6338
        %v6386 = vmul.f32 %v321, %v6338
        %v6387 = vmul.f32 %v326, %v6338
        %v6388 = vmul.f32 %v327, %v6338
        %v6389 = vmul.f32 %v328, %v6338
        %v6390 = vmul.f32 %v329, %v6338
        %v6391 = vmul.f32 %v330, %v6338
        %v6392 = vmul.f32 %v331, %v6338
        %v6393 = vmul.f32 %v332, %v6338
        %v6394 = vmul.f32 %v333, %v6338
        %v6395 = vmul.f32 %v334, %v6338
        %v6396 = vmul.f32 %v335, %v6338
        %v6397 = vmul.f32 %v336, %v6338
        %v6398 = vmul.f32 %v337, %v6338
        %v6399 = vmul.f32 %v338, %v6338
        %v6400 = vmul.f32 %v339, %v6338
        %v6401 = vmul.f32 %v340, %v6338
        %v6402 = vmul.f32 %v341, %v6338
        %v6403 = vmul.f32 %v346, %v6338
        %v6404 = vmul.f32 %v347, %v6338
        %v6405 = vmul.f32 %v348, %v6338
        %v6406 = vmul.f32 %v349, %v6338
        %v6407 = vmul.f32 %v350, %v6338
        %v6408 = vmul.f32 %v351, %v6338
        %v6409 = vmul.f32 %v352, %v6338
        %v6410 = vmul.f32 %v353, %v6338
        %v6411 = vmul.f32 %v354, %v6338
        %v6412 = vmul.f32 %v355, %v6338
        %v6413 = vmul.f32 %v356, %v6338
        %v6414 = vmul.f32 %v357, %v6338
        %v6415 = vmul.f32 %v358, %v6338
        %v6416 = vmul.f32 %v359, %v6338
        %v6417 = vmul.f32 %v360, %v6338
        %v6418 = vmul.f32 %v361, %v6338
        %v6419 = vmul.f32 %v366, %v6338
        %v6420 = vmul.f32 %v367, %v6338
        %v6421 = vmul.f32 %v368, %v6338
        %v6422 = vmul.f32 %v369, %v6338
        %v6423 = vmul.f32 %v370, %v6338
        %v6424 = vmul.f32 %v371, %v6338
        %v6425 = vmul.f32 %v372, %v6338
        %v6426 = vmul.f32 %v373, %v6338
        %v6427 = vmul.f32 %v374, %v6338
        %v6428 = vmul.f32 %v375, %v6338
        %v6429 = vmul.f32 %v376, %v6338
        %v6430 = vmul.f32 %v377, %v6338
        %v6431 = vmul.f32 %v378, %v6338
        %v6432 = vmul.f32 %v379, %v6338
        %v6433 = vmul.f32 %v380, %v6338
        %v6434 = vmul.f32 %v381, %v6338
        %v6435 = vmul.f32 %v386, %v6338
        %v6436 = vmul.f32 %v387, %v6338
        %v6437 = vmul.f32 %v388, %v6338
        %v6438 = vmul.f32 %v389, %v6338
        %v6439 = vmul.f32 %v390, %v6338
        %v6440 = vmul.f32 %v391, %v6338
        %v6441 = vmul.f32 %v392, %v6338
        %v6442 = vmul.f32 %v393, %v6338
        %v6443 = vmul.f32 %v394, %v6338
        %v6444 = vmul.f32 %v395, %v6338
        %v6445 = vmul.f32 %v396, %v6338
        %v6446 = vmul.f32 %v397, %v6338
        %v6447 = vmul.f32 %v398, %v6338
        %v6448 = vmul.f32 %v399, %v6338
        %v6449 = vmul.f32 %v400, %v6338
        %v6450 = vmul.f32 %v401, %v6338
        %v6451 = vmul.f32 %v406, %v6338
        %v6452 = vmul.f32 %v407, %v6338
        %v6453 = vmul.f32 %v408, %v6338
        %v6454 = vmul.f32 %v409, %v6338
        %v6455 = vmul.f32 %v410, %v6338
        %v6456 = vmul.f32 %v411, %v6338
        %v6457 = vmul.f32 %v412, %v6338
        %v6458 = vmul.f32 %v413, %v6338
        %v6459 = vmul.f32 %v414, %v6338
        %v6460 = vmul.f32 %v415, %v6338
        %v6461 = vmul.f32 %v416, %v6338
        %v6462 = vmul.f32 %v417, %v6338
        %v6463 = vmul.f32 %v418, %v6338
        %v6464 = vmul.f32 %v419, %v6338
        %v6465 = vmul.f32 %v420, %v6338
        %v6466 = vmul.f32 %v421, %v6338
        %v6595 = vrot.slane %v6339, 2
        %v6596 = vrot.slane %v6340, 2
        %v6597 = vsel %vm1426, %v6595, %v6596
        %v6598 = vrot.slane %v6341, 2
        %v6599 = vrot.slane %v6342, 2
        %v6600 = vsel %vm1426, %v6598, %v6599
        %v6601 = vrot.slane %v6343, 2
        %v6602 = vrot.slane %v6344, 2
        %v6603 = vsel %vm1426, %v6601, %v6602
        %v6604 = vrot.slane %v6345, 2
        %v6605 = vrot.slane %v6346, 2
        %v6606 = vsel %vm1426, %v6604, %v6605
        %v6607 = vrot.slane %v6347, 2
        %v6608 = vrot.slane %v6348, 2
        %v6609 = vsel %vm1426, %v6607, %v6608
        %v6610 = vrot.slane %v6349, 2
        %v6611 = vrot.slane %v6350, 2
        %v6612 = vsel %vm1426, %v6610, %v6611
        %v6613 = vrot.slane %v6351, 2
        %v6614 = vrot.slane %v6352, 2
        %v6615 = vsel %vm1426, %v6613, %v6614
        %v6616 = vrot.slane %v6353, 2
        %v6617 = vrot.slane %v6354, 2
        %v6618 = vsel %vm1426, %v6616, %v6617
        %v6619 = vrot.slane %v6355, 2
        %v6620 = vrot.slane %v6356, 2
        %v6621 = vsel %vm1426, %v6619, %v6620
        %v6622 = vrot.slane %v6357, 2
        %v6623 = vrot.slane %v6358, 2
        %v6624 = vsel %vm1426, %v6622, %v6623
        %v6625 = vrot.slane %v6359, 2
        %v6626 = vrot.slane %v6360, 2
        %v6627 = vsel %vm1426, %v6625, %v6626
        %v6628 = vrot.slane %v6361, 2
        %v6629 = vrot.slane %v6362, 2
        %v6630 = vsel %vm1426, %v6628, %v6629
        %v6631 = vrot.slane %v6363, 2
        %v6632 = vrot.slane %v6364, 2
        %v6633 = vsel %vm1426, %v6631, %v6632
        %v6634 = vrot.slane %v6365, 2
        %v6635 = vrot.slane %v6366, 2
        %v6636 = vsel %vm1426, %v6634, %v6635
        %v6637 = vrot.slane %v6367, 2
        %v6638 = vrot.slane %v6368, 2
        %v6639 = vsel %vm1426, %v6637, %v6638
        %v6640 = vrot.slane %v6369, 2
        %v6641 = vrot.slane %v6370, 2
        %v6642 = vsel %vm1426, %v6640, %v6641
        %v6643 = vrot.slane %v6371, 2
        %v6644 = vrot.slane %v6372, 2
        %v6645 = vsel %vm1426, %v6643, %v6644
        %v6646 = vrot.slane %v6373, 2
        %v6647 = vrot.slane %v6374, 2
        %v6648 = vsel %vm1426, %v6646, %v6647
        %v6649 = vrot.slane %v6375, 2
        %v6650 = vrot.slane %v6376, 2
        %v6651 = vsel %vm1426, %v6649, %v6650
        %v6652 = vrot.slane %v6377, 2
        %v6653 = vrot.slane %v6378, 2
        %v6654 = vsel %vm1426, %v6652, %v6653
        %v6655 = vrot.slane %v6379, 2
        %v6656 = vrot.slane %v6380, 2
        %v6657 = vsel %vm1426, %v6655, %v6656
        %v6658 = vrot.slane %v6381, 2
        %v6659 = vrot.slane %v6382, 2
        %v6660 = vsel %vm1426, %v6658, %v6659
        %v6661 = vrot.slane %v6383, 2
        %v6662 = vrot.slane %v6384, 2
        %v6663 = vsel %vm1426, %v6661, %v6662
        %v6664 = vrot.slane %v6385, 2
        %v6665 = vrot.slane %v6386, 2
        %v6666 = vsel %vm1426, %v6664, %v6665
        %v6667 = vrot.slane %v6387, 2
        %v6668 = vrot.slane %v6388, 2
        %v6669 = vsel %vm1426, %v6667, %v6668
        %v6670 = vrot.slane %v6389, 2
        %v6671 = vrot.slane %v6390, 2
        %v6672 = vsel %vm1426, %v6670, %v6671
        %v6673 = vrot.slane %v6391, 2
        %v6674 = vrot.slane %v6392, 2
        %v6675 = vsel %vm1426, %v6673, %v6674
        %v6676 = vrot.slane %v6393, 2
        %v6677 = vrot.slane %v6394, 2
        %v6678 = vsel %vm1426, %v6676, %v6677
        %v6679 = vrot.slane %v6395, 2
        %v6680 = vrot.slane %v6396, 2
        %v6681 = vsel %vm1426, %v6679, %v6680
        %v6682 = vrot.slane %v6397, 2
        %v6683 = vrot.slane %v6398, 2
        %v6684 = vsel %vm1426, %v6682, %v6683
        %v6685 = vrot.slane %v6399, 2
        %v6686 = vrot.slane %v6400, 2
        %v6687 = vsel %vm1426, %v6685, %v6686
        %v6688 = vrot.slane %v6401, 2
        %v6689 = vrot.slane %v6402, 2
        %v6690 = vsel %vm1426, %v6688, %v6689
        %v6691 = vrot.slane %v6403, 2
        %v6692 = vrot.slane %v6404, 2
        %v6693 = vsel %vm1426, %v6691, %v6692
        %v6694 = vrot.slane %v6405, 2
        %v6695 = vrot.slane %v6406, 2
        %v6696 = vsel %vm1426, %v6694, %v6695
        %v6697 = vrot.slane %v6407, 2
        %v6698 = vrot.slane %v6408, 2
        %v6699 = vsel %vm1426, %v6697, %v6698
        %v6700 = vrot.slane %v6409, 2
        %v6701 = vrot.slane %v6410, 2
        %v6702 = vsel %vm1426, %v6700, %v6701
        %v6703 = vrot.slane %v6411, 2
        %v6704 = vrot.slane %v6412, 2
        %v6705 = vsel %vm1426, %v6703, %v6704
        %v6706 = vrot.slane %v6413, 2
        %v6707 = vrot.slane %v6414, 2
        %v6708 = vsel %vm1426, %v6706, %v6707
        %v6709 = vrot.slane %v6415, 2
        %v6710 = vrot.slane %v6416, 2
        %v6711 = vsel %vm1426, %v6709, %v6710
        %v6712 = vrot.slane %v6417, 2
        %v6713 = vrot.slane %v6418, 2
        %v6714 = vsel %vm1426, %v6712, %v6713
        %v6715 = vrot.slane %v6419, 2
        %v6716 = vrot.slane %v6420, 2
        %v6717 = vsel %vm1426, %v6715, %v6716
        %v6718 = vrot.slane %v6421, 2
        %v6719 = vrot.slane %v6422, 2
        %v6720 = vsel %vm1426, %v6718, %v6719
        %v6721 = vrot.slane %v6423, 2
        %v6722 = vrot.slane %v6424, 2
        %v6723 = vsel %vm1426, %v6721, %v6722
        %v6724 = vrot.slane %v6425, 2
        %v6725 = vrot.slane %v6426, 2
        %v6726 = vsel %vm1426, %v6724, %v6725
        %v6727 = vrot.slane %v6427, 2
        %v6728 = vrot.slane %v6428, 2
        %v6729 = vsel %vm1426, %v6727, %v6728
        %v6730 = vrot.slane %v6429, 2
        %v6731 = vrot.slane %v6430, 2
        %v6732 = vsel %vm1426, %v6730, %v6731
        %v6733 = vrot.slane %v6431, 2
        %v6734 = vrot.slane %v6432, 2
        %v6735 = vsel %vm1426, %v6733, %v6734
        %v6736 = vrot.slane %v6433, 2
        %v6737 = vrot.slane %v6434, 2
        %v6738 = vsel %vm1426, %v6736, %v6737
        %v6739 = vrot.slane %v6435, 2
        %v6740 = vrot.slane %v6436, 2
        %v6741 = vsel %vm1426, %v6739, %v6740
        %v6742 = vrot.slane %v6437, 2
        %v6743 = vrot.slane %v6438, 2
        %v6744 = vsel %vm1426, %v6742, %v6743
        %v6745 = vrot.slane %v6439, 2
        %v6746 = vrot.slane %v6440, 2
        %v6747 = vsel %vm1426, %v6745, %v6746
        %v6748 = vrot.slane %v6441, 2
        %v6749 = vrot.slane %v6442, 2
        %v6750 = vsel %vm1426, %v6748, %v6749
        %v6751 = vrot.slane %v6443, 2
        %v6752 = vrot.slane %v6444, 2
        %v6753 = vsel %vm1426, %v6751, %v6752
        %v6754 = vrot.slane %v6445, 2
        %v6755 = vrot.slane %v6446, 2
        %v6756 = vsel %vm1426, %v6754, %v6755
        %v6757 = vrot.slane %v6447, 2
        %v6758 = vrot.slane %v6448, 2
        %v6759 = vsel %vm1426, %v6757, %v6758
        %v6760 = vrot.slane %v6449, 2
        %v6761 = vrot.slane %v6450, 2
        %v6762 = vsel %vm1426, %v6760, %v6761
        %v6763 = vrot.slane %v6451, 2
        %v6764 = vrot.slane %v6452, 2
        %v6765 = vsel %vm1426, %v6763, %v6764
        %v6766 = vrot.slane %v6453, 2
        %v6767 = vrot.slane %v6454, 2
        %v6768 = vsel %vm1426, %v6766, %v6767
        %v6769 = vrot.slane %v6455, 2
        %v6770 = vrot.slane %v6456, 2
        %v6771 = vsel %vm1426, %v6769, %v6770
        %v6772 = vrot.slane %v6457, 2
        %v6773 = vrot.slane %v6458, 2
        %v6774 = vsel %vm1426, %v6772, %v6773
        %v6775 = vrot.slane %v6459, 2
        %v6776 = vrot.slane %v6460, 2
        %v6777 = vsel %vm1426, %v6775, %v6776
        %v6778 = vrot.slane %v6461, 2
        %v6779 = vrot.slane %v6462, 2
        %v6780 = vsel %vm1426, %v6778, %v6779
        %v6781 = vrot.slane %v6463, 2
        %v6782 = vrot.slane %v6464, 2
        %v6783 = vsel %vm1426, %v6781, %v6782
        %v6784 = vrot.slane %v6465, 2
        %v6785 = vrot.slane %v6466, 2
        %v6786 = vsel %vm1426, %v6784, %v6785
        %v6851 = vadd.f32 %v6271, %v6597
        %v6852 = vadd.f32 %v6272, %v6600
        %v6853 = vadd.f32 %v6273, %v6603
        %v6854 = vadd.f32 %v6274, %v6606
        %v6855 = vadd.f32 %v6275, %v6609
        %v6856 = vadd.f32 %v6276, %v6612
        %v6857 = vadd.f32 %v6277, %v6615
        %v6858 = vadd.f32 %v6278, %v6618
        %v6859 = vadd.f32 %v6279, %v6621
        %v6860 = vadd.f32 %v6280, %v6624
        %v6861 = vadd.f32 %v6281, %v6627
        %v6862 = vadd.f32 %v6282, %v6630
        %v6863 = vadd.f32 %v6283, %v6633
        %v6864 = vadd.f32 %v6284, %v6636
        %v6865 = vadd.f32 %v6285, %v6639
        %v6866 = vadd.f32 %v6286, %v6642
        %v6867 = vadd.f32 %v6287, %v6645
        %v6868 = vadd.f32 %v6288, %v6648
        %v6869 = vadd.f32 %v6289, %v6651
        %v6870 = vadd.f32 %v6290, %v6654
        %v6871 = vadd.f32 %v6291, %v6657
        %v6872 = vadd.f32 %v6292, %v6660
        %v6873 = vadd.f32 %v6293, %v6663
        %v6874 = vadd.f32 %v6294, %v6666
        %v6875 = vadd.f32 %v6295, %v6669
        %v6876 = vadd.f32 %v6296, %v6672
        %v6877 = vadd.f32 %v6297, %v6675
        %v6878 = vadd.f32 %v6298, %v6678
        %v6879 = vadd.f32 %v6299, %v6681
        %v6880 = vadd.f32 %v6300, %v6684
        %v6881 = vadd.f32 %v6301, %v6687
        %v6882 = vadd.f32 %v6302, %v6690
        %v6883 = vadd.f32 %v6303, %v6693
        %v6884 = vadd.f32 %v6304, %v6696
        %v6885 = vadd.f32 %v6305, %v6699
        %v6886 = vadd.f32 %v6306, %v6702
        %v6887 = vadd.f32 %v6307, %v6705
        %v6888 = vadd.f32 %v6308, %v6708
        %v6889 = vadd.f32 %v6309, %v6711
        %v6890 = vadd.f32 %v6310, %v6714
        %v6891 = vadd.f32 %v6311, %v6717
        %v6892 = vadd.f32 %v6312, %v6720
        %v6893 = vadd.f32 %v6313, %v6723
        %v6894 = vadd.f32 %v6314, %v6726
        %v6895 = vadd.f32 %v6315, %v6729
        %v6896 = vadd.f32 %v6316, %v6732
        %v6897 = vadd.f32 %v6317, %v6735
        %v6898 = vadd.f32 %v6318, %v6738
        %v6899 = vadd.f32 %v6319, %v6741
        %v6900 = vadd.f32 %v6320, %v6744
        %v6901 = vadd.f32 %v6321, %v6747
        %v6902 = vadd.f32 %v6322, %v6750
        %v6903 = vadd.f32 %v6323, %v6753
        %v6904 = vadd.f32 %v6324, %v6756
        %v6905 = vadd.f32 %v6325, %v6759
        %v6906 = vadd.f32 %v6326, %v6762
        %v6907 = vadd.f32 %v6327, %v6765
        %v6908 = vadd.f32 %v6328, %v6768
        %v6909 = vadd.f32 %v6329, %v6771
        %v6910 = vadd.f32 %v6330, %v6774
        %v6911 = vadd.f32 %v6331, %v6777
        %v6912 = vadd.f32 %v6332, %v6780
        %v6913 = vadd.f32 %v6333, %v6783
        %v6914 = vadd.f32 %v6334, %v6786
        %v6915 = vlaneseq
        %v6916 = vshrl.u32 %v6915, 7
        %v6917 = vsub.s32 0, %v6916
        %v6918 = vrot.slane %v449, %v6917
        %v6919 = vmul.f32 %v268, %v6918
        %v6920 = vmul.f32 %v270, %v6918
        %v6921 = vmul.f32 %v272, %v6918
        %v6922 = vmul.f32 %v274, %v6918
        %v6923 = vmul.f32 %v276, %v6918
        %v6924 = vmul.f32 %v278, %v6918
        %v6925 = vmul.f32 %v280, %v6918
        %v6926 = vmul.f32 %v282, %v6918
        %v6927 = vmul.f32 %v288, %v6918
        %v6928 = vmul.f32 %v290, %v6918
        %v6929 = vmul.f32 %v292, %v6918
        %v6930 = vmul.f32 %v294, %v6918
        %v6931 = vmul.f32 %v296, %v6918
        %v6932 = vmul.f32 %v298, %v6918
        %v6933 = vmul.f32 %v300, %v6918
        %v6934 = vmul.f32 %v302, %v6918
        %v6935 = vmul.f32 %v308, %v6918
        %v6936 = vmul.f32 %v310, %v6918
        %v6937 = vmul.f32 %v312, %v6918
        %v6938 = vmul.f32 %v314, %v6918
        %v6939 = vmul.f32 %v316, %v6918
        %v6940 = vmul.f32 %v318, %v6918
        %v6941 = vmul.f32 %v320, %v6918
        %v6942 = vmul.f32 %v322, %v6918
        %v6943 = vmul.f32 %v328, %v6918
        %v6944 = vmul.f32 %v330, %v6918
        %v6945 = vmul.f32 %v332, %v6918
        %v6946 = vmul.f32 %v334, %v6918
        %v6947 = vmul.f32 %v336, %v6918
        %v6948 = vmul.f32 %v338, %v6918
        %v6949 = vmul.f32 %v340, %v6918
        %v6950 = vmul.f32 %v342, %v6918
        %v6951 = vmul.f32 %v348, %v6918
        %v6952 = vmul.f32 %v350, %v6918
        %v6953 = vmul.f32 %v352, %v6918
        %v6954 = vmul.f32 %v354, %v6918
        %v6955 = vmul.f32 %v356, %v6918
        %v6956 = vmul.f32 %v358, %v6918
        %v6957 = vmul.f32 %v360, %v6918
        %v6958 = vmul.f32 %v362, %v6918
        %v6959 = vmul.f32 %v368, %v6918
        %v6960 = vmul.f32 %v370, %v6918
        %v6961 = vmul.f32 %v372, %v6918
        %v6962 = vmul.f32 %v374, %v6918
        %v6963 = vmul.f32 %v376, %v6918
        %v6964 = vmul.f32 %v378, %v6918
        %v6965 = vmul.f32 %v380, %v6918
        %v6966 = vmul.f32 %v382, %v6918
        %v6967 = vmul.f32 %v388, %v6918
        %v6968 = vmul.f32 %v390, %v6918
        %v6969 = vmul.f32 %v392, %v6918
        %v6970 = vmul.f32 %v394, %v6918
        %v6971 = vmul.f32 %v396, %v6918
        %v6972 = vmul.f32 %v398, %v6918
        %v6973 = vmul.f32 %v400, %v6918
        %v6974 = vmul.f32 %v402, %v6918
        %v6975 = vmul.f32 %v408, %v6918
        %v6976 = vmul.f32 %v410, %v6918
        %v6977 = vmul.f32 %v412, %v6918
        %v6978 = vmul.f32 %v414, %v6918
        %v6979 = vmul.f32 %v416, %v6918
        %v6980 = vmul.f32 %v418, %v6918
        %v6981 = vmul.f32 %v420, %v6918
        %v6982 = vmul.f32 %v422, %v6918
        %v6983 = vadd.f32 %v6851, %v6919
        %v6984 = vadd.f32 %v6852, %v6920
        %v6985 = vadd.f32 %v6853, %v6921
        %v6986 = vadd.f32 %v6854, %v6922
        %v6987 = vadd.f32 %v6855, %v6923
        %v6988 = vadd.f32 %v6856, %v6924
        %v6989 = vadd.f32 %v6857, %v6925
        %v6990 = vadd.f32 %v6858, %v6926
        %v6991 = vadd.f32 %v6859, %v6927
        %v6992 = vadd.f32 %v6860, %v6928
        %v6993 = vadd.f32 %v6861, %v6929
        %v6994 = vadd.f32 %v6862, %v6930
        %v6995 = vadd.f32 %v6863, %v6931
        %v6996 = vadd.f32 %v6864, %v6932
        %v6997 = vadd.f32 %v6865, %v6933
        %v6998 = vadd.f32 %v6866, %v6934
        %v6999 = vadd.f32 %v6867, %v6935
        %v7000 = vadd.f32 %v6868, %v6936
        %v7001 = vadd.f32 %v6869, %v6937
        %v7002 = vadd.f32 %v6870, %v6938
        %v7003 = vadd.f32 %v6871, %v6939
        %v7004 = vadd.f32 %v6872, %v6940
        %v7005 = vadd.f32 %v6873, %v6941
        %v7006 = vadd.f32 %v6874, %v6942
        %v7007 = vadd.f32 %v6875, %v6943
        %v7008 = vadd.f32 %v6876, %v6944
        %v7009 = vadd.f32 %v6877, %v6945
        %v7010 = vadd.f32 %v6878, %v6946
        %v7011 = vadd.f32 %v6879, %v6947
        %v7012 = vadd.f32 %v6880, %v6948
        %v7013 = vadd.f32 %v6881, %v6949
        %v7014 = vadd.f32 %v6882, %v6950
        %v7015 = vadd.f32 %v6883, %v6951
        %v7016 = vadd.f32 %v6884, %v6952
        %v7017 = vadd.f32 %v6885, %v6953
        %v7018 = vadd.f32 %v6886, %v6954
        %v7019 = vadd.f32 %v6887, %v6955
        %v7020 = vadd.f32 %v6888, %v6956
        %v7021 = vadd.f32 %v6889, %v6957
        %v7022 = vadd.f32 %v6890, %v6958
        %v7023 = vadd.f32 %v6891, %v6959
        %v7024 = vadd.f32 %v6892, %v6960
        %v7025 = vadd.f32 %v6893, %v6961
        %v7026 = vadd.f32 %v6894, %v6962
        %v7027 = vadd.f32 %v6895, %v6963
        %v7028 = vadd.f32 %v6896, %v6964
        %v7029 = vadd.f32 %v6897, %v6965
        %v7030 = vadd.f32 %v6898, %v6966
        %v7031 = vadd.f32 %v6899, %v6967
        %v7032 = vadd.f32 %v6900, %v6968
        %v7033 = vadd.f32 %v6901, %v6969
        %v7034 = vadd.f32 %v6902, %v6970
        %v7035 = vadd.f32 %v6903, %v6971
        %v7036 = vadd.f32 %v6904, %v6972
        %v7037 = vadd.f32 %v6905, %v6973
        %v7038 = vadd.f32 %v6906, %v6974
        %v7039 = vadd.f32 %v6907, %v6975
        %v7040 = vadd.f32 %v6908, %v6976
        %v7041 = vadd.f32 %v6909, %v6977
        %v7042 = vadd.f32 %v6910, %v6978
        %v7043 = vadd.f32 %v6911, %v6979
        %v7044 = vadd.f32 %v6912, %v6980
        %v7045 = vadd.f32 %v6913, %v6981
        %v7046 = vadd.f32 %v6914, %v6982
        %v7047 = vlaneseq
        %v7048 = vshrl.u32 %v7047, 7
        %v7049 = vsub.s32 1, %v7048
        %v7050 = vrot.slane %v449, %v7049
        %v7051 = vmul.f32 %v268, %v7050
        %v7052 = vmul.f32 %v269, %v7050
        %v7053 = vmul.f32 %v270, %v7050
        %v7054 = vmul.f32 %v271, %v7050
        %v7055 = vmul.f32 %v272, %v7050
        %v7056 = vmul.f32 %v273, %v7050
        %v7057 = vmul.f32 %v274, %v7050
        %v7058 = vmul.f32 %v275, %v7050
        %v7059 = vmul.f32 %v276, %v7050
        %v7060 = vmul.f32 %v277, %v7050
        %v7061 = vmul.f32 %v278, %v7050
        %v7062 = vmul.f32 %v279, %v7050
        %v7063 = vmul.f32 %v280, %v7050
        %v7064 = vmul.f32 %v281, %v7050
        %v7065 = vmul.f32 %v282, %v7050
        %v7066 = vmul.f32 %v283, %v7050
        %v7067 = vmul.f32 %v288, %v7050
        %v7068 = vmul.f32 %v289, %v7050
        %v7069 = vmul.f32 %v290, %v7050
        %v7070 = vmul.f32 %v291, %v7050
        %v7071 = vmul.f32 %v292, %v7050
        %v7072 = vmul.f32 %v293, %v7050
        %v7073 = vmul.f32 %v294, %v7050
        %v7074 = vmul.f32 %v295, %v7050
        %v7075 = vmul.f32 %v296, %v7050
        %v7076 = vmul.f32 %v297, %v7050
        %v7077 = vmul.f32 %v298, %v7050
        %v7078 = vmul.f32 %v299, %v7050
        %v7079 = vmul.f32 %v300, %v7050
        %v7080 = vmul.f32 %v301, %v7050
        %v7081 = vmul.f32 %v302, %v7050
        %v7082 = vmul.f32 %v303, %v7050
        %v7083 = vmul.f32 %v308, %v7050
        %v7084 = vmul.f32 %v309, %v7050
        %v7085 = vmul.f32 %v310, %v7050
        %v7086 = vmul.f32 %v311, %v7050
        %v7087 = vmul.f32 %v312, %v7050
        %v7088 = vmul.f32 %v313, %v7050
        %v7089 = vmul.f32 %v314, %v7050
        %v7090 = vmul.f32 %v315, %v7050
        %v7091 = vmul.f32 %v316, %v7050
        %v7092 = vmul.f32 %v317, %v7050
        %v7093 = vmul.f32 %v318, %v7050
        %v7094 = vmul.f32 %v319, %v7050
        %v7095 = vmul.f32 %v320, %v7050
        %v7096 = vmul.f32 %v321, %v7050
        %v7097 = vmul.f32 %v322, %v7050
        %v7098 = vmul.f32 %v323, %v7050
        %v7099 = vmul.f32 %v328, %v7050
        %v7100 = vmul.f32 %v329, %v7050
        %v7101 = vmul.f32 %v330, %v7050
        %v7102 = vmul.f32 %v331, %v7050
        %v7103 = vmul.f32 %v332, %v7050
        %v7104 = vmul.f32 %v333, %v7050
        %v7105 = vmul.f32 %v334, %v7050
        %v7106 = vmul.f32 %v335, %v7050
        %v7107 = vmul.f32 %v336, %v7050
        %v7108 = vmul.f32 %v337, %v7050
        %v7109 = vmul.f32 %v338, %v7050
        %v7110 = vmul.f32 %v339, %v7050
        %v7111 = vmul.f32 %v340, %v7050
        %v7112 = vmul.f32 %v341, %v7050
        %v7113 = vmul.f32 %v342, %v7050
        %v7114 = vmul.f32 %v343, %v7050
        %v7115 = vmul.f32 %v348, %v7050
        %v7116 = vmul.f32 %v349, %v7050
        %v7117 = vmul.f32 %v350, %v7050
        %v7118 = vmul.f32 %v351, %v7050
        %v7119 = vmul.f32 %v352, %v7050
        %v7120 = vmul.f32 %v353, %v7050
        %v7121 = vmul.f32 %v354, %v7050
        %v7122 = vmul.f32 %v355, %v7050
        %v7123 = vmul.f32 %v356, %v7050
        %v7124 = vmul.f32 %v357, %v7050
        %v7125 = vmul.f32 %v358, %v7050
        %v7126 = vmul.f32 %v359, %v7050
        %v7127 = vmul.f32 %v360, %v7050
        %v7128 = vmul.f32 %v361, %v7050
        %v7129 = vmul.f32 %v362, %v7050
        %v7130 = vmul.f32 %v363, %v7050
        %v7131 = vmul.f32 %v368, %v7050
        %v7132 = vmul.f32 %v369, %v7050
        %v7133 = vmul.f32 %v370, %v7050
        %v7134 = vmul.f32 %v371, %v7050
        %v7135 = vmul.f32 %v372, %v7050
        %v7136 = vmul.f32 %v373, %v7050
        %v7137 = vmul.f32 %v374, %v7050
        %v7138 = vmul.f32 %v375, %v7050
        %v7139 = vmul.f32 %v376, %v7050
        %v7140 = vmul.f32 %v377, %v7050
        %v7141 = vmul.f32 %v378, %v7050
        %v7142 = vmul.f32 %v379, %v7050
        %v7143 = vmul.f32 %v380, %v7050
        %v7144 = vmul.f32 %v381, %v7050
        %v7145 = vmul.f32 %v382, %v7050
        %v7146 = vmul.f32 %v383, %v7050
        %v7147 = vmul.f32 %v388, %v7050
        %v7148 = vmul.f32 %v389, %v7050
        %v7149 = vmul.f32 %v390, %v7050
        %v7150 = vmul.f32 %v391, %v7050
        %v7151 = vmul.f32 %v392, %v7050
        %v7152 = vmul.f32 %v393, %v7050
        %v7153 = vmul.f32 %v394, %v7050
        %v7154 = vmul.f32 %v395, %v7050
        %v7155 = vmul.f32 %v396, %v7050
        %v7156 = vmul.f32 %v397, %v7050
        %v7157 = vmul.f32 %v398, %v7050
        %v7158 = vmul.f32 %v399, %v7050
        %v7159 = vmul.f32 %v400, %v7050
        %v7160 = vmul.f32 %v401, %v7050
        %v7161 = vmul.f32 %v402, %v7050
        %v7162 = vmul.f32 %v403, %v7050
        %v7163 = vmul.f32 %v408, %v7050
        %v7164 = vmul.f32 %v409, %v7050
        %v7165 = vmul.f32 %v410, %v7050
        %v7166 = vmul.f32 %v411, %v7050
        %v7167 = vmul.f32 %v412, %v7050
        %v7168 = vmul.f32 %v413, %v7050
        %v7169 = vmul.f32 %v414, %v7050
        %v7170 = vmul.f32 %v415, %v7050
        %v7171 = vmul.f32 %v416, %v7050
        %v7172 = vmul.f32 %v417, %v7050
        %v7173 = vmul.f32 %v418, %v7050
        %v7174 = vmul.f32 %v419, %v7050
        %v7175 = vmul.f32 %v420, %v7050
        %v7176 = vmul.f32 %v421, %v7050
        %v7177 = vmul.f32 %v422, %v7050
        %v7178 = vmul.f32 %v423, %v7050
        %v7307 = vrot.slane %v7051, 1
        %v7308 = vrot.slane %v7052, 1
        %v7309 = vsel %vm845, %v7307, %v7308
        %v7310 = vrot.slane %v7053, 1
        %v7311 = vrot.slane %v7054, 1
        %v7312 = vsel %vm845, %v7310, %v7311
        %v7313 = vrot.slane %v7055, 1
        %v7314 = vrot.slane %v7056, 1
        %v7315 = vsel %vm845, %v7313, %v7314
        %v7316 = vrot.slane %v7057, 1
        %v7317 = vrot.slane %v7058, 1
        %v7318 = vsel %vm845, %v7316, %v7317
        %v7319 = vrot.slane %v7059, 1
        %v7320 = vrot.slane %v7060, 1
        %v7321 = vsel %vm845, %v7319, %v7320
        %v7322 = vrot.slane %v7061, 1
        %v7323 = vrot.slane %v7062, 1
        %v7324 = vsel %vm845, %v7322, %v7323
        %v7325 = vrot.slane %v7063, 1
        %v7326 = vrot.slane %v7064, 1
        %v7327 = vsel %vm845, %v7325, %v7326
        %v7328 = vrot.slane %v7065, 1
        %v7329 = vrot.slane %v7066, 1
        %v7330 = vsel %vm845, %v7328, %v7329
        %v7331 = vrot.slane %v7067, 1
        %v7332 = vrot.slane %v7068, 1
        %v7333 = vsel %vm845, %v7331, %v7332
        %v7334 = vrot.slane %v7069, 1
        %v7335 = vrot.slane %v7070, 1
        %v7336 = vsel %vm845, %v7334, %v7335
        %v7337 = vrot.slane %v7071, 1
        %v7338 = vrot.slane %v7072, 1
        %v7339 = vsel %vm845, %v7337, %v7338
        %v7340 = vrot.slane %v7073, 1
        %v7341 = vrot.slane %v7074, 1
        %v7342 = vsel %vm845, %v7340, %v7341
        %v7343 = vrot.slane %v7075, 1
        %v7344 = vrot.slane %v7076, 1
        %v7345 = vsel %vm845, %v7343, %v7344
        %v7346 = vrot.slane %v7077, 1
        %v7347 = vrot.slane %v7078, 1
        %v7348 = vsel %vm845, %v7346, %v7347
        %v7349 = vrot.slane %v7079, 1
        %v7350 = vrot.slane %v7080, 1
        %v7351 = vsel %vm845, %v7349, %v7350
        %v7352 = vrot.slane %v7081, 1
        %v7353 = vrot.slane %v7082, 1
        %v7354 = vsel %vm845, %v7352, %v7353
        %v7355 = vrot.slane %v7083, 1
        %v7356 = vrot.slane %v7084, 1
        %v7357 = vsel %vm845, %v7355, %v7356
        %v7358 = vrot.slane %v7085, 1
        %v7359 = vrot.slane %v7086, 1
        %v7360 = vsel %vm845, %v7358, %v7359
        %v7361 = vrot.slane %v7087, 1
        %v7362 = vrot.slane %v7088, 1
        %v7363 = vsel %vm845, %v7361, %v7362
        %v7364 = vrot.slane %v7089, 1
        %v7365 = vrot.slane %v7090, 1
        %v7366 = vsel %vm845, %v7364, %v7365
        %v7367 = vrot.slane %v7091, 1
        %v7368 = vrot.slane %v7092, 1
        %v7369 = vsel %vm845, %v7367, %v7368
        %v7370 = vrot.slane %v7093, 1
        %v7371 = vrot.slane %v7094, 1
        %v7372 = vsel %vm845, %v7370, %v7371
        %v7373 = vrot.slane %v7095, 1
        %v7374 = vrot.slane %v7096, 1
        %v7375 = vsel %vm845, %v7373, %v7374
        %v7376 = vrot.slane %v7097, 1
        %v7377 = vrot.slane %v7098, 1
        %v7378 = vsel %vm845, %v7376, %v7377
        %v7379 = vrot.slane %v7099, 1
        %v7380 = vrot.slane %v7100, 1
        %v7381 = vsel %vm845, %v7379, %v7380
        %v7382 = vrot.slane %v7101, 1
        %v7383 = vrot.slane %v7102, 1
        %v7384 = vsel %vm845, %v7382, %v7383
        %v7385 = vrot.slane %v7103, 1
        %v7386 = vrot.slane %v7104, 1
        %v7387 = vsel %vm845, %v7385, %v7386
        %v7388 = vrot.slane %v7105, 1
        %v7389 = vrot.slane %v7106, 1
        %v7390 = vsel %vm845, %v7388, %v7389
        %v7391 = vrot.slane %v7107, 1
        %v7392 = vrot.slane %v7108, 1
        %v7393 = vsel %vm845, %v7391, %v7392
        %v7394 = vrot.slane %v7109, 1
        %v7395 = vrot.slane %v7110, 1
        %v7396 = vsel %vm845, %v7394, %v7395
        %v7397 = vrot.slane %v7111, 1
        %v7398 = vrot.slane %v7112, 1
        %v7399 = vsel %vm845, %v7397, %v7398
        %v7400 = vrot.slane %v7113, 1
        %v7401 = vrot.slane %v7114, 1
        %v7402 = vsel %vm845, %v7400, %v7401
        %v7403 = vrot.slane %v7115, 1
        %v7404 = vrot.slane %v7116, 1
        %v7405 = vsel %vm845, %v7403, %v7404
        %v7406 = vrot.slane %v7117, 1
        %v7407 = vrot.slane %v7118, 1
        %v7408 = vsel %vm845, %v7406, %v7407
        %v7409 = vrot.slane %v7119, 1
        %v7410 = vrot.slane %v7120, 1
        %v7411 = vsel %vm845, %v7409, %v7410
        %v7412 = vrot.slane %v7121, 1
        %v7413 = vrot.slane %v7122, 1
        %v7414 = vsel %vm845, %v7412, %v7413
        %v7415 = vrot.slane %v7123, 1
        %v7416 = vrot.slane %v7124, 1
        %v7417 = vsel %vm845, %v7415, %v7416
        %v7418 = vrot.slane %v7125, 1
        %v7419 = vrot.slane %v7126, 1
        %v7420 = vsel %vm845, %v7418, %v7419
        %v7421 = vrot.slane %v7127, 1
        %v7422 = vrot.slane %v7128, 1
        %v7423 = vsel %vm845, %v7421, %v7422
        %v7424 = vrot.slane %v7129, 1
        %v7425 = vrot.slane %v7130, 1
        %v7426 = vsel %vm845, %v7424, %v7425
        %v7427 = vrot.slane %v7131, 1
        %v7428 = vrot.slane %v7132, 1
        %v7429 = vsel %vm845, %v7427, %v7428
        %v7430 = vrot.slane %v7133, 1
        %v7431 = vrot.slane %v7134, 1
        %v7432 = vsel %vm845, %v7430, %v7431
        %v7433 = vrot.slane %v7135, 1
        %v7434 = vrot.slane %v7136, 1
        %v7435 = vsel %vm845, %v7433, %v7434
        %v7436 = vrot.slane %v7137, 1
        %v7437 = vrot.slane %v7138, 1
        %v7438 = vsel %vm845, %v7436, %v7437
        %v7439 = vrot.slane %v7139, 1
        %v7440 = vrot.slane %v7140, 1
        %v7441 = vsel %vm845, %v7439, %v7440
        %v7442 = vrot.slane %v7141, 1
        %v7443 = vrot.slane %v7142, 1
        %v7444 = vsel %vm845, %v7442, %v7443
        %v7445 = vrot.slane %v7143, 1
        %v7446 = vrot.slane %v7144, 1
        %v7447 = vsel %vm845, %v7445, %v7446
        %v7448 = vrot.slane %v7145, 1
        %v7449 = vrot.slane %v7146, 1
        %v7450 = vsel %vm845, %v7448, %v7449
        %v7451 = vrot.slane %v7147, 1
        %v7452 = vrot.slane %v7148, 1
        %v7453 = vsel %vm845, %v7451, %v7452
        %v7454 = vrot.slane %v7149, 1
        %v7455 = vrot.slane %v7150, 1
        %v7456 = vsel %vm845, %v7454, %v7455
        %v7457 = vrot.slane %v7151, 1
        %v7458 = vrot.slane %v7152, 1
        %v7459 = vsel %vm845, %v7457, %v7458
        %v7460 = vrot.slane %v7153, 1
        %v7461 = vrot.slane %v7154, 1
        %v7462 = vsel %vm845, %v7460, %v7461
        %v7463 = vrot.slane %v7155, 1
        %v7464 = vrot.slane %v7156, 1
        %v7465 = vsel %vm845, %v7463, %v7464
        %v7466 = vrot.slane %v7157, 1
        %v7467 = vrot.slane %v7158, 1
        %v7468 = vsel %vm845, %v7466, %v7467
        %v7469 = vrot.slane %v7159, 1
        %v7470 = vrot.slane %v7160, 1
        %v7471 = vsel %vm845, %v7469, %v7470
        %v7472 = vrot.slane %v7161, 1
        %v7473 = vrot.slane %v7162, 1
        %v7474 = vsel %vm845, %v7472, %v7473
        %v7475 = vrot.slane %v7163, 1
        %v7476 = vrot.slane %v7164, 1
        %v7477 = vsel %vm845, %v7475, %v7476
        %v7478 = vrot.slane %v7165, 1
        %v7479 = vrot.slane %v7166, 1
        %v7480 = vsel %vm845, %v7478, %v7479
        %v7481 = vrot.slane %v7167, 1
        %v7482 = vrot.slane %v7168, 1
        %v7483 = vsel %vm845, %v7481, %v7482
        %v7484 = vrot.slane %v7169, 1
        %v7485 = vrot.slane %v7170, 1
        %v7486 = vsel %vm845, %v7484, %v7485
        %v7487 = vrot.slane %v7171, 1
        %v7488 = vrot.slane %v7172, 1
        %v7489 = vsel %vm845, %v7487, %v7488
        %v7490 = vrot.slane %v7173, 1
        %v7491 = vrot.slane %v7174, 1
        %v7492 = vsel %vm845, %v7490, %v7491
        %v7493 = vrot.slane %v7175, 1
        %v7494 = vrot.slane %v7176, 1
        %v7495 = vsel %vm845, %v7493, %v7494
        %v7496 = vrot.slane %v7177, 1
        %v7497 = vrot.slane %v7178, 1
        %v7498 = vsel %vm845, %v7496, %v7497
        %v7563 = vadd.f32 %v6983, %v7309
        %v7564 = vadd.f32 %v6984, %v7312
        %v7565 = vadd.f32 %v6985, %v7315
        %v7566 = vadd.f32 %v6986, %v7318
        %v7567 = vadd.f32 %v6987, %v7321
        %v7568 = vadd.f32 %v6988, %v7324
        %v7569 = vadd.f32 %v6989, %v7327
        %v7570 = vadd.f32 %v6990, %v7330
        %v7571 = vadd.f32 %v6991, %v7333
        %v7572 = vadd.f32 %v6992, %v7336
        %v7573 = vadd.f32 %v6993, %v7339
        %v7574 = vadd.f32 %v6994, %v7342
        %v7575 = vadd.f32 %v6995, %v7345
        %v7576 = vadd.f32 %v6996, %v7348
        %v7577 = vadd.f32 %v6997, %v7351
        %v7578 = vadd.f32 %v6998, %v7354
        %v7579 = vadd.f32 %v6999, %v7357
        %v7580 = vadd.f32 %v7000, %v7360
        %v7581 = vadd.f32 %v7001, %v7363
        %v7582 = vadd.f32 %v7002, %v7366
        %v7583 = vadd.f32 %v7003, %v7369
        %v7584 = vadd.f32 %v7004, %v7372
        %v7585 = vadd.f32 %v7005, %v7375
        %v7586 = vadd.f32 %v7006, %v7378
        %v7587 = vadd.f32 %v7007, %v7381
        %v7588 = vadd.f32 %v7008, %v7384
        %v7589 = vadd.f32 %v7009, %v7387
        %v7590 = vadd.f32 %v7010, %v7390
        %v7591 = vadd.f32 %v7011, %v7393
        %v7592 = vadd.f32 %v7012, %v7396
        %v7593 = vadd.f32 %v7013, %v7399
        %v7594 = vadd.f32 %v7014, %v7402
        %v7595 = vadd.f32 %v7015, %v7405
        %v7596 = vadd.f32 %v7016, %v7408
        %v7597 = vadd.f32 %v7017, %v7411
        %v7598 = vadd.f32 %v7018, %v7414
        %v7599 = vadd.f32 %v7019, %v7417
        %v7600 = vadd.f32 %v7020, %v7420
        %v7601 = vadd.f32 %v7021, %v7423
        %v7602 = vadd.f32 %v7022, %v7426
        %v7603 = vadd.f32 %v7023, %v7429
        %v7604 = vadd.f32 %v7024, %v7432
        %v7605 = vadd.f32 %v7025, %v7435
        %v7606 = vadd.f32 %v7026, %v7438
        %v7607 = vadd.f32 %v7027, %v7441
        %v7608 = vadd.f32 %v7028, %v7444
        %v7609 = vadd.f32 %v7029, %v7447
        %v7610 = vadd.f32 %v7030, %v7450
        %v7611 = vadd.f32 %v7031, %v7453
        %v7612 = vadd.f32 %v7032, %v7456
        %v7613 = vadd.f32 %v7033, %v7459
        %v7614 = vadd.f32 %v7034, %v7462
        %v7615 = vadd.f32 %v7035, %v7465
        %v7616 = vadd.f32 %v7036, %v7468
        %v7617 = vadd.f32 %v7037, %v7471
        %v7618 = vadd.f32 %v7038, %v7474
        %v7619 = vadd.f32 %v7039, %v7477
        %v7620 = vadd.f32 %v7040, %v7480
        %v7621 = vadd.f32 %v7041, %v7483
        %v7622 = vadd.f32 %v7042, %v7486
        %v7623 = vadd.f32 %v7043, %v7489
        %v7624 = vadd.f32 %v7044, %v7492
        %v7625 = vadd.f32 %v7045, %v7495
        %v7626 = vadd.f32 %v7046, %v7498
        %v7627 = vlaneseq
        %v7628 = vshrl.u32 %v7627, 7
        %v7629 = vsub.s32 2, %v7628
        %v7630 = vrot.slane %v449, %v7629
        %v7631 = vmul.f32 %v268, %v7630
        %v7632 = vmul.f32 %v269, %v7630
        %v7633 = vmul.f32 %v270, %v7630
        %v7634 = vmul.f32 %v271, %v7630
        %v7635 = vmul.f32 %v272, %v7630
        %v7636 = vmul.f32 %v273, %v7630
        %v7637 = vmul.f32 %v274, %v7630
        %v7638 = vmul.f32 %v275, %v7630
        %v7639 = vmul.f32 %v276, %v7630
        %v7640 = vmul.f32 %v277, %v7630
        %v7641 = vmul.f32 %v278, %v7630
        %v7642 = vmul.f32 %v279, %v7630
        %v7643 = vmul.f32 %v280, %v7630
        %v7644 = vmul.f32 %v281, %v7630
        %v7645 = vmul.f32 %v282, %v7630
        %v7646 = vmul.f32 %v283, %v7630
        %v7647 = vmul.f32 %v288, %v7630
        %v7648 = vmul.f32 %v289, %v7630
        %v7649 = vmul.f32 %v290, %v7630
        %v7650 = vmul.f32 %v291, %v7630
        %v7651 = vmul.f32 %v292, %v7630
        %v7652 = vmul.f32 %v293, %v7630
        %v7653 = vmul.f32 %v294, %v7630
        %v7654 = vmul.f32 %v295, %v7630
        %v7655 = vmul.f32 %v296, %v7630
        %v7656 = vmul.f32 %v297, %v7630
        %v7657 = vmul.f32 %v298, %v7630
        %v7658 = vmul.f32 %v299, %v7630
        %v7659 = vmul.f32 %v300, %v7630
        %v7660 = vmul.f32 %v301, %v7630
        %v7661 = vmul.f32 %v302, %v7630
        %v7662 = vmul.f32 %v303, %v7630
        %v7663 = vmul.f32 %v308, %v7630
        %v7664 = vmul.f32 %v309, %v7630
        %v7665 = vmul.f32 %v310, %v7630
        %v7666 = vmul.f32 %v311, %v7630
        %v7667 = vmul.f32 %v312, %v7630
        %v7668 = vmul.f32 %v313, %v7630
        %v7669 = vmul.f32 %v314, %v7630
        %v7670 = vmul.f32 %v315, %v7630
        %v7671 = vmul.f32 %v316, %v7630
        %v7672 = vmul.f32 %v317, %v7630
        %v7673 = vmul.f32 %v318, %v7630
        %v7674 = vmul.f32 %v319, %v7630
        %v7675 = vmul.f32 %v320, %v7630
        %v7676 = vmul.f32 %v321, %v7630
        %v7677 = vmul.f32 %v322, %v7630
        %v7678 = vmul.f32 %v323, %v7630
        %v7679 = vmul.f32 %v328, %v7630
        %v7680 = vmul.f32 %v329, %v7630
        %v7681 = vmul.f32 %v330, %v7630
        %v7682 = vmul.f32 %v331, %v7630
        %v7683 = vmul.f32 %v332, %v7630
        %v7684 = vmul.f32 %v333, %v7630
        %v7685 = vmul.f32 %v334, %v7630
        %v7686 = vmul.f32 %v335, %v7630
        %v7687 = vmul.f32 %v336, %v7630
        %v7688 = vmul.f32 %v337, %v7630
        %v7689 = vmul.f32 %v338, %v7630
        %v7690 = vmul.f32 %v339, %v7630
        %v7691 = vmul.f32 %v340, %v7630
        %v7692 = vmul.f32 %v341, %v7630
        %v7693 = vmul.f32 %v342, %v7630
        %v7694 = vmul.f32 %v343, %v7630
        %v7695 = vmul.f32 %v348, %v7630
        %v7696 = vmul.f32 %v349, %v7630
        %v7697 = vmul.f32 %v350, %v7630
        %v7698 = vmul.f32 %v351, %v7630
        %v7699 = vmul.f32 %v352, %v7630
        %v7700 = vmul.f32 %v353, %v7630
        %v7701 = vmul.f32 %v354, %v7630
        %v7702 = vmul.f32 %v355, %v7630
        %v7703 = vmul.f32 %v356, %v7630
        %v7704 = vmul.f32 %v357, %v7630
        %v7705 = vmul.f32 %v358, %v7630
        %v7706 = vmul.f32 %v359, %v7630
        %v7707 = vmul.f32 %v360, %v7630
        %v7708 = vmul.f32 %v361, %v7630
        %v7709 = vmul.f32 %v362, %v7630
        %v7710 = vmul.f32 %v363, %v7630
        %v7711 = vmul.f32 %v368, %v7630
        %v7712 = vmul.f32 %v369, %v7630
        %v7713 = vmul.f32 %v370, %v7630
        %v7714 = vmul.f32 %v371, %v7630
        %v7715 = vmul.f32 %v372, %v7630
        %v7716 = vmul.f32 %v373, %v7630
        %v7717 = vmul.f32 %v374, %v7630
        %v7718 = vmul.f32 %v375, %v7630
        %v7719 = vmul.f32 %v376, %v7630
        %v7720 = vmul.f32 %v377, %v7630
        %v7721 = vmul.f32 %v378, %v7630
        %v7722 = vmul.f32 %v379, %v7630
        %v7723 = vmul.f32 %v380, %v7630
        %v7724 = vmul.f32 %v381, %v7630
        %v7725 = vmul.f32 %v382, %v7630
        %v7726 = vmul.f32 %v383, %v7630
        %v7727 = vmul.f32 %v388, %v7630
        %v7728 = vmul.f32 %v389, %v7630
        %v7729 = vmul.f32 %v390, %v7630
        %v7730 = vmul.f32 %v391, %v7630
        %v7731 = vmul.f32 %v392, %v7630
        %v7732 = vmul.f32 %v393, %v7630
        %v7733 = vmul.f32 %v394, %v7630
        %v7734 = vmul.f32 %v395, %v7630
        %v7735 = vmul.f32 %v396, %v7630
        %v7736 = vmul.f32 %v397, %v7630
        %v7737 = vmul.f32 %v398, %v7630
        %v7738 = vmul.f32 %v399, %v7630
        %v7739 = vmul.f32 %v400, %v7630
        %v7740 = vmul.f32 %v401, %v7630
        %v7741 = vmul.f32 %v402, %v7630
        %v7742 = vmul.f32 %v403, %v7630
        %v7743 = vmul.f32 %v408, %v7630
        %v7744 = vmul.f32 %v409, %v7630
        %v7745 = vmul.f32 %v410, %v7630
        %v7746 = vmul.f32 %v411, %v7630
        %v7747 = vmul.f32 %v412, %v7630
        %v7748 = vmul.f32 %v413, %v7630
        %v7749 = vmul.f32 %v414, %v7630
        %v7750 = vmul.f32 %v415, %v7630
        %v7751 = vmul.f32 %v416, %v7630
        %v7752 = vmul.f32 %v417, %v7630
        %v7753 = vmul.f32 %v418, %v7630
        %v7754 = vmul.f32 %v419, %v7630
        %v7755 = vmul.f32 %v420, %v7630
        %v7756 = vmul.f32 %v421, %v7630
        %v7757 = vmul.f32 %v422, %v7630
        %v7758 = vmul.f32 %v423, %v7630
        %v7887 = vrot.slane %v7631, 2
        %v7888 = vrot.slane %v7632, 2
        %v7889 = vsel %vm1426, %v7887, %v7888
        %v7890 = vrot.slane %v7633, 2
        %v7891 = vrot.slane %v7634, 2
        %v7892 = vsel %vm1426, %v7890, %v7891
        %v7893 = vrot.slane %v7635, 2
        %v7894 = vrot.slane %v7636, 2
        %v7895 = vsel %vm1426, %v7893, %v7894
        %v7896 = vrot.slane %v7637, 2
        %v7897 = vrot.slane %v7638, 2
        %v7898 = vsel %vm1426, %v7896, %v7897
        %v7899 = vrot.slane %v7639, 2
        %v7900 = vrot.slane %v7640, 2
        %v7901 = vsel %vm1426, %v7899, %v7900
        %v7902 = vrot.slane %v7641, 2
        %v7903 = vrot.slane %v7642, 2
        %v7904 = vsel %vm1426, %v7902, %v7903
        %v7905 = vrot.slane %v7643, 2
        %v7906 = vrot.slane %v7644, 2
        %v7907 = vsel %vm1426, %v7905, %v7906
        %v7908 = vrot.slane %v7645, 2
        %v7909 = vrot.slane %v7646, 2
        %v7910 = vsel %vm1426, %v7908, %v7909
        %v7911 = vrot.slane %v7647, 2
        %v7912 = vrot.slane %v7648, 2
        %v7913 = vsel %vm1426, %v7911, %v7912
        %v7914 = vrot.slane %v7649, 2
        %v7915 = vrot.slane %v7650, 2
        %v7916 = vsel %vm1426, %v7914, %v7915
        %v7917 = vrot.slane %v7651, 2
        %v7918 = vrot.slane %v7652, 2
        %v7919 = vsel %vm1426, %v7917, %v7918
        %v7920 = vrot.slane %v7653, 2
        %v7921 = vrot.slane %v7654, 2
        %v7922 = vsel %vm1426, %v7920, %v7921
        %v7923 = vrot.slane %v7655, 2
        %v7924 = vrot.slane %v7656, 2
        %v7925 = vsel %vm1426, %v7923, %v7924
        %v7926 = vrot.slane %v7657, 2
        %v7927 = vrot.slane %v7658, 2
        %v7928 = vsel %vm1426, %v7926, %v7927
        %v7929 = vrot.slane %v7659, 2
        %v7930 = vrot.slane %v7660, 2
        %v7931 = vsel %vm1426, %v7929, %v7930
        %v7932 = vrot.slane %v7661, 2
        %v7933 = vrot.slane %v7662, 2
        %v7934 = vsel %vm1426, %v7932, %v7933
        %v7935 = vrot.slane %v7663, 2
        %v7936 = vrot.slane %v7664, 2
        %v7937 = vsel %vm1426, %v7935, %v7936
        %v7938 = vrot.slane %v7665, 2
        %v7939 = vrot.slane %v7666, 2
        %v7940 = vsel %vm1426, %v7938, %v7939
        %v7941 = vrot.slane %v7667, 2
        %v7942 = vrot.slane %v7668, 2
        %v7943 = vsel %vm1426, %v7941, %v7942
        %v7944 = vrot.slane %v7669, 2
        %v7945 = vrot.slane %v7670, 2
        %v7946 = vsel %vm1426, %v7944, %v7945
        %v7947 = vrot.slane %v7671, 2
        %v7948 = vrot.slane %v7672, 2
        %v7949 = vsel %vm1426, %v7947, %v7948
        %v7950 = vrot.slane %v7673, 2
        %v7951 = vrot.slane %v7674, 2
        %v7952 = vsel %vm1426, %v7950, %v7951
        %v7953 = vrot.slane %v7675, 2
        %v7954 = vrot.slane %v7676, 2
        %v7955 = vsel %vm1426, %v7953, %v7954
        %v7956 = vrot.slane %v7677, 2
        %v7957 = vrot.slane %v7678, 2
        %v7958 = vsel %vm1426, %v7956, %v7957
        %v7959 = vrot.slane %v7679, 2
        %v7960 = vrot.slane %v7680, 2
        %v7961 = vsel %vm1426, %v7959, %v7960
        %v7962 = vrot.slane %v7681, 2
        %v7963 = vrot.slane %v7682, 2
        %v7964 = vsel %vm1426, %v7962, %v7963
        %v7965 = vrot.slane %v7683, 2
        %v7966 = vrot.slane %v7684, 2
        %v7967 = vsel %vm1426, %v7965, %v7966
        %v7968 = vrot.slane %v7685, 2
        %v7969 = vrot.slane %v7686, 2
        %v7970 = vsel %vm1426, %v7968, %v7969
        %v7971 = vrot.slane %v7687, 2
        %v7972 = vrot.slane %v7688, 2
        %v7973 = vsel %vm1426, %v7971, %v7972
        %v7974 = vrot.slane %v7689, 2
        %v7975 = vrot.slane %v7690, 2
        %v7976 = vsel %vm1426, %v7974, %v7975
        %v7977 = vrot.slane %v7691, 2
        %v7978 = vrot.slane %v7692, 2
        %v7979 = vsel %vm1426, %v7977, %v7978
        %v7980 = vrot.slane %v7693, 2
        %v7981 = vrot.slane %v7694, 2
        %v7982 = vsel %vm1426, %v7980, %v7981
        %v7983 = vrot.slane %v7695, 2
        %v7984 = vrot.slane %v7696, 2
        %v7985 = vsel %vm1426, %v7983, %v7984
        %v7986 = vrot.slane %v7697, 2
        %v7987 = vrot.slane %v7698, 2
        %v7988 = vsel %vm1426, %v7986, %v7987
        %v7989 = vrot.slane %v7699, 2
        %v7990 = vrot.slane %v7700, 2
        %v7991 = vsel %vm1426, %v7989, %v7990
        %v7992 = vrot.slane %v7701, 2
        %v7993 = vrot.slane %v7702, 2
        %v7994 = vsel %vm1426, %v7992, %v7993
        %v7995 = vrot.slane %v7703, 2
        %v7996 = vrot.slane %v7704, 2
        %v7997 = vsel %vm1426, %v7995, %v7996
        %v7998 = vrot.slane %v7705, 2
        %v7999 = vrot.slane %v7706, 2
        %v8000 = vsel %vm1426, %v7998, %v7999
        %v8001 = vrot.slane %v7707, 2
        %v8002 = vrot.slane %v7708, 2
        %v8003 = vsel %vm1426, %v8001, %v8002
        %v8004 = vrot.slane %v7709, 2
        %v8005 = vrot.slane %v7710, 2
        %v8006 = vsel %vm1426, %v8004, %v8005
        %v8007 = vrot.slane %v7711, 2
        %v8008 = vrot.slane %v7712, 2
        %v8009 = vsel %vm1426, %v8007, %v8008
        %v8010 = vrot.slane %v7713, 2
        %v8011 = vrot.slane %v7714, 2
        %v8012 = vsel %vm1426, %v8010, %v8011
        %v8013 = vrot.slane %v7715, 2
        %v8014 = vrot.slane %v7716, 2
        %v8015 = vsel %vm1426, %v8013, %v8014
        %v8016 = vrot.slane %v7717, 2
        %v8017 = vrot.slane %v7718, 2
        %v8018 = vsel %vm1426, %v8016, %v8017
        %v8019 = vrot.slane %v7719, 2
        %v8020 = vrot.slane %v7720, 2
        %v8021 = vsel %vm1426, %v8019, %v8020
        %v8022 = vrot.slane %v7721, 2
        %v8023 = vrot.slane %v7722, 2
        %v8024 = vsel %vm1426, %v8022, %v8023
        %v8025 = vrot.slane %v7723, 2
        %v8026 = vrot.slane %v7724, 2
        %v8027 = vsel %vm1426, %v8025, %v8026
        %v8028 = vrot.slane %v7725, 2
        %v8029 = vrot.slane %v7726, 2
        %v8030 = vsel %vm1426, %v8028, %v8029
        %v8031 = vrot.slane %v7727, 2
        %v8032 = vrot.slane %v7728, 2
        %v8033 = vsel %vm1426, %v8031, %v8032
        %v8034 = vrot.slane %v7729, 2
        %v8035 = vrot.slane %v7730, 2
        %v8036 = vsel %vm1426, %v8034, %v8035
        %v8037 = vrot.slane %v7731, 2
        %v8038 = vrot.slane %v7732, 2
        %v8039 = vsel %vm1426, %v8037, %v8038
        %v8040 = vrot.slane %v7733, 2
        %v8041 = vrot.slane %v7734, 2
        %v8042 = vsel %vm1426, %v8040, %v8041
        %v8043 = vrot.slane %v7735, 2
        %v8044 = vrot.slane %v7736, 2
        %v8045 = vsel %vm1426, %v8043, %v8044
        %v8046 = vrot.slane %v7737, 2
        %v8047 = vrot.slane %v7738, 2
        %v8048 = vsel %vm1426, %v8046, %v8047
        %v8049 = vrot.slane %v7739, 2
        %v8050 = vrot.slane %v7740, 2
        %v8051 = vsel %vm1426, %v8049, %v8050
        %v8052 = vrot.slane %v7741, 2
        %v8053 = vrot.slane %v7742, 2
        %v8054 = vsel %vm1426, %v8052, %v8053
        %v8055 = vrot.slane %v7743, 2
        %v8056 = vrot.slane %v7744, 2
        %v8057 = vsel %vm1426, %v8055, %v8056
        %v8058 = vrot.slane %v7745, 2
        %v8059 = vrot.slane %v7746, 2
        %v8060 = vsel %vm1426, %v8058, %v8059
        %v8061 = vrot.slane %v7747, 2
        %v8062 = vrot.slane %v7748, 2
        %v8063 = vsel %vm1426, %v8061, %v8062
        %v8064 = vrot.slane %v7749, 2
        %v8065 = vrot.slane %v7750, 2
        %v8066 = vsel %vm1426, %v8064, %v8065
        %v8067 = vrot.slane %v7751, 2
        %v8068 = vrot.slane %v7752, 2
        %v8069 = vsel %vm1426, %v8067, %v8068
        %v8070 = vrot.slane %v7753, 2
        %v8071 = vrot.slane %v7754, 2
        %v8072 = vsel %vm1426, %v8070, %v8071
        %v8073 = vrot.slane %v7755, 2
        %v8074 = vrot.slane %v7756, 2
        %v8075 = vsel %vm1426, %v8073, %v8074
        %v8076 = vrot.slane %v7757, 2
        %v8077 = vrot.slane %v7758, 2
        %v8078 = vsel %vm1426, %v8076, %v8077
        %v8143 = vadd.f32 %v7563, %v7889
        %v8144 = vadd.f32 %v7564, %v7892
        %v8145 = vadd.f32 %v7565, %v7895
        %v8146 = vadd.f32 %v7566, %v7898
        %v8147 = vadd.f32 %v7567, %v7901
        %v8148 = vadd.f32 %v7568, %v7904
        %v8149 = vadd.f32 %v7569, %v7907
        %v8150 = vadd.f32 %v7570, %v7910
        %v8151 = vadd.f32 %v7571, %v7913
        %v8152 = vadd.f32 %v7572, %v7916
        %v8153 = vadd.f32 %v7573, %v7919
        %v8154 = vadd.f32 %v7574, %v7922
        %v8155 = vadd.f32 %v7575, %v7925
        %v8156 = vadd.f32 %v7576, %v7928
        %v8157 = vadd.f32 %v7577, %v7931
        %v8158 = vadd.f32 %v7578, %v7934
        %v8159 = vadd.f32 %v7579, %v7937
        %v8160 = vadd.f32 %v7580, %v7940
        %v8161 = vadd.f32 %v7581, %v7943
        %v8162 = vadd.f32 %v7582, %v7946
        %v8163 = vadd.f32 %v7583, %v7949
        %v8164 = vadd.f32 %v7584, %v7952
        %v8165 = vadd.f32 %v7585, %v7955
        %v8166 = vadd.f32 %v7586, %v7958
        %v8167 = vadd.f32 %v7587, %v7961
        %v8168 = vadd.f32 %v7588, %v7964
        %v8169 = vadd.f32 %v7589, %v7967
        %v8170 = vadd.f32 %v7590, %v7970
        %v8171 = vadd.f32 %v7591, %v7973
        %v8172 = vadd.f32 %v7592, %v7976
        %v8173 = vadd.f32 %v7593, %v7979
        %v8174 = vadd.f32 %v7594, %v7982
        %v8175 = vadd.f32 %v7595, %v7985
        %v8176 = vadd.f32 %v7596, %v7988
        %v8177 = vadd.f32 %v7597, %v7991
        %v8178 = vadd.f32 %v7598, %v7994
        %v8179 = vadd.f32 %v7599, %v7997
        %v8180 = vadd.f32 %v7600, %v8000
        %v8181 = vadd.f32 %v7601, %v8003
        %v8182 = vadd.f32 %v7602, %v8006
        %v8183 = vadd.f32 %v7603, %v8009
        %v8184 = vadd.f32 %v7604, %v8012
        %v8185 = vadd.f32 %v7605, %v8015
        %v8186 = vadd.f32 %v7606, %v8018
        %v8187 = vadd.f32 %v7607, %v8021
        %v8188 = vadd.f32 %v7608, %v8024
        %v8189 = vadd.f32 %v7609, %v8027
        %v8190 = vadd.f32 %v7610, %v8030
        %v8191 = vadd.f32 %v7611, %v8033
        %v8192 = vadd.f32 %v7612, %v8036
        %v8193 = vadd.f32 %v7613, %v8039
        %v8194 = vadd.f32 %v7614, %v8042
        %v8195 = vadd.f32 %v7615, %v8045
        %v8196 = vadd.f32 %v7616, %v8048
        %v8197 = vadd.f32 %v7617, %v8051
        %v8198 = vadd.f32 %v7618, %v8054
        %v8199 = vadd.f32 %v7619, %v8057
        %v8200 = vadd.f32 %v7620, %v8060
        %v8201 = vadd.f32 %v7621, %v8063
        %v8202 = vadd.f32 %v7622, %v8066
        %v8203 = vadd.f32 %v7623, %v8069
        %v8204 = vadd.f32 %v7624, %v8072
        %v8205 = vadd.f32 %v7625, %v8075
        %v8206 = vadd.f32 %v7626, %v8078
        %v8207 = vlaneseq
        %v8208 = vshrl.u32 %v8207, 7
        %v8209 = vsub.s32 0, %v8208
        %v8210 = vrot.slane %v450, %v8209
        %v8211 = vmul.f32 %v284, %v8210
        %v8212 = vmul.f32 %v286, %v8210
        %v8213 = vmul.f32 %v288, %v8210
        %v8214 = vmul.f32 %v290, %v8210
        %v8215 = vmul.f32 %v292, %v8210
        %v8216 = vmul.f32 %v294, %v8210
        %v8217 = vmul.f32 %v296, %v8210
        %v8218 = vmul.f32 %v298, %v8210
        %v8219 = vmul.f32 %v304, %v8210
        %v8220 = vmul.f32 %v306, %v8210
        %v8221 = vmul.f32 %v308, %v8210
        %v8222 = vmul.f32 %v310, %v8210
        %v8223 = vmul.f32 %v312, %v8210
        %v8224 = vmul.f32 %v314, %v8210
        %v8225 = vmul.f32 %v316, %v8210
        %v8226 = vmul.f32 %v318, %v8210
        %v8227 = vmul.f32 %v324, %v8210
        %v8228 = vmul.f32 %v326, %v8210
        %v8229 = vmul.f32 %v328, %v8210
        %v8230 = vmul.f32 %v330, %v8210
        %v8231 = vmul.f32 %v332, %v8210
        %v8232 = vmul.f32 %v334, %v8210
        %v8233 = vmul.f32 %v336, %v8210
        %v8234 = vmul.f32 %v338, %v8210
        %v8235 = vmul.f32 %v344, %v8210
        %v8236 = vmul.f32 %v346, %v8210
        %v8237 = vmul.f32 %v348, %v8210
        %v8238 = vmul.f32 %v350, %v8210
        %v8239 = vmul.f32 %v352, %v8210
        %v8240 = vmul.f32 %v354, %v8210
        %v8241 = vmul.f32 %v356, %v8210
        %v8242 = vmul.f32 %v358, %v8210
        %v8243 = vmul.f32 %v364, %v8210
        %v8244 = vmul.f32 %v366, %v8210
        %v8245 = vmul.f32 %v368, %v8210
        %v8246 = vmul.f32 %v370, %v8210
        %v8247 = vmul.f32 %v372, %v8210
        %v8248 = vmul.f32 %v374, %v8210
        %v8249 = vmul.f32 %v376, %v8210
        %v8250 = vmul.f32 %v378, %v8210
        %v8251 = vmul.f32 %v384, %v8210
        %v8252 = vmul.f32 %v386, %v8210
        %v8253 = vmul.f32 %v388, %v8210
        %v8254 = vmul.f32 %v390, %v8210
        %v8255 = vmul.f32 %v392, %v8210
        %v8256 = vmul.f32 %v394, %v8210
        %v8257 = vmul.f32 %v396, %v8210
        %v8258 = vmul.f32 %v398, %v8210
        %v8259 = vmul.f32 %v404, %v8210
        %v8260 = vmul.f32 %v406, %v8210
        %v8261 = vmul.f32 %v408, %v8210
        %v8262 = vmul.f32 %v410, %v8210
        %v8263 = vmul.f32 %v412, %v8210
        %v8264 = vmul.f32 %v414, %v8210
        %v8265 = vmul.f32 %v416, %v8210
        %v8266 = vmul.f32 %v418, %v8210
        %v8267 = vmul.f32 %v424, %v8210
        %v8268 = vmul.f32 %v426, %v8210
        %v8269 = vmul.f32 %v428, %v8210
        %v8270 = vmul.f32 %v430, %v8210
        %v8271 = vmul.f32 %v432, %v8210
        %v8272 = vmul.f32 %v434, %v8210
        %v8273 = vmul.f32 %v436, %v8210
        %v8274 = vmul.f32 %v438, %v8210
        %v8275 = vadd.f32 %v8143, %v8211
        %v8276 = vadd.f32 %v8144, %v8212
        %v8277 = vadd.f32 %v8145, %v8213
        %v8278 = vadd.f32 %v8146, %v8214
        %v8279 = vadd.f32 %v8147, %v8215
        %v8280 = vadd.f32 %v8148, %v8216
        %v8281 = vadd.f32 %v8149, %v8217
        %v8282 = vadd.f32 %v8150, %v8218
        %v8283 = vadd.f32 %v8151, %v8219
        %v8284 = vadd.f32 %v8152, %v8220
        %v8285 = vadd.f32 %v8153, %v8221
        %v8286 = vadd.f32 %v8154, %v8222
        %v8287 = vadd.f32 %v8155, %v8223
        %v8288 = vadd.f32 %v8156, %v8224
        %v8289 = vadd.f32 %v8157, %v8225
        %v8290 = vadd.f32 %v8158, %v8226
        %v8291 = vadd.f32 %v8159, %v8227
        %v8292 = vadd.f32 %v8160, %v8228
        %v8293 = vadd.f32 %v8161, %v8229
        %v8294 = vadd.f32 %v8162, %v8230
        %v8295 = vadd.f32 %v8163, %v8231
        %v8296 = vadd.f32 %v8164, %v8232
        %v8297 = vadd.f32 %v8165, %v8233
        %v8298 = vadd.f32 %v8166, %v8234
        %v8299 = vadd.f32 %v8167, %v8235
        %v8300 = vadd.f32 %v8168, %v8236
        %v8301 = vadd.f32 %v8169, %v8237
        %v8302 = vadd.f32 %v8170, %v8238
        %v8303 = vadd.f32 %v8171, %v8239
        %v8304 = vadd.f32 %v8172, %v8240
        %v8305 = vadd.f32 %v8173, %v8241
        %v8306 = vadd.f32 %v8174, %v8242
        %v8307 = vadd.f32 %v8175, %v8243
        %v8308 = vadd.f32 %v8176, %v8244
        %v8309 = vadd.f32 %v8177, %v8245
        %v8310 = vadd.f32 %v8178, %v8246
        %v8311 = vadd.f32 %v8179, %v8247
        %v8312 = vadd.f32 %v8180, %v8248
        %v8313 = vadd.f32 %v8181, %v8249
        %v8314 = vadd.f32 %v8182, %v8250
        %v8315 = vadd.f32 %v8183, %v8251
        %v8316 = vadd.f32 %v8184, %v8252
        %v8317 = vadd.f32 %v8185, %v8253
        %v8318 = vadd.f32 %v8186, %v8254
        %v8319 = vadd.f32 %v8187, %v8255
        %v8320 = vadd.f32 %v8188, %v8256
        %v8321 = vadd.f32 %v8189, %v8257
        %v8322 = vadd.f32 %v8190, %v8258
        %v8323 = vadd.f32 %v8191, %v8259
        %v8324 = vadd.f32 %v8192, %v8260
        %v8325 = vadd.f32 %v8193, %v8261
        %v8326 = vadd.f32 %v8194, %v8262
        %v8327 = vadd.f32 %v8195, %v8263
        %v8328 = vadd.f32 %v8196, %v8264
        %v8329 = vadd.f32 %v8197, %v8265
        %v8330 = vadd.f32 %v8198, %v8266
        %v8331 = vadd.f32 %v8199, %v8267
        %v8332 = vadd.f32 %v8200, %v8268
        %v8333 = vadd.f32 %v8201, %v8269
        %v8334 = vadd.f32 %v8202, %v8270
        %v8335 = vadd.f32 %v8203, %v8271
        %v8336 = vadd.f32 %v8204, %v8272
        %v8337 = vadd.f32 %v8205, %v8273
        %v8338 = vadd.f32 %v8206, %v8274
        %v8339 = vlaneseq
        %v8340 = vshrl.u32 %v8339, 7
        %v8341 = vsub.s32 1, %v8340
        %v8342 = vrot.slane %v450, %v8341
        %v8343 = vmul.f32 %v284, %v8342
        %v8344 = vmul.f32 %v285, %v8342
        %v8345 = vmul.f32 %v286, %v8342
        %v8346 = vmul.f32 %v287, %v8342
        %v8347 = vmul.f32 %v288, %v8342
        %v8348 = vmul.f32 %v289, %v8342
        %v8349 = vmul.f32 %v290, %v8342
        %v8350 = vmul.f32 %v291, %v8342
        %v8351 = vmul.f32 %v292, %v8342
        %v8352 = vmul.f32 %v293, %v8342
        %v8353 = vmul.f32 %v294, %v8342
        %v8354 = vmul.f32 %v295, %v8342
        %v8355 = vmul.f32 %v296, %v8342
        %v8356 = vmul.f32 %v297, %v8342
        %v8357 = vmul.f32 %v298, %v8342
        %v8358 = vmul.f32 %v299, %v8342
        %v8359 = vmul.f32 %v304, %v8342
        %v8360 = vmul.f32 %v305, %v8342
        %v8361 = vmul.f32 %v306, %v8342
        %v8362 = vmul.f32 %v307, %v8342
        %v8363 = vmul.f32 %v308, %v8342
        %v8364 = vmul.f32 %v309, %v8342
        %v8365 = vmul.f32 %v310, %v8342
        %v8366 = vmul.f32 %v311, %v8342
        %v8367 = vmul.f32 %v312, %v8342
        %v8368 = vmul.f32 %v313, %v8342
        %v8369 = vmul.f32 %v314, %v8342
        %v8370 = vmul.f32 %v315, %v8342
        %v8371 = vmul.f32 %v316, %v8342
        %v8372 = vmul.f32 %v317, %v8342
        %v8373 = vmul.f32 %v318, %v8342
        %v8374 = vmul.f32 %v319, %v8342
        %v8375 = vmul.f32 %v324, %v8342
        %v8376 = vmul.f32 %v325, %v8342
        %v8377 = vmul.f32 %v326, %v8342
        %v8378 = vmul.f32 %v327, %v8342
        %v8379 = vmul.f32 %v328, %v8342
        %v8380 = vmul.f32 %v329, %v8342
        %v8381 = vmul.f32 %v330, %v8342
        %v8382 = vmul.f32 %v331, %v8342
        %v8383 = vmul.f32 %v332, %v8342
        %v8384 = vmul.f32 %v333, %v8342
        %v8385 = vmul.f32 %v334, %v8342
        %v8386 = vmul.f32 %v335, %v8342
        %v8387 = vmul.f32 %v336, %v8342
        %v8388 = vmul.f32 %v337, %v8342
        %v8389 = vmul.f32 %v338, %v8342
        %v8390 = vmul.f32 %v339, %v8342
        %v8391 = vmul.f32 %v344, %v8342
        %v8392 = vmul.f32 %v345, %v8342
        %v8393 = vmul.f32 %v346, %v8342
        %v8394 = vmul.f32 %v347, %v8342
        %v8395 = vmul.f32 %v348, %v8342
        %v8396 = vmul.f32 %v349, %v8342
        %v8397 = vmul.f32 %v350, %v8342
        %v8398 = vmul.f32 %v351, %v8342
        %v8399 = vmul.f32 %v352, %v8342
        %v8400 = vmul.f32 %v353, %v8342
        %v8401 = vmul.f32 %v354, %v8342
        %v8402 = vmul.f32 %v355, %v8342
        %v8403 = vmul.f32 %v356, %v8342
        %v8404 = vmul.f32 %v357, %v8342
        %v8405 = vmul.f32 %v358, %v8342
        %v8406 = vmul.f32 %v359, %v8342
        %v8407 = vmul.f32 %v364, %v8342
        %v8408 = vmul.f32 %v365, %v8342
        %v8409 = vmul.f32 %v366, %v8342
        %v8410 = vmul.f32 %v367, %v8342
        %v8411 = vmul.f32 %v368, %v8342
        %v8412 = vmul.f32 %v369, %v8342
        %v8413 = vmul.f32 %v370, %v8342
        %v8414 = vmul.f32 %v371, %v8342
        %v8415 = vmul.f32 %v372, %v8342
        %v8416 = vmul.f32 %v373, %v8342
        %v8417 = vmul.f32 %v374, %v8342
        %v8418 = vmul.f32 %v375, %v8342
        %v8419 = vmul.f32 %v376, %v8342
        %v8420 = vmul.f32 %v377, %v8342
        %v8421 = vmul.f32 %v378, %v8342
        %v8422 = vmul.f32 %v379, %v8342
        %v8423 = vmul.f32 %v384, %v8342
        %v8424 = vmul.f32 %v385, %v8342
        %v8425 = vmul.f32 %v386, %v8342
        %v8426 = vmul.f32 %v387, %v8342
        %v8427 = vmul.f32 %v388, %v8342
        %v8428 = vmul.f32 %v389, %v8342
        %v8429 = vmul.f32 %v390, %v8342
        %v8430 = vmul.f32 %v391, %v8342
        %v8431 = vmul.f32 %v392, %v8342
        %v8432 = vmul.f32 %v393, %v8342
        %v8433 = vmul.f32 %v394, %v8342
        %v8434 = vmul.f32 %v395, %v8342
        %v8435 = vmul.f32 %v396, %v8342
        %v8436 = vmul.f32 %v397, %v8342
        %v8437 = vmul.f32 %v398, %v8342
        %v8438 = vmul.f32 %v399, %v8342
        %v8439 = vmul.f32 %v404, %v8342
        %v8440 = vmul.f32 %v405, %v8342
        %v8441 = vmul.f32 %v406, %v8342
        %v8442 = vmul.f32 %v407, %v8342
        %v8443 = vmul.f32 %v408, %v8342
        %v8444 = vmul.f32 %v409, %v8342
        %v8445 = vmul.f32 %v410, %v8342
        %v8446 = vmul.f32 %v411, %v8342
        %v8447 = vmul.f32 %v412, %v8342
        %v8448 = vmul.f32 %v413, %v8342
        %v8449 = vmul.f32 %v414, %v8342
        %v8450 = vmul.f32 %v415, %v8342
        %v8451 = vmul.f32 %v416, %v8342
        %v8452 = vmul.f32 %v417, %v8342
        %v8453 = vmul.f32 %v418, %v8342
        %v8454 = vmul.f32 %v419, %v8342
        %v8455 = vmul.f32 %v424, %v8342
        %v8456 = vmul.f32 %v425, %v8342
        %v8457 = vmul.f32 %v426, %v8342
        %v8458 = vmul.f32 %v427, %v8342
        %v8459 = vmul.f32 %v428, %v8342
        %v8460 = vmul.f32 %v429, %v8342
        %v8461 = vmul.f32 %v430, %v8342
        %v8462 = vmul.f32 %v431, %v8342
        %v8463 = vmul.f32 %v432, %v8342
        %v8464 = vmul.f32 %v433, %v8342
        %v8465 = vmul.f32 %v434, %v8342
        %v8466 = vmul.f32 %v435, %v8342
        %v8467 = vmul.f32 %v436, %v8342
        %v8468 = vmul.f32 %v437, %v8342
        %v8469 = vmul.f32 %v438, %v8342
        %v8470 = vmul.f32 %v439, %v8342
        %v8599 = vrot.slane %v8343, 1
        %v8600 = vrot.slane %v8344, 1
        %v8601 = vsel %vm845, %v8599, %v8600
        %v8602 = vrot.slane %v8345, 1
        %v8603 = vrot.slane %v8346, 1
        %v8604 = vsel %vm845, %v8602, %v8603
        %v8605 = vrot.slane %v8347, 1
        %v8606 = vrot.slane %v8348, 1
        %v8607 = vsel %vm845, %v8605, %v8606
        %v8608 = vrot.slane %v8349, 1
        %v8609 = vrot.slane %v8350, 1
        %v8610 = vsel %vm845, %v8608, %v8609
        %v8611 = vrot.slane %v8351, 1
        %v8612 = vrot.slane %v8352, 1
        %v8613 = vsel %vm845, %v8611, %v8612
        %v8614 = vrot.slane %v8353, 1
        %v8615 = vrot.slane %v8354, 1
        %v8616 = vsel %vm845, %v8614, %v8615
        %v8617 = vrot.slane %v8355, 1
        %v8618 = vrot.slane %v8356, 1
        %v8619 = vsel %vm845, %v8617, %v8618
        %v8620 = vrot.slane %v8357, 1
        %v8621 = vrot.slane %v8358, 1
        %v8622 = vsel %vm845, %v8620, %v8621
        %v8623 = vrot.slane %v8359, 1
        %v8624 = vrot.slane %v8360, 1
        %v8625 = vsel %vm845, %v8623, %v8624
        %v8626 = vrot.slane %v8361, 1
        %v8627 = vrot.slane %v8362, 1
        %v8628 = vsel %vm845, %v8626, %v8627
        %v8629 = vrot.slane %v8363, 1
        %v8630 = vrot.slane %v8364, 1
        %v8631 = vsel %vm845, %v8629, %v8630
        %v8632 = vrot.slane %v8365, 1
        %v8633 = vrot.slane %v8366, 1
        %v8634 = vsel %vm845, %v8632, %v8633
        %v8635 = vrot.slane %v8367, 1
        %v8636 = vrot.slane %v8368, 1
        %v8637 = vsel %vm845, %v8635, %v8636
        %v8638 = vrot.slane %v8369, 1
        %v8639 = vrot.slane %v8370, 1
        %v8640 = vsel %vm845, %v8638, %v8639
        %v8641 = vrot.slane %v8371, 1
        %v8642 = vrot.slane %v8372, 1
        %v8643 = vsel %vm845, %v8641, %v8642
        %v8644 = vrot.slane %v8373, 1
        %v8645 = vrot.slane %v8374, 1
        %v8646 = vsel %vm845, %v8644, %v8645
        %v8647 = vrot.slane %v8375, 1
        %v8648 = vrot.slane %v8376, 1
        %v8649 = vsel %vm845, %v8647, %v8648
        %v8650 = vrot.slane %v8377, 1
        %v8651 = vrot.slane %v8378, 1
        %v8652 = vsel %vm845, %v8650, %v8651
        %v8653 = vrot.slane %v8379, 1
        %v8654 = vrot.slane %v8380, 1
        %v8655 = vsel %vm845, %v8653, %v8654
        %v8656 = vrot.slane %v8381, 1
        %v8657 = vrot.slane %v8382, 1
        %v8658 = vsel %vm845, %v8656, %v8657
        %v8659 = vrot.slane %v8383, 1
        %v8660 = vrot.slane %v8384, 1
        %v8661 = vsel %vm845, %v8659, %v8660
        %v8662 = vrot.slane %v8385, 1
        %v8663 = vrot.slane %v8386, 1
        %v8664 = vsel %vm845, %v8662, %v8663
        %v8665 = vrot.slane %v8387, 1
        %v8666 = vrot.slane %v8388, 1
        %v8667 = vsel %vm845, %v8665, %v8666
        %v8668 = vrot.slane %v8389, 1
        %v8669 = vrot.slane %v8390, 1
        %v8670 = vsel %vm845, %v8668, %v8669
        %v8671 = vrot.slane %v8391, 1
        %v8672 = vrot.slane %v8392, 1
        %v8673 = vsel %vm845, %v8671, %v8672
        %v8674 = vrot.slane %v8393, 1
        %v8675 = vrot.slane %v8394, 1
        %v8676 = vsel %vm845, %v8674, %v8675
        %v8677 = vrot.slane %v8395, 1
        %v8678 = vrot.slane %v8396, 1
        %v8679 = vsel %vm845, %v8677, %v8678
        %v8680 = vrot.slane %v8397, 1
        %v8681 = vrot.slane %v8398, 1
        %v8682 = vsel %vm845, %v8680, %v8681
        %v8683 = vrot.slane %v8399, 1
        %v8684 = vrot.slane %v8400, 1
        %v8685 = vsel %vm845, %v8683, %v8684
        %v8686 = vrot.slane %v8401, 1
        %v8687 = vrot.slane %v8402, 1
        %v8688 = vsel %vm845, %v8686, %v8687
        %v8689 = vrot.slane %v8403, 1
        %v8690 = vrot.slane %v8404, 1
        %v8691 = vsel %vm845, %v8689, %v8690
        %v8692 = vrot.slane %v8405, 1
        %v8693 = vrot.slane %v8406, 1
        %v8694 = vsel %vm845, %v8692, %v8693
        %v8695 = vrot.slane %v8407, 1
        %v8696 = vrot.slane %v8408, 1
        %v8697 = vsel %vm845, %v8695, %v8696
        %v8698 = vrot.slane %v8409, 1
        %v8699 = vrot.slane %v8410, 1
        %v8700 = vsel %vm845, %v8698, %v8699
        %v8701 = vrot.slane %v8411, 1
        %v8702 = vrot.slane %v8412, 1
        %v8703 = vsel %vm845, %v8701, %v8702
        %v8704 = vrot.slane %v8413, 1
        %v8705 = vrot.slane %v8414, 1
        %v8706 = vsel %vm845, %v8704, %v8705
        %v8707 = vrot.slane %v8415, 1
        %v8708 = vrot.slane %v8416, 1
        %v8709 = vsel %vm845, %v8707, %v8708
        %v8710 = vrot.slane %v8417, 1
        %v8711 = vrot.slane %v8418, 1
        %v8712 = vsel %vm845, %v8710, %v8711
        %v8713 = vrot.slane %v8419, 1
        %v8714 = vrot.slane %v8420, 1
        %v8715 = vsel %vm845, %v8713, %v8714
        %v8716 = vrot.slane %v8421, 1
        %v8717 = vrot.slane %v8422, 1
        %v8718 = vsel %vm845, %v8716, %v8717
        %v8719 = vrot.slane %v8423, 1
        %v8720 = vrot.slane %v8424, 1
        %v8721 = vsel %vm845, %v8719, %v8720
        %v8722 = vrot.slane %v8425, 1
        %v8723 = vrot.slane %v8426, 1
        %v8724 = vsel %vm845, %v8722, %v8723
        %v8725 = vrot.slane %v8427, 1
        %v8726 = vrot.slane %v8428, 1
        %v8727 = vsel %vm845, %v8725, %v8726
        %v8728 = vrot.slane %v8429, 1
        %v8729 = vrot.slane %v8430, 1
        %v8730 = vsel %vm845, %v8728, %v8729
        %v8731 = vrot.slane %v8431, 1
        %v8732 = vrot.slane %v8432, 1
        %v8733 = vsel %vm845, %v8731, %v8732
        %v8734 = vrot.slane %v8433, 1
        %v8735 = vrot.slane %v8434, 1
        %v8736 = vsel %vm845, %v8734, %v8735
        %v8737 = vrot.slane %v8435, 1
        %v8738 = vrot.slane %v8436, 1
        %v8739 = vsel %vm845, %v8737, %v8738
        %v8740 = vrot.slane %v8437, 1
        %v8741 = vrot.slane %v8438, 1
        %v8742 = vsel %vm845, %v8740, %v8741
        %v8743 = vrot.slane %v8439, 1
        %v8744 = vrot.slane %v8440, 1
        %v8745 = vsel %vm845, %v8743, %v8744
        %v8746 = vrot.slane %v8441, 1
        %v8747 = vrot.slane %v8442, 1
        %v8748 = vsel %vm845, %v8746, %v8747
        %v8749 = vrot.slane %v8443, 1
        %v8750 = vrot.slane %v8444, 1
        %v8751 = vsel %vm845, %v8749, %v8750
        %v8752 = vrot.slane %v8445, 1
        %v8753 = vrot.slane %v8446, 1
        %v8754 = vsel %vm845, %v8752, %v8753
        %v8755 = vrot.slane %v8447, 1
        %v8756 = vrot.slane %v8448, 1
        %v8757 = vsel %vm845, %v8755, %v8756
        %v8758 = vrot.slane %v8449, 1
        %v8759 = vrot.slane %v8450, 1
        %v8760 = vsel %vm845, %v8758, %v8759
        %v8761 = vrot.slane %v8451, 1
        %v8762 = vrot.slane %v8452, 1
        %v8763 = vsel %vm845, %v8761, %v8762
        %v8764 = vrot.slane %v8453, 1
        %v8765 = vrot.slane %v8454, 1
        %v8766 = vsel %vm845, %v8764, %v8765
        %v8767 = vrot.slane %v8455, 1
        %v8768 = vrot.slane %v8456, 1
        %v8769 = vsel %vm845, %v8767, %v8768
        %v8770 = vrot.slane %v8457, 1
        %v8771 = vrot.slane %v8458, 1
        %v8772 = vsel %vm845, %v8770, %v8771
        %v8773 = vrot.slane %v8459, 1
        %v8774 = vrot.slane %v8460, 1
        %v8775 = vsel %vm845, %v8773, %v8774
        %v8776 = vrot.slane %v8461, 1
        %v8777 = vrot.slane %v8462, 1
        %v8778 = vsel %vm845, %v8776, %v8777
        %v8779 = vrot.slane %v8463, 1
        %v8780 = vrot.slane %v8464, 1
        %v8781 = vsel %vm845, %v8779, %v8780
        %v8782 = vrot.slane %v8465, 1
        %v8783 = vrot.slane %v8466, 1
        %v8784 = vsel %vm845, %v8782, %v8783
        %v8785 = vrot.slane %v8467, 1
        %v8786 = vrot.slane %v8468, 1
        %v8787 = vsel %vm845, %v8785, %v8786
        %v8788 = vrot.slane %v8469, 1
        %v8789 = vrot.slane %v8470, 1
        %v8790 = vsel %vm845, %v8788, %v8789
        %v8855 = vadd.f32 %v8275, %v8601
        %v8856 = vadd.f32 %v8276, %v8604
        %v8857 = vadd.f32 %v8277, %v8607
        %v8858 = vadd.f32 %v8278, %v8610
        %v8859 = vadd.f32 %v8279, %v8613
        %v8860 = vadd.f32 %v8280, %v8616
        %v8861 = vadd.f32 %v8281, %v8619
        %v8862 = vadd.f32 %v8282, %v8622
        %v8863 = vadd.f32 %v8283, %v8625
        %v8864 = vadd.f32 %v8284, %v8628
        %v8865 = vadd.f32 %v8285, %v8631
        %v8866 = vadd.f32 %v8286, %v8634
        %v8867 = vadd.f32 %v8287, %v8637
        %v8868 = vadd.f32 %v8288, %v8640
        %v8869 = vadd.f32 %v8289, %v8643
        %v8870 = vadd.f32 %v8290, %v8646
        %v8871 = vadd.f32 %v8291, %v8649
        %v8872 = vadd.f32 %v8292, %v8652
        %v8873 = vadd.f32 %v8293, %v8655
        %v8874 = vadd.f32 %v8294, %v8658
        %v8875 = vadd.f32 %v8295, %v8661
        %v8876 = vadd.f32 %v8296, %v8664
        %v8877 = vadd.f32 %v8297, %v8667
        %v8878 = vadd.f32 %v8298, %v8670
        %v8879 = vadd.f32 %v8299, %v8673
        %v8880 = vadd.f32 %v8300, %v8676
        %v8881 = vadd.f32 %v8301, %v8679
        %v8882 = vadd.f32 %v8302, %v8682
        %v8883 = vadd.f32 %v8303, %v8685
        %v8884 = vadd.f32 %v8304, %v8688
        %v8885 = vadd.f32 %v8305, %v8691
        %v8886 = vadd.f32 %v8306, %v8694
        %v8887 = vadd.f32 %v8307, %v8697
        %v8888 = vadd.f32 %v8308, %v8700
        %v8889 = vadd.f32 %v8309, %v8703
        %v8890 = vadd.f32 %v8310, %v8706
        %v8891 = vadd.f32 %v8311, %v8709
        %v8892 = vadd.f32 %v8312, %v8712
        %v8893 = vadd.f32 %v8313, %v8715
        %v8894 = vadd.f32 %v8314, %v8718
        %v8895 = vadd.f32 %v8315, %v8721
        %v8896 = vadd.f32 %v8316, %v8724
        %v8897 = vadd.f32 %v8317, %v8727
        %v8898 = vadd.f32 %v8318, %v8730
        %v8899 = vadd.f32 %v8319, %v8733
        %v8900 = vadd.f32 %v8320, %v8736
        %v8901 = vadd.f32 %v8321, %v8739
        %v8902 = vadd.f32 %v8322, %v8742
        %v8903 = vadd.f32 %v8323, %v8745
        %v8904 = vadd.f32 %v8324, %v8748
        %v8905 = vadd.f32 %v8325, %v8751
        %v8906 = vadd.f32 %v8326, %v8754
        %v8907 = vadd.f32 %v8327, %v8757
        %v8908 = vadd.f32 %v8328, %v8760
        %v8909 = vadd.f32 %v8329, %v8763
        %v8910 = vadd.f32 %v8330, %v8766
        %v8911 = vadd.f32 %v8331, %v8769
        %v8912 = vadd.f32 %v8332, %v8772
        %v8913 = vadd.f32 %v8333, %v8775
        %v8914 = vadd.f32 %v8334, %v8778
        %v8915 = vadd.f32 %v8335, %v8781
        %v8916 = vadd.f32 %v8336, %v8784
        %v8917 = vadd.f32 %v8337, %v8787
        %v8918 = vadd.f32 %v8338, %v8790
        %v8919 = vlaneseq
        %v8920 = vshrl.u32 %v8919, 7
        %v8921 = vsub.s32 2, %v8920
        %v8922 = vrot.slane %v450, %v8921
        %v8923 = vmul.f32 %v284, %v8922
        %v8924 = vmul.f32 %v285, %v8922
        %v8925 = vmul.f32 %v286, %v8922
        %v8926 = vmul.f32 %v287, %v8922
        %v8927 = vmul.f32 %v288, %v8922
        %v8928 = vmul.f32 %v289, %v8922
        %v8929 = vmul.f32 %v290, %v8922
        %v8930 = vmul.f32 %v291, %v8922
        %v8931 = vmul.f32 %v292, %v8922
        %v8932 = vmul.f32 %v293, %v8922
        %v8933 = vmul.f32 %v294, %v8922
        %v8934 = vmul.f32 %v295, %v8922
        %v8935 = vmul.f32 %v296, %v8922
        %v8936 = vmul.f32 %v297, %v8922
        %v8937 = vmul.f32 %v298, %v8922
        %v8938 = vmul.f32 %v299, %v8922
        %v8939 = vmul.f32 %v304, %v8922
        %v8940 = vmul.f32 %v305, %v8922
        %v8941 = vmul.f32 %v306, %v8922
        %v8942 = vmul.f32 %v307, %v8922
        %v8943 = vmul.f32 %v308, %v8922
        %v8944 = vmul.f32 %v309, %v8922
        %v8945 = vmul.f32 %v310, %v8922
        %v8946 = vmul.f32 %v311, %v8922
        %v8947 = vmul.f32 %v312, %v8922
        %v8948 = vmul.f32 %v313, %v8922
        %v8949 = vmul.f32 %v314, %v8922
        %v8950 = vmul.f32 %v315, %v8922
        %v8951 = vmul.f32 %v316, %v8922
        %v8952 = vmul.f32 %v317, %v8922
        %v8953 = vmul.f32 %v318, %v8922
        %v8954 = vmul.f32 %v319, %v8922
        %v8955 = vmul.f32 %v324, %v8922
        %v8956 = vmul.f32 %v325, %v8922
        %v8957 = vmul.f32 %v326, %v8922
        %v8958 = vmul.f32 %v327, %v8922
        %v8959 = vmul.f32 %v328, %v8922
        %v8960 = vmul.f32 %v329, %v8922
        %v8961 = vmul.f32 %v330, %v8922
        %v8962 = vmul.f32 %v331, %v8922
        %v8963 = vmul.f32 %v332, %v8922
        %v8964 = vmul.f32 %v333, %v8922
        %v8965 = vmul.f32 %v334, %v8922
        %v8966 = vmul.f32 %v335, %v8922
        %v8967 = vmul.f32 %v336, %v8922
        %v8968 = vmul.f32 %v337, %v8922
        %v8969 = vmul.f32 %v338, %v8922
        %v8970 = vmul.f32 %v339, %v8922
        %v8971 = vmul.f32 %v344, %v8922
        %v8972 = vmul.f32 %v345, %v8922
        %v8973 = vmul.f32 %v346, %v8922
        %v8974 = vmul.f32 %v347, %v8922
        %v8975 = vmul.f32 %v348, %v8922
        %v8976 = vmul.f32 %v349, %v8922
        %v8977 = vmul.f32 %v350, %v8922
        %v8978 = vmul.f32 %v351, %v8922
        %v8979 = vmul.f32 %v352, %v8922
        %v8980 = vmul.f32 %v353, %v8922
        %v8981 = vmul.f32 %v354, %v8922
        %v8982 = vmul.f32 %v355, %v8922
        %v8983 = vmul.f32 %v356, %v8922
        %v8984 = vmul.f32 %v357, %v8922
        %v8985 = vmul.f32 %v358, %v8922
        %v8986 = vmul.f32 %v359, %v8922
        %v8987 = vmul.f32 %v364, %v8922
        %v8988 = vmul.f32 %v365, %v8922
        %v8989 = vmul.f32 %v366, %v8922
        %v8990 = vmul.f32 %v367, %v8922
        %v8991 = vmul.f32 %v368, %v8922
        %v8992 = vmul.f32 %v369, %v8922
        %v8993 = vmul.f32 %v370, %v8922
        %v8994 = vmul.f32 %v371, %v8922
        %v8995 = vmul.f32 %v372, %v8922
        %v8996 = vmul.f32 %v373, %v8922
        %v8997 = vmul.f32 %v374, %v8922
        %v8998 = vmul.f32 %v375, %v8922
        %v8999 = vmul.f32 %v376, %v8922
        %v9000 = vmul.f32 %v377, %v8922
        %v9001 = vmul.f32 %v378, %v8922
        %v9002 = vmul.f32 %v379, %v8922
        %v9003 = vmul.f32 %v384, %v8922
        %v9004 = vmul.f32 %v385, %v8922
        %v9005 = vmul.f32 %v386, %v8922
        %v9006 = vmul.f32 %v387, %v8922
        %v9007 = vmul.f32 %v388, %v8922
        %v9008 = vmul.f32 %v389, %v8922
        %v9009 = vmul.f32 %v390, %v8922
        %v9010 = vmul.f32 %v391, %v8922
        %v9011 = vmul.f32 %v392, %v8922
        %v9012 = vmul.f32 %v393, %v8922
        %v9013 = vmul.f32 %v394, %v8922
        %v9014 = vmul.f32 %v395, %v8922
        %v9015 = vmul.f32 %v396, %v8922
        %v9016 = vmul.f32 %v397, %v8922
        %v9017 = vmul.f32 %v398, %v8922
        %v9018 = vmul.f32 %v399, %v8922
        %v9019 = vmul.f32 %v404, %v8922
        %v9020 = vmul.f32 %v405, %v8922
        %v9021 = vmul.f32 %v406, %v8922
        %v9022 = vmul.f32 %v407, %v8922
        %v9023 = vmul.f32 %v408, %v8922
        %v9024 = vmul.f32 %v409, %v8922
        %v9025 = vmul.f32 %v410, %v8922
        %v9026 = vmul.f32 %v411, %v8922
        %v9027 = vmul.f32 %v412, %v8922
        %v9028 = vmul.f32 %v413, %v8922
        %v9029 = vmul.f32 %v414, %v8922
        %v9030 = vmul.f32 %v415, %v8922
        %v9031 = vmul.f32 %v416, %v8922
        %v9032 = vmul.f32 %v417, %v8922
        %v9033 = vmul.f32 %v418, %v8922
        %v9034 = vmul.f32 %v419, %v8922
        %v9035 = vmul.f32 %v424, %v8922
        %v9036 = vmul.f32 %v425, %v8922
        %v9037 = vmul.f32 %v426, %v8922
        %v9038 = vmul.f32 %v427, %v8922
        %v9039 = vmul.f32 %v428, %v8922
        %v9040 = vmul.f32 %v429, %v8922
        %v9041 = vmul.f32 %v430, %v8922
        %v9042 = vmul.f32 %v431, %v8922
        %v9043 = vmul.f32 %v432, %v8922
        %v9044 = vmul.f32 %v433, %v8922
        %v9045 = vmul.f32 %v434, %v8922
        %v9046 = vmul.f32 %v435, %v8922
        %v9047 = vmul.f32 %v436, %v8922
        %v9048 = vmul.f32 %v437, %v8922
        %v9049 = vmul.f32 %v438, %v8922
        %v9050 = vmul.f32 %v439, %v8922
        %v9179 = vrot.slane %v8923, 2
        %v9180 = vrot.slane %v8924, 2
        %v9181 = vsel %vm1426, %v9179, %v9180
        %v9182 = vrot.slane %v8925, 2
        %v9183 = vrot.slane %v8926, 2
        %v9184 = vsel %vm1426, %v9182, %v9183
        %v9185 = vrot.slane %v8927, 2
        %v9186 = vrot.slane %v8928, 2
        %v9187 = vsel %vm1426, %v9185, %v9186
        %v9188 = vrot.slane %v8929, 2
        %v9189 = vrot.slane %v8930, 2
        %v9190 = vsel %vm1426, %v9188, %v9189
        %v9191 = vrot.slane %v8931, 2
        %v9192 = vrot.slane %v8932, 2
        %v9193 = vsel %vm1426, %v9191, %v9192
        %v9194 = vrot.slane %v8933, 2
        %v9195 = vrot.slane %v8934, 2
        %v9196 = vsel %vm1426, %v9194, %v9195
        %v9197 = vrot.slane %v8935, 2
        %v9198 = vrot.slane %v8936, 2
        %v9199 = vsel %vm1426, %v9197, %v9198
        %v9200 = vrot.slane %v8937, 2
        %v9201 = vrot.slane %v8938, 2
        %v9202 = vsel %vm1426, %v9200, %v9201
        %v9203 = vrot.slane %v8939, 2
        %v9204 = vrot.slane %v8940, 2
        %v9205 = vsel %vm1426, %v9203, %v9204
        %v9206 = vrot.slane %v8941, 2
        %v9207 = vrot.slane %v8942, 2
        %v9208 = vsel %vm1426, %v9206, %v9207
        %v9209 = vrot.slane %v8943, 2
        %v9210 = vrot.slane %v8944, 2
        %v9211 = vsel %vm1426, %v9209, %v9210
        %v9212 = vrot.slane %v8945, 2
        %v9213 = vrot.slane %v8946, 2
        %v9214 = vsel %vm1426, %v9212, %v9213
        %v9215 = vrot.slane %v8947, 2
        %v9216 = vrot.slane %v8948, 2
        %v9217 = vsel %vm1426, %v9215, %v9216
        %v9218 = vrot.slane %v8949, 2
        %v9219 = vrot.slane %v8950, 2
        %v9220 = vsel %vm1426, %v9218, %v9219
        %v9221 = vrot.slane %v8951, 2
        %v9222 = vrot.slane %v8952, 2
        %v9223 = vsel %vm1426, %v9221, %v9222
        %v9224 = vrot.slane %v8953, 2
        %v9225 = vrot.slane %v8954, 2
        %v9226 = vsel %vm1426, %v9224, %v9225
        %v9227 = vrot.slane %v8955, 2
        %v9228 = vrot.slane %v8956, 2
        %v9229 = vsel %vm1426, %v9227, %v9228
        %v9230 = vrot.slane %v8957, 2
        %v9231 = vrot.slane %v8958, 2
        %v9232 = vsel %vm1426, %v9230, %v9231
        %v9233 = vrot.slane %v8959, 2
        %v9234 = vrot.slane %v8960, 2
        %v9235 = vsel %vm1426, %v9233, %v9234
        %v9236 = vrot.slane %v8961, 2
        %v9237 = vrot.slane %v8962, 2
        %v9238 = vsel %vm1426, %v9236, %v9237
        %v9239 = vrot.slane %v8963, 2
        %v9240 = vrot.slane %v8964, 2
        %v9241 = vsel %vm1426, %v9239, %v9240
        %v9242 = vrot.slane %v8965, 2
        %v9243 = vrot.slane %v8966, 2
        %v9244 = vsel %vm1426, %v9242, %v9243
        %v9245 = vrot.slane %v8967, 2
        %v9246 = vrot.slane %v8968, 2
        %v9247 = vsel %vm1426, %v9245, %v9246
        %v9248 = vrot.slane %v8969, 2
        %v9249 = vrot.slane %v8970, 2
        %v9250 = vsel %vm1426, %v9248, %v9249
        %v9251 = vrot.slane %v8971, 2
        %v9252 = vrot.slane %v8972, 2
        %v9253 = vsel %vm1426, %v9251, %v9252
        %v9254 = vrot.slane %v8973, 2
        %v9255 = vrot.slane %v8974, 2
        %v9256 = vsel %vm1426, %v9254, %v9255
        %v9257 = vrot.slane %v8975, 2
        %v9258 = vrot.slane %v8976, 2
        %v9259 = vsel %vm1426, %v9257, %v9258
        %v9260 = vrot.slane %v8977, 2
        %v9261 = vrot.slane %v8978, 2
        %v9262 = vsel %vm1426, %v9260, %v9261
        %v9263 = vrot.slane %v8979, 2
        %v9264 = vrot.slane %v8980, 2
        %v9265 = vsel %vm1426, %v9263, %v9264
        %v9266 = vrot.slane %v8981, 2
        %v9267 = vrot.slane %v8982, 2
        %v9268 = vsel %vm1426, %v9266, %v9267
        %v9269 = vrot.slane %v8983, 2
        %v9270 = vrot.slane %v8984, 2
        %v9271 = vsel %vm1426, %v9269, %v9270
        %v9272 = vrot.slane %v8985, 2
        %v9273 = vrot.slane %v8986, 2
        %v9274 = vsel %vm1426, %v9272, %v9273
        %v9275 = vrot.slane %v8987, 2
        %v9276 = vrot.slane %v8988, 2
        %v9277 = vsel %vm1426, %v9275, %v9276
        %v9278 = vrot.slane %v8989, 2
        %v9279 = vrot.slane %v8990, 2
        %v9280 = vsel %vm1426, %v9278, %v9279
        %v9281 = vrot.slane %v8991, 2
        %v9282 = vrot.slane %v8992, 2
        %v9283 = vsel %vm1426, %v9281, %v9282
        %v9284 = vrot.slane %v8993, 2
        %v9285 = vrot.slane %v8994, 2
        %v9286 = vsel %vm1426, %v9284, %v9285
        %v9287 = vrot.slane %v8995, 2
        %v9288 = vrot.slane %v8996, 2
        %v9289 = vsel %vm1426, %v9287, %v9288
        %v9290 = vrot.slane %v8997, 2
        %v9291 = vrot.slane %v8998, 2
        %v9292 = vsel %vm1426, %v9290, %v9291
        %v9293 = vrot.slane %v8999, 2
        %v9294 = vrot.slane %v9000, 2
        %v9295 = vsel %vm1426, %v9293, %v9294
        %v9296 = vrot.slane %v9001, 2
        %v9297 = vrot.slane %v9002, 2
        %v9298 = vsel %vm1426, %v9296, %v9297
        %v9299 = vrot.slane %v9003, 2
        %v9300 = vrot.slane %v9004, 2
        %v9301 = vsel %vm1426, %v9299, %v9300
        %v9302 = vrot.slane %v9005, 2
        %v9303 = vrot.slane %v9006, 2
        %v9304 = vsel %vm1426, %v9302, %v9303
        %v9305 = vrot.slane %v9007, 2
        %v9306 = vrot.slane %v9008, 2
        %v9307 = vsel %vm1426, %v9305, %v9306
        %v9308 = vrot.slane %v9009, 2
        %v9309 = vrot.slane %v9010, 2
        %v9310 = vsel %vm1426, %v9308, %v9309
        %v9311 = vrot.slane %v9011, 2
        %v9312 = vrot.slane %v9012, 2
        %v9313 = vsel %vm1426, %v9311, %v9312
        %v9314 = vrot.slane %v9013, 2
        %v9315 = vrot.slane %v9014, 2
        %v9316 = vsel %vm1426, %v9314, %v9315
        %v9317 = vrot.slane %v9015, 2
        %v9318 = vrot.slane %v9016, 2
        %v9319 = vsel %vm1426, %v9317, %v9318
        %v9320 = vrot.slane %v9017, 2
        %v9321 = vrot.slane %v9018, 2
        %v9322 = vsel %vm1426, %v9320, %v9321
        %v9323 = vrot.slane %v9019, 2
        %v9324 = vrot.slane %v9020, 2
        %v9325 = vsel %vm1426, %v9323, %v9324
        %v9326 = vrot.slane %v9021, 2
        %v9327 = vrot.slane %v9022, 2
        %v9328 = vsel %vm1426, %v9326, %v9327
        %v9329 = vrot.slane %v9023, 2
        %v9330 = vrot.slane %v9024, 2
        %v9331 = vsel %vm1426, %v9329, %v9330
        %v9332 = vrot.slane %v9025, 2
        %v9333 = vrot.slane %v9026, 2
        %v9334 = vsel %vm1426, %v9332, %v9333
        %v9335 = vrot.slane %v9027, 2
        %v9336 = vrot.slane %v9028, 2
        %v9337 = vsel %vm1426, %v9335, %v9336
        %v9338 = vrot.slane %v9029, 2
        %v9339 = vrot.slane %v9030, 2
        %v9340 = vsel %vm1426, %v9338, %v9339
        %v9341 = vrot.slane %v9031, 2
        %v9342 = vrot.slane %v9032, 2
        %v9343 = vsel %vm1426, %v9341, %v9342
        %v9344 = vrot.slane %v9033, 2
        %v9345 = vrot.slane %v9034, 2
        %v9346 = vsel %vm1426, %v9344, %v9345
        %v9347 = vrot.slane %v9035, 2
        %v9348 = vrot.slane %v9036, 2
        %v9349 = vsel %vm1426, %v9347, %v9348
        %v9350 = vrot.slane %v9037, 2
        %v9351 = vrot.slane %v9038, 2
        %v9352 = vsel %vm1426, %v9350, %v9351
        %v9353 = vrot.slane %v9039, 2
        %v9354 = vrot.slane %v9040, 2
        %v9355 = vsel %vm1426, %v9353, %v9354
        %v9356 = vrot.slane %v9041, 2
        %v9357 = vrot.slane %v9042, 2
        %v9358 = vsel %vm1426, %v9356, %v9357
        %v9359 = vrot.slane %v9043, 2
        %v9360 = vrot.slane %v9044, 2
        %v9361 = vsel %vm1426, %v9359, %v9360
        %v9362 = vrot.slane %v9045, 2
        %v9363 = vrot.slane %v9046, 2
        %v9364 = vsel %vm1426, %v9362, %v9363
        %v9365 = vrot.slane %v9047, 2
        %v9366 = vrot.slane %v9048, 2
        %v9367 = vsel %vm1426, %v9365, %v9366
        %v9368 = vrot.slane %v9049, 2
        %v9369 = vrot.slane %v9050, 2
        %v9370 = vsel %vm1426, %v9368, %v9369
        %v9435 = vadd.f32 %v8855, %v9181
        %v9436 = vadd.f32 %v8856, %v9184
        %v9437 = vadd.f32 %v8857, %v9187
        %v9438 = vadd.f32 %v8858, %v9190
        %v9439 = vadd.f32 %v8859, %v9193
        %v9440 = vadd.f32 %v8860, %v9196
        %v9441 = vadd.f32 %v8861, %v9199
        %v9442 = vadd.f32 %v8862, %v9202
        %v9443 = vadd.f32 %v8863, %v9205
        %v9444 = vadd.f32 %v8864, %v9208
        %v9445 = vadd.f32 %v8865, %v9211
        %v9446 = vadd.f32 %v8866, %v9214
        %v9447 = vadd.f32 %v8867, %v9217
        %v9448 = vadd.f32 %v8868, %v9220
        %v9449 = vadd.f32 %v8869, %v9223
        %v9450 = vadd.f32 %v8870, %v9226
        %v9451 = vadd.f32 %v8871, %v9229
        %v9452 = vadd.f32 %v8872, %v9232
        %v9453 = vadd.f32 %v8873, %v9235
        %v9454 = vadd.f32 %v8874, %v9238
        %v9455 = vadd.f32 %v8875, %v9241
        %v9456 = vadd.f32 %v8876, %v9244
        %v9457 = vadd.f32 %v8877, %v9247
        %v9458 = vadd.f32 %v8878, %v9250
        %v9459 = vadd.f32 %v8879, %v9253
        %v9460 = vadd.f32 %v8880, %v9256
        %v9461 = vadd.f32 %v8881, %v9259
        %v9462 = vadd.f32 %v8882, %v9262
        %v9463 = vadd.f32 %v8883, %v9265
        %v9464 = vadd.f32 %v8884, %v9268
        %v9465 = vadd.f32 %v8885, %v9271
        %v9466 = vadd.f32 %v8886, %v9274
        %v9467 = vadd.f32 %v8887, %v9277
        %v9468 = vadd.f32 %v8888, %v9280
        %v9469 = vadd.f32 %v8889, %v9283
        %v9470 = vadd.f32 %v8890, %v9286
        %v9471 = vadd.f32 %v8891, %v9289
        %v9472 = vadd.f32 %v8892, %v9292
        %v9473 = vadd.f32 %v8893, %v9295
        %v9474 = vadd.f32 %v8894, %v9298
        %v9475 = vadd.f32 %v8895, %v9301
        %v9476 = vadd.f32 %v8896, %v9304
        %v9477 = vadd.f32 %v8897, %v9307
        %v9478 = vadd.f32 %v8898, %v9310
        %v9479 = vadd.f32 %v8899, %v9313
        %v9480 = vadd.f32 %v8900, %v9316
        %v9481 = vadd.f32 %v8901, %v9319
        %v9482 = vadd.f32 %v8902, %v9322
        %v9483 = vadd.f32 %v8903, %v9325
        %v9484 = vadd.f32 %v8904, %v9328
        %v9485 = vadd.f32 %v8905, %v9331
        %v9486 = vadd.f32 %v8906, %v9334
        %v9487 = vadd.f32 %v8907, %v9337
        %v9488 = vadd.f32 %v8908, %v9340
        %v9489 = vadd.f32 %v8909, %v9343
        %v9490 = vadd.f32 %v8910, %v9346
        %v9491 = vadd.f32 %v8911, %v9349
        %v9492 = vadd.f32 %v8912, %v9352
        %v9493 = vadd.f32 %v8913, %v9355
        %v9494 = vadd.f32 %v8914, %v9358
        %v9495 = vadd.f32 %v8915, %v9361
        %v9496 = vadd.f32 %v8916, %v9364
        %v9497 = vadd.f32 %v8917, %v9367
        %v9498 = vadd.f32 %v8918, %v9370
        %v9499 = vlaneseq
        %v9500 = vshrl.u32 %v9499, 7
        %v9501 = vsub.s32 0, %v9500
        %v9502 = vrot.slane %v451, %v9501
        %v9503 = vmul.f32 %v286, %v9502
        %v9504 = vmul.f32 %v288, %v9502
        %v9505 = vmul.f32 %v290, %v9502
        %v9506 = vmul.f32 %v292, %v9502
        %v9507 = vmul.f32 %v294, %v9502
        %v9508 = vmul.f32 %v296, %v9502
        %v9509 = vmul.f32 %v298, %v9502
        %v9510 = vmul.f32 %v300, %v9502
        %v9511 = vmul.f32 %v306, %v9502
        %v9512 = vmul.f32 %v308, %v9502
        %v9513 = vmul.f32 %v310, %v9502
        %v9514 = vmul.f32 %v312, %v9502
        %v9515 = vmul.f32 %v314, %v9502
        %v9516 = vmul.f32 %v316, %v9502
        %v9517 = vmul.f32 %v318, %v9502
        %v9518 = vmul.f32 %v320, %v9502
        %v9519 = vmul.f32 %v326, %v9502
        %v9520 = vmul.f32 %v328, %v9502
        %v9521 = vmul.f32 %v330, %v9502
        %v9522 = vmul.f32 %v332, %v9502
        %v9523 = vmul.f32 %v334, %v9502
        %v9524 = vmul.f32 %v336, %v9502
        %v9525 = vmul.f32 %v338, %v9502
        %v9526 = vmul.f32 %v340, %v9502
        %v9527 = vmul.f32 %v346, %v9502
        %v9528 = vmul.f32 %v348, %v9502
        %v9529 = vmul.f32 %v350, %v9502
        %v9530 = vmul.f32 %v352, %v9502
        %v9531 = vmul.f32 %v354, %v9502
        %v9532 = vmul.f32 %v356, %v9502
        %v9533 = vmul.f32 %v358, %v9502
        %v9534 = vmul.f32 %v360, %v9502
        %v9535 = vmul.f32 %v366, %v9502
        %v9536 = vmul.f32 %v368, %v9502
        %v9537 = vmul.f32 %v370, %v9502
        %v9538 = vmul.f32 %v372, %v9502
        %v9539 = vmul.f32 %v374, %v9502
        %v9540 = vmul.f32 %v376, %v9502
        %v9541 = vmul.f32 %v378, %v9502
        %v9542 = vmul.f32 %v380, %v9502
        %v9543 = vmul.f32 %v386, %v9502
        %v9544 = vmul.f32 %v388, %v9502
        %v9545 = vmul.f32 %v390, %v9502
        %v9546 = vmul.f32 %v392, %v9502
        %v9547 = vmul.f32 %v394, %v9502
        %v9548 = vmul.f32 %v396, %v9502
        %v9549 = vmul.f32 %v398, %v9502
        %v9550 = vmul.f32 %v400, %v9502
        %v9551 = vmul.f32 %v406, %v9502
        %v9552 = vmul.f32 %v408, %v9502
        %v9553 = vmul.f32 %v410, %v9502
        %v9554 = vmul.f32 %v412, %v9502
        %v9555 = vmul.f32 %v414, %v9502
        %v9556 = vmul.f32 %v416, %v9502
        %v9557 = vmul.f32 %v418, %v9502
        %v9558 = vmul.f32 %v420, %v9502
        %v9559 = vmul.f32 %v426, %v9502
        %v9560 = vmul.f32 %v428, %v9502
        %v9561 = vmul.f32 %v430, %v9502
        %v9562 = vmul.f32 %v432, %v9502
        %v9563 = vmul.f32 %v434, %v9502
        %v9564 = vmul.f32 %v436, %v9502
        %v9565 = vmul.f32 %v438, %v9502
        %v9566 = vmul.f32 %v440, %v9502
        %v9567 = vadd.f32 %v9435, %v9503
        %v9568 = vadd.f32 %v9436, %v9504
        %v9569 = vadd.f32 %v9437, %v9505
        %v9570 = vadd.f32 %v9438, %v9506
        %v9571 = vadd.f32 %v9439, %v9507
        %v9572 = vadd.f32 %v9440, %v9508
        %v9573 = vadd.f32 %v9441, %v9509
        %v9574 = vadd.f32 %v9442, %v9510
        %v9575 = vadd.f32 %v9443, %v9511
        %v9576 = vadd.f32 %v9444, %v9512
        %v9577 = vadd.f32 %v9445, %v9513
        %v9578 = vadd.f32 %v9446, %v9514
        %v9579 = vadd.f32 %v9447, %v9515
        %v9580 = vadd.f32 %v9448, %v9516
        %v9581 = vadd.f32 %v9449, %v9517
        %v9582 = vadd.f32 %v9450, %v9518
        %v9583 = vadd.f32 %v9451, %v9519
        %v9584 = vadd.f32 %v9452, %v9520
        %v9585 = vadd.f32 %v9453, %v9521
        %v9586 = vadd.f32 %v9454, %v9522
        %v9587 = vadd.f32 %v9455, %v9523
        %v9588 = vadd.f32 %v9456, %v9524
        %v9589 = vadd.f32 %v9457, %v9525
        %v9590 = vadd.f32 %v9458, %v9526
        %v9591 = vadd.f32 %v9459, %v9527
        %v9592 = vadd.f32 %v9460, %v9528
        %v9593 = vadd.f32 %v9461, %v9529
        %v9594 = vadd.f32 %v9462, %v9530
        %v9595 = vadd.f32 %v9463, %v9531
        %v9596 = vadd.f32 %v9464, %v9532
        %v9597 = vadd.f32 %v9465, %v9533
        %v9598 = vadd.f32 %v9466, %v9534
        %v9599 = vadd.f32 %v9467, %v9535
        %v9600 = vadd.f32 %v9468, %v9536
        %v9601 = vadd.f32 %v9469, %v9537
        %v9602 = vadd.f32 %v9470, %v9538
        %v9603 = vadd.f32 %v9471, %v9539
        %v9604 = vadd.f32 %v9472, %v9540
        %v9605 = vadd.f32 %v9473, %v9541
        %v9606 = vadd.f32 %v9474, %v9542
        %v9607 = vadd.f32 %v9475, %v9543
        %v9608 = vadd.f32 %v9476, %v9544
        %v9609 = vadd.f32 %v9477, %v9545
        %v9610 = vadd.f32 %v9478, %v9546
        %v9611 = vadd.f32 %v9479, %v9547
        %v9612 = vadd.f32 %v9480, %v9548
        %v9613 = vadd.f32 %v9481, %v9549
        %v9614 = vadd.f32 %v9482, %v9550
        %v9615 = vadd.f32 %v9483, %v9551
        %v9616 = vadd.f32 %v9484, %v9552
        %v9617 = vadd.f32 %v9485, %v9553
        %v9618 = vadd.f32 %v9486, %v9554
        %v9619 = vadd.f32 %v9487, %v9555
        %v9620 = vadd.f32 %v9488, %v9556
        %v9621 = vadd.f32 %v9489, %v9557
        %v9622 = vadd.f32 %v9490, %v9558
        %v9623 = vadd.f32 %v9491, %v9559
        %v9624 = vadd.f32 %v9492, %v9560
        %v9625 = vadd.f32 %v9493, %v9561
        %v9626 = vadd.f32 %v9494, %v9562
        %v9627 = vadd.f32 %v9495, %v9563
        %v9628 = vadd.f32 %v9496, %v9564
        %v9629 = vadd.f32 %v9497, %v9565
        %v9630 = vadd.f32 %v9498, %v9566
        %v9631 = vlaneseq
        %v9632 = vshrl.u32 %v9631, 7
        %v9633 = vsub.s32 1, %v9632
        %v9634 = vrot.slane %v451, %v9633
        %v9635 = vmul.f32 %v286, %v9634
        %v9636 = vmul.f32 %v287, %v9634
        %v9637 = vmul.f32 %v288, %v9634
        %v9638 = vmul.f32 %v289, %v9634
        %v9639 = vmul.f32 %v290, %v9634
        %v9640 = vmul.f32 %v291, %v9634
        %v9641 = vmul.f32 %v292, %v9634
        %v9642 = vmul.f32 %v293, %v9634
        %v9643 = vmul.f32 %v294, %v9634
        %v9644 = vmul.f32 %v295, %v9634
        %v9645 = vmul.f32 %v296, %v9634
        %v9646 = vmul.f32 %v297, %v9634
        %v9647 = vmul.f32 %v298, %v9634
        %v9648 = vmul.f32 %v299, %v9634
        %v9649 = vmul.f32 %v300, %v9634
        %v9650 = vmul.f32 %v301, %v9634
        %v9651 = vmul.f32 %v306, %v9634
        %v9652 = vmul.f32 %v307, %v9634
        %v9653 = vmul.f32 %v308, %v9634
        %v9654 = vmul.f32 %v309, %v9634
        %v9655 = vmul.f32 %v310, %v9634
        %v9656 = vmul.f32 %v311, %v9634
        %v9657 = vmul.f32 %v312, %v9634
        %v9658 = vmul.f32 %v313, %v9634
        %v9659 = vmul.f32 %v314, %v9634
        %v9660 = vmul.f32 %v315, %v9634
        %v9661 = vmul.f32 %v316, %v9634
        %v9662 = vmul.f32 %v317, %v9634
        %v9663 = vmul.f32 %v318, %v9634
        %v9664 = vmul.f32 %v319, %v9634
        %v9665 = vmul.f32 %v320, %v9634
        %v9666 = vmul.f32 %v321, %v9634
        %v9667 = vmul.f32 %v326, %v9634
        %v9668 = vmul.f32 %v327, %v9634
        %v9669 = vmul.f32 %v328, %v9634
        %v9670 = vmul.f32 %v329, %v9634
        %v9671 = vmul.f32 %v330, %v9634
        %v9672 = vmul.f32 %v331, %v9634
        %v9673 = vmul.f32 %v332, %v9634
        %v9674 = vmul.f32 %v333, %v9634
        %v9675 = vmul.f32 %v334, %v9634
        %v9676 = vmul.f32 %v335, %v9634
        %v9677 = vmul.f32 %v336, %v9634
        %v9678 = vmul.f32 %v337, %v9634
        %v9679 = vmul.f32 %v338, %v9634
        %v9680 = vmul.f32 %v339, %v9634
        %v9681 = vmul.f32 %v340, %v9634
        %v9682 = vmul.f32 %v341, %v9634
        %v9683 = vmul.f32 %v346, %v9634
        %v9684 = vmul.f32 %v347, %v9634
        %v9685 = vmul.f32 %v348, %v9634
        %v9686 = vmul.f32 %v349, %v9634
        %v9687 = vmul.f32 %v350, %v9634
        %v9688 = vmul.f32 %v351, %v9634
        %v9689 = vmul.f32 %v352, %v9634
        %v9690 = vmul.f32 %v353, %v9634
        %v9691 = vmul.f32 %v354, %v9634
        %v9692 = vmul.f32 %v355, %v9634
        %v9693 = vmul.f32 %v356, %v9634
        %v9694 = vmul.f32 %v357, %v9634
        %v9695 = vmul.f32 %v358, %v9634
        %v9696 = vmul.f32 %v359, %v9634
        %v9697 = vmul.f32 %v360, %v9634
        %v9698 = vmul.f32 %v361, %v9634
        %v9699 = vmul.f32 %v366, %v9634
        %v9700 = vmul.f32 %v367, %v9634
        %v9701 = vmul.f32 %v368, %v9634
        %v9702 = vmul.f32 %v369, %v9634
        %v9703 = vmul.f32 %v370, %v9634
        %v9704 = vmul.f32 %v371, %v9634
        %v9705 = vmul.f32 %v372, %v9634
        %v9706 = vmul.f32 %v373, %v9634
        %v9707 = vmul.f32 %v374, %v9634
        %v9708 = vmul.f32 %v375, %v9634
        %v9709 = vmul.f32 %v376, %v9634
        %v9710 = vmul.f32 %v377, %v9634
        %v9711 = vmul.f32 %v378, %v9634
        %v9712 = vmul.f32 %v379, %v9634
        %v9713 = vmul.f32 %v380, %v9634
        %v9714 = vmul.f32 %v381, %v9634
        %v9715 = vmul.f32 %v386, %v9634
        %v9716 = vmul.f32 %v387, %v9634
        %v9717 = vmul.f32 %v388, %v9634
        %v9718 = vmul.f32 %v389, %v9634
        %v9719 = vmul.f32 %v390, %v9634
        %v9720 = vmul.f32 %v391, %v9634
        %v9721 = vmul.f32 %v392, %v9634
        %v9722 = vmul.f32 %v393, %v9634
        %v9723 = vmul.f32 %v394, %v9634
        %v9724 = vmul.f32 %v395, %v9634
        %v9725 = vmul.f32 %v396, %v9634
        %v9726 = vmul.f32 %v397, %v9634
        %v9727 = vmul.f32 %v398, %v9634
        %v9728 = vmul.f32 %v399, %v9634
        %v9729 = vmul.f32 %v400, %v9634
        %v9730 = vmul.f32 %v401, %v9634
        %v9731 = vmul.f32 %v406, %v9634
        %v9732 = vmul.f32 %v407, %v9634
        %v9733 = vmul.f32 %v408, %v9634
        %v9734 = vmul.f32 %v409, %v9634
        %v9735 = vmul.f32 %v410, %v9634
        %v9736 = vmul.f32 %v411, %v9634
        %v9737 = vmul.f32 %v412, %v9634
        %v9738 = vmul.f32 %v413, %v9634
        %v9739 = vmul.f32 %v414, %v9634
        %v9740 = vmul.f32 %v415, %v9634
        %v9741 = vmul.f32 %v416, %v9634
        %v9742 = vmul.f32 %v417, %v9634
        %v9743 = vmul.f32 %v418, %v9634
        %v9744 = vmul.f32 %v419, %v9634
        %v9745 = vmul.f32 %v420, %v9634
        %v9746 = vmul.f32 %v421, %v9634
        %v9747 = vmul.f32 %v426, %v9634
        %v9748 = vmul.f32 %v427, %v9634
        %v9749 = vmul.f32 %v428, %v9634
        %v9750 = vmul.f32 %v429, %v9634
        %v9751 = vmul.f32 %v430, %v9634
        %v9752 = vmul.f32 %v431, %v9634
        %v9753 = vmul.f32 %v432, %v9634
        %v9754 = vmul.f32 %v433, %v9634
        %v9755 = vmul.f32 %v434, %v9634
        %v9756 = vmul.f32 %v435, %v9634
        %v9757 = vmul.f32 %v436, %v9634
        %v9758 = vmul.f32 %v437, %v9634
        %v9759 = vmul.f32 %v438, %v9634
        %v9760 = vmul.f32 %v439, %v9634
        %v9761 = vmul.f32 %v440, %v9634
        %v9762 = vmul.f32 %v441, %v9634
        %v9891 = vrot.slane %v9635, 1
        %v9892 = vrot.slane %v9636, 1
        %v9893 = vsel %vm845, %v9891, %v9892
        %v9894 = vrot.slane %v9637, 1
        %v9895 = vrot.slane %v9638, 1
        %v9896 = vsel %vm845, %v9894, %v9895
        %v9897 = vrot.slane %v9639, 1
        %v9898 = vrot.slane %v9640, 1
        %v9899 = vsel %vm845, %v9897, %v9898
        %v9900 = vrot.slane %v9641, 1
        %v9901 = vrot.slane %v9642, 1
        %v9902 = vsel %vm845, %v9900, %v9901
        %v9903 = vrot.slane %v9643, 1
        %v9904 = vrot.slane %v9644, 1
        %v9905 = vsel %vm845, %v9903, %v9904
        %v9906 = vrot.slane %v9645, 1
        %v9907 = vrot.slane %v9646, 1
        %v9908 = vsel %vm845, %v9906, %v9907
        %v9909 = vrot.slane %v9647, 1
        %v9910 = vrot.slane %v9648, 1
        %v9911 = vsel %vm845, %v9909, %v9910
        %v9912 = vrot.slane %v9649, 1
        %v9913 = vrot.slane %v9650, 1
        %v9914 = vsel %vm845, %v9912, %v9913
        %v9915 = vrot.slane %v9651, 1
        %v9916 = vrot.slane %v9652, 1
        %v9917 = vsel %vm845, %v9915, %v9916
        %v9918 = vrot.slane %v9653, 1
        %v9919 = vrot.slane %v9654, 1
        %v9920 = vsel %vm845, %v9918, %v9919
        %v9921 = vrot.slane %v9655, 1
        %v9922 = vrot.slane %v9656, 1
        %v9923 = vsel %vm845, %v9921, %v9922
        %v9924 = vrot.slane %v9657, 1
        %v9925 = vrot.slane %v9658, 1
        %v9926 = vsel %vm845, %v9924, %v9925
        %v9927 = vrot.slane %v9659, 1
        %v9928 = vrot.slane %v9660, 1
        %v9929 = vsel %vm845, %v9927, %v9928
        %v9930 = vrot.slane %v9661, 1
        %v9931 = vrot.slane %v9662, 1
        %v9932 = vsel %vm845, %v9930, %v9931
        %v9933 = vrot.slane %v9663, 1
        %v9934 = vrot.slane %v9664, 1
        %v9935 = vsel %vm845, %v9933, %v9934
        %v9936 = vrot.slane %v9665, 1
        %v9937 = vrot.slane %v9666, 1
        %v9938 = vsel %vm845, %v9936, %v9937
        %v9939 = vrot.slane %v9667, 1
        %v9940 = vrot.slane %v9668, 1
        %v9941 = vsel %vm845, %v9939, %v9940
        %v9942 = vrot.slane %v9669, 1
        %v9943 = vrot.slane %v9670, 1
        %v9944 = vsel %vm845, %v9942, %v9943
        %v9945 = vrot.slane %v9671, 1
        %v9946 = vrot.slane %v9672, 1
        %v9947 = vsel %vm845, %v9945, %v9946
        %v9948 = vrot.slane %v9673, 1
        %v9949 = vrot.slane %v9674, 1
        %v9950 = vsel %vm845, %v9948, %v9949
        %v9951 = vrot.slane %v9675, 1
        %v9952 = vrot.slane %v9676, 1
        %v9953 = vsel %vm845, %v9951, %v9952
        %v9954 = vrot.slane %v9677, 1
        %v9955 = vrot.slane %v9678, 1
        %v9956 = vsel %vm845, %v9954, %v9955
        %v9957 = vrot.slane %v9679, 1
        %v9958 = vrot.slane %v9680, 1
        %v9959 = vsel %vm845, %v9957, %v9958
        %v9960 = vrot.slane %v9681, 1
        %v9961 = vrot.slane %v9682, 1
        %v9962 = vsel %vm845, %v9960, %v9961
        %v9963 = vrot.slane %v9683, 1
        %v9964 = vrot.slane %v9684, 1
        %v9965 = vsel %vm845, %v9963, %v9964
        %v9966 = vrot.slane %v9685, 1
        %v9967 = vrot.slane %v9686, 1
        %v9968 = vsel %vm845, %v9966, %v9967
        %v9969 = vrot.slane %v9687, 1
        %v9970 = vrot.slane %v9688, 1
        %v9971 = vsel %vm845, %v9969, %v9970
        %v9972 = vrot.slane %v9689, 1
        %v9973 = vrot.slane %v9690, 1
        %v9974 = vsel %vm845, %v9972, %v9973
        %v9975 = vrot.slane %v9691, 1
        %v9976 = vrot.slane %v9692, 1
        %v9977 = vsel %vm845, %v9975, %v9976
        %v9978 = vrot.slane %v9693, 1
        %v9979 = vrot.slane %v9694, 1
        %v9980 = vsel %vm845, %v9978, %v9979
        %v9981 = vrot.slane %v9695, 1
        %v9982 = vrot.slane %v9696, 1
        %v9983 = vsel %vm845, %v9981, %v9982
        %v9984 = vrot.slane %v9697, 1
        %v9985 = vrot.slane %v9698, 1
        %v9986 = vsel %vm845, %v9984, %v9985
        %v9987 = vrot.slane %v9699, 1
        %v9988 = vrot.slane %v9700, 1
        %v9989 = vsel %vm845, %v9987, %v9988
        %v9990 = vrot.slane %v9701, 1
        %v9991 = vrot.slane %v9702, 1
        %v9992 = vsel %vm845, %v9990, %v9991
        %v9993 = vrot.slane %v9703, 1
        %v9994 = vrot.slane %v9704, 1
        %v9995 = vsel %vm845, %v9993, %v9994
        %v9996 = vrot.slane %v9705, 1
        %v9997 = vrot.slane %v9706, 1
        %v9998 = vsel %vm845, %v9996, %v9997
        %v9999 = vrot.slane %v9707, 1
        %v10000 = vrot.slane %v9708, 1
        %v10001 = vsel %vm845, %v9999, %v10000
        %v10002 = vrot.slane %v9709, 1
        %v10003 = vrot.slane %v9710, 1
        %v10004 = vsel %vm845, %v10002, %v10003
        %v10005 = vrot.slane %v9711, 1
        %v10006 = vrot.slane %v9712, 1
        %v10007 = vsel %vm845, %v10005, %v10006
        %v10008 = vrot.slane %v9713, 1
        %v10009 = vrot.slane %v9714, 1
        %v10010 = vsel %vm845, %v10008, %v10009
        %v10011 = vrot.slane %v9715, 1
        %v10012 = vrot.slane %v9716, 1
        %v10013 = vsel %vm845, %v10011, %v10012
        %v10014 = vrot.slane %v9717, 1
        %v10015 = vrot.slane %v9718, 1
        %v10016 = vsel %vm845, %v10014, %v10015
        %v10017 = vrot.slane %v9719, 1
        %v10018 = vrot.slane %v9720, 1
        %v10019 = vsel %vm845, %v10017, %v10018
        %v10020 = vrot.slane %v9721, 1
        %v10021 = vrot.slane %v9722, 1
        %v10022 = vsel %vm845, %v10020, %v10021
        %v10023 = vrot.slane %v9723, 1
        %v10024 = vrot.slane %v9724, 1
        %v10025 = vsel %vm845, %v10023, %v10024
        %v10026 = vrot.slane %v9725, 1
        %v10027 = vrot.slane %v9726, 1
        %v10028 = vsel %vm845, %v10026, %v10027
        %v10029 = vrot.slane %v9727, 1
        %v10030 = vrot.slane %v9728, 1
        %v10031 = vsel %vm845, %v10029, %v10030
        %v10032 = vrot.slane %v9729, 1
        %v10033 = vrot.slane %v9730, 1
        %v10034 = vsel %vm845, %v10032, %v10033
        %v10035 = vrot.slane %v9731, 1
        %v10036 = vrot.slane %v9732, 1
        %v10037 = vsel %vm845, %v10035, %v10036
        %v10038 = vrot.slane %v9733, 1
        %v10039 = vrot.slane %v9734, 1
        %v10040 = vsel %vm845, %v10038, %v10039
        %v10041 = vrot.slane %v9735, 1
        %v10042 = vrot.slane %v9736, 1
        %v10043 = vsel %vm845, %v10041, %v10042
        %v10044 = vrot.slane %v9737, 1
        %v10045 = vrot.slane %v9738, 1
        %v10046 = vsel %vm845, %v10044, %v10045
        %v10047 = vrot.slane %v9739, 1
        %v10048 = vrot.slane %v9740, 1
        %v10049 = vsel %vm845, %v10047, %v10048
        %v10050 = vrot.slane %v9741, 1
        %v10051 = vrot.slane %v9742, 1
        %v10052 = vsel %vm845, %v10050, %v10051
        %v10053 = vrot.slane %v9743, 1
        %v10054 = vrot.slane %v9744, 1
        %v10055 = vsel %vm845, %v10053, %v10054
        %v10056 = vrot.slane %v9745, 1
        %v10057 = vrot.slane %v9746, 1
        %v10058 = vsel %vm845, %v10056, %v10057
        %v10059 = vrot.slane %v9747, 1
        %v10060 = vrot.slane %v9748, 1
        %v10061 = vsel %vm845, %v10059, %v10060
        %v10062 = vrot.slane %v9749, 1
        %v10063 = vrot.slane %v9750, 1
        %v10064 = vsel %vm845, %v10062, %v10063
        %v10065 = vrot.slane %v9751, 1
        %v10066 = vrot.slane %v9752, 1
        %v10067 = vsel %vm845, %v10065, %v10066
        %v10068 = vrot.slane %v9753, 1
        %v10069 = vrot.slane %v9754, 1
        %v10070 = vsel %vm845, %v10068, %v10069
        %v10071 = vrot.slane %v9755, 1
        %v10072 = vrot.slane %v9756, 1
        %v10073 = vsel %vm845, %v10071, %v10072
        %v10074 = vrot.slane %v9757, 1
        %v10075 = vrot.slane %v9758, 1
        %v10076 = vsel %vm845, %v10074, %v10075
        %v10077 = vrot.slane %v9759, 1
        %v10078 = vrot.slane %v9760, 1
        %v10079 = vsel %vm845, %v10077, %v10078
        %v10080 = vrot.slane %v9761, 1
        %v10081 = vrot.slane %v9762, 1
        %v10082 = vsel %vm845, %v10080, %v10081
        %v10147 = vadd.f32 %v9567, %v9893
        %v10148 = vadd.f32 %v9568, %v9896
        %v10149 = vadd.f32 %v9569, %v9899
        %v10150 = vadd.f32 %v9570, %v9902
        %v10151 = vadd.f32 %v9571, %v9905
        %v10152 = vadd.f32 %v9572, %v9908
        %v10153 = vadd.f32 %v9573, %v9911
        %v10154 = vadd.f32 %v9574, %v9914
        %v10155 = vadd.f32 %v9575, %v9917
        %v10156 = vadd.f32 %v9576, %v9920
        %v10157 = vadd.f32 %v9577, %v9923
        %v10158 = vadd.f32 %v9578, %v9926
        %v10159 = vadd.f32 %v9579, %v9929
        %v10160 = vadd.f32 %v9580, %v9932
        %v10161 = vadd.f32 %v9581, %v9935
        %v10162 = vadd.f32 %v9582, %v9938
        %v10163 = vadd.f32 %v9583, %v9941
        %v10164 = vadd.f32 %v9584, %v9944
        %v10165 = vadd.f32 %v9585, %v9947
        %v10166 = vadd.f32 %v9586, %v9950
        %v10167 = vadd.f32 %v9587, %v9953
        %v10168 = vadd.f32 %v9588, %v9956
        %v10169 = vadd.f32 %v9589, %v9959
        %v10170 = vadd.f32 %v9590, %v9962
        %v10171 = vadd.f32 %v9591, %v9965
        %v10172 = vadd.f32 %v9592, %v9968
        %v10173 = vadd.f32 %v9593, %v9971
        %v10174 = vadd.f32 %v9594, %v9974
        %v10175 = vadd.f32 %v9595, %v9977
        %v10176 = vadd.f32 %v9596, %v9980
        %v10177 = vadd.f32 %v9597, %v9983
        %v10178 = vadd.f32 %v9598, %v9986
        %v10179 = vadd.f32 %v9599, %v9989
        %v10180 = vadd.f32 %v9600, %v9992
        %v10181 = vadd.f32 %v9601, %v9995
        %v10182 = vadd.f32 %v9602, %v9998
        %v10183 = vadd.f32 %v9603, %v10001
        %v10184 = vadd.f32 %v9604, %v10004
        %v10185 = vadd.f32 %v9605, %v10007
        %v10186 = vadd.f32 %v9606, %v10010
        %v10187 = vadd.f32 %v9607, %v10013
        %v10188 = vadd.f32 %v9608, %v10016
        %v10189 = vadd.f32 %v9609, %v10019
        %v10190 = vadd.f32 %v9610, %v10022
        %v10191 = vadd.f32 %v9611, %v10025
        %v10192 = vadd.f32 %v9612, %v10028
        %v10193 = vadd.f32 %v9613, %v10031
        %v10194 = vadd.f32 %v9614, %v10034
        %v10195 = vadd.f32 %v9615, %v10037
        %v10196 = vadd.f32 %v9616, %v10040
        %v10197 = vadd.f32 %v9617, %v10043
        %v10198 = vadd.f32 %v9618, %v10046
        %v10199 = vadd.f32 %v9619, %v10049
        %v10200 = vadd.f32 %v9620, %v10052
        %v10201 = vadd.f32 %v9621, %v10055
        %v10202 = vadd.f32 %v9622, %v10058
        %v10203 = vadd.f32 %v9623, %v10061
        %v10204 = vadd.f32 %v9624, %v10064
        %v10205 = vadd.f32 %v9625, %v10067
        %v10206 = vadd.f32 %v9626, %v10070
        %v10207 = vadd.f32 %v9627, %v10073
        %v10208 = vadd.f32 %v9628, %v10076
        %v10209 = vadd.f32 %v9629, %v10079
        %v10210 = vadd.f32 %v9630, %v10082
        %v10211 = vlaneseq
        %v10212 = vshrl.u32 %v10211, 7
        %v10213 = vsub.s32 2, %v10212
        %v10214 = vrot.slane %v451, %v10213
        %v10215 = vmul.f32 %v286, %v10214
        %v10216 = vmul.f32 %v287, %v10214
        %v10217 = vmul.f32 %v288, %v10214
        %v10218 = vmul.f32 %v289, %v10214
        %v10219 = vmul.f32 %v290, %v10214
        %v10220 = vmul.f32 %v291, %v10214
        %v10221 = vmul.f32 %v292, %v10214
        %v10222 = vmul.f32 %v293, %v10214
        %v10223 = vmul.f32 %v294, %v10214
        %v10224 = vmul.f32 %v295, %v10214
        %v10225 = vmul.f32 %v296, %v10214
        %v10226 = vmul.f32 %v297, %v10214
        %v10227 = vmul.f32 %v298, %v10214
        %v10228 = vmul.f32 %v299, %v10214
        %v10229 = vmul.f32 %v300, %v10214
        %v10230 = vmul.f32 %v301, %v10214
        %v10231 = vmul.f32 %v306, %v10214
        %v10232 = vmul.f32 %v307, %v10214
        %v10233 = vmul.f32 %v308, %v10214
        %v10234 = vmul.f32 %v309, %v10214
        %v10235 = vmul.f32 %v310, %v10214
        %v10236 = vmul.f32 %v311, %v10214
        %v10237 = vmul.f32 %v312, %v10214
        %v10238 = vmul.f32 %v313, %v10214
        %v10239 = vmul.f32 %v314, %v10214
        %v10240 = vmul.f32 %v315, %v10214
        %v10241 = vmul.f32 %v316, %v10214
        %v10242 = vmul.f32 %v317, %v10214
        %v10243 = vmul.f32 %v318, %v10214
        %v10244 = vmul.f32 %v319, %v10214
        %v10245 = vmul.f32 %v320, %v10214
        %v10246 = vmul.f32 %v321, %v10214
        %v10247 = vmul.f32 %v326, %v10214
        %v10248 = vmul.f32 %v327, %v10214
        %v10249 = vmul.f32 %v328, %v10214
        %v10250 = vmul.f32 %v329, %v10214
        %v10251 = vmul.f32 %v330, %v10214
        %v10252 = vmul.f32 %v331, %v10214
        %v10253 = vmul.f32 %v332, %v10214
        %v10254 = vmul.f32 %v333, %v10214
        %v10255 = vmul.f32 %v334, %v10214
        %v10256 = vmul.f32 %v335, %v10214
        %v10257 = vmul.f32 %v336, %v10214
        %v10258 = vmul.f32 %v337, %v10214
        %v10259 = vmul.f32 %v338, %v10214
        %v10260 = vmul.f32 %v339, %v10214
        %v10261 = vmul.f32 %v340, %v10214
        %v10262 = vmul.f32 %v341, %v10214
        %v10263 = vmul.f32 %v346, %v10214
        %v10264 = vmul.f32 %v347, %v10214
        %v10265 = vmul.f32 %v348, %v10214
        %v10266 = vmul.f32 %v349, %v10214
        %v10267 = vmul.f32 %v350, %v10214
        %v10268 = vmul.f32 %v351, %v10214
        %v10269 = vmul.f32 %v352, %v10214
        %v10270 = vmul.f32 %v353, %v10214
        %v10271 = vmul.f32 %v354, %v10214
        %v10272 = vmul.f32 %v355, %v10214
        %v10273 = vmul.f32 %v356, %v10214
        %v10274 = vmul.f32 %v357, %v10214
        %v10275 = vmul.f32 %v358, %v10214
        %v10276 = vmul.f32 %v359, %v10214
        %v10277 = vmul.f32 %v360, %v10214
        %v10278 = vmul.f32 %v361, %v10214
        %v10279 = vmul.f32 %v366, %v10214
        %v10280 = vmul.f32 %v367, %v10214
        %v10281 = vmul.f32 %v368, %v10214
        %v10282 = vmul.f32 %v369, %v10214
        %v10283 = vmul.f32 %v370, %v10214
        %v10284 = vmul.f32 %v371, %v10214
        %v10285 = vmul.f32 %v372, %v10214
        %v10286 = vmul.f32 %v373, %v10214
        %v10287 = vmul.f32 %v374, %v10214
        %v10288 = vmul.f32 %v375, %v10214
        %v10289 = vmul.f32 %v376, %v10214
        %v10290 = vmul.f32 %v377, %v10214
        %v10291 = vmul.f32 %v378, %v10214
        %v10292 = vmul.f32 %v379, %v10214
        %v10293 = vmul.f32 %v380, %v10214
        %v10294 = vmul.f32 %v381, %v10214
        %v10295 = vmul.f32 %v386, %v10214
        %v10296 = vmul.f32 %v387, %v10214
        %v10297 = vmul.f32 %v388, %v10214
        %v10298 = vmul.f32 %v389, %v10214
        %v10299 = vmul.f32 %v390, %v10214
        %v10300 = vmul.f32 %v391, %v10214
        %v10301 = vmul.f32 %v392, %v10214
        %v10302 = vmul.f32 %v393, %v10214
        %v10303 = vmul.f32 %v394, %v10214
        %v10304 = vmul.f32 %v395, %v10214
        %v10305 = vmul.f32 %v396, %v10214
        %v10306 = vmul.f32 %v397, %v10214
        %v10307 = vmul.f32 %v398, %v10214
        %v10308 = vmul.f32 %v399, %v10214
        %v10309 = vmul.f32 %v400, %v10214
        %v10310 = vmul.f32 %v401, %v10214
        %v10311 = vmul.f32 %v406, %v10214
        %v10312 = vmul.f32 %v407, %v10214
        %v10313 = vmul.f32 %v408, %v10214
        %v10314 = vmul.f32 %v409, %v10214
        %v10315 = vmul.f32 %v410, %v10214
        %v10316 = vmul.f32 %v411, %v10214
        %v10317 = vmul.f32 %v412, %v10214
        %v10318 = vmul.f32 %v413, %v10214
        %v10319 = vmul.f32 %v414, %v10214
        %v10320 = vmul.f32 %v415, %v10214
        %v10321 = vmul.f32 %v416, %v10214
        %v10322 = vmul.f32 %v417, %v10214
        %v10323 = vmul.f32 %v418, %v10214
        %v10324 = vmul.f32 %v419, %v10214
        %v10325 = vmul.f32 %v420, %v10214
        %v10326 = vmul.f32 %v421, %v10214
        %v10327 = vmul.f32 %v426, %v10214
        %v10328 = vmul.f32 %v427, %v10214
        %v10329 = vmul.f32 %v428, %v10214
        %v10330 = vmul.f32 %v429, %v10214
        %v10331 = vmul.f32 %v430, %v10214
        %v10332 = vmul.f32 %v431, %v10214
        %v10333 = vmul.f32 %v432, %v10214
        %v10334 = vmul.f32 %v433, %v10214
        %v10335 = vmul.f32 %v434, %v10214
        %v10336 = vmul.f32 %v435, %v10214
        %v10337 = vmul.f32 %v436, %v10214
        %v10338 = vmul.f32 %v437, %v10214
        %v10339 = vmul.f32 %v438, %v10214
        %v10340 = vmul.f32 %v439, %v10214
        %v10341 = vmul.f32 %v440, %v10214
        %v10342 = vmul.f32 %v441, %v10214
        %v10471 = vrot.slane %v10215, 2
        %v10472 = vrot.slane %v10216, 2
        %v10473 = vsel %vm1426, %v10471, %v10472
        %v10474 = vrot.slane %v10217, 2
        %v10475 = vrot.slane %v10218, 2
        %v10476 = vsel %vm1426, %v10474, %v10475
        %v10477 = vrot.slane %v10219, 2
        %v10478 = vrot.slane %v10220, 2
        %v10479 = vsel %vm1426, %v10477, %v10478
        %v10480 = vrot.slane %v10221, 2
        %v10481 = vrot.slane %v10222, 2
        %v10482 = vsel %vm1426, %v10480, %v10481
        %v10483 = vrot.slane %v10223, 2
        %v10484 = vrot.slane %v10224, 2
        %v10485 = vsel %vm1426, %v10483, %v10484
        %v10486 = vrot.slane %v10225, 2
        %v10487 = vrot.slane %v10226, 2
        %v10488 = vsel %vm1426, %v10486, %v10487
        %v10489 = vrot.slane %v10227, 2
        %v10490 = vrot.slane %v10228, 2
        %v10491 = vsel %vm1426, %v10489, %v10490
        %v10492 = vrot.slane %v10229, 2
        %v10493 = vrot.slane %v10230, 2
        %v10494 = vsel %vm1426, %v10492, %v10493
        %v10495 = vrot.slane %v10231, 2
        %v10496 = vrot.slane %v10232, 2
        %v10497 = vsel %vm1426, %v10495, %v10496
        %v10498 = vrot.slane %v10233, 2
        %v10499 = vrot.slane %v10234, 2
        %v10500 = vsel %vm1426, %v10498, %v10499
        %v10501 = vrot.slane %v10235, 2
        %v10502 = vrot.slane %v10236, 2
        %v10503 = vsel %vm1426, %v10501, %v10502
        %v10504 = vrot.slane %v10237, 2
        %v10505 = vrot.slane %v10238, 2
        %v10506 = vsel %vm1426, %v10504, %v10505
        %v10507 = vrot.slane %v10239, 2
        %v10508 = vrot.slane %v10240, 2
        %v10509 = vsel %vm1426, %v10507, %v10508
        %v10510 = vrot.slane %v10241, 2
        %v10511 = vrot.slane %v10242, 2
        %v10512 = vsel %vm1426, %v10510, %v10511
        %v10513 = vrot.slane %v10243, 2
        %v10514 = vrot.slane %v10244, 2
        %v10515 = vsel %vm1426, %v10513, %v10514
        %v10516 = vrot.slane %v10245, 2
        %v10517 = vrot.slane %v10246, 2
        %v10518 = vsel %vm1426, %v10516, %v10517
        %v10519 = vrot.slane %v10247, 2
        %v10520 = vrot.slane %v10248, 2
        %v10521 = vsel %vm1426, %v10519, %v10520
        %v10522 = vrot.slane %v10249, 2
        %v10523 = vrot.slane %v10250, 2
        %v10524 = vsel %vm1426, %v10522, %v10523
        %v10525 = vrot.slane %v10251, 2
        %v10526 = vrot.slane %v10252, 2
        %v10527 = vsel %vm1426, %v10525, %v10526
        %v10528 = vrot.slane %v10253, 2
        %v10529 = vrot.slane %v10254, 2
        %v10530 = vsel %vm1426, %v10528, %v10529
        %v10531 = vrot.slane %v10255, 2
        %v10532 = vrot.slane %v10256, 2
        %v10533 = vsel %vm1426, %v10531, %v10532
        %v10534 = vrot.slane %v10257, 2
        %v10535 = vrot.slane %v10258, 2
        %v10536 = vsel %vm1426, %v10534, %v10535
        %v10537 = vrot.slane %v10259, 2
        %v10538 = vrot.slane %v10260, 2
        %v10539 = vsel %vm1426, %v10537, %v10538
        %v10540 = vrot.slane %v10261, 2
        %v10541 = vrot.slane %v10262, 2
        %v10542 = vsel %vm1426, %v10540, %v10541
        %v10543 = vrot.slane %v10263, 2
        %v10544 = vrot.slane %v10264, 2
        %v10545 = vsel %vm1426, %v10543, %v10544
        %v10546 = vrot.slane %v10265, 2
        %v10547 = vrot.slane %v10266, 2
        %v10548 = vsel %vm1426, %v10546, %v10547
        %v10549 = vrot.slane %v10267, 2
        %v10550 = vrot.slane %v10268, 2
        %v10551 = vsel %vm1426, %v10549, %v10550
        %v10552 = vrot.slane %v10269, 2
        %v10553 = vrot.slane %v10270, 2
        %v10554 = vsel %vm1426, %v10552, %v10553
        %v10555 = vrot.slane %v10271, 2
        %v10556 = vrot.slane %v10272, 2
        %v10557 = vsel %vm1426, %v10555, %v10556
        %v10558 = vrot.slane %v10273, 2
        %v10559 = vrot.slane %v10274, 2
        %v10560 = vsel %vm1426, %v10558, %v10559
        %v10561 = vrot.slane %v10275, 2
        %v10562 = vrot.slane %v10276, 2
        %v10563 = vsel %vm1426, %v10561, %v10562
        %v10564 = vrot.slane %v10277, 2
        %v10565 = vrot.slane %v10278, 2
        %v10566 = vsel %vm1426, %v10564, %v10565
        %v10567 = vrot.slane %v10279, 2
        %v10568 = vrot.slane %v10280, 2
        %v10569 = vsel %vm1426, %v10567, %v10568
        %v10570 = vrot.slane %v10281, 2
        %v10571 = vrot.slane %v10282, 2
        %v10572 = vsel %vm1426, %v10570, %v10571
        %v10573 = vrot.slane %v10283, 2
        %v10574 = vrot.slane %v10284, 2
        %v10575 = vsel %vm1426, %v10573, %v10574
        %v10576 = vrot.slane %v10285, 2
        %v10577 = vrot.slane %v10286, 2
        %v10578 = vsel %vm1426, %v10576, %v10577
        %v10579 = vrot.slane %v10287, 2
        %v10580 = vrot.slane %v10288, 2
        %v10581 = vsel %vm1426, %v10579, %v10580
        %v10582 = vrot.slane %v10289, 2
        %v10583 = vrot.slane %v10290, 2
        %v10584 = vsel %vm1426, %v10582, %v10583
        %v10585 = vrot.slane %v10291, 2
        %v10586 = vrot.slane %v10292, 2
        %v10587 = vsel %vm1426, %v10585, %v10586
        %v10588 = vrot.slane %v10293, 2
        %v10589 = vrot.slane %v10294, 2
        %v10590 = vsel %vm1426, %v10588, %v10589
        %v10591 = vrot.slane %v10295, 2
        %v10592 = vrot.slane %v10296, 2
        %v10593 = vsel %vm1426, %v10591, %v10592
        %v10594 = vrot.slane %v10297, 2
        %v10595 = vrot.slane %v10298, 2
        %v10596 = vsel %vm1426, %v10594, %v10595
        %v10597 = vrot.slane %v10299, 2
        %v10598 = vrot.slane %v10300, 2
        %v10599 = vsel %vm1426, %v10597, %v10598
        %v10600 = vrot.slane %v10301, 2
        %v10601 = vrot.slane %v10302, 2
        %v10602 = vsel %vm1426, %v10600, %v10601
        %v10603 = vrot.slane %v10303, 2
        %v10604 = vrot.slane %v10304, 2
        %v10605 = vsel %vm1426, %v10603, %v10604
        %v10606 = vrot.slane %v10305, 2
        %v10607 = vrot.slane %v10306, 2
        %v10608 = vsel %vm1426, %v10606, %v10607
        %v10609 = vrot.slane %v10307, 2
        %v10610 = vrot.slane %v10308, 2
        %v10611 = vsel %vm1426, %v10609, %v10610
        %v10612 = vrot.slane %v10309, 2
        %v10613 = vrot.slane %v10310, 2
        %v10614 = vsel %vm1426, %v10612, %v10613
        %v10615 = vrot.slane %v10311, 2
        %v10616 = vrot.slane %v10312, 2
        %v10617 = vsel %vm1426, %v10615, %v10616
        %v10618 = vrot.slane %v10313, 2
        %v10619 = vrot.slane %v10314, 2
        %v10620 = vsel %vm1426, %v10618, %v10619
        %v10621 = vrot.slane %v10315, 2
        %v10622 = vrot.slane %v10316, 2
        %v10623 = vsel %vm1426, %v10621, %v10622
        %v10624 = vrot.slane %v10317, 2
        %v10625 = vrot.slane %v10318, 2
        %v10626 = vsel %vm1426, %v10624, %v10625
        %v10627 = vrot.slane %v10319, 2
        %v10628 = vrot.slane %v10320, 2
        %v10629 = vsel %vm1426, %v10627, %v10628
        %v10630 = vrot.slane %v10321, 2
        %v10631 = vrot.slane %v10322, 2
        %v10632 = vsel %vm1426, %v10630, %v10631
        %v10633 = vrot.slane %v10323, 2
        %v10634 = vrot.slane %v10324, 2
        %v10635 = vsel %vm1426, %v10633, %v10634
        %v10636 = vrot.slane %v10325, 2
        %v10637 = vrot.slane %v10326, 2
        %v10638 = vsel %vm1426, %v10636, %v10637
        %v10639 = vrot.slane %v10327, 2
        %v10640 = vrot.slane %v10328, 2
        %v10641 = vsel %vm1426, %v10639, %v10640
        %v10642 = vrot.slane %v10329, 2
        %v10643 = vrot.slane %v10330, 2
        %v10644 = vsel %vm1426, %v10642, %v10643
        %v10645 = vrot.slane %v10331, 2
        %v10646 = vrot.slane %v10332, 2
        %v10647 = vsel %vm1426, %v10645, %v10646
        %v10648 = vrot.slane %v10333, 2
        %v10649 = vrot.slane %v10334, 2
        %v10650 = vsel %vm1426, %v10648, %v10649
        %v10651 = vrot.slane %v10335, 2
        %v10652 = vrot.slane %v10336, 2
        %v10653 = vsel %vm1426, %v10651, %v10652
        %v10654 = vrot.slane %v10337, 2
        %v10655 = vrot.slane %v10338, 2
        %v10656 = vsel %vm1426, %v10654, %v10655
        %v10657 = vrot.slane %v10339, 2
        %v10658 = vrot.slane %v10340, 2
        %v10659 = vsel %vm1426, %v10657, %v10658
        %v10660 = vrot.slane %v10341, 2
        %v10661 = vrot.slane %v10342, 2
        %v10662 = vsel %vm1426, %v10660, %v10661
        %v10727 = vadd.f32 %v10147, %v10473
        %v10728 = vadd.f32 %v10148, %v10476
        %v10729 = vadd.f32 %v10149, %v10479
        %v10730 = vadd.f32 %v10150, %v10482
        %v10731 = vadd.f32 %v10151, %v10485
        %v10732 = vadd.f32 %v10152, %v10488
        %v10733 = vadd.f32 %v10153, %v10491
        %v10734 = vadd.f32 %v10154, %v10494
        %v10735 = vadd.f32 %v10155, %v10497
        %v10736 = vadd.f32 %v10156, %v10500
        %v10737 = vadd.f32 %v10157, %v10503
        %v10738 = vadd.f32 %v10158, %v10506
        %v10739 = vadd.f32 %v10159, %v10509
        %v10740 = vadd.f32 %v10160, %v10512
        %v10741 = vadd.f32 %v10161, %v10515
        %v10742 = vadd.f32 %v10162, %v10518
        %v10743 = vadd.f32 %v10163, %v10521
        %v10744 = vadd.f32 %v10164, %v10524
        %v10745 = vadd.f32 %v10165, %v10527
        %v10746 = vadd.f32 %v10166, %v10530
        %v10747 = vadd.f32 %v10167, %v10533
        %v10748 = vadd.f32 %v10168, %v10536
        %v10749 = vadd.f32 %v10169, %v10539
        %v10750 = vadd.f32 %v10170, %v10542
        %v10751 = vadd.f32 %v10171, %v10545
        %v10752 = vadd.f32 %v10172, %v10548
        %v10753 = vadd.f32 %v10173, %v10551
        %v10754 = vadd.f32 %v10174, %v10554
        %v10755 = vadd.f32 %v10175, %v10557
        %v10756 = vadd.f32 %v10176, %v10560
        %v10757 = vadd.f32 %v10177, %v10563
        %v10758 = vadd.f32 %v10178, %v10566
        %v10759 = vadd.f32 %v10179, %v10569
        %v10760 = vadd.f32 %v10180, %v10572
        %v10761 = vadd.f32 %v10181, %v10575
        %v10762 = vadd.f32 %v10182, %v10578
        %v10763 = vadd.f32 %v10183, %v10581
        %v10764 = vadd.f32 %v10184, %v10584
        %v10765 = vadd.f32 %v10185, %v10587
        %v10766 = vadd.f32 %v10186, %v10590
        %v10767 = vadd.f32 %v10187, %v10593
        %v10768 = vadd.f32 %v10188, %v10596
        %v10769 = vadd.f32 %v10189, %v10599
        %v10770 = vadd.f32 %v10190, %v10602
        %v10771 = vadd.f32 %v10191, %v10605
        %v10772 = vadd.f32 %v10192, %v10608
        %v10773 = vadd.f32 %v10193, %v10611
        %v10774 = vadd.f32 %v10194, %v10614
        %v10775 = vadd.f32 %v10195, %v10617
        %v10776 = vadd.f32 %v10196, %v10620
        %v10777 = vadd.f32 %v10197, %v10623
        %v10778 = vadd.f32 %v10198, %v10626
        %v10779 = vadd.f32 %v10199, %v10629
        %v10780 = vadd.f32 %v10200, %v10632
        %v10781 = vadd.f32 %v10201, %v10635
        %v10782 = vadd.f32 %v10202, %v10638
        %v10783 = vadd.f32 %v10203, %v10641
        %v10784 = vadd.f32 %v10204, %v10644
        %v10785 = vadd.f32 %v10205, %v10647
        %v10786 = vadd.f32 %v10206, %v10650
        %v10787 = vadd.f32 %v10207, %v10653
        %v10788 = vadd.f32 %v10208, %v10656
        %v10789 = vadd.f32 %v10209, %v10659
        %v10790 = vadd.f32 %v10210, %v10662
        %v10791 = vlaneseq
        %v10792 = vshrl.u32 %v10791, 7
        %v10793 = vsub.s32 0, %v10792
        %v10794 = vrot.slane %v452, %v10793
        %v10795 = vmul.f32 %v288, %v10794
        %v10796 = vmul.f32 %v290, %v10794
        %v10797 = vmul.f32 %v292, %v10794
        %v10798 = vmul.f32 %v294, %v10794
        %v10799 = vmul.f32 %v296, %v10794
        %v10800 = vmul.f32 %v298, %v10794
        %v10801 = vmul.f32 %v300, %v10794
        %v10802 = vmul.f32 %v302, %v10794
        %v10803 = vmul.f32 %v308, %v10794
        %v10804 = vmul.f32 %v310, %v10794
        %v10805 = vmul.f32 %v312, %v10794
        %v10806 = vmul.f32 %v314, %v10794
        %v10807 = vmul.f32 %v316, %v10794
        %v10808 = vmul.f32 %v318, %v10794
        %v10809 = vmul.f32 %v320, %v10794
        %v10810 = vmul.f32 %v322, %v10794
        %v10811 = vmul.f32 %v328, %v10794
        %v10812 = vmul.f32 %v330, %v10794
        %v10813 = vmul.f32 %v332, %v10794
        %v10814 = vmul.f32 %v334, %v10794
        %v10815 = vmul.f32 %v336, %v10794
        %v10816 = vmul.f32 %v338, %v10794
        %v10817 = vmul.f32 %v340, %v10794
        %v10818 = vmul.f32 %v342, %v10794
        %v10819 = vmul.f32 %v348, %v10794
        %v10820 = vmul.f32 %v350, %v10794
        %v10821 = vmul.f32 %v352, %v10794
        %v10822 = vmul.f32 %v354, %v10794
        %v10823 = vmul.f32 %v356, %v10794
        %v10824 = vmul.f32 %v358, %v10794
        %v10825 = vmul.f32 %v360, %v10794
        %v10826 = vmul.f32 %v362, %v10794
        %v10827 = vmul.f32 %v368, %v10794
        %v10828 = vmul.f32 %v370, %v10794
        %v10829 = vmul.f32 %v372, %v10794
        %v10830 = vmul.f32 %v374, %v10794
        %v10831 = vmul.f32 %v376, %v10794
        %v10832 = vmul.f32 %v378, %v10794
        %v10833 = vmul.f32 %v380, %v10794
        %v10834 = vmul.f32 %v382, %v10794
        %v10835 = vmul.f32 %v388, %v10794
        %v10836 = vmul.f32 %v390, %v10794
        %v10837 = vmul.f32 %v392, %v10794
        %v10838 = vmul.f32 %v394, %v10794
        %v10839 = vmul.f32 %v396, %v10794
        %v10840 = vmul.f32 %v398, %v10794
        %v10841 = vmul.f32 %v400, %v10794
        %v10842 = vmul.f32 %v402, %v10794
        %v10843 = vmul.f32 %v408, %v10794
        %v10844 = vmul.f32 %v410, %v10794
        %v10845 = vmul.f32 %v412, %v10794
        %v10846 = vmul.f32 %v414, %v10794
        %v10847 = vmul.f32 %v416, %v10794
        %v10848 = vmul.f32 %v418, %v10794
        %v10849 = vmul.f32 %v420, %v10794
        %v10850 = vmul.f32 %v422, %v10794
        %v10851 = vmul.f32 %v428, %v10794
        %v10852 = vmul.f32 %v430, %v10794
        %v10853 = vmul.f32 %v432, %v10794
        %v10854 = vmul.f32 %v434, %v10794
        %v10855 = vmul.f32 %v436, %v10794
        %v10856 = vmul.f32 %v438, %v10794
        %v10857 = vmul.f32 %v440, %v10794
        %v10858 = vmul.f32 %v442, %v10794
        %v10859 = vadd.f32 %v10727, %v10795
        %v10860 = vadd.f32 %v10728, %v10796
        %v10861 = vadd.f32 %v10729, %v10797
        %v10862 = vadd.f32 %v10730, %v10798
        %v10863 = vadd.f32 %v10731, %v10799
        %v10864 = vadd.f32 %v10732, %v10800
        %v10865 = vadd.f32 %v10733, %v10801
        %v10866 = vadd.f32 %v10734, %v10802
        %v10867 = vadd.f32 %v10735, %v10803
        %v10868 = vadd.f32 %v10736, %v10804
        %v10869 = vadd.f32 %v10737, %v10805
        %v10870 = vadd.f32 %v10738, %v10806
        %v10871 = vadd.f32 %v10739, %v10807
        %v10872 = vadd.f32 %v10740, %v10808
        %v10873 = vadd.f32 %v10741, %v10809
        %v10874 = vadd.f32 %v10742, %v10810
        %v10875 = vadd.f32 %v10743, %v10811
        %v10876 = vadd.f32 %v10744, %v10812
        %v10877 = vadd.f32 %v10745, %v10813
        %v10878 = vadd.f32 %v10746, %v10814
        %v10879 = vadd.f32 %v10747, %v10815
        %v10880 = vadd.f32 %v10748, %v10816
        %v10881 = vadd.f32 %v10749, %v10817
        %v10882 = vadd.f32 %v10750, %v10818
        %v10883 = vadd.f32 %v10751, %v10819
        %v10884 = vadd.f32 %v10752, %v10820
        %v10885 = vadd.f32 %v10753, %v10821
        %v10886 = vadd.f32 %v10754, %v10822
        %v10887 = vadd.f32 %v10755, %v10823
        %v10888 = vadd.f32 %v10756, %v10824
        %v10889 = vadd.f32 %v10757, %v10825
        %v10890 = vadd.f32 %v10758, %v10826
        %v10891 = vadd.f32 %v10759, %v10827
        %v10892 = vadd.f32 %v10760, %v10828
        %v10893 = vadd.f32 %v10761, %v10829
        %v10894 = vadd.f32 %v10762, %v10830
        %v10895 = vadd.f32 %v10763, %v10831
        %v10896 = vadd.f32 %v10764, %v10832
        %v10897 = vadd.f32 %v10765, %v10833
        %v10898 = vadd.f32 %v10766, %v10834
        %v10899 = vadd.f32 %v10767, %v10835
        %v10900 = vadd.f32 %v10768, %v10836
        %v10901 = vadd.f32 %v10769, %v10837
        %v10902 = vadd.f32 %v10770, %v10838
        %v10903 = vadd.f32 %v10771, %v10839
        %v10904 = vadd.f32 %v10772, %v10840
        %v10905 = vadd.f32 %v10773, %v10841
        %v10906 = vadd.f32 %v10774, %v10842
        %v10907 = vadd.f32 %v10775, %v10843
        %v10908 = vadd.f32 %v10776, %v10844
        %v10909 = vadd.f32 %v10777, %v10845
        %v10910 = vadd.f32 %v10778, %v10846
        %v10911 = vadd.f32 %v10779, %v10847
        %v10912 = vadd.f32 %v10780, %v10848
        %v10913 = vadd.f32 %v10781, %v10849
        %v10914 = vadd.f32 %v10782, %v10850
        %v10915 = vadd.f32 %v10783, %v10851
        %v10916 = vadd.f32 %v10784, %v10852
        %v10917 = vadd.f32 %v10785, %v10853
        %v10918 = vadd.f32 %v10786, %v10854
        %v10919 = vadd.f32 %v10787, %v10855
        %v10920 = vadd.f32 %v10788, %v10856
        %v10921 = vadd.f32 %v10789, %v10857
        %v10922 = vadd.f32 %v10790, %v10858
        %v10923 = vlaneseq
        %v10924 = vshrl.u32 %v10923, 7
        %v10925 = vsub.s32 1, %v10924
        %v10926 = vrot.slane %v452, %v10925
        %v10927 = vmul.f32 %v288, %v10926
        %v10928 = vmul.f32 %v289, %v10926
        %v10929 = vmul.f32 %v290, %v10926
        %v10930 = vmul.f32 %v291, %v10926
        %v10931 = vmul.f32 %v292, %v10926
        %v10932 = vmul.f32 %v293, %v10926
        %v10933 = vmul.f32 %v294, %v10926
        %v10934 = vmul.f32 %v295, %v10926
        %v10935 = vmul.f32 %v296, %v10926
        %v10936 = vmul.f32 %v297, %v10926
        %v10937 = vmul.f32 %v298, %v10926
        %v10938 = vmul.f32 %v299, %v10926
        %v10939 = vmul.f32 %v300, %v10926
        %v10940 = vmul.f32 %v301, %v10926
        %v10941 = vmul.f32 %v302, %v10926
        %v10942 = vmul.f32 %v303, %v10926
        %v10943 = vmul.f32 %v308, %v10926
        %v10944 = vmul.f32 %v309, %v10926
        %v10945 = vmul.f32 %v310, %v10926
        %v10946 = vmul.f32 %v311, %v10926
        %v10947 = vmul.f32 %v312, %v10926
        %v10948 = vmul.f32 %v313, %v10926
        %v10949 = vmul.f32 %v314, %v10926
        %v10950 = vmul.f32 %v315, %v10926
        %v10951 = vmul.f32 %v316, %v10926
        %v10952 = vmul.f32 %v317, %v10926
        %v10953 = vmul.f32 %v318, %v10926
        %v10954 = vmul.f32 %v319, %v10926
        %v10955 = vmul.f32 %v320, %v10926
        %v10956 = vmul.f32 %v321, %v10926
        %v10957 = vmul.f32 %v322, %v10926
        %v10958 = vmul.f32 %v323, %v10926
        %v10959 = vmul.f32 %v328, %v10926
        %v10960 = vmul.f32 %v329, %v10926
        %v10961 = vmul.f32 %v330, %v10926
        %v10962 = vmul.f32 %v331, %v10926
        %v10963 = vmul.f32 %v332, %v10926
        %v10964 = vmul.f32 %v333, %v10926
        %v10965 = vmul.f32 %v334, %v10926
        %v10966 = vmul.f32 %v335, %v10926
        %v10967 = vmul.f32 %v336, %v10926
        %v10968 = vmul.f32 %v337, %v10926
        %v10969 = vmul.f32 %v338, %v10926
        %v10970 = vmul.f32 %v339, %v10926
        %v10971 = vmul.f32 %v340, %v10926
        %v10972 = vmul.f32 %v341, %v10926
        %v10973 = vmul.f32 %v342, %v10926
        %v10974 = vmul.f32 %v343, %v10926
        %v10975 = vmul.f32 %v348, %v10926
        %v10976 = vmul.f32 %v349, %v10926
        %v10977 = vmul.f32 %v350, %v10926
        %v10978 = vmul.f32 %v351, %v10926
        %v10979 = vmul.f32 %v352, %v10926
        %v10980 = vmul.f32 %v353, %v10926
        %v10981 = vmul.f32 %v354, %v10926
        %v10982 = vmul.f32 %v355, %v10926
        %v10983 = vmul.f32 %v356, %v10926
        %v10984 = vmul.f32 %v357, %v10926
        %v10985 = vmul.f32 %v358, %v10926
        %v10986 = vmul.f32 %v359, %v10926
        %v10987 = vmul.f32 %v360, %v10926
        %v10988 = vmul.f32 %v361, %v10926
        %v10989 = vmul.f32 %v362, %v10926
        %v10990 = vmul.f32 %v363, %v10926
        %v10991 = vmul.f32 %v368, %v10926
        %v10992 = vmul.f32 %v369, %v10926
        %v10993 = vmul.f32 %v370, %v10926
        %v10994 = vmul.f32 %v371, %v10926
        %v10995 = vmul.f32 %v372, %v10926
        %v10996 = vmul.f32 %v373, %v10926
        %v10997 = vmul.f32 %v374, %v10926
        %v10998 = vmul.f32 %v375, %v10926
        %v10999 = vmul.f32 %v376, %v10926
        %v11000 = vmul.f32 %v377, %v10926
        %v11001 = vmul.f32 %v378, %v10926
        %v11002 = vmul.f32 %v379, %v10926
        %v11003 = vmul.f32 %v380, %v10926
        %v11004 = vmul.f32 %v381, %v10926
        %v11005 = vmul.f32 %v382, %v10926
        %v11006 = vmul.f32 %v383, %v10926
        %v11007 = vmul.f32 %v388, %v10926
        %v11008 = vmul.f32 %v389, %v10926
        %v11009 = vmul.f32 %v390, %v10926
        %v11010 = vmul.f32 %v391, %v10926
        %v11011 = vmul.f32 %v392, %v10926
        %v11012 = vmul.f32 %v393, %v10926
        %v11013 = vmul.f32 %v394, %v10926
        %v11014 = vmul.f32 %v395, %v10926
        %v11015 = vmul.f32 %v396, %v10926
        %v11016 = vmul.f32 %v397, %v10926
        %v11017 = vmul.f32 %v398, %v10926
        %v11018 = vmul.f32 %v399, %v10926
        %v11019 = vmul.f32 %v400, %v10926
        %v11020 = vmul.f32 %v401, %v10926
        %v11021 = vmul.f32 %v402, %v10926
        %v11022 = vmul.f32 %v403, %v10926
        %v11023 = vmul.f32 %v408, %v10926
        %v11024 = vmul.f32 %v409, %v10926
        %v11025 = vmul.f32 %v410, %v10926
        %v11026 = vmul.f32 %v411, %v10926
        %v11027 = vmul.f32 %v412, %v10926
        %v11028 = vmul.f32 %v413, %v10926
        %v11029 = vmul.f32 %v414, %v10926
        %v11030 = vmul.f32 %v415, %v10926
        %v11031 = vmul.f32 %v416, %v10926
        %v11032 = vmul.f32 %v417, %v10926
        %v11033 = vmul.f32 %v418, %v10926
        %v11034 = vmul.f32 %v419, %v10926
        %v11035 = vmul.f32 %v420, %v10926
        %v11036 = vmul.f32 %v421, %v10926
        %v11037 = vmul.f32 %v422, %v10926
        %v11038 = vmul.f32 %v423, %v10926
        %v11039 = vmul.f32 %v428, %v10926
        %v11040 = vmul.f32 %v429, %v10926
        %v11041 = vmul.f32 %v430, %v10926
        %v11042 = vmul.f32 %v431, %v10926
        %v11043 = vmul.f32 %v432, %v10926
        %v11044 = vmul.f32 %v433, %v10926
        %v11045 = vmul.f32 %v434, %v10926
        %v11046 = vmul.f32 %v435, %v10926
        %v11047 = vmul.f32 %v436, %v10926
        %v11048 = vmul.f32 %v437, %v10926
        %v11049 = vmul.f32 %v438, %v10926
        %v11050 = vmul.f32 %v439, %v10926
        %v11051 = vmul.f32 %v440, %v10926
        %v11052 = vmul.f32 %v441, %v10926
        %v11053 = vmul.f32 %v442, %v10926
        %v11054 = vmul.f32 %v443, %v10926
        %v11183 = vrot.slane %v10927, 1
        %v11184 = vrot.slane %v10928, 1
        %v11185 = vsel %vm845, %v11183, %v11184
        %v11186 = vrot.slane %v10929, 1
        %v11187 = vrot.slane %v10930, 1
        %v11188 = vsel %vm845, %v11186, %v11187
        %v11189 = vrot.slane %v10931, 1
        %v11190 = vrot.slane %v10932, 1
        %v11191 = vsel %vm845, %v11189, %v11190
        %v11192 = vrot.slane %v10933, 1
        %v11193 = vrot.slane %v10934, 1
        %v11194 = vsel %vm845, %v11192, %v11193
        %v11195 = vrot.slane %v10935, 1
        %v11196 = vrot.slane %v10936, 1
        %v11197 = vsel %vm845, %v11195, %v11196
        %v11198 = vrot.slane %v10937, 1
        %v11199 = vrot.slane %v10938, 1
        %v11200 = vsel %vm845, %v11198, %v11199
        %v11201 = vrot.slane %v10939, 1
        %v11202 = vrot.slane %v10940, 1
        %v11203 = vsel %vm845, %v11201, %v11202
        %v11204 = vrot.slane %v10941, 1
        %v11205 = vrot.slane %v10942, 1
        %v11206 = vsel %vm845, %v11204, %v11205
        %v11207 = vrot.slane %v10943, 1
        %v11208 = vrot.slane %v10944, 1
        %v11209 = vsel %vm845, %v11207, %v11208
        %v11210 = vrot.slane %v10945, 1
        %v11211 = vrot.slane %v10946, 1
        %v11212 = vsel %vm845, %v11210, %v11211
        %v11213 = vrot.slane %v10947, 1
        %v11214 = vrot.slane %v10948, 1
        %v11215 = vsel %vm845, %v11213, %v11214
        %v11216 = vrot.slane %v10949, 1
        %v11217 = vrot.slane %v10950, 1
        %v11218 = vsel %vm845, %v11216, %v11217
        %v11219 = vrot.slane %v10951, 1
        %v11220 = vrot.slane %v10952, 1
        %v11221 = vsel %vm845, %v11219, %v11220
        %v11222 = vrot.slane %v10953, 1
        %v11223 = vrot.slane %v10954, 1
        %v11224 = vsel %vm845, %v11222, %v11223
        %v11225 = vrot.slane %v10955, 1
        %v11226 = vrot.slane %v10956, 1
        %v11227 = vsel %vm845, %v11225, %v11226
        %v11228 = vrot.slane %v10957, 1
        %v11229 = vrot.slane %v10958, 1
        %v11230 = vsel %vm845, %v11228, %v11229
        %v11231 = vrot.slane %v10959, 1
        %v11232 = vrot.slane %v10960, 1
        %v11233 = vsel %vm845, %v11231, %v11232
        %v11234 = vrot.slane %v10961, 1
        %v11235 = vrot.slane %v10962, 1
        %v11236 = vsel %vm845, %v11234, %v11235
        %v11237 = vrot.slane %v10963, 1
        %v11238 = vrot.slane %v10964, 1
        %v11239 = vsel %vm845, %v11237, %v11238
        %v11240 = vrot.slane %v10965, 1
        %v11241 = vrot.slane %v10966, 1
        %v11242 = vsel %vm845, %v11240, %v11241
        %v11243 = vrot.slane %v10967, 1
        %v11244 = vrot.slane %v10968, 1
        %v11245 = vsel %vm845, %v11243, %v11244
        %v11246 = vrot.slane %v10969, 1
        %v11247 = vrot.slane %v10970, 1
        %v11248 = vsel %vm845, %v11246, %v11247
        %v11249 = vrot.slane %v10971, 1
        %v11250 = vrot.slane %v10972, 1
        %v11251 = vsel %vm845, %v11249, %v11250
        %v11252 = vrot.slane %v10973, 1
        %v11253 = vrot.slane %v10974, 1
        %v11254 = vsel %vm845, %v11252, %v11253
        %v11255 = vrot.slane %v10975, 1
        %v11256 = vrot.slane %v10976, 1
        %v11257 = vsel %vm845, %v11255, %v11256
        %v11258 = vrot.slane %v10977, 1
        %v11259 = vrot.slane %v10978, 1
        %v11260 = vsel %vm845, %v11258, %v11259
        %v11261 = vrot.slane %v10979, 1
        %v11262 = vrot.slane %v10980, 1
        %v11263 = vsel %vm845, %v11261, %v11262
        %v11264 = vrot.slane %v10981, 1
        %v11265 = vrot.slane %v10982, 1
        %v11266 = vsel %vm845, %v11264, %v11265
        %v11267 = vrot.slane %v10983, 1
        %v11268 = vrot.slane %v10984, 1
        %v11269 = vsel %vm845, %v11267, %v11268
        %v11270 = vrot.slane %v10985, 1
        %v11271 = vrot.slane %v10986, 1
        %v11272 = vsel %vm845, %v11270, %v11271
        %v11273 = vrot.slane %v10987, 1
        %v11274 = vrot.slane %v10988, 1
        %v11275 = vsel %vm845, %v11273, %v11274
        %v11276 = vrot.slane %v10989, 1
        %v11277 = vrot.slane %v10990, 1
        %v11278 = vsel %vm845, %v11276, %v11277
        %v11279 = vrot.slane %v10991, 1
        %v11280 = vrot.slane %v10992, 1
        %v11281 = vsel %vm845, %v11279, %v11280
        %v11282 = vrot.slane %v10993, 1
        %v11283 = vrot.slane %v10994, 1
        %v11284 = vsel %vm845, %v11282, %v11283
        %v11285 = vrot.slane %v10995, 1
        %v11286 = vrot.slane %v10996, 1
        %v11287 = vsel %vm845, %v11285, %v11286
        %v11288 = vrot.slane %v10997, 1
        %v11289 = vrot.slane %v10998, 1
        %v11290 = vsel %vm845, %v11288, %v11289
        %v11291 = vrot.slane %v10999, 1
        %v11292 = vrot.slane %v11000, 1
        %v11293 = vsel %vm845, %v11291, %v11292
        %v11294 = vrot.slane %v11001, 1
        %v11295 = vrot.slane %v11002, 1
        %v11296 = vsel %vm845, %v11294, %v11295
        %v11297 = vrot.slane %v11003, 1
        %v11298 = vrot.slane %v11004, 1
        %v11299 = vsel %vm845, %v11297, %v11298
        %v11300 = vrot.slane %v11005, 1
        %v11301 = vrot.slane %v11006, 1
        %v11302 = vsel %vm845, %v11300, %v11301
        %v11303 = vrot.slane %v11007, 1
        %v11304 = vrot.slane %v11008, 1
        %v11305 = vsel %vm845, %v11303, %v11304
        %v11306 = vrot.slane %v11009, 1
        %v11307 = vrot.slane %v11010, 1
        %v11308 = vsel %vm845, %v11306, %v11307
        %v11309 = vrot.slane %v11011, 1
        %v11310 = vrot.slane %v11012, 1
        %v11311 = vsel %vm845, %v11309, %v11310
        %v11312 = vrot.slane %v11013, 1
        %v11313 = vrot.slane %v11014, 1
        %v11314 = vsel %vm845, %v11312, %v11313
        %v11315 = vrot.slane %v11015, 1
        %v11316 = vrot.slane %v11016, 1
        %v11317 = vsel %vm845, %v11315, %v11316
        %v11318 = vrot.slane %v11017, 1
        %v11319 = vrot.slane %v11018, 1
        %v11320 = vsel %vm845, %v11318, %v11319
        %v11321 = vrot.slane %v11019, 1
        %v11322 = vrot.slane %v11020, 1
        %v11323 = vsel %vm845, %v11321, %v11322
        %v11324 = vrot.slane %v11021, 1
        %v11325 = vrot.slane %v11022, 1
        %v11326 = vsel %vm845, %v11324, %v11325
        %v11327 = vrot.slane %v11023, 1
        %v11328 = vrot.slane %v11024, 1
        %v11329 = vsel %vm845, %v11327, %v11328
        %v11330 = vrot.slane %v11025, 1
        %v11331 = vrot.slane %v11026, 1
        %v11332 = vsel %vm845, %v11330, %v11331
        %v11333 = vrot.slane %v11027, 1
        %v11334 = vrot.slane %v11028, 1
        %v11335 = vsel %vm845, %v11333, %v11334
        %v11336 = vrot.slane %v11029, 1
        %v11337 = vrot.slane %v11030, 1
        %v11338 = vsel %vm845, %v11336, %v11337
        %v11339 = vrot.slane %v11031, 1
        %v11340 = vrot.slane %v11032, 1
        %v11341 = vsel %vm845, %v11339, %v11340
        %v11342 = vrot.slane %v11033, 1
        %v11343 = vrot.slane %v11034, 1
        %v11344 = vsel %vm845, %v11342, %v11343
        %v11345 = vrot.slane %v11035, 1
        %v11346 = vrot.slane %v11036, 1
        %v11347 = vsel %vm845, %v11345, %v11346
        %v11348 = vrot.slane %v11037, 1
        %v11349 = vrot.slane %v11038, 1
        %v11350 = vsel %vm845, %v11348, %v11349
        %v11351 = vrot.slane %v11039, 1
        %v11352 = vrot.slane %v11040, 1
        %v11353 = vsel %vm845, %v11351, %v11352
        %v11354 = vrot.slane %v11041, 1
        %v11355 = vrot.slane %v11042, 1
        %v11356 = vsel %vm845, %v11354, %v11355
        %v11357 = vrot.slane %v11043, 1
        %v11358 = vrot.slane %v11044, 1
        %v11359 = vsel %vm845, %v11357, %v11358
        %v11360 = vrot.slane %v11045, 1
        %v11361 = vrot.slane %v11046, 1
        %v11362 = vsel %vm845, %v11360, %v11361
        %v11363 = vrot.slane %v11047, 1
        %v11364 = vrot.slane %v11048, 1
        %v11365 = vsel %vm845, %v11363, %v11364
        %v11366 = vrot.slane %v11049, 1
        %v11367 = vrot.slane %v11050, 1
        %v11368 = vsel %vm845, %v11366, %v11367
        %v11369 = vrot.slane %v11051, 1
        %v11370 = vrot.slane %v11052, 1
        %v11371 = vsel %vm845, %v11369, %v11370
        %v11372 = vrot.slane %v11053, 1
        %v11373 = vrot.slane %v11054, 1
        %v11374 = vsel %vm845, %v11372, %v11373
        %v11439 = vadd.f32 %v10859, %v11185
        %v11440 = vadd.f32 %v10860, %v11188
        %v11441 = vadd.f32 %v10861, %v11191
        %v11442 = vadd.f32 %v10862, %v11194
        %v11443 = vadd.f32 %v10863, %v11197
        %v11444 = vadd.f32 %v10864, %v11200
        %v11445 = vadd.f32 %v10865, %v11203
        %v11446 = vadd.f32 %v10866, %v11206
        %v11447 = vadd.f32 %v10867, %v11209
        %v11448 = vadd.f32 %v10868, %v11212
        %v11449 = vadd.f32 %v10869, %v11215
        %v11450 = vadd.f32 %v10870, %v11218
        %v11451 = vadd.f32 %v10871, %v11221
        %v11452 = vadd.f32 %v10872, %v11224
        %v11453 = vadd.f32 %v10873, %v11227
        %v11454 = vadd.f32 %v10874, %v11230
        %v11455 = vadd.f32 %v10875, %v11233
        %v11456 = vadd.f32 %v10876, %v11236
        %v11457 = vadd.f32 %v10877, %v11239
        %v11458 = vadd.f32 %v10878, %v11242
        %v11459 = vadd.f32 %v10879, %v11245
        %v11460 = vadd.f32 %v10880, %v11248
        %v11461 = vadd.f32 %v10881, %v11251
        %v11462 = vadd.f32 %v10882, %v11254
        %v11463 = vadd.f32 %v10883, %v11257
        %v11464 = vadd.f32 %v10884, %v11260
        %v11465 = vadd.f32 %v10885, %v11263
        %v11466 = vadd.f32 %v10886, %v11266
        %v11467 = vadd.f32 %v10887, %v11269
        %v11468 = vadd.f32 %v10888, %v11272
        %v11469 = vadd.f32 %v10889, %v11275
        %v11470 = vadd.f32 %v10890, %v11278
        %v11471 = vadd.f32 %v10891, %v11281
        %v11472 = vadd.f32 %v10892, %v11284
        %v11473 = vadd.f32 %v10893, %v11287
        %v11474 = vadd.f32 %v10894, %v11290
        %v11475 = vadd.f32 %v10895, %v11293
        %v11476 = vadd.f32 %v10896, %v11296
        %v11477 = vadd.f32 %v10897, %v11299
        %v11478 = vadd.f32 %v10898, %v11302
        %v11479 = vadd.f32 %v10899, %v11305
        %v11480 = vadd.f32 %v10900, %v11308
        %v11481 = vadd.f32 %v10901, %v11311
        %v11482 = vadd.f32 %v10902, %v11314
        %v11483 = vadd.f32 %v10903, %v11317
        %v11484 = vadd.f32 %v10904, %v11320
        %v11485 = vadd.f32 %v10905, %v11323
        %v11486 = vadd.f32 %v10906, %v11326
        %v11487 = vadd.f32 %v10907, %v11329
        %v11488 = vadd.f32 %v10908, %v11332
        %v11489 = vadd.f32 %v10909, %v11335
        %v11490 = vadd.f32 %v10910, %v11338
        %v11491 = vadd.f32 %v10911, %v11341
        %v11492 = vadd.f32 %v10912, %v11344
        %v11493 = vadd.f32 %v10913, %v11347
        %v11494 = vadd.f32 %v10914, %v11350
        %v11495 = vadd.f32 %v10915, %v11353
        %v11496 = vadd.f32 %v10916, %v11356
        %v11497 = vadd.f32 %v10917, %v11359
        %v11498 = vadd.f32 %v10918, %v11362
        %v11499 = vadd.f32 %v10919, %v11365
        %v11500 = vadd.f32 %v10920, %v11368
        %v11501 = vadd.f32 %v10921, %v11371
        %v11502 = vadd.f32 %v10922, %v11374
        %v11503 = vlaneseq
        %v11504 = vshrl.u32 %v11503, 7
        %v11505 = vsub.s32 2, %v11504
        %v11506 = vrot.slane %v452, %v11505
        %v11507 = vmul.f32 %v288, %v11506
        %v11508 = vmul.f32 %v289, %v11506
        %v11509 = vmul.f32 %v290, %v11506
        %v11510 = vmul.f32 %v291, %v11506
        %v11511 = vmul.f32 %v292, %v11506
        %v11512 = vmul.f32 %v293, %v11506
        %v11513 = vmul.f32 %v294, %v11506
        %v11514 = vmul.f32 %v295, %v11506
        %v11515 = vmul.f32 %v296, %v11506
        %v11516 = vmul.f32 %v297, %v11506
        %v11517 = vmul.f32 %v298, %v11506
        %v11518 = vmul.f32 %v299, %v11506
        %v11519 = vmul.f32 %v300, %v11506
        %v11520 = vmul.f32 %v301, %v11506
        %v11521 = vmul.f32 %v302, %v11506
        %v11522 = vmul.f32 %v303, %v11506
        %v11523 = vmul.f32 %v308, %v11506
        %v11524 = vmul.f32 %v309, %v11506
        %v11525 = vmul.f32 %v310, %v11506
        %v11526 = vmul.f32 %v311, %v11506
        %v11527 = vmul.f32 %v312, %v11506
        %v11528 = vmul.f32 %v313, %v11506
        %v11529 = vmul.f32 %v314, %v11506
        %v11530 = vmul.f32 %v315, %v11506
        %v11531 = vmul.f32 %v316, %v11506
        %v11532 = vmul.f32 %v317, %v11506
        %v11533 = vmul.f32 %v318, %v11506
        %v11534 = vmul.f32 %v319, %v11506
        %v11535 = vmul.f32 %v320, %v11506
        %v11536 = vmul.f32 %v321, %v11506
        %v11537 = vmul.f32 %v322, %v11506
        %v11538 = vmul.f32 %v323, %v11506
        %v11539 = vmul.f32 %v328, %v11506
        %v11540 = vmul.f32 %v329, %v11506
        %v11541 = vmul.f32 %v330, %v11506
        %v11542 = vmul.f32 %v331, %v11506
        %v11543 = vmul.f32 %v332, %v11506
        %v11544 = vmul.f32 %v333, %v11506
        %v11545 = vmul.f32 %v334, %v11506
        %v11546 = vmul.f32 %v335, %v11506
        %v11547 = vmul.f32 %v336, %v11506
        %v11548 = vmul.f32 %v337, %v11506
        %v11549 = vmul.f32 %v338, %v11506
        %v11550 = vmul.f32 %v339, %v11506
        %v11551 = vmul.f32 %v340, %v11506
        %v11552 = vmul.f32 %v341, %v11506
        %v11553 = vmul.f32 %v342, %v11506
        %v11554 = vmul.f32 %v343, %v11506
        %v11555 = vmul.f32 %v348, %v11506
        %v11556 = vmul.f32 %v349, %v11506
        %v11557 = vmul.f32 %v350, %v11506
        %v11558 = vmul.f32 %v351, %v11506
        %v11559 = vmul.f32 %v352, %v11506
        %v11560 = vmul.f32 %v353, %v11506
        %v11561 = vmul.f32 %v354, %v11506
        %v11562 = vmul.f32 %v355, %v11506
        %v11563 = vmul.f32 %v356, %v11506
        %v11564 = vmul.f32 %v357, %v11506
        %v11565 = vmul.f32 %v358, %v11506
        %v11566 = vmul.f32 %v359, %v11506
        %v11567 = vmul.f32 %v360, %v11506
        %v11568 = vmul.f32 %v361, %v11506
        %v11569 = vmul.f32 %v362, %v11506
        %v11570 = vmul.f32 %v363, %v11506
        %v11571 = vmul.f32 %v368, %v11506
        %v11572 = vmul.f32 %v369, %v11506
        %v11573 = vmul.f32 %v370, %v11506
        %v11574 = vmul.f32 %v371, %v11506
        %v11575 = vmul.f32 %v372, %v11506
        %v11576 = vmul.f32 %v373, %v11506
        %v11577 = vmul.f32 %v374, %v11506
        %v11578 = vmul.f32 %v375, %v11506
        %v11579 = vmul.f32 %v376, %v11506
        %v11580 = vmul.f32 %v377, %v11506
        %v11581 = vmul.f32 %v378, %v11506
        %v11582 = vmul.f32 %v379, %v11506
        %v11583 = vmul.f32 %v380, %v11506
        %v11584 = vmul.f32 %v381, %v11506
        %v11585 = vmul.f32 %v382, %v11506
        %v11586 = vmul.f32 %v383, %v11506
        %v11587 = vmul.f32 %v388, %v11506
        %v11588 = vmul.f32 %v389, %v11506
        %v11589 = vmul.f32 %v390, %v11506
        %v11590 = vmul.f32 %v391, %v11506
        %v11591 = vmul.f32 %v392, %v11506
        %v11592 = vmul.f32 %v393, %v11506
        %v11593 = vmul.f32 %v394, %v11506
        %v11594 = vmul.f32 %v395, %v11506
        %v11595 = vmul.f32 %v396, %v11506
        %v11596 = vmul.f32 %v397, %v11506
        %v11597 = vmul.f32 %v398, %v11506
        %v11598 = vmul.f32 %v399, %v11506
        %v11599 = vmul.f32 %v400, %v11506
        %v11600 = vmul.f32 %v401, %v11506
        %v11601 = vmul.f32 %v402, %v11506
        %v11602 = vmul.f32 %v403, %v11506
        %v11603 = vmul.f32 %v408, %v11506
        %v11604 = vmul.f32 %v409, %v11506
        %v11605 = vmul.f32 %v410, %v11506
        %v11606 = vmul.f32 %v411, %v11506
        %v11607 = vmul.f32 %v412, %v11506
        %v11608 = vmul.f32 %v413, %v11506
        %v11609 = vmul.f32 %v414, %v11506
        %v11610 = vmul.f32 %v415, %v11506
        %v11611 = vmul.f32 %v416, %v11506
        %v11612 = vmul.f32 %v417, %v11506
        %v11613 = vmul.f32 %v418, %v11506
        %v11614 = vmul.f32 %v419, %v11506
        %v11615 = vmul.f32 %v420, %v11506
        %v11616 = vmul.f32 %v421, %v11506
        %v11617 = vmul.f32 %v422, %v11506
        %v11618 = vmul.f32 %v423, %v11506
        %v11619 = vmul.f32 %v428, %v11506
        %v11620 = vmul.f32 %v429, %v11506
        %v11621 = vmul.f32 %v430, %v11506
        %v11622 = vmul.f32 %v431, %v11506
        %v11623 = vmul.f32 %v432, %v11506
        %v11624 = vmul.f32 %v433, %v11506
        %v11625 = vmul.f32 %v434, %v11506
        %v11626 = vmul.f32 %v435, %v11506
        %v11627 = vmul.f32 %v436, %v11506
        %v11628 = vmul.f32 %v437, %v11506
        %v11629 = vmul.f32 %v438, %v11506
        %v11630 = vmul.f32 %v439, %v11506
        %v11631 = vmul.f32 %v440, %v11506
        %v11632 = vmul.f32 %v441, %v11506
        %v11633 = vmul.f32 %v442, %v11506
        %v11634 = vmul.f32 %v443, %v11506
        %v11763 = vrot.slane %v11507, 2
        %v11764 = vrot.slane %v11508, 2
        %v11765 = vsel %vm1426, %v11763, %v11764
        %v11766 = vrot.slane %v11509, 2
        %v11767 = vrot.slane %v11510, 2
        %v11768 = vsel %vm1426, %v11766, %v11767
        %v11769 = vrot.slane %v11511, 2
        %v11770 = vrot.slane %v11512, 2
        %v11771 = vsel %vm1426, %v11769, %v11770
        %v11772 = vrot.slane %v11513, 2
        %v11773 = vrot.slane %v11514, 2
        %v11774 = vsel %vm1426, %v11772, %v11773
        %v11775 = vrot.slane %v11515, 2
        %v11776 = vrot.slane %v11516, 2
        %v11777 = vsel %vm1426, %v11775, %v11776
        %v11778 = vrot.slane %v11517, 2
        %v11779 = vrot.slane %v11518, 2
        %v11780 = vsel %vm1426, %v11778, %v11779
        %v11781 = vrot.slane %v11519, 2
        %v11782 = vrot.slane %v11520, 2
        %v11783 = vsel %vm1426, %v11781, %v11782
        %v11784 = vrot.slane %v11521, 2
        %v11785 = vrot.slane %v11522, 2
        %v11786 = vsel %vm1426, %v11784, %v11785
        %v11787 = vrot.slane %v11523, 2
        %v11788 = vrot.slane %v11524, 2
        %v11789 = vsel %vm1426, %v11787, %v11788
        %v11790 = vrot.slane %v11525, 2
        %v11791 = vrot.slane %v11526, 2
        %v11792 = vsel %vm1426, %v11790, %v11791
        %v11793 = vrot.slane %v11527, 2
        %v11794 = vrot.slane %v11528, 2
        %v11795 = vsel %vm1426, %v11793, %v11794
        %v11796 = vrot.slane %v11529, 2
        %v11797 = vrot.slane %v11530, 2
        %v11798 = vsel %vm1426, %v11796, %v11797
        %v11799 = vrot.slane %v11531, 2
        %v11800 = vrot.slane %v11532, 2
        %v11801 = vsel %vm1426, %v11799, %v11800
        %v11802 = vrot.slane %v11533, 2
        %v11803 = vrot.slane %v11534, 2
        %v11804 = vsel %vm1426, %v11802, %v11803
        %v11805 = vrot.slane %v11535, 2
        %v11806 = vrot.slane %v11536, 2
        %v11807 = vsel %vm1426, %v11805, %v11806
        %v11808 = vrot.slane %v11537, 2
        %v11809 = vrot.slane %v11538, 2
        %v11810 = vsel %vm1426, %v11808, %v11809
        %v11811 = vrot.slane %v11539, 2
        %v11812 = vrot.slane %v11540, 2
        %v11813 = vsel %vm1426, %v11811, %v11812
        %v11814 = vrot.slane %v11541, 2
        %v11815 = vrot.slane %v11542, 2
        %v11816 = vsel %vm1426, %v11814, %v11815
        %v11817 = vrot.slane %v11543, 2
        %v11818 = vrot.slane %v11544, 2
        %v11819 = vsel %vm1426, %v11817, %v11818
        %v11820 = vrot.slane %v11545, 2
        %v11821 = vrot.slane %v11546, 2
        %v11822 = vsel %vm1426, %v11820, %v11821
        %v11823 = vrot.slane %v11547, 2
        %v11824 = vrot.slane %v11548, 2
        %v11825 = vsel %vm1426, %v11823, %v11824
        %v11826 = vrot.slane %v11549, 2
        %v11827 = vrot.slane %v11550, 2
        %v11828 = vsel %vm1426, %v11826, %v11827
        %v11829 = vrot.slane %v11551, 2
        %v11830 = vrot.slane %v11552, 2
        %v11831 = vsel %vm1426, %v11829, %v11830
        %v11832 = vrot.slane %v11553, 2
        %v11833 = vrot.slane %v11554, 2
        %v11834 = vsel %vm1426, %v11832, %v11833
        %v11835 = vrot.slane %v11555, 2
        %v11836 = vrot.slane %v11556, 2
        %v11837 = vsel %vm1426, %v11835, %v11836
        %v11838 = vrot.slane %v11557, 2
        %v11839 = vrot.slane %v11558, 2
        %v11840 = vsel %vm1426, %v11838, %v11839
        %v11841 = vrot.slane %v11559, 2
        %v11842 = vrot.slane %v11560, 2
        %v11843 = vsel %vm1426, %v11841, %v11842
        %v11844 = vrot.slane %v11561, 2
        %v11845 = vrot.slane %v11562, 2
        %v11846 = vsel %vm1426, %v11844, %v11845
        %v11847 = vrot.slane %v11563, 2
        %v11848 = vrot.slane %v11564, 2
        %v11849 = vsel %vm1426, %v11847, %v11848
        %v11850 = vrot.slane %v11565, 2
        %v11851 = vrot.slane %v11566, 2
        %v11852 = vsel %vm1426, %v11850, %v11851
        %v11853 = vrot.slane %v11567, 2
        %v11854 = vrot.slane %v11568, 2
        %v11855 = vsel %vm1426, %v11853, %v11854
        %v11856 = vrot.slane %v11569, 2
        %v11857 = vrot.slane %v11570, 2
        %v11858 = vsel %vm1426, %v11856, %v11857
        %v11859 = vrot.slane %v11571, 2
        %v11860 = vrot.slane %v11572, 2
        %v11861 = vsel %vm1426, %v11859, %v11860
        %v11862 = vrot.slane %v11573, 2
        %v11863 = vrot.slane %v11574, 2
        %v11864 = vsel %vm1426, %v11862, %v11863
        %v11865 = vrot.slane %v11575, 2
        %v11866 = vrot.slane %v11576, 2
        %v11867 = vsel %vm1426, %v11865, %v11866
        %v11868 = vrot.slane %v11577, 2
        %v11869 = vrot.slane %v11578, 2
        %v11870 = vsel %vm1426, %v11868, %v11869
        %v11871 = vrot.slane %v11579, 2
        %v11872 = vrot.slane %v11580, 2
        %v11873 = vsel %vm1426, %v11871, %v11872
        %v11874 = vrot.slane %v11581, 2
        %v11875 = vrot.slane %v11582, 2
        %v11876 = vsel %vm1426, %v11874, %v11875
        %v11877 = vrot.slane %v11583, 2
        %v11878 = vrot.slane %v11584, 2
        %v11879 = vsel %vm1426, %v11877, %v11878
        %v11880 = vrot.slane %v11585, 2
        %v11881 = vrot.slane %v11586, 2
        %v11882 = vsel %vm1426, %v11880, %v11881
        %v11883 = vrot.slane %v11587, 2
        %v11884 = vrot.slane %v11588, 2
        %v11885 = vsel %vm1426, %v11883, %v11884
        %v11886 = vrot.slane %v11589, 2
        %v11887 = vrot.slane %v11590, 2
        %v11888 = vsel %vm1426, %v11886, %v11887
        %v11889 = vrot.slane %v11591, 2
        %v11890 = vrot.slane %v11592, 2
        %v11891 = vsel %vm1426, %v11889, %v11890
        %v11892 = vrot.slane %v11593, 2
        %v11893 = vrot.slane %v11594, 2
        %v11894 = vsel %vm1426, %v11892, %v11893
        %v11895 = vrot.slane %v11595, 2
        %v11896 = vrot.slane %v11596, 2
        %v11897 = vsel %vm1426, %v11895, %v11896
        %v11898 = vrot.slane %v11597, 2
        %v11899 = vrot.slane %v11598, 2
        %v11900 = vsel %vm1426, %v11898, %v11899
        %v11901 = vrot.slane %v11599, 2
        %v11902 = vrot.slane %v11600, 2
        %v11903 = vsel %vm1426, %v11901, %v11902
        %v11904 = vrot.slane %v11601, 2
        %v11905 = vrot.slane %v11602, 2
        %v11906 = vsel %vm1426, %v11904, %v11905
        %v11907 = vrot.slane %v11603, 2
        %v11908 = vrot.slane %v11604, 2
        %v11909 = vsel %vm1426, %v11907, %v11908
        %v11910 = vrot.slane %v11605, 2
        %v11911 = vrot.slane %v11606, 2
        %v11912 = vsel %vm1426, %v11910, %v11911
        %v11913 = vrot.slane %v11607, 2
        %v11914 = vrot.slane %v11608, 2
        %v11915 = vsel %vm1426, %v11913, %v11914
        %v11916 = vrot.slane %v11609, 2
        %v11917 = vrot.slane %v11610, 2
        %v11918 = vsel %vm1426, %v11916, %v11917
        %v11919 = vrot.slane %v11611, 2
        %v11920 = vrot.slane %v11612, 2
        %v11921 = vsel %vm1426, %v11919, %v11920
        %v11922 = vrot.slane %v11613, 2
        %v11923 = vrot.slane %v11614, 2
        %v11924 = vsel %vm1426, %v11922, %v11923
        %v11925 = vrot.slane %v11615, 2
        %v11926 = vrot.slane %v11616, 2
        %v11927 = vsel %vm1426, %v11925, %v11926
        %v11928 = vrot.slane %v11617, 2
        %v11929 = vrot.slane %v11618, 2
        %v11930 = vsel %vm1426, %v11928, %v11929
        %v11931 = vrot.slane %v11619, 2
        %v11932 = vrot.slane %v11620, 2
        %v11933 = vsel %vm1426, %v11931, %v11932
        %v11934 = vrot.slane %v11621, 2
        %v11935 = vrot.slane %v11622, 2
        %v11936 = vsel %vm1426, %v11934, %v11935
        %v11937 = vrot.slane %v11623, 2
        %v11938 = vrot.slane %v11624, 2
        %v11939 = vsel %vm1426, %v11937, %v11938
        %v11940 = vrot.slane %v11625, 2
        %v11941 = vrot.slane %v11626, 2
        %v11942 = vsel %vm1426, %v11940, %v11941
        %v11943 = vrot.slane %v11627, 2
        %v11944 = vrot.slane %v11628, 2
        %v11945 = vsel %vm1426, %v11943, %v11944
        %v11946 = vrot.slane %v11629, 2
        %v11947 = vrot.slane %v11630, 2
        %v11948 = vsel %vm1426, %v11946, %v11947
        %v11949 = vrot.slane %v11631, 2
        %v11950 = vrot.slane %v11632, 2
        %v11951 = vsel %vm1426, %v11949, %v11950
        %v11952 = vrot.slane %v11633, 2
        %v11953 = vrot.slane %v11634, 2
        %v11954 = vsel %vm1426, %v11952, %v11953
        %v12019 = vadd.f32 %v11439, %v11765
        %v12020 = vadd.f32 %v11440, %v11768
        %v12021 = vadd.f32 %v11441, %v11771
        %v12022 = vadd.f32 %v11442, %v11774
        %v12023 = vadd.f32 %v11443, %v11777
        %v12024 = vadd.f32 %v11444, %v11780
        %v12025 = vadd.f32 %v11445, %v11783
        %v12026 = vadd.f32 %v11446, %v11786
        %v12027 = vadd.f32 %v11447, %v11789
        %v12028 = vadd.f32 %v11448, %v11792
        %v12029 = vadd.f32 %v11449, %v11795
        %v12030 = vadd.f32 %v11450, %v11798
        %v12031 = vadd.f32 %v11451, %v11801
        %v12032 = vadd.f32 %v11452, %v11804
        %v12033 = vadd.f32 %v11453, %v11807
        %v12034 = vadd.f32 %v11454, %v11810
        %v12035 = vadd.f32 %v11455, %v11813
        %v12036 = vadd.f32 %v11456, %v11816
        %v12037 = vadd.f32 %v11457, %v11819
        %v12038 = vadd.f32 %v11458, %v11822
        %v12039 = vadd.f32 %v11459, %v11825
        %v12040 = vadd.f32 %v11460, %v11828
        %v12041 = vadd.f32 %v11461, %v11831
        %v12042 = vadd.f32 %v11462, %v11834
        %v12043 = vadd.f32 %v11463, %v11837
        %v12044 = vadd.f32 %v11464, %v11840
        %v12045 = vadd.f32 %v11465, %v11843
        %v12046 = vadd.f32 %v11466, %v11846
        %v12047 = vadd.f32 %v11467, %v11849
        %v12048 = vadd.f32 %v11468, %v11852
        %v12049 = vadd.f32 %v11469, %v11855
        %v12050 = vadd.f32 %v11470, %v11858
        %v12051 = vadd.f32 %v11471, %v11861
        %v12052 = vadd.f32 %v11472, %v11864
        %v12053 = vadd.f32 %v11473, %v11867
        %v12054 = vadd.f32 %v11474, %v11870
        %v12055 = vadd.f32 %v11475, %v11873
        %v12056 = vadd.f32 %v11476, %v11876
        %v12057 = vadd.f32 %v11477, %v11879
        %v12058 = vadd.f32 %v11478, %v11882
        %v12059 = vadd.f32 %v11479, %v11885
        %v12060 = vadd.f32 %v11480, %v11888
        %v12061 = vadd.f32 %v11481, %v11891
        %v12062 = vadd.f32 %v11482, %v11894
        %v12063 = vadd.f32 %v11483, %v11897
        %v12064 = vadd.f32 %v11484, %v11900
        %v12065 = vadd.f32 %v11485, %v11903
        %v12066 = vadd.f32 %v11486, %v11906
        %v12067 = vadd.f32 %v11487, %v11909
        %v12068 = vadd.f32 %v11488, %v11912
        %v12069 = vadd.f32 %v11489, %v11915
        %v12070 = vadd.f32 %v11490, %v11918
        %v12071 = vadd.f32 %v11491, %v11921
        %v12072 = vadd.f32 %v11492, %v11924
        %v12073 = vadd.f32 %v11493, %v11927
        %v12074 = vadd.f32 %v11494, %v11930
        %v12075 = vadd.f32 %v11495, %v11933
        %v12076 = vadd.f32 %v11496, %v11936
        %v12077 = vadd.f32 %v11497, %v11939
        %v12078 = vadd.f32 %v11498, %v11942
        %v12079 = vadd.f32 %v11499, %v11945
        %v12080 = vadd.f32 %v11500, %v11948
        %v12081 = vadd.f32 %v11501, %v11951
        %v12082 = vadd.f32 %v11502, %v11954
        %v12083 = vld [vmem:[%s2] sm:$0x1]
        %v12085 = vlaneseq
        %v12086 = vshrl.u32 %v12085, 7
        %v12087 = vsub.s32 0, %v12086
        %v12088 = vrot.slane %v12083, %v12087
        %v12090 = vadd.f32 %v12019, %v12088
        %v12091 = vadd.f32 %v12020, %v12088
        %v12092 = vadd.f32 %v12021, %v12088
        %v12093 = vadd.f32 %v12022, %v12088
        %v12094 = vadd.f32 %v12023, %v12088
        %v12095 = vadd.f32 %v12024, %v12088
        %v12096 = vadd.f32 %v12025, %v12088
        %v12097 = vadd.f32 %v12026, %v12088
        %v12098 = vadd.f32 %v12027, %v12088
        %v12099 = vadd.f32 %v12028, %v12088
        %v12100 = vadd.f32 %v12029, %v12088
        %v12101 = vadd.f32 %v12030, %v12088
        %v12102 = vadd.f32 %v12031, %v12088
        %v12103 = vadd.f32 %v12032, %v12088
        %v12104 = vadd.f32 %v12033, %v12088
        %v12105 = vadd.f32 %v12034, %v12088
        %v12106 = vadd.f32 %v12035, %v12088
        %v12107 = vadd.f32 %v12036, %v12088
        %v12108 = vadd.f32 %v12037, %v12088
        %v12109 = vadd.f32 %v12038, %v12088
        %v12110 = vadd.f32 %v12039, %v12088
        %v12111 = vadd.f32 %v12040, %v12088
        %v12112 = vadd.f32 %v12041, %v12088
        %v12113 = vadd.f32 %v12042, %v12088
        %v12114 = vadd.f32 %v12043, %v12088
        %v12115 = vadd.f32 %v12044, %v12088
        %v12116 = vadd.f32 %v12045, %v12088
        %v12117 = vadd.f32 %v12046, %v12088
        %v12118 = vadd.f32 %v12047, %v12088
        %v12119 = vadd.f32 %v12048, %v12088
        %v12120 = vadd.f32 %v12049, %v12088
        %v12121 = vadd.f32 %v12050, %v12088
        %v12122 = vadd.f32 %v12051, %v12088
        %v12123 = vadd.f32 %v12052, %v12088
        %v12124 = vadd.f32 %v12053, %v12088
        %v12125 = vadd.f32 %v12054, %v12088
        %v12126 = vadd.f32 %v12055, %v12088
        %v12127 = vadd.f32 %v12056, %v12088
        %v12128 = vadd.f32 %v12057, %v12088
        %v12129 = vadd.f32 %v12058, %v12088
        %v12130 = vadd.f32 %v12059, %v12088
        %v12131 = vadd.f32 %v12060, %v12088
        %v12132 = vadd.f32 %v12061, %v12088
        %v12133 = vadd.f32 %v12062, %v12088
        %v12134 = vadd.f32 %v12063, %v12088
        %v12135 = vadd.f32 %v12064, %v12088
        %v12136 = vadd.f32 %v12065, %v12088
        %v12137 = vadd.f32 %v12066, %v12088
        %v12138 = vadd.f32 %v12067, %v12088
        %v12139 = vadd.f32 %v12068, %v12088
        %v12140 = vadd.f32 %v12069, %v12088
        %v12141 = vadd.f32 %v12070, %v12088
        %v12142 = vadd.f32 %v12071, %v12088
        %v12143 = vadd.f32 %v12072, %v12088
        %v12144 = vadd.f32 %v12073, %v12088
        %v12145 = vadd.f32 %v12074, %v12088
        %v12146 = vadd.f32 %v12075, %v12088
        %v12147 = vadd.f32 %v12076, %v12088
        %v12148 = vadd.f32 %v12077, %v12088
        %v12149 = vadd.f32 %v12078, %v12088
        %v12150 = vadd.f32 %v12079, %v12088
        %v12151 = vadd.f32 %v12080, %v12088
        %v12152 = vadd.f32 %v12081, %v12088
        %v12153 = vadd.f32 %v12082, %v12088
        %vm12154 = vcmask 31744
        %12155 = vst.msk [vmem:[%s243] sm:$0xff] %vm12154, %v12090
        %12156 = vst.msk [vmem:[%s243 + $0x8] sm:$0xff] %vm12154, %v12091
        %12157 = vst.msk [vmem:[%s243 + $0x10] sm:$0xff] %vm12154, %v12092
        %12158 = vst.msk [vmem:[%s243 + $0x18] sm:$0xff] %vm12154, %v12093
        %12159 = vst.msk [vmem:[%s243 + $0x20] sm:$0xff] %vm12154, %v12094
        %12160 = vst.msk [vmem:[%s243 + $0x28] sm:$0xff] %vm12154, %v12095
        %12161 = vst.msk [vmem:[%s243 + $0x30] sm:$0xff] %vm12154, %v12096
        %12162 = vst.msk [vmem:[%s243 + $0x38] sm:$0xff] %vm12154, %v12097
        %12163 = vst.msk [vmem:[%s243 + $0x40] sm:$0xff] %vm12154, %v12098
        %12164 = vst.msk [vmem:[%s243 + $0x48] sm:$0xff] %vm12154, %v12099
        %12165 = vst.msk [vmem:[%s243 + $0x50] sm:$0xff] %vm12154, %v12100
        %12166 = vst.msk [vmem:[%s243 + $0x58] sm:$0xff] %vm12154, %v12101
        %12167 = vst.msk [vmem:[%s243 + $0x60] sm:$0xff] %vm12154, %v12102
        %12168 = vst.msk [vmem:[%s243 + $0x68] sm:$0xff] %vm12154, %v12103
        %12169 = vst.msk [vmem:[%s243 + $0x70] sm:$0xff] %vm12154, %v12104
        %12170 = vst.msk [vmem:[%s243 + $0x78] sm:$0xff] %vm12154, %v12105
        %12171 = vst.msk [vmem:[%s243 + $0x80] sm:$0xff] %vm12154, %v12106
        %12172 = vst.msk [vmem:[%s243 + $0x88] sm:$0xff] %vm12154, %v12107
        %12173 = vst.msk [vmem:[%s243 + $0x90] sm:$0xff] %vm12154, %v12108
        %12174 = vst.msk [vmem:[%s243 + $0x98] sm:$0xff] %vm12154, %v12109
        %12175 = vst.msk [vmem:[%s243 + $0xa0] sm:$0xff] %vm12154, %v12110
        %12176 = vst.msk [vmem:[%s243 + $0xa8] sm:$0xff] %vm12154, %v12111
        %12177 = vst.msk [vmem:[%s243 + $0xb0] sm:$0xff] %vm12154, %v12112
        %12178 = vst.msk [vmem:[%s243 + $0xb8] sm:$0xff] %vm12154, %v12113
        %12179 = vst.msk [vmem:[%s243 + $0xc0] sm:$0xff] %vm12154, %v12114
        %12180 = vst.msk [vmem:[%s243 + $0xc8] sm:$0xff] %vm12154, %v12115
        %12181 = vst.msk [vmem:[%s243 + $0xd0] sm:$0xff] %vm12154, %v12116
        %12182 = vst.msk [vmem:[%s243 + $0xd8] sm:$0xff] %vm12154, %v12117
        %12183 = vst.msk [vmem:[%s243 + $0xe0] sm:$0xff] %vm12154, %v12118
        %12184 = vst.msk [vmem:[%s243 + $0xe8] sm:$0xff] %vm12154, %v12119
        %12185 = vst.msk [vmem:[%s243 + $0xf0] sm:$0xff] %vm12154, %v12120
        %12186 = vst.msk [vmem:[%s243 + $0xf8] sm:$0xff] %vm12154, %v12121
        %12187 = vst.msk [vmem:[%s243 + $0x100] sm:$0xff] %vm12154, %v12122
        %12188 = vst.msk [vmem:[%s243 + $0x108] sm:$0xff] %vm12154, %v12123
        %12189 = vst.msk [vmem:[%s243 + $0x110] sm:$0xff] %vm12154, %v12124
        %12190 = vst.msk [vmem:[%s243 + $0x118] sm:$0xff] %vm12154, %v12125
        %12191 = vst.msk [vmem:[%s243 + $0x120] sm:$0xff] %vm12154, %v12126
        %12192 = vst.msk [vmem:[%s243 + $0x128] sm:$0xff] %vm12154, %v12127
        %12193 = vst.msk [vmem:[%s243 + $0x130] sm:$0xff] %vm12154, %v12128
        %12194 = vst.msk [vmem:[%s243 + $0x138] sm:$0xff] %vm12154, %v12129
        %12195 = vst.msk [vmem:[%s243 + $0x140] sm:$0xff] %vm12154, %v12130
        %12196 = vst.msk [vmem:[%s243 + $0x148] sm:$0xff] %vm12154, %v12131
        %12197 = vst.msk [vmem:[%s243 + $0x150] sm:$0xff] %vm12154, %v12132
        %12198 = vst.msk [vmem:[%s243 + $0x158] sm:$0xff] %vm12154, %v12133
        %12199 = vst.msk [vmem:[%s243 + $0x160] sm:$0xff] %vm12154, %v12134
        %12200 = vst.msk [vmem:[%s243 + $0x168] sm:$0xff] %vm12154, %v12135
        %12201 = vst.msk [vmem:[%s243 + $0x170] sm:$0xff] %vm12154, %v12136
        %12202 = vst.msk [vmem:[%s243 + $0x178] sm:$0xff] %vm12154, %v12137
        %12203 = vst.msk [vmem:[%s243 + $0x180] sm:$0xff] %vm12154, %v12138
        %12204 = vst.msk [vmem:[%s243 + $0x188] sm:$0xff] %vm12154, %v12139
        %12205 = vst.msk [vmem:[%s243 + $0x190] sm:$0xff] %vm12154, %v12140
        %12206 = vst.msk [vmem:[%s243 + $0x198] sm:$0xff] %vm12154, %v12141
        %12207 = vst.msk [vmem:[%s243 + $0x1a0] sm:$0xff] %vm12154, %v12142
        %12208 = vst.msk [vmem:[%s243 + $0x1a8] sm:$0xff] %vm12154, %v12143
        %12209 = vst.msk [vmem:[%s243 + $0x1b0] sm:$0xff] %vm12154, %v12144
        %12210 = vst.msk [vmem:[%s243 + $0x1b8] sm:$0xff] %vm12154, %v12145
        %12211 = vst.msk [vmem:[%s243 + $0x1c0] sm:$0xff] %vm12154, %v12146
        %12212 = vst.msk [vmem:[%s243 + $0x1c8] sm:$0xff] %vm12154, %v12147
        %12213 = vst.msk [vmem:[%s243 + $0x1d0] sm:$0xff] %vm12154, %v12148
        %12214 = vst.msk [vmem:[%s243 + $0x1d8] sm:$0xff] %vm12154, %v12149
        %12215 = vst.msk [vmem:[%s243 + $0x1e0] sm:$0xff] %vm12154, %v12150
        %12216 = vst.msk [vmem:[%s243 + $0x1e8] sm:$0xff] %vm12154, %v12151
        %12217 = vst.msk [vmem:[%s243 + $0x1f0] sm:$0xff] %vm12154, %v12152
        %12218 = vst.msk [vmem:[%s243 + $0x1f8] sm:$0xff] %vm12154, %v12153
        %v12219 = vsel %vm12154, %v12090, 0.0
        %v12220 = vsel %vm12154, %v12091, 0.0
        %v12221 = vadd.f32 %v12219, %v12220
        %v12222 = vsel %vm12154, %v12092, 0.0
        %v12223 = vadd.f32 %v12221, %v12222
        %v12224 = vsel %vm12154, %v12093, 0.0
        %v12225 = vadd.f32 %v12223, %v12224
        %v12226 = vsel %vm12154, %v12094, 0.0
        %v12227 = vadd.f32 %v12225, %v12226
        %v12228 = vsel %vm12154, %v12095, 0.0
        %v12229 = vadd.f32 %v12227, %v12228
        %v12230 = vsel %vm12154, %v12096, 0.0
        %v12231 = vadd.f32 %v12229, %v12230
        %v12232 = vsel %vm12154, %v12097, 0.0
        %v12233 = vadd.f32 %v12231, %v12232
        %v12234 = vsel %vm12154, %v12098, 0.0
        %v12235 = vadd.f32 %v12233, %v12234
        %v12236 = vsel %vm12154, %v12099, 0.0
        %v12237 = vadd.f32 %v12235, %v12236
        %v12238 = vsel %vm12154, %v12100, 0.0
        %v12239 = vadd.f32 %v12237, %v12238
        %v12240 = vsel %vm12154, %v12101, 0.0
        %v12241 = vadd.f32 %v12239, %v12240
        %v12242 = vsel %vm12154, %v12102, 0.0
        %v12243 = vadd.f32 %v12241, %v12242
        %v12244 = vsel %vm12154, %v12103, 0.0
        %v12245 = vadd.f32 %v12243, %v12244
        %v12246 = vsel %vm12154, %v12104, 0.0
        %v12247 = vadd.f32 %v12245, %v12246
        %v12248 = vsel %vm12154, %v12105, 0.0
        %v12249 = vadd.f32 %v12247, %v12248
        %v12250 = vsel %vm12154, %v12106, 0.0
        %v12251 = vadd.f32 %v12249, %v12250
        %v12252 = vsel %vm12154, %v12107, 0.0
        %v12253 = vadd.f32 %v12251, %v12252
        %v12254 = vsel %vm12154, %v12108, 0.0
        %v12255 = vadd.f32 %v12253, %v12254
        %v12256 = vsel %vm12154, %v12109, 0.0
        %v12257 = vadd.f32 %v12255, %v12256
        %v12258 = vsel %vm12154, %v12110, 0.0
        %v12259 = vadd.f32 %v12257, %v12258
        %v12260 = vsel %vm12154, %v12111, 0.0
        %v12261 = vadd.f32 %v12259, %v12260
        %v12262 = vsel %vm12154, %v12112, 0.0
        %v12263 = vadd.f32 %v12261, %v12262
        %v12264 = vsel %vm12154, %v12113, 0.0
        %v12265 = vadd.f32 %v12263, %v12264
        %v12266 = vsel %vm12154, %v12114, 0.0
        %v12267 = vadd.f32 %v12265, %v12266
        %v12268 = vsel %vm12154, %v12115, 0.0
        %v12269 = vadd.f32 %v12267, %v12268
        %v12270 = vsel %vm12154, %v12116, 0.0
        %v12271 = vadd.f32 %v12269, %v12270
        %v12272 = vsel %vm12154, %v12117, 0.0
        %v12273 = vadd.f32 %v12271, %v12272
        %v12274 = vsel %vm12154, %v12118, 0.0
        %v12275 = vadd.f32 %v12273, %v12274
        %v12276 = vsel %vm12154, %v12119, 0.0
        %v12277 = vadd.f32 %v12275, %v12276
        %v12278 = vsel %vm12154, %v12120, 0.0
        %v12279 = vadd.f32 %v12277, %v12278
        %v12280 = vsel %vm12154, %v12121, 0.0
        %v12281 = vadd.f32 %v12279, %v12280
        %v12282 = vsel %vm12154, %v12122, 0.0
        %v12283 = vadd.f32 %v12281, %v12282
        %v12284 = vsel %vm12154, %v12123, 0.0
        %v12285 = vadd.f32 %v12283, %v12284
        %v12286 = vsel %vm12154, %v12124, 0.0
        %v12287 = vadd.f32 %v12285, %v12286
        %v12288 = vsel %vm12154, %v12125, 0.0
        %v12289 = vadd.f32 %v12287, %v12288
        %v12290 = vsel %vm12154, %v12126, 0.0
        %v12291 = vadd.f32 %v12289, %v12290
        %v12292 = vsel %vm12154, %v12127, 0.0
        %v12293 = vadd.f32 %v12291, %v12292
        %v12294 = vsel %vm12154, %v12128, 0.0
        %v12295 = vadd.f32 %v12293, %v12294
        %v12296 = vsel %vm12154, %v12129, 0.0
        %v12297 = vadd.f32 %v12295, %v12296
        %v12298 = vsel %vm12154, %v12130, 0.0
        %v12299 = vadd.f32 %v12297, %v12298
        %v12300 = vsel %vm12154, %v12131, 0.0
        %v12301 = vadd.f32 %v12299, %v12300
        %v12302 = vsel %vm12154, %v12132, 0.0
        %v12303 = vadd.f32 %v12301, %v12302
        %v12304 = vsel %vm12154, %v12133, 0.0
        %v12305 = vadd.f32 %v12303, %v12304
        %v12306 = vsel %vm12154, %v12134, 0.0
        %v12307 = vadd.f32 %v12305, %v12306
        %v12308 = vsel %vm12154, %v12135, 0.0
        %v12309 = vadd.f32 %v12307, %v12308
        %v12310 = vsel %vm12154, %v12136, 0.0
        %v12311 = vadd.f32 %v12309, %v12310
        %v12312 = vsel %vm12154, %v12137, 0.0
        %v12313 = vadd.f32 %v12311, %v12312
        %v12314 = vsel %vm12154, %v12138, 0.0
        %v12315 = vadd.f32 %v12313, %v12314
        %v12316 = vsel %vm12154, %v12139, 0.0
        %v12317 = vadd.f32 %v12315, %v12316
        %v12318 = vsel %vm12154, %v12140, 0.0
        %v12319 = vadd.f32 %v12317, %v12318
        %v12320 = vsel %vm12154, %v12141, 0.0
        %v12321 = vadd.f32 %v12319, %v12320
        %v12322 = vsel %vm12154, %v12142, 0.0
        %v12323 = vadd.f32 %v12321, %v12322
        %v12324 = vsel %vm12154, %v12143, 0.0
        %v12325 = vadd.f32 %v12323, %v12324
        %v12326 = vsel %vm12154, %v12144, 0.0
        %v12327 = vadd.f32 %v12325, %v12326
        %v12328 = vsel %vm12154, %v12145, 0.0
        %v12329 = vadd.f32 %v12327, %v12328
        %v12330 = vsel %vm12154, %v12146, 0.0
        %v12331 = vadd.f32 %v12329, %v12330
        %v12332 = vsel %vm12154, %v12147, 0.0
        %v12333 = vadd.f32 %v12331, %v12332
        %v12334 = vsel %vm12154, %v12148, 0.0
        %v12335 = vadd.f32 %v12333, %v12334
        %v12336 = vsel %vm12154, %v12149, 0.0
        %v12337 = vadd.f32 %v12335, %v12336
        %v12338 = vsel %vm12154, %v12150, 0.0
        %v12339 = vadd.f32 %v12337, %v12338
        %v12340 = vsel %vm12154, %v12151, 0.0
        %v12341 = vadd.f32 %v12339, %v12340
        %v12342 = vsel %vm12154, %v12152, 0.0
        %v12343 = vadd.f32 %v12341, %v12342
        %v12344 = vsel %vm12154, %v12153, 0.0
        %v12345 = vadd.f32 %v12343, %v12344
        %v12346 = vrot.slane %v12345, 4
        %v12347 = vadd.f32 %v12345, %v12346
        %v12348 = vrot.slane %v12347, 2
        %v12349 = vadd.f32 %v12347, %v12348
        %v12350 = vrot.slane %v12349, 1
        %v12351 = vadd.f32 %v12349, %v12350
        %vm12352 = vcmask 24576
        %12353 = vst.msk [vmem:[%s227] sm:$0x1] %vm12352, %v12351
        %v12354 = vmul.f32 %v12090, %v12090
        %v12355 = vmul.f32 %v12091, %v12091
        %v12356 = vmul.f32 %v12092, %v12092
        %v12357 = vmul.f32 %v12093, %v12093
        %v12358 = vmul.f32 %v12094, %v12094
        %v12359 = vmul.f32 %v12095, %v12095
        %v12360 = vmul.f32 %v12096, %v12096
        %v12361 = vmul.f32 %v12097, %v12097
        %v12362 = vmul.f32 %v12098, %v12098
        %v12363 = vmul.f32 %v12099, %v12099
        %v12364 = vmul.f32 %v12100, %v12100
        %v12365 = vmul.f32 %v12101, %v12101
        %v12366 = vmul.f32 %v12102, %v12102
        %v12367 = vmul.f32 %v12103, %v12103
        %v12368 = vmul.f32 %v12104, %v12104
        %v12369 = vmul.f32 %v12105, %v12105
        %v12370 = vmul.f32 %v12106, %v12106
        %v12371 = vmul.f32 %v12107, %v12107
        %v12372 = vmul.f32 %v12108, %v12108
        %v12373 = vmul.f32 %v12109, %v12109
        %v12374 = vmul.f32 %v12110, %v12110
        %v12375 = vmul.f32 %v12111, %v12111
        %v12376 = vmul.f32 %v12112, %v12112
        %v12377 = vmul.f32 %v12113, %v12113
        %v12378 = vmul.f32 %v12114, %v12114
        %v12379 = vmul.f32 %v12115, %v12115
        %v12380 = vmul.f32 %v12116, %v12116
        %v12381 = vmul.f32 %v12117, %v12117
        %v12382 = vmul.f32 %v12118, %v12118
        %v12383 = vmul.f32 %v12119, %v12119
        %v12384 = vmul.f32 %v12120, %v12120
        %v12385 = vmul.f32 %v12121, %v12121
        %v12386 = vmul.f32 %v12122, %v12122
        %v12387 = vmul.f32 %v12123, %v12123
        %v12388 = vmul.f32 %v12124, %v12124
        %v12389 = vmul.f32 %v12125, %v12125
        %v12390 = vmul.f32 %v12126, %v12126
        %v12391 = vmul.f32 %v12127, %v12127
        %v12392 = vmul.f32 %v12128, %v12128
        %v12393 = vmul.f32 %v12129, %v12129
        %v12394 = vmul.f32 %v12130, %v12130
        %v12395 = vmul.f32 %v12131, %v12131
        %v12396 = vmul.f32 %v12132, %v12132
        %v12397 = vmul.f32 %v12133, %v12133
        %v12398 = vmul.f32 %v12134, %v12134
        %v12399 = vmul.f32 %v12135, %v12135
        %v12400 = vmul.f32 %v12136, %v12136
        %v12401 = vmul.f32 %v12137, %v12137
        %v12402 = vmul.f32 %v12138, %v12138
        %v12403 = vmul.f32 %v12139, %v12139
        %v12404 = vmul.f32 %v12140, %v12140
        %v12405 = vmul.f32 %v12141, %v12141
        %v12406 = vmul.f32 %v12142, %v12142
        %v12407 = vmul.f32 %v12143, %v12143
        %v12408 = vmul.f32 %v12144, %v12144
        %v12409 = vmul.f32 %v12145, %v12145
        %v12410 = vmul.f32 %v12146, %v12146
        %v12411 = vmul.f32 %v12147, %v12147
        %v12412 = vmul.f32 %v12148, %v12148
        %v12413 = vmul.f32 %v12149, %v12149
        %v12414 = vmul.f32 %v12150, %v12150
        %v12415 = vmul.f32 %v12151, %v12151
        %v12416 = vmul.f32 %v12152, %v12152
        %v12417 = vmul.f32 %v12153, %v12153
        %v12418 = vsel %vm12154, %v12354, 0.0
        %v12419 = vsel %vm12154, %v12355, 0.0
        %v12420 = vadd.f32 %v12418, %v12419
        %v12421 = vsel %vm12154, %v12356, 0.0
        %v12422 = vadd.f32 %v12420, %v12421
        %v12423 = vsel %vm12154, %v12357, 0.0
        %v12424 = vadd.f32 %v12422, %v12423
        %v12425 = vsel %vm12154, %v12358, 0.0
        %v12426 = vadd.f32 %v12424, %v12425
        %v12427 = vsel %vm12154, %v12359, 0.0
        %v12428 = vadd.f32 %v12426, %v12427
        %v12429 = vsel %vm12154, %v12360, 0.0
        %v12430 = vadd.f32 %v12428, %v12429
        %v12431 = vsel %vm12154, %v12361, 0.0
        %v12432 = vadd.f32 %v12430, %v12431
        %v12433 = vsel %vm12154, %v12362, 0.0
        %v12434 = vadd.f32 %v12432, %v12433
        %v12435 = vsel %vm12154, %v12363, 0.0
        %v12436 = vadd.f32 %v12434, %v12435
        %v12437 = vsel %vm12154, %v12364, 0.0
        %v12438 = vadd.f32 %v12436, %v12437
        %v12439 = vsel %vm12154, %v12365, 0.0
        %v12440 = vadd.f32 %v12438, %v12439
        %v12441 = vsel %vm12154, %v12366, 0.0
        %v12442 = vadd.f32 %v12440, %v12441
        %v12443 = vsel %vm12154, %v12367, 0.0
        %v12444 = vadd.f32 %v12442, %v12443
        %v12445 = vsel %vm12154, %v12368, 0.0
        %v12446 = vadd.f32 %v12444, %v12445
        %v12447 = vsel %vm12154, %v12369, 0.0
        %v12448 = vadd.f32 %v12446, %v12447
        %v12449 = vsel %vm12154, %v12370, 0.0
        %v12450 = vadd.f32 %v12448, %v12449
        %v12451 = vsel %vm12154, %v12371, 0.0
        %v12452 = vadd.f32 %v12450, %v12451
        %v12453 = vsel %vm12154, %v12372, 0.0
        %v12454 = vadd.f32 %v12452, %v12453
        %v12455 = vsel %vm12154, %v12373, 0.0
        %v12456 = vadd.f32 %v12454, %v12455
        %v12457 = vsel %vm12154, %v12374, 0.0
        %v12458 = vadd.f32 %v12456, %v12457
        %v12459 = vsel %vm12154, %v12375, 0.0
        %v12460 = vadd.f32 %v12458, %v12459
        %v12461 = vsel %vm12154, %v12376, 0.0
        %v12462 = vadd.f32 %v12460, %v12461
        %v12463 = vsel %vm12154, %v12377, 0.0
        %v12464 = vadd.f32 %v12462, %v12463
        %v12465 = vsel %vm12154, %v12378, 0.0
        %v12466 = vadd.f32 %v12464, %v12465
        %v12467 = vsel %vm12154, %v12379, 0.0
        %v12468 = vadd.f32 %v12466, %v12467
        %v12469 = vsel %vm12154, %v12380, 0.0
        %v12470 = vadd.f32 %v12468, %v12469
        %v12471 = vsel %vm12154, %v12381, 0.0
        %v12472 = vadd.f32 %v12470, %v12471
        %v12473 = vsel %vm12154, %v12382, 0.0
        %v12474 = vadd.f32 %v12472, %v12473
        %v12475 = vsel %vm12154, %v12383, 0.0
        %v12476 = vadd.f32 %v12474, %v12475
        %v12477 = vsel %vm12154, %v12384, 0.0
        %v12478 = vadd.f32 %v12476, %v12477
        %v12479 = vsel %vm12154, %v12385, 0.0
        %v12480 = vadd.f32 %v12478, %v12479
        %v12481 = vsel %vm12154, %v12386, 0.0
        %v12482 = vadd.f32 %v12480, %v12481
        %v12483 = vsel %vm12154, %v12387, 0.0
        %v12484 = vadd.f32 %v12482, %v12483
        %v12485 = vsel %vm12154, %v12388, 0.0
        %v12486 = vadd.f32 %v12484, %v12485
        %v12487 = vsel %vm12154, %v12389, 0.0
        %v12488 = vadd.f32 %v12486, %v12487
        %v12489 = vsel %vm12154, %v12390, 0.0
        %v12490 = vadd.f32 %v12488, %v12489
        %v12491 = vsel %vm12154, %v12391, 0.0
        %v12492 = vadd.f32 %v12490, %v12491
        %v12493 = vsel %vm12154, %v12392, 0.0
        %v12494 = vadd.f32 %v12492, %v12493
        %v12495 = vsel %vm12154, %v12393, 0.0
        %v12496 = vadd.f32 %v12494, %v12495
        %v12497 = vsel %vm12154, %v12394, 0.0
        %v12498 = vadd.f32 %v12496, %v12497
        %v12499 = vsel %vm12154, %v12395, 0.0
        %v12500 = vadd.f32 %v12498, %v12499
        %v12501 = vsel %vm12154, %v12396, 0.0
        %v12502 = vadd.f32 %v12500, %v12501
        %v12503 = vsel %vm12154, %v12397, 0.0
        %v12504 = vadd.f32 %v12502, %v12503
        %v12505 = vsel %vm12154, %v12398, 0.0
        %v12506 = vadd.f32 %v12504, %v12505
        %v12507 = vsel %vm12154, %v12399, 0.0
        %v12508 = vadd.f32 %v12506, %v12507
        %v12509 = vsel %vm12154, %v12400, 0.0
        %v12510 = vadd.f32 %v12508, %v12509
        %v12511 = vsel %vm12154, %v12401, 0.0
        %v12512 = vadd.f32 %v12510, %v12511
        %v12513 = vsel %vm12154, %v12402, 0.0
        %v12514 = vadd.f32 %v12512, %v12513
        %v12515 = vsel %vm12154, %v12403, 0.0
        %v12516 = vadd.f32 %v12514, %v12515
        %v12517 = vsel %vm12154, %v12404, 0.0
        %v12518 = vadd.f32 %v12516, %v12517
        %v12519 = vsel %vm12154, %v12405, 0.0
        %v12520 = vadd.f32 %v12518, %v12519
        %v12521 = vsel %vm12154, %v12406, 0.0
        %v12522 = vadd.f32 %v12520, %v12521
        %v12523 = vsel %vm12154, %v12407, 0.0
        %v12524 = vadd.f32 %v12522, %v12523
        %v12525 = vsel %vm12154, %v12408, 0.0
        %v12526 = vadd.f32 %v12524, %v12525
        %v12527 = vsel %vm12154, %v12409, 0.0
        %v12528 = vadd.f32 %v12526, %v12527
        %v12529 = vsel %vm12154, %v12410, 0.0
        %v12530 = vadd.f32 %v12528, %v12529
        %v12531 = vsel %vm12154, %v12411, 0.0
        %v12532 = vadd.f32 %v12530, %v12531
        %v12533 = vsel %vm12154, %v12412, 0.0
        %v12534 = vadd.f32 %v12532, %v12533
        %v12535 = vsel %vm12154, %v12413, 0.0
        %v12536 = vadd.f32 %v12534, %v12535
        %v12537 = vsel %vm12154, %v12414, 0.0
        %v12538 = vadd.f32 %v12536, %v12537
        %v12539 = vsel %vm12154, %v12415, 0.0
        %v12540 = vadd.f32 %v12538, %v12539
        %v12541 = vsel %vm12154, %v12416, 0.0
        %v12542 = vadd.f32 %v12540, %v12541
        %v12543 = vsel %vm12154, %v12417, 0.0
        %v12544 = vadd.f32 %v12542, %v12543
        %v12545 = vrot.slane %v12544, 4
        %v12546 = vadd.f32 %v12544, %v12545
        %v12547 = vrot.slane %v12546, 2
        %v12548 = vadd.f32 %v12546, %v12547
        %v12549 = vrot.slane %v12548, 1
        %v12550 = vadd.f32 %v12548, %v12549
        %12551 = vst.msk [vmem:[%s233] sm:$0x1] %vm12352, %v12550
        %p12552 = scmp.lt.s32.totalorder %s23, 1
        %s12553 = scalar_select %p12552, %s23, 1
        %s12554 = smul.addr %s12553, 64
        %s12555 = smul.addr %s12554, 8
        %s12556 = scalar_lea.vmem %s3, %s12555
        %s12557 = sand.u32 %s125, 1
        %s12558 = scalar_lea.sflag [#allocation3], %s12557
        %s12559 = sand.u32 %s125, 1
        %s12560 = scalar_lea.vmem [#allocation2], %s12559
        %s12561 = sand.u32 %s151, 1
        %s12562 = scalar_lea.sflag [#allocation5], %s12561
        %s12563 = sand.u32 %s151, 1
        %s12564 = scalar_lea.vmem [#allocation4], %s12563
        // Predicated region
        $region33: #{tpu_custom_call.1} parent=31 // pred_check
          %p12565 = pneg %p109
        $region34: #{tpu_custom_call.1} parent=31 // pred_check_branch
          %12567 = sbr.rel (%p12565) target = $region36
        $region35: #{tpu_custom_call.1} parent=31 // pred_region
          _
        $region36: #{tpu_custom_call.1} parent=31 // pred_fallthru
          _
        // Predicated region
        $region37: #{tpu_custom_call.1} parent=31 // pred_check
          %p12568 = pneg %p135
        $region38: #{tpu_custom_call.1} parent=31 // pred_check_branch
          %12570 = sbr.rel (%p12568) target = $region40
        $region39: #{tpu_custom_call.1} parent=31 // pred_region
          %s12572 = ssub.s32 16, 16
          %12573 = vsyncadd %s12558, %s12572
          %s12574 = smul.addr %s23, 16
          %s12575 = scalar_lea.hbm %s4, %s12574
          %s12577 = sshll.u32 %s12560, 4
          %s12578 = int_to_ptr.vmem [resolvable:$true] %s12577
          %12580 = dma.vmem_to_hbm [thread:$0]  %s12578, 16, %s12575, %s12558
        $region40: #{tpu_custom_call.1} parent=31 // pred_fallthru
          _
        // Predicated region
        $region41: #{tpu_custom_call.1} parent=31 // pred_check
          %p12581 = pneg %p161
        $region42: #{tpu_custom_call.1} parent=31 // pred_check_branch
          %12583 = sbr.rel (%p12581) target = $region44
        $region43: #{tpu_custom_call.1} parent=31 // pred_region
          %s12585 = ssub.s32 16, 16
          %12586 = vsyncadd %s12562, %s12585
          %s12587 = smul.addr %s23, 16
          %s12588 = scalar_lea.hbm %s5, %s12587
          %s12590 = sshll.u32 %s12564, 4
          %s12591 = int_to_ptr.vmem [resolvable:$true] %s12590
          %12593 = dma.vmem_to_hbm [thread:$0]  %s12591, 16, %s12588, %s12562
        $region44: #{tpu_custom_call.1} parent=31 // pred_fallthru
          _
      $region32: #{tpu_custom_call.1} parent=5 // pred_fallthru
        _
      %p12594 = scmp.le.s32.totalorder 2, %s18
      // Predicated region
      $region45: #{tpu_custom_call.1} parent=5 // pred_check
        %p12595 = pneg %p12594
      $region46: #{tpu_custom_call.1} parent=5 // pred_check_branch
        %12597 = sbr.rel (%p12595) target = $region48
      $region47: #{tpu_custom_call.1} parent=5 // pred_region
        %s12598 = ssub.s32 %s18, 2
        // Predicated region
        $region49: #{tpu_custom_call.1} parent=47 // pred_check
          %p12599 = pneg %p115
        $region50: #{tpu_custom_call.1} parent=47 // pred_check_branch
          %12601 = sbr.rel (%p12599) target = $region52
        $region51: #{tpu_custom_call.1} parent=47 // pred_region
          %p12602 = scmp.lt.s32.totalorder %s24, 1
          %s12603 = scalar_select %p12602, %s24, 1
          %s12604 = smul.addr %s12603, 64
          %s12605 = smul.addr %s12604, 8
          %s12606 = scalar_lea.vmem %s3, %s12605
        $region52: #{tpu_custom_call.1} parent=47 // pred_fallthru
          _
        // Predicated region
        $region53: #{tpu_custom_call.1} parent=47 // pred_check
          %p12607 = pneg %p141
        $region54: #{tpu_custom_call.1} parent=47 // pred_check_branch
          %12609 = sbr.rel (%p12607) target = $region56
        $region55: #{tpu_custom_call.1} parent=47 // pred_region
          %s12610 = sand.u32 %s126, 1
          %s12611 = scalar_lea.sflag [#allocation3], %s12610
          %s12612 = sand.u32 %s126, 1
          %s12613 = scalar_lea.vmem [#allocation2], %s12612
          %12614 = dma.done %s12611, 16
        $region56: #{tpu_custom_call.1} parent=47 // pred_fallthru
          _
        // Predicated region
        $region57: #{tpu_custom_call.1} parent=47 // pred_check
          %p12615 = pneg %p167
        $region58: #{tpu_custom_call.1} parent=47 // pred_check_branch
          %12617 = sbr.rel (%p12615) target = $region60
        $region59: #{tpu_custom_call.1} parent=47 // pred_region
          %s12618 = sand.u32 %s152, 1
          %s12619 = scalar_lea.sflag [#allocation5], %s12618
          %s12620 = sand.u32 %s152, 1
          %s12621 = scalar_lea.vmem [#allocation4], %s12620
          %12622 = dma.done %s12619, 16
        $region60: #{tpu_custom_call.1} parent=47 // pred_fallthru
          _
      $region48: #{tpu_custom_call.1} parent=5 // pred_fallthru
        _
    $region6: #{tpu_custom_call.1} parent=1 // loop_footer
      %s22 = sadd.s32 1, %s18
    $region7: #{tpu_custom_call.1} parent=1 // loop_footer_branch
      %17 = sbr.rel target = $region3
    $region8: #{tpu_custom_call.1} parent=1 // loop_exit
      _
    %12623 = vsyncpa [#allocation3], 1
    %s12624 = scalar_lea.sflag [#allocation3], 1
    %12625 = vsyncpa %s12624, 1
    %12626 = vsyncpa [#allocation5], 1
    %s12627 = scalar_lea.sflag [#allocation5], 1
    %12628 = vsyncpa %s12627, 1

</llo_original>
